<compile_context>
chip_gen: v7x
topology: tpu7x:2x2x1
jax: 0.10.0
libtpu: 0.0.40
codegen_flags: <defaults>
</compile_context>

<pallas_src>
import functools

import jax
import jax.numpy as jnp
from jax import lax
from jax.experimental import pallas as pl
from jax.experimental.pallas import tpu as pltpu

_EPS = 1e-5
_LANES = 128
_VMEM_LIMIT = 32 * 1024 * 1024


def _round_up(x, m):
    return (x + m - 1) // m * m


def _pad_axis(a, axis, target):
    pad = target - a.shape[axis]
    if pad == 0:
        return a
    widths = [(0, 0)] * a.ndim
    widths[axis] = (0, pad)
    return jnp.pad(a, widths)


# ------------------------------------------------------------ fused kernels --
def _tap(pad_ref, kh, kw, ho, wo, stride):
    """Read the (1, ho, wo, C) input window for conv tap (kh, kw) at `stride`."""
    if stride == 1:
        return pad_ref[:, kh:kh + ho, kw:kw + wo, :]
    # strided read straight from VMEM (lane dim stays contiguous, stride 1)
    return pad_ref[:, pl.ds(kh, ho, stride), pl.ds(kw, wo, stride), :]


def _bn_relu_conv1_kernel(compute_dtype,
                          x_ref, scale_ref, shift_ref, w_ref, b_ref,
                          o_ref, pad_ref):
    """o = conv3x3(relu(x*scale+shift), stride=1, pad=1) + b   (one image/block)."""
    _, H, W, Cin = x_ref.shape
    _, Ho, Wo, Cout = o_ref.shape
    rows = Ho * Wo

    # halo zero-padding entirely in VMEM scratch (no HBM round trip).
    pad_ref[...] = jnp.zeros_like(pad_ref)
    pad_ref[:, 1:H + 1, 1:W + 1, :] = jnp.maximum(
        x_ref[...] * scale_ref[...] + shift_ref[...], 0.0)

    acc = jnp.zeros((rows, Cout), jnp.float32)
    for kh in range(3):
        for kw in range(3):
            patch = _tap(pad_ref, kh, kw, Ho, Wo, 1)
            acc = acc + jnp.dot(
                patch.reshape(rows, Cin).astype(compute_dtype),
                w_ref[3 * kh + kw].astype(compute_dtype),
                preferred_element_type=jnp.float32)

    o_ref[...] = (acc + b_ref[...].reshape(1, Cout)).reshape(1, Ho, Wo, Cout)


def _bn_relu_conv2_shortcut_kernel(stride, compute_dtype,
                                   h_ref, x_ref, scale_ref, shift_ref,
                                   w_ref, b_ref, scw_ref, scb_ref,
                                   o_ref, pad_ref):
    """o = conv3x3(relu(h*scale+shift), stride, pad=1) + b + (x[::s,::s] @ scw + scb)."""
    _, H, W, Cmid = h_ref.shape
    _, Ho, Wo, Cout = o_ref.shape
    Cin = x_ref.shape[-1]
    rows = Ho * Wo

    pad_ref[...] = jnp.zeros_like(pad_ref)
    pad_ref[:, 1:H + 1, 1:W + 1, :] = jnp.maximum(
        h_ref[...] * scale_ref[...] + shift_ref[...], 0.0)

    acc = jnp.zeros((rows, Cout), jnp.float32)
    for kh in range(3):
        for kw in range(3):
            patch = _tap(pad_ref, kh, kw, Ho, Wo, stride)
            acc = acc + jnp.dot(
                patch.reshape(rows, Cmid).astype(compute_dtype),
                w_ref[3 * kh + kw].astype(compute_dtype),
                preferred_element_type=jnp.float32)

    # fused 1x1 (possibly strided) shortcut on the raw input x; identity
    # shortcut is expressed as an identity scw / zero scb from the wrapper.
    if stride == 1:
        xs = x_ref[...]
    else:
        xs = x_ref[:, pl.ds(0, Ho, stride), pl.ds(0, Wo, stride), :]
    acc = acc + jnp.dot(
        xs.reshape(rows, Cin).astype(compute_dtype),
        scw_ref[...].astype(compute_dtype),
        preferred_element_type=jnp.float32)

    bias = b_ref[...].reshape(1, Cout) + scb_ref[...].reshape(1, Cout)
    o_ref[...] = (acc + bias).reshape(1, Ho, Wo, Cout)


# ------------------------------------------------------------ pallas_call glue --
def _conv1_call(x, scale, shift, w9, b, compute_dtype):
    N, H, W, Cin = x.shape
    Cout = w9.shape[-1]
    kernel = functools.partial(_bn_relu_conv1_kernel, compute_dtype)
    return pl.pallas_call(
        kernel,
        out_shape=jax.ShapeDtypeStruct((N, H, W, Cout), jnp.float32),
        grid_spec=pltpu.PrefetchScalarGridSpec(
            num_scalar_prefetch=0,
            grid=(N,),
            in_specs=[
                pl.BlockSpec((1, H, W, Cin), lambda n: (n, 0, 0, 0)),
                pl.BlockSpec((1, 1, 1, Cin), lambda n: (0, 0, 0, 0)),
                pl.BlockSpec((1, 1, 1, Cin), lambda n: (0, 0, 0, 0)),
                pl.BlockSpec((9, Cin, Cout), lambda n: (0, 0, 0)),
                pl.BlockSpec((1, 1, 1, Cout), lambda n: (0, 0, 0, 0)),
            ],
            out_specs=pl.BlockSpec((1, H, W, Cout), lambda n: (n, 0, 0, 0)),
            scratch_shapes=[pltpu.VMEM((1, H + 2, W + 2, Cin), jnp.float32)],
        ),
        compiler_params=pltpu.CompilerParams(
            dimension_semantics=("parallel",),
            vmem_limit_bytes=_VMEM_LIMIT),
    )(x, scale, shift, w9, b)


def _conv2_shortcut_call(h, x, scale, shift, w9, b, scw, scb, stride, compute_dtype):
    N, H, W, Cmid = h.shape
    Cin = x.shape[-1]
    Cout = w9.shape[-1]
    Ho = (H - 1) // stride + 1
    Wo = (W - 1) // stride + 1
    kernel = functools.partial(_bn_relu_conv2_shortcut_kernel, stride, compute_dtype)
    return pl.pallas_call(
        kernel,
        out_shape=jax.ShapeDtypeStruct((N, Ho, Wo, Cout), jnp.float32),
        grid_spec=pltpu.PrefetchScalarGridSpec(
            num_scalar_prefetch=0,
            grid=(N,),
            in_specs=[
                pl.BlockSpec((1, H, W, Cmid), lambda n: (n, 0, 0, 0)),
                pl.BlockSpec((1, H, W, Cin), lambda n: (n, 0, 0, 0)),
                pl.BlockSpec((1, 1, 1, Cmid), lambda n: (0, 0, 0, 0)),
                pl.BlockSpec((1, 1, 1, Cmid), lambda n: (0, 0, 0, 0)),
                pl.BlockSpec((9, Cmid, Cout), lambda n: (0, 0, 0)),
                pl.BlockSpec((1, 1, 1, Cout), lambda n: (0, 0, 0, 0)),
                pl.BlockSpec((Cin, Cout), lambda n: (0, 0)),
                pl.BlockSpec((1, 1, 1, Cout), lambda n: (0, 0, 0, 0)),
            ],
            out_specs=pl.BlockSpec((1, Ho, Wo, Cout), lambda n: (n, 0, 0, 0)),
            scratch_shapes=[pltpu.VMEM((1, H + 2, W + 2, Cmid), jnp.float32)],
        ),
        compiler_params=pltpu.CompilerParams(
            dimension_semantics=("parallel",),
            vmem_limit_bytes=_VMEM_LIMIT),
    )(h, x, scale, shift, w9, b, scw, scb)


# ----------------------------------------------------------------- forward --
def wide_basic_forward(x_nchw, params, stride=1, compute_dtype=jnp.float32):
    """Pallas forward of _WideBasic. Input/output are NCHW (PyTorch convention)."""
    N, in_planes, H, W = x_nchw.shape
    planes = params["conv1_w"].shape[-1]
    cp_in = _round_up(in_planes, _LANES)
    cp_out = _round_up(planes, _LANES)

    # NCHW -> NHWC, channels zero-padded to 128 lanes (lane-dense, unmasked stores)
    x = jnp.transpose(x_nchw, (0, 2, 3, 1)).astype(jnp.float32)
    x = _pad_axis(x, 3, cp_in)

    # fold eval-mode BN into per-channel scale/shift (padded lanes -> 0)
    def _fold(gamma, beta, mean, var, cp):
        scale = gamma / jnp.sqrt(var + _EPS)
        shift = beta - mean * scale
        return (_pad_axis(scale, 0, cp).reshape(1, 1, 1, cp),
                _pad_axis(shift, 0, cp).reshape(1, 1, 1, cp))

    scale1, shift1 = _fold(params["bn1_gamma"], params["bn1_beta"],
                           params["bn1_mean"], params["bn1_var"], cp_in)
    scale2, shift2 = _fold(params["bn2_gamma"], params["bn2_beta"],
                           params["bn2_mean"], params["bn2_var"], cp_out)

    def _prep_conv_w(w):  # (3,3,ci,co) -> (9, cp_ci, cp_co), zero-padded lanes
        w = _pad_axis(w, 2, _round_up(w.shape[2], _LANES))
        w = _pad_axis(w, 3, _round_up(w.shape[3], _LANES))
        return w.reshape(9, w.shape[2], w.shape[3]).astype(jnp.float32)

    w1 = _prep_conv_w(params["conv1_w"])
    b1 = _pad_axis(params["conv1_b"], 0, cp_out).reshape(1, 1, 1, cp_out)
    w2 = _prep_conv_w(params["conv2_w"])
    b2 = _pad_axis(params["conv2_b"], 0, cp_out).reshape(1, 1, 1, cp_out)

    if stride != 1 or in_planes != planes:
        scw = _pad_axis(_pad_axis(params["sc_w"].astype(jnp.float32), 0, cp_in), 1, cp_out)
        scb = _pad_axis(params["sc_b"], 0, cp_out).reshape(1, 1, 1, cp_out)
    else:
        # identity shortcut expressed as a 1x1 conv with identity weight
        scw = jnp.eye(cp_in, cp_out, dtype=jnp.float32)
        scb = jnp.zeros((1, 1, 1, cp_out), jnp.float32)

    # kernel 1: bn1 + relu + conv1 (dropout == identity in eval mode)
    h = _conv1_call(x, scale1, shift1, w1, b1, compute_dtype)

    # kernel 2: bn2 + relu + strided conv2 + bias + fused shortcut add
    out = _conv2_shortcut_call(h, x, scale2, shift2, w2, b2, scw, scb,
                               stride, compute_dtype)

    out = out[..., :planes]                      # drop padded lanes
    return jnp.transpose(out, (0, 3, 1, 2))      # -> NCHW


# ------------------------------------------------------- pure-JAX reference --
def _reference(x_nchw, params, stride, in_planes, planes):
    x = x_nchw.astype(jnp.float32)

    def bn(t, g, b, m, v):
        g, b, m, v = (a[None, :, None, None] for a in (g, b, m, v))
        return (t - m) / jnp.sqrt(v + _EPS) * g + b

    def conv(t, w_hwio, b, s, pad):
        y = lax.conv_general_dilated(
            t, w_hwio, (s, s), ((pad, pad), (pad, pad)),
            dimension_numbers=("NCHW", "HWIO", "NCHW"))
        return y + b[None, :, None, None]

    h = jax.nn.relu(bn(x, params["bn1_gamma"], params["bn1_beta"],
                       params["bn1_mean"], params["bn1_var"]))
    h = conv(h, params["conv1_w"], params["conv1_b"], 1, 1)
    h = jax.nn.relu(bn(h, params["bn2_gamma"], params["bn2_beta"],
                       params["bn2_mean"], params["bn2_var"]))
    h = conv(h, params["conv2_w"], params["conv2_b"], stride, 1)
    if stride != 1 or in_planes != planes:
        sc = conv(x, params["sc_w"][None, None], params["sc_b"], stride, 0)
    else:
        sc = x
    return h + sc


# ------------------------------------------------------------------- main --
def _make_params(key, in_planes, planes, stride):
    ks = jax.random.split(key, 14)
    params = {
        "bn1_gamma": jax.random.uniform(ks[0], (in_planes,), minval=0.5, maxval=1.5),
        "bn1_beta":  jax.random.normal(ks[1], (in_planes,)) * 0.1,
        "bn1_mean":  jax.random.normal(ks[2], (in_planes,)) * 0.1,
        "bn1_var":   jax.random.uniform(ks[3], (in_planes,), minval=0.5, maxval=1.5),
        "bn2_gamma": jax.random.uniform(ks[4], (planes,), minval=0.5, maxval=1.5),
        "bn2_beta":  jax.random.normal(ks[5], (planes,)) * 0.1,
        "bn2_mean":  jax.random.normal(ks[6], (planes,)) * 0.1,
        "bn2_var":   jax.random.uniform(ks[7], (planes,), minval=0.5, maxval=1.5),
        # conv weights stored directly in HWIO (3,3,Cin,Cout); biases (Cout,)
        "conv1_w": jax.random.normal(ks[8], (3, 3, in_planes, planes)) * 0.1,
        "conv1_b": jax.random.normal(ks[9], (planes,)) * 0.1,
        "conv2_w": jax.random.normal(ks[10], (3, 3, planes, planes)) * 0.1,
        "conv2_b": jax.random.normal(ks[11], (planes,)) * 0.1,
    }
    if stride != 1 or in_planes != planes:
        params["sc_w"] = jax.random.normal(ks[12], (in_planes, planes)) * 0.1
        params["sc_b"] = jax.random.normal(ks[13], (planes,)) * 0.1
    return params


def _run_case(key, in_planes, planes, stride, N=2, H=16, W=16):
    params = _make_params(key, in_planes, planes, stride)
    x = jax.random.normal(jax.random.fold_in(key, 200),
                          (N, in_planes, H, W), dtype=jnp.float32)

    fwd = jax.jit(functools.partial(wide_basic_forward, stride=stride))
    out = jax.block_until_ready(fwd(x, params))
    ref = jax.block_until_ready(_reference(x, params, stride, in_planes, planes))

    ho = (H - 1) // stride + 1
    wo = (W - 1) // stride + 1
    assert out.shape == (N, planes, ho, wo), out.shape
    err = float(jnp.max(jnp.abs(out - ref)))
    assert jnp.allclose(out, ref, atol=1e-4, rtol=1e-4), err


if __name__ == "__main__":
    key = jax.random.PRNGKey(0)
    # _WideBasic(in_planes=4, planes=8, dropout=0.1, stride=2): projection shortcut
    _run_case(key, in_planes=4, planes=8, stride=2, N=2, H=16, W=16)
    # identity-shortcut configuration (stride=1, in_planes == planes)
    _run_case(jax.random.fold_in(key, 1), in_planes=8, planes=8, stride=1, N=2, H=16, W=16)
    print("KERNEL_OK")
</pallas_src>

<mosaic_0001>
module attributes {stable_mosaic.version = 11 : i64} {
  func.func @_bn_relu_conv1_kernel(%arg0: i32, %arg1: memref<1x16x16x128xf32, #tpu.memory_space<vmem>>, %arg2: memref<1x1x1x128xf32, #tpu.memory_space<vmem>>, %arg3: memref<1x1x1x128xf32, #tpu.memory_space<vmem>>, %arg4: memref<9x128x128xf32, #tpu.memory_space<vmem>>, %arg5: memref<1x1x1x128xf32, #tpu.memory_space<vmem>>, %arg6: memref<1x16x16x128xf32, #tpu.memory_space<vmem>>, %arg7: memref<1x18x18x128xf32, #tpu.memory_space<vmem>>) attributes {dimension_semantics = [#tpu.dimension_semantics<parallel>], iteration_bounds = array<i64: 2>, scalar_prefetch = 0 : i64, scratch_operands = 1 : i64, tpu.core_type = #tpu.core_type<tc>, window_params = [{transform_indices = @transform_0, window_bounds = array<i64: 1, 16, 16, 128>}, {pipeline_mode = #tpu.pipeline_mode<synchronous>, transform_indices = @transform_1, window_bounds = array<i64: 1, 1, 1, 128>}, {pipeline_mode = #tpu.pipeline_mode<synchronous>, transform_indices = @transform_2, window_bounds = array<i64: 1, 1, 1, 128>}, {pipeline_mode = #tpu.pipeline_mode<synchronous>, transform_indices = @transform_3, window_bounds = array<i64: 9, 128, 128>}, {pipeline_mode = #tpu.pipeline_mode<synchronous>, transform_indices = @transform_4, window_bounds = array<i64: 1, 1, 1, 128>}, {transform_indices = @transform_5, window_bounds = array<i64: 1, 16, 16, 128>}]} {
    %cst = arith.constant 0.000000e+00 : f32
    %0 = vector.broadcast %cst : f32 to vector<1x18x18x128xf32>
    %c0 = arith.constant 0 : index
    %c0_0 = arith.constant 0 : index
    %c0_1 = arith.constant 0 : index
    %c0_2 = arith.constant 0 : index
    %1 = vector.load %arg7[%c0, %c0_0, %c0_1, %c0_2] : memref<1x18x18x128xf32, #tpu.memory_space<vmem>>, vector<1x18x18x128xf32>
    tpu.vector_store %arg7[%c0, %c0_0, %c0_1, %c0_2], %0 {strides = array<i32>} : memref<1x18x18x128xf32, #tpu.memory_space<vmem>>, vector<1x18x18x128xf32>,
    %c0_3 = arith.constant 0 : index
    %c0_4 = arith.constant 0 : index
    %c0_5 = arith.constant 0 : index
    %c0_6 = arith.constant 0 : index
    %2 = vector.load %arg1[%c0_3, %c0_4, %c0_5, %c0_6] : memref<1x16x16x128xf32, #tpu.memory_space<vmem>>, vector<1x16x16x128xf32>
    %c0_7 = arith.constant 0 : index
    %c0_8 = arith.constant 0 : index
    %c0_9 = arith.constant 0 : index
    %c0_10 = arith.constant 0 : index
    %3 = vector.load %arg2[%c0_7, %c0_8, %c0_9, %c0_10] : memref<1x1x1x128xf32, #tpu.memory_space<vmem>>, vector<1x1x1x128xf32>
    %4 = vector.broadcast %3 : vector<1x1x1x128xf32> to vector<1x16x16x128xf32>
    %5 = arith.mulf %2, %4 : vector<1x16x16x128xf32>
    %c0_11 = arith.constant 0 : index
    %c0_12 = arith.constant 0 : index
    %c0_13 = arith.constant 0 : index
    %c0_14 = arith.constant 0 : index
    %6 = vector.load %arg3[%c0_11, %c0_12, %c0_13, %c0_14] : memref<1x1x1x128xf32, #tpu.memory_space<vmem>>, vector<1x1x1x128xf32>
    %7 = vector.broadcast %6 : vector<1x1x1x128xf32> to vector<1x16x16x128xf32>
    %8 = arith.addf %5, %7 : vector<1x16x16x128xf32>
    %cst_15 = arith.constant 0.000000e+00 : f32
    %9 = vector.broadcast %cst_15 : f32 to vector<1x16x16x128xf32>
    %10 = arith.maximumf %8, %9 : vector<1x16x16x128xf32>
    %c0_16 = arith.constant 0 : index
    %c1 = arith.constant 1 : index
    %c1_17 = arith.constant 1 : index
    %c0_18 = arith.constant 0 : index
    %11 = vector.load %arg7[%c0_16, %c1, %c1_17, %c0_18] : memref<1x18x18x128xf32, #tpu.memory_space<vmem>>, vector<1x16x16x128xf32>
    tpu.vector_store %arg7[%c0_16, %c1, %c1_17, %c0_18], %10 {strides = array<i32>} : memref<1x18x18x128xf32, #tpu.memory_space<vmem>>, vector<1x16x16x128xf32>,
    %cst_19 = arith.constant 0.000000e+00 : f32
    %12 = vector.broadcast %cst_19 : f32 to vector<256x128xf32>
    %c0_20 = arith.constant 0 : index
    %c0_21 = arith.constant 0 : index
    %c0_22 = arith.constant 0 : index
    %c0_23 = arith.constant 0 : index
    %13 = vector.load %arg7[%c0_20, %c0_21, %c0_22, %c0_23] : memref<1x18x18x128xf32, #tpu.memory_space<vmem>>, vector<1x16x16x128xf32>
    %14 = vector.shape_cast %13 : vector<1x16x16x128xf32> to vector<256x128xf32>
    %c0_24 = arith.constant 0 : index
    %c0_25 = arith.constant 0 : index
    %c0_26 = arith.constant 0 : index
    %15 = vector.load %arg4[%c0_24, %c0_25, %c0_26] : memref<9x128x128xf32, #tpu.memory_space<vmem>>, vector<1x128x128xf32>
    %16 = vector.shape_cast %15 : vector<1x128x128xf32> to vector<128x128xf32>
    %cst_27 = arith.constant dense<0.000000e+00> : vector<256x128xf32>
    %17 = tpu.matmul %14, %16, %cst_27 {dimension_numbers = #tpu.dot_dimension_numbers<[1], [0], [0], [1], [0, 0, 1, 1], [], []>} : vector<256x128xf32>, vector<128x128xf32>, vector<256x128xf32> -> vector<256x128xf32>
    %18 = arith.addf %12, %17 : vector<256x128xf32>
    %c0_28 = arith.constant 0 : index
    %c0_29 = arith.constant 0 : index
    %c1_30 = arith.constant 1 : index
    %c0_31 = arith.constant 0 : index
    %19 = vector.load %arg7[%c0_28, %c0_29, %c1_30, %c0_31] : memref<1x18x18x128xf32, #tpu.memory_space<vmem>>, vector<1x16x16x128xf32>
    %20 = vector.shape_cast %19 : vector<1x16x16x128xf32> to vector<256x128xf32>
    %c1_32 = arith.constant 1 : index
    %c0_33 = arith.constant 0 : index
    %c0_34 = arith.constant 0 : index
    %21 = vector.load %arg4[%c1_32, %c0_33, %c0_34] : memref<9x128x128xf32, #tpu.memory_space<vmem>>, vector<1x128x128xf32>
    %22 = vector.shape_cast %21 : vector<1x128x128xf32> to vector<128x128xf32>
    %cst_35 = arith.constant dense<0.000000e+00> : vector<256x128xf32>
    %23 = tpu.matmul %20, %22, %cst_35 {dimension_numbers = #tpu.dot_dimension_numbers<[1], [0], [0], [1], [0, 0, 1, 1], [], []>} : vector<256x128xf32>, vector<128x128xf32>, vector<256x128xf32> -> vector<256x128xf32>
    %24 = arith.addf %18, %23 : vector<256x128xf32>
    %c0_36 = arith.constant 0 : index
    %c0_37 = arith.constant 0 : index
    %c2 = arith.constant 2 : index
    %c0_38 = arith.constant 0 : index
    %25 = vector.load %arg7[%c0_36, %c0_37, %c2, %c0_38] : memref<1x18x18x128xf32, #tpu.memory_space<vmem>>, vector<1x16x16x128xf32>
    %26 = vector.shape_cast %25 : vector<1x16x16x128xf32> to vector<256x128xf32>
    %c2_39 = arith.constant 2 : index
    %c0_40 = arith.constant 0 : index
    %c0_41 = arith.constant 0 : index
    %27 = vector.load %arg4[%c2_39, %c0_40, %c0_41] : memref<9x128x128xf32, #tpu.memory_space<vmem>>, vector<1x128x128xf32>
    %28 = vector.shape_cast %27 : vector<1x128x128xf32> to vector<128x128xf32>
    %cst_42 = arith.constant dense<0.000000e+00> : vector<256x128xf32>
    %29 = tpu.matmul %26, %28, %cst_42 {dimension_numbers = #tpu.dot_dimension_numbers<[1], [0], [0], [1], [0, 0, 1, 1], [], []>} : vector<256x128xf32>, vector<128x128xf32>, vector<256x128xf32> -> vector<256x128xf32>
    %30 = arith.addf %24, %29 : vector<256x128xf32>
    %c0_43 = arith.constant 0 : index
    %c1_44 = arith.constant 1 : index
    %c0_45 = arith.constant 0 : index
    %c0_46 = arith.constant 0 : index
    %31 = vector.load %arg7[%c0_43, %c1_44, %c0_45, %c0_46] : memref<1x18x18x128xf32, #tpu.memory_space<vmem>>, vector<1x16x16x128xf32>
    %32 = vector.shape_cast %31 : vector<1x16x16x128xf32> to vector<256x128xf32>
    %c3 = arith.constant 3 : index
    %c0_47 = arith.constant 0 : index
    %c0_48 = arith.constant 0 : index
    %33 = vector.load %arg4[%c3, %c0_47, %c0_48] : memref<9x128x128xf32, #tpu.memory_space<vmem>>, vector<1x128x128xf32>
    %34 = vector.shape_cast %33 : vector<1x128x128xf32> to vector<128x128xf32>
    %cst_49 = arith.constant dense<0.000000e+00> : vector<256x128xf32>
    %35 = tpu.matmul %32, %34, %cst_49 {dimension_numbers = #tpu.dot_dimension_numbers<[1], [0], [0], [1], [0, 0, 1, 1], [], []>} : vector<256x128xf32>, vector<128x128xf32>, vector<256x128xf32> -> vector<256x128xf32>
    %36 = arith.addf %30, %35 : vector<256x128xf32>
    %c0_50 = arith.constant 0 : index
    %c1_51 = arith.constant 1 : index
    %c1_52 = arith.constant 1 : index
    %c0_53 = arith.constant 0 : index
    %37 = vector.load %arg7[%c0_50, %c1_51, %c1_52, %c0_53] : memref<1x18x18x128xf32, #tpu.memory_space<vmem>>, vector<1x16x16x128xf32>
    %38 = vector.shape_cast %37 : vector<1x16x16x128xf32> to vector<256x128xf32>
    %c4 = arith.constant 4 : index
    %c0_54 = arith.constant 0 : index
    %c0_55 = arith.constant 0 : index
    %39 = vector.load %arg4[%c4, %c0_54, %c0_55] : memref<9x128x128xf32, #tpu.memory_space<vmem>>, vector<1x128x128xf32>
    %40 = vector.shape_cast %39 : vector<1x128x128xf32> to vector<128x128xf32>
    %cst_56 = arith.constant dense<0.000000e+00> : vector<256x128xf32>
    %41 = tpu.matmul %38, %40, %cst_56 {dimension_numbers = #tpu.dot_dimension_numbers<[1], [0], [0], [1], [0, 0, 1, 1], [], []>} : vector<256x128xf32>, vector<128x128xf32>, vector<256x128xf32> -> vector<256x128xf32>
    %42 = arith.addf %36, %41 : vector<256x128xf32>
    %c0_57 = arith.constant 0 : index
    %c1_58 = arith.constant 1 : index
    %c2_59 = arith.constant 2 : index
    %c0_60 = arith.constant 0 : index
    %43 = vector.load %arg7[%c0_57, %c1_58, %c2_59, %c0_60] : memref<1x18x18x128xf32, #tpu.memory_space<vmem>>, vector<1x16x16x128xf32>
    %44 = vector.shape_cast %43 : vector<1x16x16x128xf32> to vector<256x128xf32>
    %c5 = arith.constant 5 : index
    %c0_61 = arith.constant 0 : index
    %c0_62 = arith.constant 0 : index
    %45 = vector.load %arg4[%c5, %c0_61, %c0_62] : memref<9x128x128xf32, #tpu.memory_space<vmem>>, vector<1x128x128xf32>
    %46 = vector.shape_cast %45 : vector<1x128x128xf32> to vector<128x128xf32>
    %cst_63 = arith.constant dense<0.000000e+00> : vector<256x128xf32>
    %47 = tpu.matmul %44, %46, %cst_63 {dimension_numbers = #tpu.dot_dimension_numbers<[1], [0], [0], [1], [0, 0, 1, 1], [], []>} : vector<256x128xf32>, vector<128x128xf32>, vector<256x128xf32> -> vector<256x128xf32>
    %48 = arith.addf %42, %47 : vector<256x128xf32>
    %c0_64 = arith.constant 0 : index
    %c2_65 = arith.constant 2 : index
    %c0_66 = arith.constant 0 : index
    %c0_67 = arith.constant 0 : index
    %49 = vector.load %arg7[%c0_64, %c2_65, %c0_66, %c0_67] : memref<1x18x18x128xf32, #tpu.memory_space<vmem>>, vector<1x16x16x128xf32>
    %50 = vector.shape_cast %49 : vector<1x16x16x128xf32> to vector<256x128xf32>
    %c6 = arith.constant 6 : index
    %c0_68 = arith.constant 0 : index
    %c0_69 = arith.constant 0 : index
    %51 = vector.load %arg4[%c6, %c0_68, %c0_69] : memref<9x128x128xf32, #tpu.memory_space<vmem>>, vector<1x128x128xf32>
    %52 = vector.shape_cast %51 : vector<1x128x128xf32> to vector<128x128xf32>
    %cst_70 = arith.constant dense<0.000000e+00> : vector<256x128xf32>
    %53 = tpu.matmul %50, %52, %cst_70 {dimension_numbers = #tpu.dot_dimension_numbers<[1], [0], [0], [1], [0, 0, 1, 1], [], []>} : vector<256x128xf32>, vector<128x128xf32>, vector<256x128xf32> -> vector<256x128xf32>
    %54 = arith.addf %48, %53 : vector<256x128xf32>
    %c0_71 = arith.constant 0 : index
    %c2_72 = arith.constant 2 : index
    %c1_73 = arith.constant 1 : index
    %c0_74 = arith.constant 0 : index
    %55 = vector.load %arg7[%c0_71, %c2_72, %c1_73, %c0_74] : memref<1x18x18x128xf32, #tpu.memory_space<vmem>>, vector<1x16x16x128xf32>
    %56 = vector.shape_cast %55 : vector<1x16x16x128xf32> to vector<256x128xf32>
    %c7 = arith.constant 7 : index
    %c0_75 = arith.constant 0 : index
    %c0_76 = arith.constant 0 : index
    %57 = vector.load %arg4[%c7, %c0_75, %c0_76] : memref<9x128x128xf32, #tpu.memory_space<vmem>>, vector<1x128x128xf32>
    %58 = vector.shape_cast %57 : vector<1x128x128xf32> to vector<128x128xf32>
    %cst_77 = arith.constant dense<0.000000e+00> : vector<256x128xf32>
    %59 = tpu.matmul %56, %58, %cst_77 {dimension_numbers = #tpu.dot_dimension_numbers<[1], [0], [0], [1], [0, 0, 1, 1], [], []>} : vector<256x128xf32>, vector<128x128xf32>, vector<256x128xf32> -> vector<256x128xf32>
    %60 = arith.addf %54, %59 : vector<256x128xf32>
    %c0_78 = arith.constant 0 : index
    %c2_79 = arith.constant 2 : index
    %c2_80 = arith.constant 2 : index
    %c0_81 = arith.constant 0 : index
    %61 = vector.load %arg7[%c0_78, %c2_79, %c2_80, %c0_81] : memref<1x18x18x128xf32, #tpu.memory_space<vmem>>, vector<1x16x16x128xf32>
    %62 = vector.shape_cast %61 : vector<1x16x16x128xf32> to vector<256x128xf32>
    %c8 = arith.constant 8 : index
    %c0_82 = arith.constant 0 : index
    %c0_83 = arith.constant 0 : index
    %63 = vector.load %arg4[%c8, %c0_82, %c0_83] : memref<9x128x128xf32, #tpu.memory_space<vmem>>, vector<1x128x128xf32>
    %64 = vector.shape_cast %63 : vector<1x128x128xf32> to vector<128x128xf32>
    %cst_84 = arith.constant dense<0.000000e+00> : vector<256x128xf32>
    %65 = tpu.matmul %62, %64, %cst_84 {dimension_numbers = #tpu.dot_dimension_numbers<[1], [0], [0], [1], [0, 0, 1, 1], [], []>} : vector<256x128xf32>, vector<128x128xf32>, vector<256x128xf32> -> vector<256x128xf32>
    %66 = arith.addf %60, %65 : vector<256x128xf32>
    %c0_85 = arith.constant 0 : index
    %c0_86 = arith.constant 0 : index
    %c0_87 = arith.constant 0 : index
    %c0_88 = arith.constant 0 : index
    %67 = vector.load %arg5[%c0_85, %c0_86, %c0_87, %c0_88] : memref<1x1x1x128xf32, #tpu.memory_space<vmem>>, vector<1x1x1x128xf32>
    %68 = vector.shape_cast %67 : vector<1x1x1x128xf32> to vector<1x128xf32>
    %69 = vector.broadcast %68 : vector<1x128xf32> to vector<256x128xf32>
    %70 = arith.addf %66, %69 : vector<256x128xf32>
    %71 = vector.shape_cast %70 : vector<256x128xf32> to vector<1x16x16x128xf32>
    %c0_89 = arith.constant 0 : index
    %c0_90 = arith.constant 0 : index
    %c0_91 = arith.constant 0 : index
    %c0_92 = arith.constant 0 : index
    %72 = vector.load %arg6[%c0_89, %c0_90, %c0_91, %c0_92] : memref<1x16x16x128xf32, #tpu.memory_space<vmem>>, vector<1x16x16x128xf32>
    tpu.vector_store %arg6[%c0_89, %c0_90, %c0_91, %c0_92], %71 {strides = array<i32>} : memref<1x16x16x128xf32, #tpu.memory_space<vmem>>, vector<1x16x16x128xf32>,
    return
  }
  func.func @transform_0(%arg0: i32) -> (i32, i32, i32, i32) {
    %c0_i32 = arith.constant 0 : i32
    %c0_i32_0 = arith.constant 0 : i32
    %c0_i32_1 = arith.constant 0 : i32
    %c0_i32_2 = arith.constant 0 : i32
    return %arg0, %c0_i32, %c0_i32_0, %c0_i32_1 : i32, i32, i32, i32
  }
  func.func @transform_1(%arg0: i32) -> (i32, i32, i32, i32) {
    %c0_i32 = arith.constant 0 : i32
    %c0_i32_0 = arith.constant 0 : i32
    %c0_i32_1 = arith.constant 0 : i32
    %c0_i32_2 = arith.constant 0 : i32
    %c0_i32_3 = arith.constant 0 : i32
    return %c0_i32, %c0_i32_0, %c0_i32_1, %c0_i32_2 : i32, i32, i32, i32
  }
  func.func @transform_2(%arg0: i32) -> (i32, i32, i32, i32) {
    %c0_i32 = arith.constant 0 : i32
    %c0_i32_0 = arith.constant 0 : i32
    %c0_i32_1 = arith.constant 0 : i32
    %c0_i32_2 = arith.constant 0 : i32
    %c0_i32_3 = arith.constant 0 : i32
    return %c0_i32, %c0_i32_0, %c0_i32_1, %c0_i32_2 : i32, i32, i32, i32
  }
  func.func @transform_3(%arg0: i32) -> (i32, i32, i32) {
    %c0_i32 = arith.constant 0 : i32
    %c0_i32_0 = arith.constant 0 : i32
    %c0_i32_1 = arith.constant 0 : i32
    %c0_i32_2 = arith.constant 0 : i32
    return %c0_i32, %c0_i32_0, %c0_i32_1 : i32, i32, i32
  }
  func.func @transform_4(%arg0: i32) -> (i32, i32, i32, i32) {
    %c0_i32 = arith.constant 0 : i32
    %c0_i32_0 = arith.constant 0 : i32
    %c0_i32_1 = arith.constant 0 : i32
    %c0_i32_2 = arith.constant 0 : i32
    %c0_i32_3 = arith.constant 0 : i32
    return %c0_i32, %c0_i32_0, %c0_i32_1, %c0_i32_2 : i32, i32, i32, i32
  }
  func.func @transform_5(%arg0: i32) -> (i32, i32, i32, i32) {
    %c0_i32 = arith.constant 0 : i32
    %c0_i32_0 = arith.constant 0 : i32
    %c0_i32_1 = arith.constant 0 : i32
    %c0_i32_2 = arith.constant 0 : i32
    return %arg0, %c0_i32, %c0_i32_0, %c0_i32_1 : i32, i32, i32, i32
  }
}

module attributes {stable_mosaic.version = 11 : i64} {
  func.func @_bn_relu_conv2_shortcut_kernel(%arg0: i32, %arg1: memref<1x16x16x128xf32, #tpu.memory_space<vmem>>, %arg2: memref<1x16x16x128xf32, #tpu.memory_space<vmem>>, %arg3: memref<1x1x1x128xf32, #tpu.memory_space<vmem>>, %arg4: memref<1x1x1x128xf32, #tpu.memory_space<vmem>>, %arg5: memref<9x128x128xf32, #tpu.memory_space<vmem>>, %arg6: memref<1x1x1x128xf32, #tpu.memory_space<vmem>>, %arg7: memref<128x128xf32, #tpu.memory_space<vmem>>, %arg8: memref<1x1x1x128xf32, #tpu.memory_space<vmem>>, %arg9: memref<1x8x8x128xf32, #tpu.memory_space<vmem>>, %arg10: memref<1x18x18x128xf32, #tpu.memory_space<vmem>>) attributes {dimension_semantics = [#tpu.dimension_semantics<parallel>], iteration_bounds = array<i64: 2>, scalar_prefetch = 0 : i64, scratch_operands = 1 : i64, tpu.core_type = #tpu.core_type<tc>, window_params = [{transform_indices = @transform_0, window_bounds = array<i64: 1, 16, 16, 128>}, {transform_indices = @transform_1, window_bounds = array<i64: 1, 16, 16, 128>}, {pipeline_mode = #tpu.pipeline_mode<synchronous>, transform_indices = @transform_2, window_bounds = array<i64: 1, 1, 1, 128>}, {pipeline_mode = #tpu.pipeline_mode<synchronous>, transform_indices = @transform_3, window_bounds = array<i64: 1, 1, 1, 128>}, {pipeline_mode = #tpu.pipeline_mode<synchronous>, transform_indices = @transform_4, window_bounds = array<i64: 9, 128, 128>}, {pipeline_mode = #tpu.pipeline_mode<synchronous>, transform_indices = @transform_5, window_bounds = array<i64: 1, 1, 1, 128>}, {pipeline_mode = #tpu.pipeline_mode<synchronous>, transform_indices = @transform_6, window_bounds = array<i64: 128, 128>}, {pipeline_mode = #tpu.pipeline_mode<synchronous>, transform_indices = @transform_7, window_bounds = array<i64: 1, 1, 1, 128>}, {transform_indices = @transform_8, window_bounds = array<i64: 1, 8, 8, 128>}]} {
    %cst = arith.constant 0.000000e+00 : f32
    %0 = vector.broadcast %cst : f32 to vector<1x18x18x128xf32>
    %c0 = arith.constant 0 : index
    %c0_0 = arith.constant 0 : index
    %c0_1 = arith.constant 0 : index
    %c0_2 = arith.constant 0 : index
    %1 = vector.load %arg10[%c0, %c0_0, %c0_1, %c0_2] : memref<1x18x18x128xf32, #tpu.memory_space<vmem>>, vector<1x18x18x128xf32>
    tpu.vector_store %arg10[%c0, %c0_0, %c0_1, %c0_2], %0 {strides = array<i32>} : memref<1x18x18x128xf32, #tpu.memory_space<vmem>>, vector<1x18x18x128xf32>,
    %c0_3 = arith.constant 0 : index
    %c0_4 = arith.constant 0 : index
    %c0_5 = arith.constant 0 : index
    %c0_6 = arith.constant 0 : index
    %2 = vector.load %arg1[%c0_3, %c0_4, %c0_5, %c0_6] : memref<1x16x16x128xf32, #tpu.memory_space<vmem>>, vector<1x16x16x128xf32>
    %c0_7 = arith.constant 0 : index
    %c0_8 = arith.constant 0 : index
    %c0_9 = arith.constant 0 : index
    %c0_10 = arith.constant 0 : index
    %3 = vector.load %arg3[%c0_7, %c0_8, %c0_9, %c0_10] : memref<1x1x1x128xf32, #tpu.memory_space<vmem>>, vector<1x1x1x128xf32>
    %4 = vector.broadcast %3 : vector<1x1x1x128xf32> to vector<1x16x16x128xf32>
    %5 = arith.mulf %2, %4 : vector<1x16x16x128xf32>
    %c0_11 = arith.constant 0 : index
    %c0_12 = arith.constant 0 : index
    %c0_13 = arith.constant 0 : index
    %c0_14 = arith.constant 0 : index
    %6 = vector.load %arg4[%c0_11, %c0_12, %c0_13, %c0_14] : memref<1x1x1x128xf32, #tpu.memory_space<vmem>>, vector<1x1x1x128xf32>
    %7 = vector.broadcast %6 : vector<1x1x1x128xf32> to vector<1x16x16x128xf32>
    %8 = arith.addf %5, %7 : vector<1x16x16x128xf32>
    %cst_15 = arith.constant 0.000000e+00 : f32
    %9 = vector.broadcast %cst_15 : f32 to vector<1x16x16x128xf32>
    %10 = arith.maximumf %8, %9 : vector<1x16x16x128xf32>
    %c0_16 = arith.constant 0 : index
    %c1 = arith.constant 1 : index
    %c1_17 = arith.constant 1 : index
    %c0_18 = arith.constant 0 : index
    %11 = vector.load %arg10[%c0_16, %c1, %c1_17, %c0_18] : memref<1x18x18x128xf32, #tpu.memory_space<vmem>>, vector<1x16x16x128xf32>
    tpu.vector_store %arg10[%c0_16, %c1, %c1_17, %c0_18], %10 {strides = array<i32>} : memref<1x18x18x128xf32, #tpu.memory_space<vmem>>, vector<1x16x16x128xf32>,
    %cst_19 = arith.constant 0.000000e+00 : f32
    %12 = vector.broadcast %cst_19 : f32 to vector<64x128xf32>
    %c0_20 = arith.constant 0 : index
    %c0_21 = arith.constant 0 : index
    %c0_22 = arith.constant 0 : index
    %c0_23 = arith.constant 0 : index
    %13 = tpu.strided_load %arg10[%c0_20, %c0_21, %c0_22, %c0_23] {strides = array<i32: 1, 2, 2, 1>} : memref<1x18x18x128xf32, #tpu.memory_space<vmem>>, vector<1x8x8x128xf32>
    %14 = vector.shape_cast %13 : vector<1x8x8x128xf32> to vector<64x128xf32>
    %c0_24 = arith.constant 0 : index
    %c0_25 = arith.constant 0 : index
    %c0_26 = arith.constant 0 : index
    %15 = vector.load %arg5[%c0_24, %c0_25, %c0_26] : memref<9x128x128xf32, #tpu.memory_space<vmem>>, vector<1x128x128xf32>
    %16 = vector.shape_cast %15 : vector<1x128x128xf32> to vector<128x128xf32>
    %cst_27 = arith.constant dense<0.000000e+00> : vector<64x128xf32>
    %17 = tpu.matmul %14, %16, %cst_27 {dimension_numbers = #tpu.dot_dimension_numbers<[1], [0], [0], [1], [0, 0, 1, 1], [], []>} : vector<64x128xf32>, vector<128x128xf32>, vector<64x128xf32> -> vector<64x128xf32>
    %18 = arith.addf %12, %17 : vector<64x128xf32>
    %c0_28 = arith.constant 0 : index
    %c0_29 = arith.constant 0 : index
    %c1_30 = arith.constant 1 : index
    %c0_31 = arith.constant 0 : index
    %19 = tpu.strided_load %arg10[%c0_28, %c0_29, %c1_30, %c0_31] {strides = array<i32: 1, 2, 2, 1>} : memref<1x18x18x128xf32, #tpu.memory_space<vmem>>, vector<1x8x8x128xf32>
    %20 = vector.shape_cast %19 : vector<1x8x8x128xf32> to vector<64x128xf32>
    %c1_32 = arith.constant 1 : index
    %c0_33 = arith.constant 0 : index
    %c0_34 = arith.constant 0 : index
    %21 = vector.load %arg5[%c1_32, %c0_33, %c0_34] : memref<9x128x128xf32, #tpu.memory_space<vmem>>, vector<1x128x128xf32>
    %22 = vector.shape_cast %21 : vector<1x128x128xf32> to vector<128x128xf32>
    %cst_35 = arith.constant dense<0.000000e+00> : vector<64x128xf32>
    %23 = tpu.matmul %20, %22, %cst_35 {dimension_numbers = #tpu.dot_dimension_numbers<[1], [0], [0], [1], [0, 0, 1, 1], [], []>} : vector<64x128xf32>, vector<128x128xf32>, vector<64x128xf32> -> vector<64x128xf32>
    %24 = arith.addf %18, %23 : vector<64x128xf32>
    %c0_36 = arith.constant 0 : index
    %c0_37 = arith.constant 0 : index
    %c2 = arith.constant 2 : index
    %c0_38 = arith.constant 0 : index
    %25 = tpu.strided_load %arg10[%c0_36, %c0_37, %c2, %c0_38] {strides = array<i32: 1, 2, 2, 1>} : memref<1x18x18x128xf32, #tpu.memory_space<vmem>>, vector<1x8x8x128xf32>
    %26 = vector.shape_cast %25 : vector<1x8x8x128xf32> to vector<64x128xf32>
    %c2_39 = arith.constant 2 : index
    %c0_40 = arith.constant 0 : index
    %c0_41 = arith.constant 0 : index
    %27 = vector.load %arg5[%c2_39, %c0_40, %c0_41] : memref<9x128x128xf32, #tpu.memory_space<vmem>>, vector<1x128x128xf32>
    %28 = vector.shape_cast %27 : vector<1x128x128xf32> to vector<128x128xf32>
    %cst_42 = arith.constant dense<0.000000e+00> : vector<64x128xf32>
    %29 = tpu.matmul %26, %28, %cst_42 {dimension_numbers = #tpu.dot_dimension_numbers<[1], [0], [0], [1], [0, 0, 1, 1], [], []>} : vector<64x128xf32>, vector<128x128xf32>, vector<64x128xf32> -> vector<64x128xf32>
    %30 = arith.addf %24, %29 : vector<64x128xf32>
    %c0_43 = arith.constant 0 : index
    %c1_44 = arith.constant 1 : index
    %c0_45 = arith.constant 0 : index
    %c0_46 = arith.constant 0 : index
    %31 = tpu.strided_load %arg10[%c0_43, %c1_44, %c0_45, %c0_46] {strides = array<i32: 1, 2, 2, 1>} : memref<1x18x18x128xf32, #tpu.memory_space<vmem>>, vector<1x8x8x128xf32>
    %32 = vector.shape_cast %31 : vector<1x8x8x128xf32> to vector<64x128xf32>
    %c3 = arith.constant 3 : index
    %c0_47 = arith.constant 0 : index
    %c0_48 = arith.constant 0 : index
    %33 = vector.load %arg5[%c3, %c0_47, %c0_48] : memref<9x128x128xf32, #tpu.memory_space<vmem>>, vector<1x128x128xf32>
    %34 = vector.shape_cast %33 : vector<1x128x128xf32> to vector<128x128xf32>
    %cst_49 = arith.constant dense<0.000000e+00> : vector<64x128xf32>
    %35 = tpu.matmul %32, %34, %cst_49 {dimension_numbers = #tpu.dot_dimension_numbers<[1], [0], [0], [1], [0, 0, 1, 1], [], []>} : vector<64x128xf32>, vector<128x128xf32>, vector<64x128xf32> -> vector<64x128xf32>
    %36 = arith.addf %30, %35 : vector<64x128xf32>
    %c0_50 = arith.constant 0 : index
    %c1_51 = arith.constant 1 : index
    %c1_52 = arith.constant 1 : index
    %c0_53 = arith.constant 0 : index
    %37 = tpu.strided_load %arg10[%c0_50, %c1_51, %c1_52, %c0_53] {strides = array<i32: 1, 2, 2, 1>} : memref<1x18x18x128xf32, #tpu.memory_space<vmem>>, vector<1x8x8x128xf32>
    %38 = vector.shape_cast %37 : vector<1x8x8x128xf32> to vector<64x128xf32>
    %c4 = arith.constant 4 : index
    %c0_54 = arith.constant 0 : index
    %c0_55 = arith.constant 0 : index
    %39 = vector.load %arg5[%c4, %c0_54, %c0_55] : memref<9x128x128xf32, #tpu.memory_space<vmem>>, vector<1x128x128xf32>
    %40 = vector.shape_cast %39 : vector<1x128x128xf32> to vector<128x128xf32>
    %cst_56 = arith.constant dense<0.000000e+00> : vector<64x128xf32>
    %41 = tpu.matmul %38, %40, %cst_56 {dimension_numbers = #tpu.dot_dimension_numbers<[1], [0], [0], [1], [0, 0, 1, 1], [], []>} : vector<64x128xf32>, vector<128x128xf32>, vector<64x128xf32> -> vector<64x128xf32>
    %42 = arith.addf %36, %41 : vector<64x128xf32>
    %c0_57 = arith.constant 0 : index
    %c1_58 = arith.constant 1 : index
    %c2_59 = arith.constant 2 : index
    %c0_60 = arith.constant 0 : index
    %43 = tpu.strided_load %arg10[%c0_57, %c1_58, %c2_59, %c0_60] {strides = array<i32: 1, 2, 2, 1>} : memref<1x18x18x128xf32, #tpu.memory_space<vmem>>, vector<1x8x8x128xf32>
    %44 = vector.shape_cast %43 : vector<1x8x8x128xf32> to vector<64x128xf32>
    %c5 = arith.constant 5 : index
    %c0_61 = arith.constant 0 : index
    %c0_62 = arith.constant 0 : index
    %45 = vector.load %arg5[%c5, %c0_61, %c0_62] : memref<9x128x128xf32, #tpu.memory_space<vmem>>, vector<1x128x128xf32>
    %46 = vector.shape_cast %45 : vector<1x128x128xf32> to vector<128x128xf32>
    %cst_63 = arith.constant dense<0.000000e+00> : vector<64x128xf32>
    %47 = tpu.matmul %44, %46, %cst_63 {dimension_numbers = #tpu.dot_dimension_numbers<[1], [0], [0], [1], [0, 0, 1, 1], [], []>} : vector<64x128xf32>, vector<128x128xf32>, vector<64x128xf32> -> vector<64x128xf32>
    %48 = arith.addf %42, %47 : vector<64x128xf32>
    %c0_64 = arith.constant 0 : index
    %c2_65 = arith.constant 2 : index
    %c0_66 = arith.constant 0 : index
    %c0_67 = arith.constant 0 : index
    %49 = tpu.strided_load %arg10[%c0_64, %c2_65, %c0_66, %c0_67] {strides = array<i32: 1, 2, 2, 1>} : memref<1x18x18x128xf32, #tpu.memory_space<vmem>>, vector<1x8x8x128xf32>
    %50 = vector.shape_cast %49 : vector<1x8x8x128xf32> to vector<64x128xf32>
    %c6 = arith.constant 6 : index
    %c0_68 = arith.constant 0 : index
    %c0_69 = arith.constant 0 : index
    %51 = vector.load %arg5[%c6, %c0_68, %c0_69] : memref<9x128x128xf32, #tpu.memory_space<vmem>>, vector<1x128x128xf32>
    %52 = vector.shape_cast %51 : vector<1x128x128xf32> to vector<128x128xf32>
    %cst_70 = arith.constant dense<0.000000e+00> : vector<64x128xf32>
    %53 = tpu.matmul %50, %52, %cst_70 {dimension_numbers = #tpu.dot_dimension_numbers<[1], [0], [0], [1], [0, 0, 1, 1], [], []>} : vector<64x128xf32>, vector<128x128xf32>, vector<64x128xf32> -> vector<64x128xf32>
    %54 = arith.addf %48, %53 : vector<64x128xf32>
    %c0_71 = arith.constant 0 : index
    %c2_72 = arith.constant 2 : index
    %c1_73 = arith.constant 1 : index
    %c0_74 = arith.constant 0 : index
    %55 = tpu.strided_load %arg10[%c0_71, %c2_72, %c1_73, %c0_74] {strides = array<i32: 1, 2, 2, 1>} : memref<1x18x18x128xf32, #tpu.memory_space<vmem>>, vector<1x8x8x128xf32>
    %56 = vector.shape_cast %55 : vector<1x8x8x128xf32> to vector<64x128xf32>
    %c7 = arith.constant 7 : index
    %c0_75 = arith.constant 0 : index
    %c0_76 = arith.constant 0 : index
    %57 = vector.load %arg5[%c7, %c0_75, %c0_76] : memref<9x128x128xf32, #tpu.memory_space<vmem>>, vector<1x128x128xf32>
    %58 = vector.shape_cast %57 : vector<1x128x128xf32> to vector<128x128xf32>
    %cst_77 = arith.constant dense<0.000000e+00> : vector<64x128xf32>
    %59 = tpu.matmul %56, %58, %cst_77 {dimension_numbers = #tpu.dot_dimension_numbers<[1], [0], [0], [1], [0, 0, 1, 1], [], []>} : vector<64x128xf32>, vector<128x128xf32>, vector<64x128xf32> -> vector<64x128xf32>
    %60 = arith.addf %54, %59 : vector<64x128xf32>
    %c0_78 = arith.constant 0 : index
    %c2_79 = arith.constant 2 : index
    %c2_80 = arith.constant 2 : index
    %c0_81 = arith.constant 0 : index
    %61 = tpu.strided_load %arg10[%c0_78, %c2_79, %c2_80, %c0_81] {strides = array<i32: 1, 2, 2, 1>} : memref<1x18x18x128xf32, #tpu.memory_space<vmem>>, vector<1x8x8x128xf32>
    %62 = vector.shape_cast %61 : vector<1x8x8x128xf32> to vector<64x128xf32>
    %c8 = arith.constant 8 : index
    %c0_82 = arith.constant 0 : index
    %c0_83 = arith.constant 0 : index
    %63 = vector.load %arg5[%c8, %c0_82, %c0_83] : memref<9x128x128xf32, #tpu.memory_space<vmem>>, vector<1x128x128xf32>
    %64 = vector.shape_cast %63 : vector<1x128x128xf32> to vector<128x128xf32>
    %cst_84 = arith.constant dense<0.000000e+00> : vector<64x128xf32>
    %65 = tpu.matmul %62, %64, %cst_84 {dimension_numbers = #tpu.dot_dimension_numbers<[1], [0], [0], [1], [0, 0, 1, 1], [], []>} : vector<64x128xf32>, vector<128x128xf32>, vector<64x128xf32> -> vector<64x128xf32>
    %66 = arith.addf %60, %65 : vector<64x128xf32>
    %c0_85 = arith.constant 0 : index
    %c0_86 = arith.constant 0 : index
    %c0_87 = arith.constant 0 : index
    %c0_88 = arith.constant 0 : index
    %67 = tpu.strided_load %arg2[%c0_85, %c0_86, %c0_87, %c0_88] {strides = array<i32: 1, 2, 2, 1>} : memref<1x16x16x128xf32, #tpu.memory_space<vmem>>, vector<1x8x8x128xf32>
    %68 = vector.shape_cast %67 : vector<1x8x8x128xf32> to vector<64x128xf32>
    %c0_89 = arith.constant 0 : index
    %c0_90 = arith.constant 0 : index
    %69 = vector.load %arg7[%c0_89, %c0_90] : memref<128x128xf32, #tpu.memory_space<vmem>>, vector<128x128xf32>
    %cst_91 = arith.constant dense<0.000000e+00> : vector<64x128xf32>
    %70 = tpu.matmul %68, %69, %cst_91 {dimension_numbers = #tpu.dot_dimension_numbers<[1], [0], [0], [1], [0, 0, 1, 1], [], []>} : vector<64x128xf32>, vector<128x128xf32>, vector<64x128xf32> -> vector<64x128xf32>
    %71 = arith.addf %66, %70 : vector<64x128xf32>
    %c0_92 = arith.constant 0 : index
    %c0_93 = arith.constant 0 : index
    %c0_94 = arith.constant 0 : index
    %c0_95 = arith.constant 0 : index
    %72 = vector.load %arg6[%c0_92, %c0_93, %c0_94, %c0_95] : memref<1x1x1x128xf32, #tpu.memory_space<vmem>>, vector<1x1x1x128xf32>
    %73 = vector.shape_cast %72 : vector<1x1x1x128xf32> to vector<1x128xf32>
    %c0_96 = arith.constant 0 : index
    %c0_97 = arith.constant 0 : index
    %c0_98 = arith.constant 0 : index
    %c0_99 = arith.constant 0 : index
    %74 = vector.load %arg8[%c0_96, %c0_97, %c0_98, %c0_99] : memref<1x1x1x128xf32, #tpu.memory_space<vmem>>, vector<1x1x1x128xf32>
    %75 = vector.shape_cast %74 : vector<1x1x1x128xf32> to vector<1x128xf32>
    %76 = arith.addf %73, %75 : vector<1x128xf32>
    %77 = vector.broadcast %76 : vector<1x128xf32> to vector<64x128xf32>
    %78 = arith.addf %71, %77 : vector<64x128xf32>
    %79 = vector.shape_cast %78 : vector<64x128xf32> to vector<1x8x8x128xf32>
    %c0_100 = arith.constant 0 : index
    %c0_101 = arith.constant 0 : index
    %c0_102 = arith.constant 0 : index
    %c0_103 = arith.constant 0 : index
    %80 = vector.load %arg9[%c0_100, %c0_101, %c0_102, %c0_103] : memref<1x8x8x128xf32, #tpu.memory_space<vmem>>, vector<1x8x8x128xf32>
    tpu.vector_store %arg9[%c0_100, %c0_101, %c0_102, %c0_103], %79 {strides = array<i32>} : memref<1x8x8x128xf32, #tpu.memory_space<vmem>>, vector<1x8x8x128xf32>,
    return
  }
  func.func @transform_0(%arg0: i32) -> (i32, i32, i32, i32) {
    %c0_i32 = arith.constant 0 : i32
    %c0_i32_0 = arith.constant 0 : i32
    %c0_i32_1 = arith.constant 0 : i32
    %c0_i32_2 = arith.constant 0 : i32
    return %arg0, %c0_i32, %c0_i32_0, %c0_i32_1 : i32, i32, i32, i32
  }
  func.func @transform_1(%arg0: i32) -> (i32, i32, i32, i32) {
    %c0_i32 = arith.constant 0 : i32
    %c0_i32_0 = arith.constant 0 : i32
    %c0_i32_1 = arith.constant 0 : i32
    %c0_i32_2 = arith.constant 0 : i32
    return %arg0, %c0_i32, %c0_i32_0, %c0_i32_1 : i32, i32, i32, i32
  }
  func.func @transform_2(%arg0: i32) -> (i32, i32, i32, i32) {
    %c0_i32 = arith.constant 0 : i32
    %c0_i32_0 = arith.constant 0 : i32
    %c0_i32_1 = arith.constant 0 : i32
    %c0_i32_2 = arith.constant 0 : i32
    %c0_i32_3 = arith.constant 0 : i32
    return %c0_i32, %c0_i32_0, %c0_i32_1, %c0_i32_2 : i32, i32, i32, i32
  }
  func.func @transform_3(%arg0: i32) -> (i32, i32, i32, i32) {
    %c0_i32 = arith.constant 0 : i32
    %c0_i32_0 = arith.constant 0 : i32
    %c0_i32_1 = arith.constant 0 : i32
    %c0_i32_2 = arith.constant 0 : i32
    %c0_i32_3 = arith.constant 0 : i32
    return %c0_i32, %c0_i32_0, %c0_i32_1, %c0_i32_2 : i32, i32, i32, i32
  }
  func.func @transform_4(%arg0: i32) -> (i32, i32, i32) {
    %c0_i32 = arith.constant 0 : i32
    %c0_i32_0 = arith.constant 0 : i32
    %c0_i32_1 = arith.constant 0 : i32
    %c0_i32_2 = arith.constant 0 : i32
    return %c0_i32, %c0_i32_0, %c0_i32_1 : i32, i32, i32
  }
  func.func @transform_5(%arg0: i32) -> (i32, i32, i32, i32) {
    %c0_i32 = arith.constant 0 : i32
    %c0_i32_0 = arith.constant 0 : i32
    %c0_i32_1 = arith.constant 0 : i32
    %c0_i32_2 = arith.constant 0 : i32
    %c0_i32_3 = arith.constant 0 : i32
    return %c0_i32, %c0_i32_0, %c0_i32_1, %c0_i32_2 : i32, i32, i32, i32
  }
  func.func @transform_6(%arg0: i32) -> (i32, i32) {
    %c0_i32 = arith.constant 0 : i32
    %c0_i32_0 = arith.constant 0 : i32
    %c0_i32_1 = arith.constant 0 : i32
    return %c0_i32, %c0_i32_0 : i32, i32
  }
  func.func @transform_7(%arg0: i32) -> (i32, i32, i32, i32) {
    %c0_i32 = arith.constant 0 : i32
    %c0_i32_0 = arith.constant 0 : i32
    %c0_i32_1 = arith.constant 0 : i32
    %c0_i32_2 = arith.constant 0 : i32
    %c0_i32_3 = arith.constant 0 : i32
    return %c0_i32, %c0_i32_0, %c0_i32_1, %c0_i32_2 : i32, i32, i32, i32
  }
  func.func @transform_8(%arg0: i32) -> (i32, i32, i32, i32) {
    %c0_i32 = arith.constant 0 : i32
    %c0_i32_0 = arith.constant 0 : i32
    %c0_i32_1 = arith.constant 0 : i32
    %c0_i32_2 = arith.constant 0 : i32
    return %arg0, %c0_i32, %c0_i32_0, %c0_i32_1 : i32, i32, i32, i32
  }
}

</mosaic_0001>

<llo_original>
// kernel: wide_basic_forward.3
$region0: #{wide_basic_forward.3}
  #allocation0 [shape = 'u32[]', space=smem, size = 0x4, offset = 0x4, fixed_abs, tag = 'smem constant byte address 0x4 - core index']
  #allocation1 [shape = 'u32[144,128]{1,0:T(1,128)}', space=vmem, size = 0x12000, scoped, tag = 'internal scratch']
  #allocation2 [shape = 'f32[1,18,18,128]{3,2,1,0:T(8,128)}', space=vmem, size = 0x36000, scoped, tag = 'scratch operand']
  %s0 = inlined_call_operand.vmem [shape: f32[2,16,16,128], index: 0, kind: input, shape index: {}]
  %s1 = inlined_call_operand.vmem [shape: f32[2,16,16,128], index: 1, kind: input, shape index: {}]
  %s2 = inlined_call_operand.vmem [shape: f32[1,1,1,128], index: 2, kind: input, shape index: {}]
  %s3 = inlined_call_operand.vmem [shape: f32[1,1,1,128], index: 3, kind: input, shape index: {}]
  %s4 = inlined_call_operand.vmem [shape: f32[9,128,128], index: 4, kind: input, shape index: {}]
  %s5 = inlined_call_operand.vmem [shape: f32[1,1,1,128], index: 5, kind: input, shape index: {}]
  %s6 = inlined_call_operand.vmem [shape: f32[128,128], index: 6, kind: input, shape index: {}]
  %s7 = inlined_call_operand.vmem [shape: f32[1,1,1,128], index: 7, kind: input, shape index: {}]
  %s8 = inlined_call_operand.vmem [shape: f32[2,8,8,128], index: 8, kind: output, shape index: {}]
  %s9 = sld [smem:[#allocation0]]
  $region65: #{wide_basic_forward.3} parent=0
    _
  %s11 = ssub.s32 1, %s9
  %s12 = scalar_select 0, %s11, %s9
  loop: start=0, step=1, limit=4
  $region2: #{wide_basic_forward.3} parent=0 // loop_pre_header
    _
  $region3: #{wide_basic_forward.3} parent=0 // loop_header
    %s14 = sphi 0, %s18
    %p15 = scmp.ge.s32.totalorder %s14, 4
    %s24 = sphi 0, %s26
    %s27 = sphi 0, %s24
    %s28 = sphi 0, %s27
    %s44 = sphi 0, %s28
    %s50 = sphi 0, %s52
    %s53 = sphi 0, %s50
    %s54 = sphi 0, %s53
    %s70 = sphi 0, %s54
    %s74 = sphi 0, %s74
    %s76 = sphi 0, %s74
    %s77 = sphi 0, %s76
    %s91 = sphi 0, %s77
    %s95 = sphi 0, %s95
    %s97 = sphi 0, %s95
    %s98 = sphi 0, %s97
    %s112 = sphi 0, %s98
    %s116 = sphi 0, %s116
    %s118 = sphi 0, %s116
    %s119 = sphi 0, %s118
    %s133 = sphi 0, %s119
    %s137 = sphi 0, %s137
    %s139 = sphi 0, %s137
    %s140 = sphi 0, %s139
    %s154 = sphi 0, %s140
    %s158 = sphi 0, %s158
    %s160 = sphi 0, %s158
    %s161 = sphi 0, %s160
    %s175 = sphi 0, %s161
    %s179 = sphi 0, %s179
    %s181 = sphi 0, %s179
    %s182 = sphi 0, %s181
    %s196 = sphi 0, %s182
    %s202 = sphi 0, %s204
    %s205 = sphi 0, %s202
    %s206 = sphi 0, %s205
    %s222 = sphi 0, %s206
  $region4: #{wide_basic_forward.3} parent=0 // loop_header_branch
    %17 = sbr.rel (%p15) target = $region8
  $region5: #{wide_basic_forward.3} parent=0 // loop_body
    %s19 = ssub.s32 %s14, 1
    %s20 = ssub.s32 %s14, 2
    %s21 = sadd.s32 %s14, 1
    %s22 = ssub.s32 %s14, %s21
    %p23 = scmp.eq.s32.totalorder %s22, 0
    %s25 = sadd.s32 %s24, 1
    %s26 = scalar_select %p23, %s24, %s25
    %p29 = pneg %p23
    %p30 = scmp.eq.s32.totalorder %s14, 1
    %p31 = por %p29, %p30
    %p32 = scmp.ne.s32.totalorder %s24, %s27
    %p33 = scmp.eq.s32.totalorder %s14, 0
    %p34 = por %p32, %p33
    %p35 = scmp.ne.s32.totalorder %s24, %s27
    %p36 = scmp.eq.s32.totalorder %s19, 1
    %p37 = por %p35, %p36
    %p38 = scmp.ne.s32.totalorder %s27, %s28
    %p39 = scmp.eq.s32.totalorder %s19, 0
    %p40 = por %p38, %p39
    %p41 = scmp.ne.s32.totalorder %s27, %s28
    %p42 = scmp.eq.s32.totalorder %s20, 1
    %p43 = por %p41, %p42
    %p45 = scmp.ne.s32.totalorder %s28, %s44
    %p46 = scmp.eq.s32.totalorder %s20, 0
    %p47 = por %p45, %p46
    %s48 = ssub.s32 %s14, %s21
    %p49 = scmp.eq.s32.totalorder %s48, 0
    %s51 = sadd.s32 %s50, 1
    %s52 = scalar_select %p49, %s50, %s51
    %p55 = pneg %p49
    %p56 = scmp.eq.s32.totalorder %s14, 1
    %p57 = por %p55, %p56
    %p58 = scmp.ne.s32.totalorder %s50, %s53
    %p59 = scmp.eq.s32.totalorder %s14, 0
    %p60 = por %p58, %p59
    %p61 = scmp.ne.s32.totalorder %s50, %s53
    %p62 = scmp.eq.s32.totalorder %s19, 1
    %p63 = por %p61, %p62
    %p64 = scmp.ne.s32.totalorder %s53, %s54
    %p65 = scmp.eq.s32.totalorder %s19, 0
    %p66 = por %p64, %p65
    %p67 = scmp.ne.s32.totalorder %s53, %s54
    %p68 = scmp.eq.s32.totalorder %s20, 1
    %p69 = por %p67, %p68
    %p71 = scmp.ne.s32.totalorder %s54, %s70
    %p72 = scmp.eq.s32.totalorder %s20, 0
    %p73 = por %p71, %p72
    %s75 = sadd.s32 %s74, 1
    %p78 = scmp.eq.s32.totalorder %s14, 1
    %p79 = scmp.ne.s32.totalorder %s74, %s76
    %p80 = scmp.eq.s32.totalorder %s14, 0
    %p81 = por %p79, %p80
    %p82 = scmp.ne.s32.totalorder %s74, %s76
    %p83 = scmp.eq.s32.totalorder %s19, 1
    %p84 = por %p82, %p83
    %p85 = scmp.ne.s32.totalorder %s76, %s77
    %p86 = scmp.eq.s32.totalorder %s19, 0
    %p87 = por %p85, %p86
    %p88 = scmp.ne.s32.totalorder %s76, %s77
    %p89 = scmp.eq.s32.totalorder %s20, 1
    %p90 = por %p88, %p89
    %p92 = scmp.ne.s32.totalorder %s77, %s91
    %p93 = scmp.eq.s32.totalorder %s20, 0
    %p94 = por %p92, %p93
    %s96 = sadd.s32 %s95, 1
    %p99 = scmp.eq.s32.totalorder %s14, 1
    %p100 = scmp.ne.s32.totalorder %s95, %s97
    %p101 = scmp.eq.s32.totalorder %s14, 0
    %p102 = por %p100, %p101
    %p103 = scmp.ne.s32.totalorder %s95, %s97
    %p104 = scmp.eq.s32.totalorder %s19, 1
    %p105 = por %p103, %p104
    %p106 = scmp.ne.s32.totalorder %s97, %s98
    %p107 = scmp.eq.s32.totalorder %s19, 0
    %p108 = por %p106, %p107
    %p109 = scmp.ne.s32.totalorder %s97, %s98
    %p110 = scmp.eq.s32.totalorder %s20, 1
    %p111 = por %p109, %p110
    %p113 = scmp.ne.s32.totalorder %s98, %s112
    %p114 = scmp.eq.s32.totalorder %s20, 0
    %p115 = por %p113, %p114
    %s117 = sadd.s32 %s116, 1
    %p120 = scmp.eq.s32.totalorder %s14, 1
    %p121 = scmp.ne.s32.totalorder %s116, %s118
    %p122 = scmp.eq.s32.totalorder %s14, 0
    %p123 = por %p121, %p122
    %p124 = scmp.ne.s32.totalorder %s116, %s118
    %p125 = scmp.eq.s32.totalorder %s19, 1
    %p126 = por %p124, %p125
    %p127 = scmp.ne.s32.totalorder %s118, %s119
    %p128 = scmp.eq.s32.totalorder %s19, 0
    %p129 = por %p127, %p128
    %p130 = scmp.ne.s32.totalorder %s118, %s119
    %p131 = scmp.eq.s32.totalorder %s20, 1
    %p132 = por %p130, %p131
    %p134 = scmp.ne.s32.totalorder %s119, %s133
    %p135 = scmp.eq.s32.totalorder %s20, 0
    %p136 = por %p134, %p135
    %s138 = sadd.s32 %s137, 1
    %p141 = scmp.eq.s32.totalorder %s14, 1
    %p142 = scmp.ne.s32.totalorder %s137, %s139
    %p143 = scmp.eq.s32.totalorder %s14, 0
    %p144 = por %p142, %p143
    %p145 = scmp.ne.s32.totalorder %s137, %s139
    %p146 = scmp.eq.s32.totalorder %s19, 1
    %p147 = por %p145, %p146
    %p148 = scmp.ne.s32.totalorder %s139, %s140
    %p149 = scmp.eq.s32.totalorder %s19, 0
    %p150 = por %p148, %p149
    %p151 = scmp.ne.s32.totalorder %s139, %s140
    %p152 = scmp.eq.s32.totalorder %s20, 1
    %p153 = por %p151, %p152
    %p155 = scmp.ne.s32.totalorder %s140, %s154
    %p156 = scmp.eq.s32.totalorder %s20, 0
    %p157 = por %p155, %p156
    %s159 = sadd.s32 %s158, 1
    %p162 = scmp.eq.s32.totalorder %s14, 1
    %p163 = scmp.ne.s32.totalorder %s158, %s160
    %p164 = scmp.eq.s32.totalorder %s14, 0
    %p165 = por %p163, %p164
    %p166 = scmp.ne.s32.totalorder %s158, %s160
    %p167 = scmp.eq.s32.totalorder %s19, 1
    %p168 = por %p166, %p167
    %p169 = scmp.ne.s32.totalorder %s160, %s161
    %p170 = scmp.eq.s32.totalorder %s19, 0
    %p171 = por %p169, %p170
    %p172 = scmp.ne.s32.totalorder %s160, %s161
    %p173 = scmp.eq.s32.totalorder %s20, 1
    %p174 = por %p172, %p173
    %p176 = scmp.ne.s32.totalorder %s161, %s175
    %p177 = scmp.eq.s32.totalorder %s20, 0
    %p178 = por %p176, %p177
    %s180 = sadd.s32 %s179, 1
    %p183 = scmp.eq.s32.totalorder %s14, 1
    %p184 = scmp.ne.s32.totalorder %s179, %s181
    %p185 = scmp.eq.s32.totalorder %s14, 0
    %p186 = por %p184, %p185
    %p187 = scmp.ne.s32.totalorder %s179, %s181
    %p188 = scmp.eq.s32.totalorder %s19, 1
    %p189 = por %p187, %p188
    %p190 = scmp.ne.s32.totalorder %s181, %s182
    %p191 = scmp.eq.s32.totalorder %s19, 0
    %p192 = por %p190, %p191
    %p193 = scmp.ne.s32.totalorder %s181, %s182
    %p194 = scmp.eq.s32.totalorder %s20, 1
    %p195 = por %p193, %p194
    %p197 = scmp.ne.s32.totalorder %s182, %s196
    %p198 = scmp.eq.s32.totalorder %s20, 0
    %p199 = por %p197, %p198
    %s200 = ssub.s32 %s14, %s21
    %p201 = scmp.eq.s32.totalorder %s200, 0
    %s203 = sadd.s32 %s202, 1
    %s204 = scalar_select %p201, %s202, %s203
    %p207 = pneg %p201
    %p208 = scmp.eq.s32.totalorder %s14, 1
    %p209 = por %p207, %p208
    %p210 = scmp.ne.s32.totalorder %s202, %s205
    %p211 = scmp.eq.s32.totalorder %s14, 0
    %p212 = por %p210, %p211
    %p213 = scmp.ne.s32.totalorder %s202, %s205
    %p214 = scmp.eq.s32.totalorder %s19, 1
    %p215 = por %p213, %p214
    %p216 = scmp.ne.s32.totalorder %s205, %s206
    %p217 = scmp.eq.s32.totalorder %s19, 0
    %p218 = por %p216, %p217
    %p219 = scmp.ne.s32.totalorder %s205, %s206
    %p220 = scmp.eq.s32.totalorder %s20, 1
    %p221 = por %p219, %p220
    %p223 = scmp.ne.s32.totalorder %s206, %s222
    %p224 = scmp.eq.s32.totalorder %s20, 0
    %p225 = por %p223, %p224
    %p226 = scmp.le.s32.totalorder 1, %s14
    %p227 = scmp.lt.s32.totalorder %s14, 3
    %p228 = pnand %p226, %p227
    %p229 = pneg %p228
    // Predicated region
    $region9: #{wide_basic_forward.3} parent=5 // pred_check
      _
    $region10: #{wide_basic_forward.3} parent=5 // pred_check_branch
      %231 = sbr.rel (%p228) target = $region12
    $region11: #{wide_basic_forward.3} parent=5 // pred_region
      %s232 = ssub.s32 %s14, 1
      // Predicated region
      $region13: #{wide_basic_forward.3} parent=11 // pred_check
        %p233 = pneg %p87
      $region14: #{wide_basic_forward.3} parent=11 // pred_check_branch
        %235 = sbr.rel (%p233) target = $region16
      $region15: #{wide_basic_forward.3} parent=11 // pred_region
        _
      $region16: #{wide_basic_forward.3} parent=11 // pred_fallthru
        _
      // Predicated region
      $region17: #{wide_basic_forward.3} parent=11 // pred_check
        %p236 = pneg %p108
      $region18: #{wide_basic_forward.3} parent=11 // pred_check_branch
        %238 = sbr.rel (%p236) target = $region20
      $region19: #{wide_basic_forward.3} parent=11 // pred_region
        _
      $region20: #{wide_basic_forward.3} parent=11 // pred_fallthru
        _
      // Predicated region
      $region21: #{wide_basic_forward.3} parent=11 // pred_check
        %p239 = pneg %p129
      $region22: #{wide_basic_forward.3} parent=11 // pred_check_branch
        %241 = sbr.rel (%p239) target = $region24
      $region23: #{wide_basic_forward.3} parent=11 // pred_region
        _
      $region24: #{wide_basic_forward.3} parent=11 // pred_fallthru
        _
      // Predicated region
      $region25: #{wide_basic_forward.3} parent=11 // pred_check
        %p242 = pneg %p150
      $region26: #{wide_basic_forward.3} parent=11 // pred_check_branch
        %244 = sbr.rel (%p242) target = $region28
      $region27: #{wide_basic_forward.3} parent=11 // pred_region
        _
      $region28: #{wide_basic_forward.3} parent=11 // pred_fallthru
        _
      // Predicated region
      $region29: #{wide_basic_forward.3} parent=11 // pred_check
        %p245 = pneg %p171
      $region30: #{wide_basic_forward.3} parent=11 // pred_check_branch
        %247 = sbr.rel (%p245) target = $region32
      $region31: #{wide_basic_forward.3} parent=11 // pred_region
        _
      $region32: #{wide_basic_forward.3} parent=11 // pred_fallthru
        _
      // Predicated region
      $region33: #{wide_basic_forward.3} parent=11 // pred_check
        %p248 = pneg %p192
      $region34: #{wide_basic_forward.3} parent=11 // pred_check_branch
        %250 = sbr.rel (%p248) target = $region36
      $region35: #{wide_basic_forward.3} parent=11 // pred_region
        _
      $region36: #{wide_basic_forward.3} parent=11 // pred_fallthru
        _
    $region12: #{wide_basic_forward.3} parent=5 // pred_fallthru
      _
    %p251 = scmp.lt.s32.totalorder %s14, 2
    // Predicated region
    $region37: #{wide_basic_forward.3} parent=5 // pred_check
      %p252 = pneg %p251
    $region38: #{wide_basic_forward.3} parent=5 // pred_check_branch
      %254 = sbr.rel (%p252) target = $region40
    $region39: #{wide_basic_forward.3} parent=5 // pred_region
      // Predicated region
      $region41: #{wide_basic_forward.3} parent=39 // pred_check
        %p255 = pneg %p34
      $region42: #{wide_basic_forward.3} parent=39 // pred_check_branch
        %257 = sbr.rel (%p255) target = $region44
      $region43: #{wide_basic_forward.3} parent=39 // pred_region
        %p258 = scmp.lt.s32.totalorder %s14, 1
        %s259 = scalar_select %p258, %s14, 1
        %s260 = smul.addr %s259, 32
        %s261 = smul.addr %s260, 8
        %s262 = scalar_lea.vmem %s0, %s261
      $region44: #{wide_basic_forward.3} parent=39 // pred_fallthru
        _
      // Predicated region
      $region45: #{wide_basic_forward.3} parent=39 // pred_check
        %p263 = pneg %p60
      $region46: #{wide_basic_forward.3} parent=39 // pred_check_branch
        %265 = sbr.rel (%p263) target = $region48
      $region47: #{wide_basic_forward.3} parent=39 // pred_region
        %p266 = scmp.lt.s32.totalorder %s14, 1
        %s267 = scalar_select %p266, %s14, 1
        %s268 = smul.addr %s267, 32
        %s269 = smul.addr %s268, 8
        %s270 = scalar_lea.vmem %s1, %s269
      $region48: #{wide_basic_forward.3} parent=39 // pred_fallthru
        _
    $region40: #{wide_basic_forward.3} parent=5 // pred_fallthru
      _
    %p271 = scmp.le.s32.totalorder 1, %s14
    %p272 = scmp.lt.s32.totalorder %s14, 3
    %p273 = pnand %p271, %p272
    %p274 = pneg %p273
    // Predicated region
    $region49: #{wide_basic_forward.3} parent=5 // pred_check
      _
    $region50: #{wide_basic_forward.3} parent=5 // pred_check_branch
      %276 = sbr.rel (%p273) target = $region52
    $region51: #{wide_basic_forward.3} parent=5 // pred_region
      %s277 = ssub.s32 %s14, 1
      %p278 = scmp.lt.s32.totalorder %s19, 1
      %s279 = scalar_select %p278, %s19, 1
      %s280 = smul.addr %s279, 32
      %s281 = smul.addr %s280, 8
      %s282 = scalar_lea.vmem %s0, %s281
      %p283 = pneg %p40
      %p284 = pneg %p37
      %p285 = scmp.lt.s32.totalorder %s19, 1
      %s286 = scalar_select %p285, %s19, 1
      %s287 = smul.addr %s286, 32
      %s288 = smul.addr %s287, 8
      %s289 = scalar_lea.vmem %s1, %s288
      %p290 = pneg %p66
      %p291 = pneg %p63
      %p292 = pneg %p87
      %p293 = pneg %p84
      %p294 = pneg %p108
      %p295 = pneg %p105
      %p296 = pneg %p129
      %p297 = pneg %p126
      %p298 = pneg %p150
      %p299 = pneg %p147
      %p300 = pneg %p171
      %p301 = pneg %p168
      %p302 = pneg %p192
      %p303 = pneg %p189
      %p304 = pneg %p218
      %p305 = pneg %p215
      %p306 = scmp.lt.s32.totalorder %s19, 1
      %s307 = scalar_select %p306, %s19, 1
      %s308 = smul.addr %s307, 8
      %s309 = smul.addr %s308, 8
      %s310 = scalar_lea.vmem %s8, %s309
      %p311 = scmp.lt.s32.totalorder %s19, 1
      %s312 = scalar_select %p311, %s19, 1
      %s313 = smul.addr %s312, 32
      %s314 = smul.addr %s313, 8
      %s315 = scalar_lea.vmem %s0, %s314
      %p316 = scmp.lt.s32.totalorder %s19, 1
      %s317 = scalar_select %p316, %s19, 1
      %s318 = smul.addr %s317, 32
      %s319 = smul.addr %s318, 8
      %s320 = scalar_lea.vmem %s1, %s319
      %p321 = scmp.lt.s32.totalorder %s19, 1
      %s322 = scalar_select %p321, %s19, 1
      %s323 = smul.addr %s322, 8
      %s324 = smul.addr %s323, 8
      %s325 = scalar_lea.vmem %s8, %s324
      %326 = vst [vmem:[#allocation2] sm:$0xff] 0.0
      %327 = vst [vmem:[#allocation2 + $0x8] sm:$0xff] 0.0
      %328 = vst [vmem:[#allocation2 + $0x10] sm:$0x3] 0.0
      %329 = vst [vmem:[#allocation2 + $0x18] sm:$0xff] 0.0
      %330 = vst [vmem:[#allocation2 + $0x20] sm:$0xff] 0.0
      %331 = vst [vmem:[#allocation2 + $0x28] sm:$0x3] 0.0
      %332 = vst [vmem:[#allocation2 + $0x30] sm:$0xff] 0.0
      %333 = vst [vmem:[#allocation2 + $0x38] sm:$0xff] 0.0
      %334 = vst [vmem:[#allocation2 + $0x40] sm:$0x3] 0.0
      %335 = vst [vmem:[#allocation2 + $0x48] sm:$0xff] 0.0
      %336 = vst [vmem:[#allocation2 + $0x50] sm:$0xff] 0.0
      %337 = vst [vmem:[#allocation2 + $0x58] sm:$0x3] 0.0
      %338 = vst [vmem:[#allocation2 + $0x60] sm:$0xff] 0.0
      %339 = vst [vmem:[#allocation2 + $0x68] sm:$0xff] 0.0
      %340 = vst [vmem:[#allocation2 + $0x70] sm:$0x3] 0.0
      %341 = vst [vmem:[#allocation2 + $0x78] sm:$0xff] 0.0
      %342 = vst [vmem:[#allocation2 + $0x80] sm:$0xff] 0.0
      %343 = vst [vmem:[#allocation2 + $0x88] sm:$0x3] 0.0
      %344 = vst [vmem:[#allocation2 + $0x90] sm:$0xff] 0.0
      %345 = vst [vmem:[#allocation2 + $0x98] sm:$0xff] 0.0
      %346 = vst [vmem:[#allocation2 + $0xa0] sm:$0x3] 0.0
      %347 = vst [vmem:[#allocation2 + $0xa8] sm:$0xff] 0.0
      %348 = vst [vmem:[#allocation2 + $0xb0] sm:$0xff] 0.0
      %349 = vst [vmem:[#allocation2 + $0xb8] sm:$0x3] 0.0
      %350 = vst [vmem:[#allocation2 + $0xc0] sm:$0xff] 0.0
      %351 = vst [vmem:[#allocation2 + $0xc8] sm:$0xff] 0.0
      %352 = vst [vmem:[#allocation2 + $0xd0] sm:$0x3] 0.0
      %353 = vst [vmem:[#allocation2 + $0xd8] sm:$0xff] 0.0
      %354 = vst [vmem:[#allocation2 + $0xe0] sm:$0xff] 0.0
      %355 = vst [vmem:[#allocation2 + $0xe8] sm:$0x3] 0.0
      %356 = vst [vmem:[#allocation2 + $0xf0] sm:$0xff] 0.0
      %357 = vst [vmem:[#allocation2 + $0xf8] sm:$0xff] 0.0
      %358 = vst [vmem:[#allocation2 + $0x100] sm:$0x3] 0.0
      %359 = vst [vmem:[#allocation2 + $0x108] sm:$0xff] 0.0
      %360 = vst [vmem:[#allocation2 + $0x110] sm:$0xff] 0.0
      %361 = vst [vmem:[#allocation2 + $0x118] sm:$0x3] 0.0
      %362 = vst [vmem:[#allocation2 + $0x120] sm:$0xff] 0.0
      %363 = vst [vmem:[#allocation2 + $0x128] sm:$0xff] 0.0
      %364 = vst [vmem:[#allocation2 + $0x130] sm:$0x3] 0.0
      %365 = vst [vmem:[#allocation2 + $0x138] sm:$0xff] 0.0
      %366 = vst [vmem:[#allocation2 + $0x140] sm:$0xff] 0.0
      %367 = vst [vmem:[#allocation2 + $0x148] sm:$0x3] 0.0
      %368 = vst [vmem:[#allocation2 + $0x150] sm:$0xff] 0.0
      %369 = vst [vmem:[#allocation2 + $0x158] sm:$0xff] 0.0
      %370 = vst [vmem:[#allocation2 + $0x160] sm:$0x3] 0.0
      %371 = vst [vmem:[#allocation2 + $0x168] sm:$0xff] 0.0
      %372 = vst [vmem:[#allocation2 + $0x170] sm:$0xff] 0.0
      %373 = vst [vmem:[#allocation2 + $0x178] sm:$0x3] 0.0
      %374 = vst [vmem:[#allocation2 + $0x180] sm:$0xff] 0.0
      %375 = vst [vmem:[#allocation2 + $0x188] sm:$0xff] 0.0
      %376 = vst [vmem:[#allocation2 + $0x190] sm:$0x3] 0.0
      %377 = vst [vmem:[#allocation2 + $0x198] sm:$0xff] 0.0
      %378 = vst [vmem:[#allocation2 + $0x1a0] sm:$0xff] 0.0
      %379 = vst [vmem:[#allocation2 + $0x1a8] sm:$0x3] 0.0
      %v380 = vld [vmem:[%s315] sm:$0xff]
      %v381 = vld [vmem:[%s315 + $0x8] sm:$0xff]
      %v382 = vld [vmem:[%s315 + $0x10] sm:$0xff]
      %v383 = vld [vmem:[%s315 + $0x18] sm:$0xff]
      %v384 = vld [vmem:[%s315 + $0x20] sm:$0xff]
      %v385 = vld [vmem:[%s315 + $0x28] sm:$0xff]
      %v386 = vld [vmem:[%s315 + $0x30] sm:$0xff]
      %v387 = vld [vmem:[%s315 + $0x38] sm:$0xff]
      %v388 = vld [vmem:[%s315 + $0x40] sm:$0xff]
      %v389 = vld [vmem:[%s315 + $0x48] sm:$0xff]
      %v390 = vld [vmem:[%s315 + $0x50] sm:$0xff]
      %v391 = vld [vmem:[%s315 + $0x58] sm:$0xff]
      %v392 = vld [vmem:[%s315 + $0x60] sm:$0xff]
      %v393 = vld [vmem:[%s315 + $0x68] sm:$0xff]
      %v394 = vld [vmem:[%s315 + $0x70] sm:$0xff]
      %v395 = vld [vmem:[%s315 + $0x78] sm:$0xff]
      %v396 = vld [vmem:[%s315 + $0x80] sm:$0xff]
      %v397 = vld [vmem:[%s315 + $0x88] sm:$0xff]
      %v398 = vld [vmem:[%s315 + $0x90] sm:$0xff]
      %v399 = vld [vmem:[%s315 + $0x98] sm:$0xff]
      %v400 = vld [vmem:[%s315 + $0xa0] sm:$0xff]
      %v401 = vld [vmem:[%s315 + $0xa8] sm:$0xff]
      %v402 = vld [vmem:[%s315 + $0xb0] sm:$0xff]
      %v403 = vld [vmem:[%s315 + $0xb8] sm:$0xff]
      %v404 = vld [vmem:[%s315 + $0xc0] sm:$0xff]
      %v405 = vld [vmem:[%s315 + $0xc8] sm:$0xff]
      %v406 = vld [vmem:[%s315 + $0xd0] sm:$0xff]
      %v407 = vld [vmem:[%s315 + $0xd8] sm:$0xff]
      %v408 = vld [vmem:[%s315 + $0xe0] sm:$0xff]
      %v409 = vld [vmem:[%s315 + $0xe8] sm:$0xff]
      %v410 = vld [vmem:[%s315 + $0xf0] sm:$0xff]
      %v411 = vld [vmem:[%s315 + $0xf8] sm:$0xff]
      %v412 = vld [vmem:[%s2] sm:$0x1]
      %v414 = vlaneseq
      %v415 = vshrl.u32 %v414, 7
      %v416 = vsub.s32 0, %v415
      %v417 = vrot.slane %v412, %v416
      %v419 = vmul.f32 %v380, %v417
      %v420 = vmul.f32 %v381, %v417
      %v421 = vmul.f32 %v382, %v417
      %v422 = vmul.f32 %v383, %v417
      %v423 = vmul.f32 %v384, %v417
      %v424 = vmul.f32 %v385, %v417
      %v425 = vmul.f32 %v386, %v417
      %v426 = vmul.f32 %v387, %v417
      %v427 = vmul.f32 %v388, %v417
      %v428 = vmul.f32 %v389, %v417
      %v429 = vmul.f32 %v390, %v417
      %v430 = vmul.f32 %v391, %v417
      %v431 = vmul.f32 %v392, %v417
      %v432 = vmul.f32 %v393, %v417
      %v433 = vmul.f32 %v394, %v417
      %v434 = vmul.f32 %v395, %v417
      %v435 = vmul.f32 %v396, %v417
      %v436 = vmul.f32 %v397, %v417
      %v437 = vmul.f32 %v398, %v417
      %v438 = vmul.f32 %v399, %v417
      %v439 = vmul.f32 %v400, %v417
      %v440 = vmul.f32 %v401, %v417
      %v441 = vmul.f32 %v402, %v417
      %v442 = vmul.f32 %v403, %v417
      %v443 = vmul.f32 %v404, %v417
      %v444 = vmul.f32 %v405, %v417
      %v445 = vmul.f32 %v406, %v417
      %v446 = vmul.f32 %v407, %v417
      %v447 = vmul.f32 %v408, %v417
      %v448 = vmul.f32 %v409, %v417
      %v449 = vmul.f32 %v410, %v417
      %v450 = vmul.f32 %v411, %v417
      %v451 = vld [vmem:[%s3] sm:$0x1]
      %v453 = vlaneseq
      %v454 = vshrl.u32 %v453, 7
      %v455 = vsub.s32 0, %v454
      %v456 = vrot.slane %v451, %v455
      %v458 = vadd.f32 %v419, %v456
      %v459 = vadd.f32 %v420, %v456
      %v460 = vadd.f32 %v421, %v456
      %v461 = vadd.f32 %v422, %v456
      %v462 = vadd.f32 %v423, %v456
      %v463 = vadd.f32 %v424, %v456
      %v464 = vadd.f32 %v425, %v456
      %v465 = vadd.f32 %v426, %v456
      %v466 = vadd.f32 %v427, %v456
      %v467 = vadd.f32 %v428, %v456
      %v468 = vadd.f32 %v429, %v456
      %v469 = vadd.f32 %v430, %v456
      %v470 = vadd.f32 %v431, %v456
      %v471 = vadd.f32 %v432, %v456
      %v472 = vadd.f32 %v433, %v456
      %v473 = vadd.f32 %v434, %v456
      %v474 = vadd.f32 %v435, %v456
      %v475 = vadd.f32 %v436, %v456
      %v476 = vadd.f32 %v437, %v456
      %v477 = vadd.f32 %v438, %v456
      %v478 = vadd.f32 %v439, %v456
      %v479 = vadd.f32 %v440, %v456
      %v480 = vadd.f32 %v441, %v456
      %v481 = vadd.f32 %v442, %v456
      %v482 = vadd.f32 %v443, %v456
      %v483 = vadd.f32 %v444, %v456
      %v484 = vadd.f32 %v445, %v456
      %v485 = vadd.f32 %v446, %v456
      %v486 = vadd.f32 %v447, %v456
      %v487 = vadd.f32 %v448, %v456
      %v488 = vadd.f32 %v449, %v456
      %v489 = vadd.f32 %v450, %v456
      %v490 = vmax.f32 %v458, 0.0
      %v491 = vmax.f32 %v459, 0.0
      %v492 = vmax.f32 %v460, 0.0
      %v493 = vmax.f32 %v461, 0.0
      %v494 = vmax.f32 %v462, 0.0
      %v495 = vmax.f32 %v463, 0.0
      %v496 = vmax.f32 %v464, 0.0
      %v497 = vmax.f32 %v465, 0.0
      %v498 = vmax.f32 %v466, 0.0
      %v499 = vmax.f32 %v467, 0.0
      %v500 = vmax.f32 %v468, 0.0
      %v501 = vmax.f32 %v469, 0.0
      %v502 = vmax.f32 %v470, 0.0
      %v503 = vmax.f32 %v471, 0.0
      %v504 = vmax.f32 %v472, 0.0
      %v505 = vmax.f32 %v473, 0.0
      %v506 = vmax.f32 %v474, 0.0
      %v507 = vmax.f32 %v475, 0.0
      %v508 = vmax.f32 %v476, 0.0
      %v509 = vmax.f32 %v477, 0.0
      %v510 = vmax.f32 %v478, 0.0
      %v511 = vmax.f32 %v479, 0.0
      %v512 = vmax.f32 %v480, 0.0
      %v513 = vmax.f32 %v481, 0.0
      %v514 = vmax.f32 %v482, 0.0
      %v515 = vmax.f32 %v483, 0.0
      %v516 = vmax.f32 %v484, 0.0
      %v517 = vmax.f32 %v485, 0.0
      %v518 = vmax.f32 %v486, 0.0
      %v519 = vmax.f32 %v487, 0.0
      %v520 = vmax.f32 %v488, 0.0
      %v521 = vmax.f32 %v489, 0.0
      %s522 = scalar_lea.vmem [#allocation2], 24
      %523 = vst [vmem:[%s522 + $0x1] sm:$0xff] %v490
      %524 = vst [vmem:[%s522 + $0x9] sm:$0xff] %v491
      %525 = vst [vmem:[%s522 + $0x19] sm:$0xff] %v492
      %526 = vst [vmem:[%s522 + $0x21] sm:$0xff] %v493
      %527 = vst [vmem:[%s522 + $0x31] sm:$0xff] %v494
      %528 = vst [vmem:[%s522 + $0x39] sm:$0xff] %v495
      %529 = vst [vmem:[%s522 + $0x49] sm:$0xff] %v496
      %530 = vst [vmem:[%s522 + $0x51] sm:$0xff] %v497
      %531 = vst [vmem:[%s522 + $0x61] sm:$0xff] %v498
      %532 = vst [vmem:[%s522 + $0x69] sm:$0xff] %v499
      %533 = vst [vmem:[%s522 + $0x79] sm:$0xff] %v500
      %534 = vst [vmem:[%s522 + $0x81] sm:$0xff] %v501
      %535 = vst [vmem:[%s522 + $0x91] sm:$0xff] %v502
      %536 = vst [vmem:[%s522 + $0x99] sm:$0xff] %v503
      %537 = vst [vmem:[%s522 + $0xa9] sm:$0xff] %v504
      %538 = vst [vmem:[%s522 + $0xb1] sm:$0xff] %v505
      %539 = vst [vmem:[%s522 + $0xc1] sm:$0xff] %v506
      %540 = vst [vmem:[%s522 + $0xc9] sm:$0xff] %v507
      %541 = vst [vmem:[%s522 + $0xd9] sm:$0xff] %v508
      %542 = vst [vmem:[%s522 + $0xe1] sm:$0xff] %v509
      %543 = vst [vmem:[%s522 + $0xf1] sm:$0xff] %v510
      %544 = vst [vmem:[%s522 + $0xf9] sm:$0xff] %v511
      %545 = vst [vmem:[%s522 + $0x109] sm:$0xff] %v512
      %546 = vst [vmem:[%s522 + $0x111] sm:$0xff] %v513
      %547 = vst [vmem:[%s522 + $0x121] sm:$0xff] %v514
      %548 = vst [vmem:[%s522 + $0x129] sm:$0xff] %v515
      %549 = vst [vmem:[%s522 + $0x139] sm:$0xff] %v516
      %550 = vst [vmem:[%s522 + $0x141] sm:$0xff] %v517
      %551 = vst [vmem:[%s522 + $0x151] sm:$0xff] %v518
      %552 = vst [vmem:[%s522 + $0x159] sm:$0xff] %v519
      %553 = vst [vmem:[%s522 + $0x169] sm:$0xff] %v520
      %554 = vst [vmem:[%s522 + $0x171] sm:$0xff] %v521
      %v555 = vld [vmem:[#allocation2] ss:$2 sm:$0xff]
      %s556 = scalar_lea.vmem [#allocation2], 48
      %v557 = vld [vmem:[%s556] ss:$2 sm:$0xff]
      %s558 = scalar_lea.vmem [#allocation2], 96
      %v559 = vld [vmem:[%s558] ss:$2 sm:$0xff]
      %s560 = scalar_lea.vmem [#allocation2], 144
      %v561 = vld [vmem:[%s560] ss:$2 sm:$0xff]
      %s562 = scalar_lea.vmem [#allocation2], 192
      %v563 = vld [vmem:[%s562] ss:$2 sm:$0xff]
      %s564 = scalar_lea.vmem [#allocation2], 240
      %v565 = vld [vmem:[%s564] ss:$2 sm:$0xff]
      %s566 = scalar_lea.vmem [#allocation2], 288
      %v567 = vld [vmem:[%s566] ss:$2 sm:$0xff]
      %s568 = scalar_lea.vmem [#allocation2], 336
      %v569 = vld [vmem:[%s568] ss:$2 sm:$0xff]
      %v570 = vld [vmem:[%s4] sm:$0xff]
      %v571 = vld [vmem:[%s4 + $0x8] sm:$0xff]
      %v572 = vld [vmem:[%s4 + $0x10] sm:$0xff]
      %v573 = vld [vmem:[%s4 + $0x18] sm:$0xff]
      %v574 = vld [vmem:[%s4 + $0x20] sm:$0xff]
      %v575 = vld [vmem:[%s4 + $0x28] sm:$0xff]
      %v576 = vld [vmem:[%s4 + $0x30] sm:$0xff]
      %v577 = vld [vmem:[%s4 + $0x38] sm:$0xff]
      %v578 = vld [vmem:[%s4 + $0x40] sm:$0xff]
      %v579 = vld [vmem:[%s4 + $0x48] sm:$0xff]
      %v580 = vld [vmem:[%s4 + $0x50] sm:$0xff]
      %v581 = vld [vmem:[%s4 + $0x58] sm:$0xff]
      %v582 = vld [vmem:[%s4 + $0x60] sm:$0xff]
      %v583 = vld [vmem:[%s4 + $0x68] sm:$0xff]
      %v584 = vld [vmem:[%s4 + $0x70] sm:$0xff]
      %v585 = vld [vmem:[%s4 + $0x78] sm:$0xff]
      %s586 = scalar_lea.vmem [#allocation2], 1
      %v587 = vld [vmem:[%s586] ss:$2 sm:$0xff]
      %s588 = scalar_lea.vmem [#allocation2], 49
      %v589 = vld [vmem:[%s588] ss:$2 sm:$0xff]
      %s590 = scalar_lea.vmem [#allocation2], 97
      %v591 = vld [vmem:[%s590] ss:$2 sm:$0xff]
      %s592 = scalar_lea.vmem [#allocation2], 145
      %v593 = vld [vmem:[%s592] ss:$2 sm:$0xff]
      %s594 = scalar_lea.vmem [#allocation2], 193
      %v595 = vld [vmem:[%s594] ss:$2 sm:$0xff]
      %s596 = scalar_lea.vmem [#allocation2], 241
      %v597 = vld [vmem:[%s596] ss:$2 sm:$0xff]
      %s598 = scalar_lea.vmem [#allocation2], 289
      %v599 = vld [vmem:[%s598] ss:$2 sm:$0xff]
      %s600 = scalar_lea.vmem [#allocation2], 337
      %v601 = vld [vmem:[%s600] ss:$2 sm:$0xff]
      %s602 = scalar_lea.vmem %s4, 128
      %v603 = vld [vmem:[%s602] sm:$0xff]
      %v604 = vld [vmem:[%s602 + $0x8] sm:$0xff]
      %v605 = vld [vmem:[%s602 + $0x10] sm:$0xff]
      %v606 = vld [vmem:[%s602 + $0x18] sm:$0xff]
      %v607 = vld [vmem:[%s602 + $0x20] sm:$0xff]
      %v608 = vld [vmem:[%s602 + $0x28] sm:$0xff]
      %v609 = vld [vmem:[%s602 + $0x30] sm:$0xff]
      %v610 = vld [vmem:[%s602 + $0x38] sm:$0xff]
      %v611 = vld [vmem:[%s602 + $0x40] sm:$0xff]
      %v612 = vld [vmem:[%s602 + $0x48] sm:$0xff]
      %v613 = vld [vmem:[%s602 + $0x50] sm:$0xff]
      %v614 = vld [vmem:[%s602 + $0x58] sm:$0xff]
      %v615 = vld [vmem:[%s602 + $0x60] sm:$0xff]
      %v616 = vld [vmem:[%s602 + $0x68] sm:$0xff]
      %v617 = vld [vmem:[%s602 + $0x70] sm:$0xff]
      %v618 = vld [vmem:[%s602 + $0x78] sm:$0xff]
      %619 = vmatprep.subr.mxu0 0.0
      %620 = vmatpush1.msra.mxu0 %v603
      %621 = vmatprep.subr.mxu0 0.0
      %622 = vmatpush1.msra.mxu0 %v604
      %623 = vmatprep.subr.mxu0 0.0
      %624 = vmatpush1.msra.mxu0 %v605
      %625 = vmatprep.subr.mxu0 0.0
      %626 = vmatpush1.msra.mxu0 %v606
      %627 = vmatprep.subr.mxu0 0.0
      %628 = vmatpush1.msra.mxu0 %v607
      %629 = vmatprep.subr.mxu0 0.0
      %630 = vmatpush1.msra.mxu0 %v608
      %631 = vmatprep.subr.mxu0 0.0
      %632 = vmatpush1.msra.mxu0 %v609
      %633 = vmatprep.subr.mxu0 0.0
      %634 = vmatpush1.msra.mxu0 %v610
      %635 = vmatprep.subr.mxu0 0.0
      %636 = vmatpush1.msra.mxu0 %v611
      %637 = vmatprep.subr.mxu0 0.0
      %638 = vmatpush1.msra.mxu0 %v612
      %639 = vmatprep.subr.mxu0 0.0
      %640 = vmatpush1.msra.mxu0 %v613
      %641 = vmatprep.subr.mxu0 0.0
      %642 = vmatpush1.msra.mxu0 %v614
      %643 = vmatprep.subr.mxu0 0.0
      %644 = vmatpush1.msra.mxu0 %v615
      %645 = vmatprep.subr.mxu0 0.0
      %646 = vmatpush1.msra.mxu0 %v616
      %647 = vmatprep.subr.mxu0 0.0
      %648 = vmatpush1.msra.mxu0 %v617
      %649 = vmatprep.subr.mxu0 0.0
      %650 = vmatpush1.msra.mxu0 %v618
      %651 = vmatprep.subr.mxu0 0.0
      %652 = vmatpush1.msra.mxu0 0.0
      %653 = vmatprep.subr.mxu0 0.0
      %654 = vmatpush1.msra.mxu0 0.0
      %655 = vmatprep.subr.mxu0 0.0
      %656 = vmatpush1.msra.mxu0 0.0
      %657 = vmatprep.subr.mxu0 0.0
      %658 = vmatpush1.msra.mxu0 0.0
      %659 = vmatprep.subr.mxu0 0.0
      %660 = vmatpush1.msra.mxu0 0.0
      %661 = vmatprep.subr.mxu0 0.0
      %662 = vmatpush1.msra.mxu0 0.0
      %663 = vmatprep.subr.mxu0 0.0
      %664 = vmatpush1.msra.mxu0 0.0
      %665 = vmatprep.subr.mxu0 0.0
      %666 = vmatpush1.msra.mxu0 0.0
      %667 = vmatprep.subr.mxu0 0.0
      %668 = vmatpush1.msra.mxu0 0.0
      %669 = vmatprep.subr.mxu0 0.0
      %670 = vmatpush1.msra.mxu0 0.0
      %671 = vmatprep.subr.mxu0 0.0
      %672 = vmatpush1.msra.mxu0 0.0
      %673 = vmatprep.subr.mxu0 0.0
      %674 = vmatpush1.msra.mxu0 0.0
      %675 = vmatprep.subr.mxu0 0.0
      %676 = vmatpush1.msra.mxu0 0.0
      %677 = vmatprep.subr.mxu0 0.0
      %678 = vmatpush1.msra.mxu0 0.0
      %679 = vmatprep.subr.mxu0 0.0
      %680 = vmatpush1.msra.mxu0 0.0
      %681 = vmatprep.subr.mxu0 0.0
      %682 = vmatpush1.msra.mxu0 0.0
      %683 = vmatprep.mubr.f32.mxu0 0.0
      %684 = vmatmul.mubr.f32.gmra.mrb[0].mxu0 %v587
      %v685 = vpop.f32.mrb[0].mxu0
      %v686 = vadd.f32 0.0, %v685
      %v687 = vpop.f32.mrb[0].mxu0
      %688 = vmatprep.mubr.f32.mxu0 0.0
      %689 = vmatmul.mubr.f32.gmra.mrb[0].mxu0 %v589
      %v690 = vpop.f32.mrb[0].mxu0
      %v691 = vadd.f32 0.0, %v690
      %v692 = vpop.f32.mrb[0].mxu0
      %693 = vmatprep.mubr.f32.mxu0 0.0
      %694 = vmatmul.mubr.f32.gmra.mrb[0].mxu0 %v591
      %v695 = vpop.f32.mrb[0].mxu0
      %v696 = vadd.f32 0.0, %v695
      %v697 = vpop.f32.mrb[0].mxu0
      %698 = vmatprep.mubr.f32.mxu0 0.0
      %699 = vmatmul.mubr.f32.gmra.mrb[0].mxu0 %v593
      %v700 = vpop.f32.mrb[0].mxu0
      %v701 = vadd.f32 0.0, %v700
      %v702 = vpop.f32.mrb[0].mxu0
      %703 = vmatprep.mubr.f32.mxu0 0.0
      %704 = vmatmul.mubr.f32.gmra.mrb[0].mxu0 %v595
      %v705 = vpop.f32.mrb[0].mxu0
      %v706 = vadd.f32 0.0, %v705
      %v707 = vpop.f32.mrb[0].mxu0
      %708 = vmatprep.mubr.f32.mxu0 0.0
      %709 = vmatmul.mubr.f32.gmra.mrb[0].mxu0 %v597
      %v710 = vpop.f32.mrb[0].mxu0
      %v711 = vadd.f32 0.0, %v710
      %v712 = vpop.f32.mrb[0].mxu0
      %713 = vmatprep.mubr.f32.mxu0 0.0
      %714 = vmatmul.mubr.f32.gmra.mrb[0].mxu0 %v599
      %v715 = vpop.f32.mrb[0].mxu0
      %v716 = vadd.f32 0.0, %v715
      %v717 = vpop.f32.mrb[0].mxu0
      %718 = vmatprep.mubr.f32.mxu0 0.0
      %719 = vmatmul.mubr.f32.gmra.mrb[0].mxu0 %v601
      %v720 = vpop.f32.mrb[0].mxu0
      %v721 = vadd.f32 0.0, %v720
      %v722 = vpop.f32.mrb[0].mxu0
      %723 = vdwg.mxu0
      %724 = vmatprep.subr.mxu0 0.0
      %725 = vmatpush1.msra.mxu0 %v570
      %726 = vmatprep.subr.mxu0 0.0
      %727 = vmatpush1.msra.mxu0 %v571
      %728 = vmatprep.subr.mxu0 0.0
      %729 = vmatpush1.msra.mxu0 %v572
      %730 = vmatprep.subr.mxu0 0.0
      %731 = vmatpush1.msra.mxu0 %v573
      %732 = vmatprep.subr.mxu0 0.0
      %733 = vmatpush1.msra.mxu0 %v574
      %734 = vmatprep.subr.mxu0 0.0
      %735 = vmatpush1.msra.mxu0 %v575
      %736 = vmatprep.subr.mxu0 0.0
      %737 = vmatpush1.msra.mxu0 %v576
      %738 = vmatprep.subr.mxu0 0.0
      %739 = vmatpush1.msra.mxu0 %v577
      %740 = vmatprep.subr.mxu0 0.0
      %741 = vmatpush1.msra.mxu0 %v578
      %742 = vmatprep.subr.mxu0 0.0
      %743 = vmatpush1.msra.mxu0 %v579
      %744 = vmatprep.subr.mxu0 0.0
      %745 = vmatpush1.msra.mxu0 %v580
      %746 = vmatprep.subr.mxu0 0.0
      %747 = vmatpush1.msra.mxu0 %v581
      %748 = vmatprep.subr.mxu0 0.0
      %749 = vmatpush1.msra.mxu0 %v582
      %750 = vmatprep.subr.mxu0 0.0
      %751 = vmatpush1.msra.mxu0 %v583
      %752 = vmatprep.subr.mxu0 0.0
      %753 = vmatpush1.msra.mxu0 %v584
      %754 = vmatprep.subr.mxu0 0.0
      %755 = vmatpush1.msra.mxu0 %v585
      %756 = vmatprep.subr.mxu0 0.0
      %757 = vmatpush1.msra.mxu0 0.0
      %758 = vmatprep.subr.mxu0 0.0
      %759 = vmatpush1.msra.mxu0 0.0
      %760 = vmatprep.subr.mxu0 0.0
      %761 = vmatpush1.msra.mxu0 0.0
      %762 = vmatprep.subr.mxu0 0.0
      %763 = vmatpush1.msra.mxu0 0.0
      %764 = vmatprep.subr.mxu0 0.0
      %765 = vmatpush1.msra.mxu0 0.0
      %766 = vmatprep.subr.mxu0 0.0
      %767 = vmatpush1.msra.mxu0 0.0
      %768 = vmatprep.subr.mxu0 0.0
      %769 = vmatpush1.msra.mxu0 0.0
      %770 = vmatprep.subr.mxu0 0.0
      %771 = vmatpush1.msra.mxu0 0.0
      %772 = vmatprep.subr.mxu0 0.0
      %773 = vmatpush1.msra.mxu0 0.0
      %774 = vmatprep.subr.mxu0 0.0
      %775 = vmatpush1.msra.mxu0 0.0
      %776 = vmatprep.subr.mxu0 0.0
      %777 = vmatpush1.msra.mxu0 0.0
      %778 = vmatprep.subr.mxu0 0.0
      %779 = vmatpush1.msra.mxu0 0.0
      %780 = vmatprep.subr.mxu0 0.0
      %781 = vmatpush1.msra.mxu0 0.0
      %782 = vmatprep.subr.mxu0 0.0
      %783 = vmatpush1.msra.mxu0 0.0
      %784 = vmatprep.subr.mxu0 0.0
      %785 = vmatpush1.msra.mxu0 0.0
      %786 = vmatprep.subr.mxu0 0.0
      %787 = vmatpush1.msra.mxu0 0.0
      %788 = vmatprep.mubr.f32.mxu0 0.0
      %789 = vmatmul.mubr.f32.gmra.mrb[0].mxu0 %v555
      %v790 = vpop.f32.mrb[0].mxu0
      %v791 = vadd.f32 %v686, %v790
      %v792 = vpop.f32.mrb[0].mxu0
      %793 = vmatprep.mubr.f32.mxu0 0.0
      %794 = vmatmul.mubr.f32.gmra.mrb[0].mxu0 %v557
      %v795 = vpop.f32.mrb[0].mxu0
      %v796 = vadd.f32 %v691, %v795
      %v797 = vpop.f32.mrb[0].mxu0
      %798 = vmatprep.mubr.f32.mxu0 0.0
      %799 = vmatmul.mubr.f32.gmra.mrb[0].mxu0 %v559
      %v800 = vpop.f32.mrb[0].mxu0
      %v801 = vadd.f32 %v696, %v800
      %v802 = vpop.f32.mrb[0].mxu0
      %803 = vmatprep.mubr.f32.mxu0 0.0
      %804 = vmatmul.mubr.f32.gmra.mrb[0].mxu0 %v561
      %v805 = vpop.f32.mrb[0].mxu0
      %v806 = vadd.f32 %v701, %v805
      %v807 = vpop.f32.mrb[0].mxu0
      %808 = vmatprep.mubr.f32.mxu0 0.0
      %809 = vmatmul.mubr.f32.gmra.mrb[0].mxu0 %v563
      %v810 = vpop.f32.mrb[0].mxu0
      %v811 = vadd.f32 %v706, %v810
      %v812 = vpop.f32.mrb[0].mxu0
      %813 = vmatprep.mubr.f32.mxu0 0.0
      %814 = vmatmul.mubr.f32.gmra.mrb[0].mxu0 %v565
      %v815 = vpop.f32.mrb[0].mxu0
      %v816 = vadd.f32 %v711, %v815
      %v817 = vpop.f32.mrb[0].mxu0
      %818 = vmatprep.mubr.f32.mxu0 0.0
      %819 = vmatmul.mubr.f32.gmra.mrb[0].mxu0 %v567
      %v820 = vpop.f32.mrb[0].mxu0
      %v821 = vadd.f32 %v716, %v820
      %v822 = vpop.f32.mrb[0].mxu0
      %823 = vmatprep.mubr.f32.mxu0 0.0
      %824 = vmatmul.mubr.f32.gmra.mrb[0].mxu0 %v569
      %v825 = vpop.f32.mrb[0].mxu0
      %v826 = vadd.f32 %v721, %v825
      %v827 = vpop.f32.mrb[0].mxu0
      %828 = vdwg.mxu0
      %s829 = scalar_lea.vmem [#allocation2], 2
      %v830 = vld [vmem:[%s829] ss:$2 sm:$0xff]
      %s831 = scalar_lea.vmem [#allocation2], 50
      %v832 = vld [vmem:[%s831] ss:$2 sm:$0xff]
      %s833 = scalar_lea.vmem [#allocation2], 98
      %v834 = vld [vmem:[%s833] ss:$2 sm:$0xff]
      %s835 = scalar_lea.vmem [#allocation2], 146
      %v836 = vld [vmem:[%s835] ss:$2 sm:$0xff]
      %s837 = scalar_lea.vmem [#allocation2], 194
      %v838 = vld [vmem:[%s837] ss:$2 sm:$0xff]
      %s839 = scalar_lea.vmem [#allocation2], 242
      %v840 = vld [vmem:[%s839] ss:$2 sm:$0xff]
      %s841 = scalar_lea.vmem [#allocation2], 290
      %v842 = vld [vmem:[%s841] ss:$2 sm:$0xff]
      %s843 = scalar_lea.vmem [#allocation2], 338
      %v844 = vld [vmem:[%s843] ss:$2 sm:$0xff]
      %s845 = scalar_lea.vmem %s4, 256
      %v846 = vld [vmem:[%s845] sm:$0xff]
      %v847 = vld [vmem:[%s845 + $0x8] sm:$0xff]
      %v848 = vld [vmem:[%s845 + $0x10] sm:$0xff]
      %v849 = vld [vmem:[%s845 + $0x18] sm:$0xff]
      %v850 = vld [vmem:[%s845 + $0x20] sm:$0xff]
      %v851 = vld [vmem:[%s845 + $0x28] sm:$0xff]
      %v852 = vld [vmem:[%s845 + $0x30] sm:$0xff]
      %v853 = vld [vmem:[%s845 + $0x38] sm:$0xff]
      %v854 = vld [vmem:[%s845 + $0x40] sm:$0xff]
      %v855 = vld [vmem:[%s845 + $0x48] sm:$0xff]
      %v856 = vld [vmem:[%s845 + $0x50] sm:$0xff]
      %v857 = vld [vmem:[%s845 + $0x58] sm:$0xff]
      %v858 = vld [vmem:[%s845 + $0x60] sm:$0xff]
      %v859 = vld [vmem:[%s845 + $0x68] sm:$0xff]
      %v860 = vld [vmem:[%s845 + $0x70] sm:$0xff]
      %v861 = vld [vmem:[%s845 + $0x78] sm:$0xff]
      %862 = vmatprep.subr.mxu0 0.0
      %863 = vmatpush1.msra.mxu0 %v846
      %864 = vmatprep.subr.mxu0 0.0
      %865 = vmatpush1.msra.mxu0 %v847
      %866 = vmatprep.subr.mxu0 0.0
      %867 = vmatpush1.msra.mxu0 %v848
      %868 = vmatprep.subr.mxu0 0.0
      %869 = vmatpush1.msra.mxu0 %v849
      %870 = vmatprep.subr.mxu0 0.0
      %871 = vmatpush1.msra.mxu0 %v850
      %872 = vmatprep.subr.mxu0 0.0
      %873 = vmatpush1.msra.mxu0 %v851
      %874 = vmatprep.subr.mxu0 0.0
      %875 = vmatpush1.msra.mxu0 %v852
      %876 = vmatprep.subr.mxu0 0.0
      %877 = vmatpush1.msra.mxu0 %v853
      %878 = vmatprep.subr.mxu0 0.0
      %879 = vmatpush1.msra.mxu0 %v854
      %880 = vmatprep.subr.mxu0 0.0
      %881 = vmatpush1.msra.mxu0 %v855
      %882 = vmatprep.subr.mxu0 0.0
      %883 = vmatpush1.msra.mxu0 %v856
      %884 = vmatprep.subr.mxu0 0.0
      %885 = vmatpush1.msra.mxu0 %v857
      %886 = vmatprep.subr.mxu0 0.0
      %887 = vmatpush1.msra.mxu0 %v858
      %888 = vmatprep.subr.mxu0 0.0
      %889 = vmatpush1.msra.mxu0 %v859
      %890 = vmatprep.subr.mxu0 0.0
      %891 = vmatpush1.msra.mxu0 %v860
      %892 = vmatprep.subr.mxu0 0.0
      %893 = vmatpush1.msra.mxu0 %v861
      %894 = vmatprep.subr.mxu0 0.0
      %895 = vmatpush1.msra.mxu0 0.0
      %896 = vmatprep.subr.mxu0 0.0
      %897 = vmatpush1.msra.mxu0 0.0
      %898 = vmatprep.subr.mxu0 0.0
      %899 = vmatpush1.msra.mxu0 0.0
      %900 = vmatprep.subr.mxu0 0.0
      %901 = vmatpush1.msra.mxu0 0.0
      %902 = vmatprep.subr.mxu0 0.0
      %903 = vmatpush1.msra.mxu0 0.0
      %904 = vmatprep.subr.mxu0 0.0
      %905 = vmatpush1.msra.mxu0 0.0
      %906 = vmatprep.subr.mxu0 0.0
      %907 = vmatpush1.msra.mxu0 0.0
      %908 = vmatprep.subr.mxu0 0.0
      %909 = vmatpush1.msra.mxu0 0.0
      %910 = vmatprep.subr.mxu0 0.0
      %911 = vmatpush1.msra.mxu0 0.0
      %912 = vmatprep.subr.mxu0 0.0
      %913 = vmatpush1.msra.mxu0 0.0
      %914 = vmatprep.subr.mxu0 0.0
      %915 = vmatpush1.msra.mxu0 0.0
      %916 = vmatprep.subr.mxu0 0.0
      %917 = vmatpush1.msra.mxu0 0.0
      %918 = vmatprep.subr.mxu0 0.0
      %919 = vmatpush1.msra.mxu0 0.0
      %920 = vmatprep.subr.mxu0 0.0
      %921 = vmatpush1.msra.mxu0 0.0
      %922 = vmatprep.subr.mxu0 0.0
      %923 = vmatpush1.msra.mxu0 0.0
      %924 = vmatprep.subr.mxu0 0.0
      %925 = vmatpush1.msra.mxu0 0.0
      %926 = vmatprep.mubr.f32.mxu0 0.0
      %927 = vmatmul.mubr.f32.gmra.mrb[0].mxu0 %v830
      %v928 = vpop.f32.mrb[0].mxu0
      %v929 = vadd.f32 0.0, %v928
      %v930 = vpop.f32.mrb[0].mxu0
      %931 = vmatprep.mubr.f32.mxu0 0.0
      %932 = vmatmul.mubr.f32.gmra.mrb[0].mxu0 %v832
      %v933 = vpop.f32.mrb[0].mxu0
      %v934 = vadd.f32 0.0, %v933
      %v935 = vpop.f32.mrb[0].mxu0
      %936 = vmatprep.mubr.f32.mxu0 0.0
      %937 = vmatmul.mubr.f32.gmra.mrb[0].mxu0 %v834
      %v938 = vpop.f32.mrb[0].mxu0
      %v939 = vadd.f32 0.0, %v938
      %v940 = vpop.f32.mrb[0].mxu0
      %941 = vmatprep.mubr.f32.mxu0 0.0
      %942 = vmatmul.mubr.f32.gmra.mrb[0].mxu0 %v836
      %v943 = vpop.f32.mrb[0].mxu0
      %v944 = vadd.f32 0.0, %v943
      %v945 = vpop.f32.mrb[0].mxu0
      %946 = vmatprep.mubr.f32.mxu0 0.0
      %947 = vmatmul.mubr.f32.gmra.mrb[0].mxu0 %v838
      %v948 = vpop.f32.mrb[0].mxu0
      %v949 = vadd.f32 0.0, %v948
      %v950 = vpop.f32.mrb[0].mxu0
      %951 = vmatprep.mubr.f32.mxu0 0.0
      %952 = vmatmul.mubr.f32.gmra.mrb[0].mxu0 %v840
      %v953 = vpop.f32.mrb[0].mxu0
      %v954 = vadd.f32 0.0, %v953
      %v955 = vpop.f32.mrb[0].mxu0
      %956 = vmatprep.mubr.f32.mxu0 0.0
      %957 = vmatmul.mubr.f32.gmra.mrb[0].mxu0 %v842
      %v958 = vpop.f32.mrb[0].mxu0
      %v959 = vadd.f32 0.0, %v958
      %v960 = vpop.f32.mrb[0].mxu0
      %961 = vmatprep.mubr.f32.mxu0 0.0
      %962 = vmatmul.mubr.f32.gmra.mrb[0].mxu0 %v844
      %v963 = vpop.f32.mrb[0].mxu0
      %v964 = vadd.f32 0.0, %v963
      %v965 = vpop.f32.mrb[0].mxu0
      %966 = vdwg.mxu0
      %v967 = vadd.f32 %v791, %v929
      %v968 = vadd.f32 %v796, %v934
      %v969 = vadd.f32 %v801, %v939
      %v970 = vadd.f32 %v806, %v944
      %v971 = vadd.f32 %v811, %v949
      %v972 = vadd.f32 %v816, %v954
      %v973 = vadd.f32 %v821, %v959
      %v974 = vadd.f32 %v826, %v964
      %v975 = vld [vmem:[%s522] ss:$2 sm:$0xff]
      %s976 = scalar_lea.vmem %s522, 48 [#allocation2]
      %v977 = vld [vmem:[%s976] ss:$2 sm:$0xff]
      %s978 = scalar_lea.vmem %s522, 96 [#allocation2]
      %v979 = vld [vmem:[%s978] ss:$2 sm:$0xff]
      %s980 = scalar_lea.vmem %s522, 144 [#allocation2]
      %v981 = vld [vmem:[%s980] ss:$2 sm:$0xff]
      %s982 = scalar_lea.vmem %s522, 192 [#allocation2]
      %v983 = vld [vmem:[%s982] ss:$2 sm:$0xff]
      %s984 = scalar_lea.vmem %s522, 240 [#allocation2]
      %v985 = vld [vmem:[%s984] ss:$2 sm:$0xff]
      %s986 = scalar_lea.vmem %s522, 288 [#allocation2]
      %v987 = vld [vmem:[%s986] ss:$2 sm:$0xff]
      %s988 = scalar_lea.vmem %s522, 336 [#allocation2]
      %v989 = vld [vmem:[%s988] ss:$2 sm:$0xff]
      %s990 = scalar_lea.vmem %s4, 384
      %v991 = vld [vmem:[%s990] sm:$0xff]
      %v992 = vld [vmem:[%s990 + $0x8] sm:$0xff]
      %v993 = vld [vmem:[%s990 + $0x10] sm:$0xff]
      %v994 = vld [vmem:[%s990 + $0x18] sm:$0xff]
      %v995 = vld [vmem:[%s990 + $0x20] sm:$0xff]
      %v996 = vld [vmem:[%s990 + $0x28] sm:$0xff]
      %v997 = vld [vmem:[%s990 + $0x30] sm:$0xff]
      %v998 = vld [vmem:[%s990 + $0x38] sm:$0xff]
      %v999 = vld [vmem:[%s990 + $0x40] sm:$0xff]
      %v1000 = vld [vmem:[%s990 + $0x48] sm:$0xff]
      %v1001 = vld [vmem:[%s990 + $0x50] sm:$0xff]
      %v1002 = vld [vmem:[%s990 + $0x58] sm:$0xff]
      %v1003 = vld [vmem:[%s990 + $0x60] sm:$0xff]
      %v1004 = vld [vmem:[%s990 + $0x68] sm:$0xff]
      %v1005 = vld [vmem:[%s990 + $0x70] sm:$0xff]
      %v1006 = vld [vmem:[%s990 + $0x78] sm:$0xff]
      %1007 = vmatprep.subr.mxu0 0.0
      %1008 = vmatpush1.msra.mxu0 %v991
      %1009 = vmatprep.subr.mxu0 0.0
      %1010 = vmatpush1.msra.mxu0 %v992
      %1011 = vmatprep.subr.mxu0 0.0
      %1012 = vmatpush1.msra.mxu0 %v993
      %1013 = vmatprep.subr.mxu0 0.0
      %1014 = vmatpush1.msra.mxu0 %v994
      %1015 = vmatprep.subr.mxu0 0.0
      %1016 = vmatpush1.msra.mxu0 %v995
      %1017 = vmatprep.subr.mxu0 0.0
      %1018 = vmatpush1.msra.mxu0 %v996
      %1019 = vmatprep.subr.mxu0 0.0
      %1020 = vmatpush1.msra.mxu0 %v997
      %1021 = vmatprep.subr.mxu0 0.0
      %1022 = vmatpush1.msra.mxu0 %v998
      %1023 = vmatprep.subr.mxu0 0.0
      %1024 = vmatpush1.msra.mxu0 %v999
      %1025 = vmatprep.subr.mxu0 0.0
      %1026 = vmatpush1.msra.mxu0 %v1000
      %1027 = vmatprep.subr.mxu0 0.0
      %1028 = vmatpush1.msra.mxu0 %v1001
      %1029 = vmatprep.subr.mxu0 0.0
      %1030 = vmatpush1.msra.mxu0 %v1002
      %1031 = vmatprep.subr.mxu0 0.0
      %1032 = vmatpush1.msra.mxu0 %v1003
      %1033 = vmatprep.subr.mxu0 0.0
      %1034 = vmatpush1.msra.mxu0 %v1004
      %1035 = vmatprep.subr.mxu0 0.0
      %1036 = vmatpush1.msra.mxu0 %v1005
      %1037 = vmatprep.subr.mxu0 0.0
      %1038 = vmatpush1.msra.mxu0 %v1006
      %1039 = vmatprep.subr.mxu0 0.0
      %1040 = vmatpush1.msra.mxu0 0.0
      %1041 = vmatprep.subr.mxu0 0.0
      %1042 = vmatpush1.msra.mxu0 0.0
      %1043 = vmatprep.subr.mxu0 0.0
      %1044 = vmatpush1.msra.mxu0 0.0
      %1045 = vmatprep.subr.mxu0 0.0
      %1046 = vmatpush1.msra.mxu0 0.0
      %1047 = vmatprep.subr.mxu0 0.0
      %1048 = vmatpush1.msra.mxu0 0.0
      %1049 = vmatprep.subr.mxu0 0.0
      %1050 = vmatpush1.msra.mxu0 0.0
      %1051 = vmatprep.subr.mxu0 0.0
      %1052 = vmatpush1.msra.mxu0 0.0
      %1053 = vmatprep.subr.mxu0 0.0
      %1054 = vmatpush1.msra.mxu0 0.0
      %1055 = vmatprep.subr.mxu0 0.0
      %1056 = vmatpush1.msra.mxu0 0.0
      %1057 = vmatprep.subr.mxu0 0.0
      %1058 = vmatpush1.msra.mxu0 0.0
      %1059 = vmatprep.subr.mxu0 0.0
      %1060 = vmatpush1.msra.mxu0 0.0
      %1061 = vmatprep.subr.mxu0 0.0
      %1062 = vmatpush1.msra.mxu0 0.0
      %1063 = vmatprep.subr.mxu0 0.0
      %1064 = vmatpush1.msra.mxu0 0.0
      %1065 = vmatprep.subr.mxu0 0.0
      %1066 = vmatpush1.msra.mxu0 0.0
      %1067 = vmatprep.subr.mxu0 0.0
      %1068 = vmatpush1.msra.mxu0 0.0
      %1069 = vmatprep.subr.mxu0 0.0
      %1070 = vmatpush1.msra.mxu0 0.0
      %1071 = vmatprep.mubr.f32.mxu0 0.0
      %1072 = vmatmul.mubr.f32.gmra.mrb[0].mxu0 %v975
      %v1073 = vpop.f32.mrb[0].mxu0
      %v1074 = vadd.f32 0.0, %v1073
      %v1075 = vpop.f32.mrb[0].mxu0
      %1076 = vmatprep.mubr.f32.mxu0 0.0
      %1077 = vmatmul.mubr.f32.gmra.mrb[0].mxu0 %v977
      %v1078 = vpop.f32.mrb[0].mxu0
      %v1079 = vadd.f32 0.0, %v1078
      %v1080 = vpop.f32.mrb[0].mxu0
      %1081 = vmatprep.mubr.f32.mxu0 0.0
      %1082 = vmatmul.mubr.f32.gmra.mrb[0].mxu0 %v979
      %v1083 = vpop.f32.mrb[0].mxu0
      %v1084 = vadd.f32 0.0, %v1083
      %v1085 = vpop.f32.mrb[0].mxu0
      %1086 = vmatprep.mubr.f32.mxu0 0.0
      %1087 = vmatmul.mubr.f32.gmra.mrb[0].mxu0 %v981
      %v1088 = vpop.f32.mrb[0].mxu0
      %v1089 = vadd.f32 0.0, %v1088
      %v1090 = vpop.f32.mrb[0].mxu0
      %1091 = vmatprep.mubr.f32.mxu0 0.0
      %1092 = vmatmul.mubr.f32.gmra.mrb[0].mxu0 %v983
      %v1093 = vpop.f32.mrb[0].mxu0
      %v1094 = vadd.f32 0.0, %v1093
      %v1095 = vpop.f32.mrb[0].mxu0
      %1096 = vmatprep.mubr.f32.mxu0 0.0
      %1097 = vmatmul.mubr.f32.gmra.mrb[0].mxu0 %v985
      %v1098 = vpop.f32.mrb[0].mxu0
      %v1099 = vadd.f32 0.0, %v1098
      %v1100 = vpop.f32.mrb[0].mxu0
      %1101 = vmatprep.mubr.f32.mxu0 0.0
      %1102 = vmatmul.mubr.f32.gmra.mrb[0].mxu0 %v987
      %v1103 = vpop.f32.mrb[0].mxu0
      %v1104 = vadd.f32 0.0, %v1103
      %v1105 = vpop.f32.mrb[0].mxu0
      %1106 = vmatprep.mubr.f32.mxu0 0.0
      %1107 = vmatmul.mubr.f32.gmra.mrb[0].mxu0 %v989
      %v1108 = vpop.f32.mrb[0].mxu0
      %v1109 = vadd.f32 0.0, %v1108
      %v1110 = vpop.f32.mrb[0].mxu0
      %1111 = vdwg.mxu0
      %v1112 = vadd.f32 %v967, %v1074
      %v1113 = vadd.f32 %v968, %v1079
      %v1114 = vadd.f32 %v969, %v1084
      %v1115 = vadd.f32 %v970, %v1089
      %v1116 = vadd.f32 %v971, %v1094
      %v1117 = vadd.f32 %v972, %v1099
      %v1118 = vadd.f32 %v973, %v1104
      %v1119 = vadd.f32 %v974, %v1109
      %s1120 = scalar_lea.vmem %s522, 1 [#allocation2]
      %v1121 = vld [vmem:[%s1120] ss:$2 sm:$0xff]
      %s1122 = scalar_lea.vmem %s522, 49 [#allocation2]
      %v1123 = vld [vmem:[%s1122] ss:$2 sm:$0xff]
      %s1124 = scalar_lea.vmem %s522, 97 [#allocation2]
      %v1125 = vld [vmem:[%s1124] ss:$2 sm:$0xff]
      %s1126 = scalar_lea.vmem %s522, 145 [#allocation2]
      %v1127 = vld [vmem:[%s1126] ss:$2 sm:$0xff]
      %s1128 = scalar_lea.vmem %s522, 193 [#allocation2]
      %v1129 = vld [vmem:[%s1128] ss:$2 sm:$0xff]
      %s1130 = scalar_lea.vmem %s522, 241 [#allocation2]
      %v1131 = vld [vmem:[%s1130] ss:$2 sm:$0xff]
      %s1132 = scalar_lea.vmem %s522, 289 [#allocation2]
      %v1133 = vld [vmem:[%s1132] ss:$2 sm:$0xff]
      %s1134 = scalar_lea.vmem %s522, 337 [#allocation2]
      %v1135 = vld [vmem:[%s1134] ss:$2 sm:$0xff]
      %s1136 = scalar_lea.vmem %s4, 512
      %v1137 = vld [vmem:[%s1136] sm:$0xff]
      %v1138 = vld [vmem:[%s1136 + $0x8] sm:$0xff]
      %v1139 = vld [vmem:[%s1136 + $0x10] sm:$0xff]
      %v1140 = vld [vmem:[%s1136 + $0x18] sm:$0xff]
      %v1141 = vld [vmem:[%s1136 + $0x20] sm:$0xff]
      %v1142 = vld [vmem:[%s1136 + $0x28] sm:$0xff]
      %v1143 = vld [vmem:[%s1136 + $0x30] sm:$0xff]
      %v1144 = vld [vmem:[%s1136 + $0x38] sm:$0xff]
      %v1145 = vld [vmem:[%s1136 + $0x40] sm:$0xff]
      %v1146 = vld [vmem:[%s1136 + $0x48] sm:$0xff]
      %v1147 = vld [vmem:[%s1136 + $0x50] sm:$0xff]
      %v1148 = vld [vmem:[%s1136 + $0x58] sm:$0xff]
      %v1149 = vld [vmem:[%s1136 + $0x60] sm:$0xff]
      %v1150 = vld [vmem:[%s1136 + $0x68] sm:$0xff]
      %v1151 = vld [vmem:[%s1136 + $0x70] sm:$0xff]
      %v1152 = vld [vmem:[%s1136 + $0x78] sm:$0xff]
      %1153 = vmatprep.subr.mxu0 0.0
      %1154 = vmatpush1.msra.mxu0 %v1137
      %1155 = vmatprep.subr.mxu0 0.0
      %1156 = vmatpush1.msra.mxu0 %v1138
      %1157 = vmatprep.subr.mxu0 0.0
      %1158 = vmatpush1.msra.mxu0 %v1139
      %1159 = vmatprep.subr.mxu0 0.0
      %1160 = vmatpush1.msra.mxu0 %v1140
      %1161 = vmatprep.subr.mxu0 0.0
      %1162 = vmatpush1.msra.mxu0 %v1141
      %1163 = vmatprep.subr.mxu0 0.0
      %1164 = vmatpush1.msra.mxu0 %v1142
      %1165 = vmatprep.subr.mxu0 0.0
      %1166 = vmatpush1.msra.mxu0 %v1143
      %1167 = vmatprep.subr.mxu0 0.0
      %1168 = vmatpush1.msra.mxu0 %v1144
      %1169 = vmatprep.subr.mxu0 0.0
      %1170 = vmatpush1.msra.mxu0 %v1145
      %1171 = vmatprep.subr.mxu0 0.0
      %1172 = vmatpush1.msra.mxu0 %v1146
      %1173 = vmatprep.subr.mxu0 0.0
      %1174 = vmatpush1.msra.mxu0 %v1147
      %1175 = vmatprep.subr.mxu0 0.0
      %1176 = vmatpush1.msra.mxu0 %v1148
      %1177 = vmatprep.subr.mxu0 0.0
      %1178 = vmatpush1.msra.mxu0 %v1149
      %1179 = vmatprep.subr.mxu0 0.0
      %1180 = vmatpush1.msra.mxu0 %v1150
      %1181 = vmatprep.subr.mxu0 0.0
      %1182 = vmatpush1.msra.mxu0 %v1151
      %1183 = vmatprep.subr.mxu0 0.0
      %1184 = vmatpush1.msra.mxu0 %v1152
      %1185 = vmatprep.subr.mxu0 0.0
      %1186 = vmatpush1.msra.mxu0 0.0
      %1187 = vmatprep.subr.mxu0 0.0
      %1188 = vmatpush1.msra.mxu0 0.0
      %1189 = vmatprep.subr.mxu0 0.0
      %1190 = vmatpush1.msra.mxu0 0.0
      %1191 = vmatprep.subr.mxu0 0.0
      %1192 = vmatpush1.msra.mxu0 0.0
      %1193 = vmatprep.subr.mxu0 0.0
      %1194 = vmatpush1.msra.mxu0 0.0
      %1195 = vmatprep.subr.mxu0 0.0
      %1196 = vmatpush1.msra.mxu0 0.0
      %1197 = vmatprep.subr.mxu0 0.0
      %1198 = vmatpush1.msra.mxu0 0.0
      %1199 = vmatprep.subr.mxu0 0.0
      %1200 = vmatpush1.msra.mxu0 0.0
      %1201 = vmatprep.subr.mxu0 0.0
      %1202 = vmatpush1.msra.mxu0 0.0
      %1203 = vmatprep.subr.mxu0 0.0
      %1204 = vmatpush1.msra.mxu0 0.0
      %1205 = vmatprep.subr.mxu0 0.0
      %1206 = vmatpush1.msra.mxu0 0.0
      %1207 = vmatprep.subr.mxu0 0.0
      %1208 = vmatpush1.msra.mxu0 0.0
      %1209 = vmatprep.subr.mxu0 0.0
      %1210 = vmatpush1.msra.mxu0 0.0
      %1211 = vmatprep.subr.mxu0 0.0
      %1212 = vmatpush1.msra.mxu0 0.0
      %1213 = vmatprep.subr.mxu0 0.0
      %1214 = vmatpush1.msra.mxu0 0.0
      %1215 = vmatprep.subr.mxu0 0.0
      %1216 = vmatpush1.msra.mxu0 0.0
      %1217 = vmatprep.mubr.f32.mxu0 0.0
      %1218 = vmatmul.mubr.f32.gmra.mrb[0].mxu0 %v1121
      %v1219 = vpop.f32.mrb[0].mxu0
      %v1220 = vadd.f32 0.0, %v1219
      %v1221 = vpop.f32.mrb[0].mxu0
      %1222 = vmatprep.mubr.f32.mxu0 0.0
      %1223 = vmatmul.mubr.f32.gmra.mrb[0].mxu0 %v1123
      %v1224 = vpop.f32.mrb[0].mxu0
      %v1225 = vadd.f32 0.0, %v1224
      %v1226 = vpop.f32.mrb[0].mxu0
      %1227 = vmatprep.mubr.f32.mxu0 0.0
      %1228 = vmatmul.mubr.f32.gmra.mrb[0].mxu0 %v1125
      %v1229 = vpop.f32.mrb[0].mxu0
      %v1230 = vadd.f32 0.0, %v1229
      %v1231 = vpop.f32.mrb[0].mxu0
      %1232 = vmatprep.mubr.f32.mxu0 0.0
      %1233 = vmatmul.mubr.f32.gmra.mrb[0].mxu0 %v1127
      %v1234 = vpop.f32.mrb[0].mxu0
      %v1235 = vadd.f32 0.0, %v1234
      %v1236 = vpop.f32.mrb[0].mxu0
      %1237 = vmatprep.mubr.f32.mxu0 0.0
      %1238 = vmatmul.mubr.f32.gmra.mrb[0].mxu0 %v1129
      %v1239 = vpop.f32.mrb[0].mxu0
      %v1240 = vadd.f32 0.0, %v1239
      %v1241 = vpop.f32.mrb[0].mxu0
      %1242 = vmatprep.mubr.f32.mxu0 0.0
      %1243 = vmatmul.mubr.f32.gmra.mrb[0].mxu0 %v1131
      %v1244 = vpop.f32.mrb[0].mxu0
      %v1245 = vadd.f32 0.0, %v1244
      %v1246 = vpop.f32.mrb[0].mxu0
      %1247 = vmatprep.mubr.f32.mxu0 0.0
      %1248 = vmatmul.mubr.f32.gmra.mrb[0].mxu0 %v1133
      %v1249 = vpop.f32.mrb[0].mxu0
      %v1250 = vadd.f32 0.0, %v1249
      %v1251 = vpop.f32.mrb[0].mxu0
      %1252 = vmatprep.mubr.f32.mxu0 0.0
      %1253 = vmatmul.mubr.f32.gmra.mrb[0].mxu0 %v1135
      %v1254 = vpop.f32.mrb[0].mxu0
      %v1255 = vadd.f32 0.0, %v1254
      %v1256 = vpop.f32.mrb[0].mxu0
      %1257 = vdwg.mxu0
      %v1258 = vadd.f32 %v1112, %v1220
      %v1259 = vadd.f32 %v1113, %v1225
      %v1260 = vadd.f32 %v1114, %v1230
      %v1261 = vadd.f32 %v1115, %v1235
      %v1262 = vadd.f32 %v1116, %v1240
      %v1263 = vadd.f32 %v1117, %v1245
      %v1264 = vadd.f32 %v1118, %v1250
      %v1265 = vadd.f32 %v1119, %v1255
      %s1266 = scalar_lea.vmem %s522, 2 [#allocation2]
      %v1267 = vld [vmem:[%s1266] ss:$2 sm:$0xff]
      %s1268 = scalar_lea.vmem %s522, 50 [#allocation2]
      %v1269 = vld [vmem:[%s1268] ss:$2 sm:$0xff]
      %s1270 = scalar_lea.vmem %s522, 98 [#allocation2]
      %v1271 = vld [vmem:[%s1270] ss:$2 sm:$0xff]
      %s1272 = scalar_lea.vmem %s522, 146 [#allocation2]
      %v1273 = vld [vmem:[%s1272] ss:$2 sm:$0xff]
      %s1274 = scalar_lea.vmem %s522, 194 [#allocation2]
      %v1275 = vld [vmem:[%s1274] ss:$2 sm:$0xff]
      %s1276 = scalar_lea.vmem %s522, 242 [#allocation2]
      %v1277 = vld [vmem:[%s1276] ss:$2 sm:$0xff]
      %s1278 = scalar_lea.vmem %s522, 290 [#allocation2]
      %v1279 = vld [vmem:[%s1278] ss:$2 sm:$0xff]
      %s1280 = scalar_lea.vmem %s522, 338 [#allocation2]
      %v1281 = vld [vmem:[%s1280] ss:$2 sm:$0xff]
      %s1282 = scalar_lea.vmem %s4, 640
      %v1283 = vld [vmem:[%s1282] sm:$0xff]
      %v1284 = vld [vmem:[%s1282 + $0x8] sm:$0xff]
      %v1285 = vld [vmem:[%s1282 + $0x10] sm:$0xff]
      %v1286 = vld [vmem:[%s1282 + $0x18] sm:$0xff]
      %v1287 = vld [vmem:[%s1282 + $0x20] sm:$0xff]
      %v1288 = vld [vmem:[%s1282 + $0x28] sm:$0xff]
      %v1289 = vld [vmem:[%s1282 + $0x30] sm:$0xff]
      %v1290 = vld [vmem:[%s1282 + $0x38] sm:$0xff]
      %v1291 = vld [vmem:[%s1282 + $0x40] sm:$0xff]
      %v1292 = vld [vmem:[%s1282 + $0x48] sm:$0xff]
      %v1293 = vld [vmem:[%s1282 + $0x50] sm:$0xff]
      %v1294 = vld [vmem:[%s1282 + $0x58] sm:$0xff]
      %v1295 = vld [vmem:[%s1282 + $0x60] sm:$0xff]
      %v1296 = vld [vmem:[%s1282 + $0x68] sm:$0xff]
      %v1297 = vld [vmem:[%s1282 + $0x70] sm:$0xff]
      %v1298 = vld [vmem:[%s1282 + $0x78] sm:$0xff]
      %1299 = vmatprep.subr.mxu0 0.0
      %1300 = vmatpush1.msra.mxu0 %v1283
      %1301 = vmatprep.subr.mxu0 0.0
      %1302 = vmatpush1.msra.mxu0 %v1284
      %1303 = vmatprep.subr.mxu0 0.0
      %1304 = vmatpush1.msra.mxu0 %v1285
      %1305 = vmatprep.subr.mxu0 0.0
      %1306 = vmatpush1.msra.mxu0 %v1286
      %1307 = vmatprep.subr.mxu0 0.0
      %1308 = vmatpush1.msra.mxu0 %v1287
      %1309 = vmatprep.subr.mxu0 0.0
      %1310 = vmatpush1.msra.mxu0 %v1288
      %1311 = vmatprep.subr.mxu0 0.0
      %1312 = vmatpush1.msra.mxu0 %v1289
      %1313 = vmatprep.subr.mxu0 0.0
      %1314 = vmatpush1.msra.mxu0 %v1290
      %1315 = vmatprep.subr.mxu0 0.0
      %1316 = vmatpush1.msra.mxu0 %v1291
      %1317 = vmatprep.subr.mxu0 0.0
      %1318 = vmatpush1.msra.mxu0 %v1292
      %1319 = vmatprep.subr.mxu0 0.0
      %1320 = vmatpush1.msra.mxu0 %v1293
      %1321 = vmatprep.subr.mxu0 0.0
      %1322 = vmatpush1.msra.mxu0 %v1294
      %1323 = vmatprep.subr.mxu0 0.0
      %1324 = vmatpush1.msra.mxu0 %v1295
      %1325 = vmatprep.subr.mxu0 0.0
      %1326 = vmatpush1.msra.mxu0 %v1296
      %1327 = vmatprep.subr.mxu0 0.0
      %1328 = vmatpush1.msra.mxu0 %v1297
      %1329 = vmatprep.subr.mxu0 0.0
      %1330 = vmatpush1.msra.mxu0 %v1298
      %1331 = vmatprep.subr.mxu0 0.0
      %1332 = vmatpush1.msra.mxu0 0.0
      %1333 = vmatprep.subr.mxu0 0.0
      %1334 = vmatpush1.msra.mxu0 0.0
      %1335 = vmatprep.subr.mxu0 0.0
      %1336 = vmatpush1.msra.mxu0 0.0
      %1337 = vmatprep.subr.mxu0 0.0
      %1338 = vmatpush1.msra.mxu0 0.0
      %1339 = vmatprep.subr.mxu0 0.0
      %1340 = vmatpush1.msra.mxu0 0.0
      %1341 = vmatprep.subr.mxu0 0.0
      %1342 = vmatpush1.msra.mxu0 0.0
      %1343 = vmatprep.subr.mxu0 0.0
      %1344 = vmatpush1.msra.mxu0 0.0
      %1345 = vmatprep.subr.mxu0 0.0
      %1346 = vmatpush1.msra.mxu0 0.0
      %1347 = vmatprep.subr.mxu0 0.0
      %1348 = vmatpush1.msra.mxu0 0.0
      %1349 = vmatprep.subr.mxu0 0.0
      %1350 = vmatpush1.msra.mxu0 0.0
      %1351 = vmatprep.subr.mxu0 0.0
      %1352 = vmatpush1.msra.mxu0 0.0
      %1353 = vmatprep.subr.mxu0 0.0
      %1354 = vmatpush1.msra.mxu0 0.0
      %1355 = vmatprep.subr.mxu0 0.0
      %1356 = vmatpush1.msra.mxu0 0.0
      %1357 = vmatprep.subr.mxu0 0.0
      %1358 = vmatpush1.msra.mxu0 0.0
      %1359 = vmatprep.subr.mxu0 0.0
      %1360 = vmatpush1.msra.mxu0 0.0
      %1361 = vmatprep.subr.mxu0 0.0
      %1362 = vmatpush1.msra.mxu0 0.0
      %1363 = vmatprep.mubr.f32.mxu0 0.0
      %1364 = vmatmul.mubr.f32.gmra.mrb[0].mxu0 %v1267
      %v1365 = vpop.f32.mrb[0].mxu0
      %v1366 = vadd.f32 0.0, %v1365
      %v1367 = vpop.f32.mrb[0].mxu0
      %1368 = vmatprep.mubr.f32.mxu0 0.0
      %1369 = vmatmul.mubr.f32.gmra.mrb[0].mxu0 %v1269
      %v1370 = vpop.f32.mrb[0].mxu0
      %v1371 = vadd.f32 0.0, %v1370
      %v1372 = vpop.f32.mrb[0].mxu0
      %1373 = vmatprep.mubr.f32.mxu0 0.0
      %1374 = vmatmul.mubr.f32.gmra.mrb[0].mxu0 %v1271
      %v1375 = vpop.f32.mrb[0].mxu0
      %v1376 = vadd.f32 0.0, %v1375
      %v1377 = vpop.f32.mrb[0].mxu0
      %1378 = vmatprep.mubr.f32.mxu0 0.0
      %1379 = vmatmul.mubr.f32.gmra.mrb[0].mxu0 %v1273
      %v1380 = vpop.f32.mrb[0].mxu0
      %v1381 = vadd.f32 0.0, %v1380
      %v1382 = vpop.f32.mrb[0].mxu0
      %1383 = vmatprep.mubr.f32.mxu0 0.0
      %1384 = vmatmul.mubr.f32.gmra.mrb[0].mxu0 %v1275
      %v1385 = vpop.f32.mrb[0].mxu0
      %v1386 = vadd.f32 0.0, %v1385
      %v1387 = vpop.f32.mrb[0].mxu0
      %1388 = vmatprep.mubr.f32.mxu0 0.0
      %1389 = vmatmul.mubr.f32.gmra.mrb[0].mxu0 %v1277
      %v1390 = vpop.f32.mrb[0].mxu0
      %v1391 = vadd.f32 0.0, %v1390
      %v1392 = vpop.f32.mrb[0].mxu0
      %1393 = vmatprep.mubr.f32.mxu0 0.0
      %1394 = vmatmul.mubr.f32.gmra.mrb[0].mxu0 %v1279
      %v1395 = vpop.f32.mrb[0].mxu0
      %v1396 = vadd.f32 0.0, %v1395
      %v1397 = vpop.f32.mrb[0].mxu0
      %1398 = vmatprep.mubr.f32.mxu0 0.0
      %1399 = vmatmul.mubr.f32.gmra.mrb[0].mxu0 %v1281
      %v1400 = vpop.f32.mrb[0].mxu0
      %v1401 = vadd.f32 0.0, %v1400
      %v1402 = vpop.f32.mrb[0].mxu0
      %1403 = vdwg.mxu0
      %v1404 = vadd.f32 %v1258, %v1366
      %v1405 = vadd.f32 %v1259, %v1371
      %v1406 = vadd.f32 %v1260, %v1376
      %v1407 = vadd.f32 %v1261, %v1381
      %v1408 = vadd.f32 %v1262, %v1386
      %v1409 = vadd.f32 %v1263, %v1391
      %v1410 = vadd.f32 %v1264, %v1396
      %v1411 = vadd.f32 %v1265, %v1401
      %s1412 = scalar_lea.vmem [#allocation2], 48
      %v1413 = vld [vmem:[%s1412] ss:$2 sm:$0xff]
      %s1414 = scalar_lea.vmem %s1412, 48 [#allocation2]
      %v1415 = vld [vmem:[%s1414] ss:$2 sm:$0xff]
      %s1416 = scalar_lea.vmem %s1412, 96 [#allocation2]
      %v1417 = vld [vmem:[%s1416] ss:$2 sm:$0xff]
      %s1418 = scalar_lea.vmem %s1412, 144 [#allocation2]
      %v1419 = vld [vmem:[%s1418] ss:$2 sm:$0xff]
      %s1420 = scalar_lea.vmem %s1412, 192 [#allocation2]
      %v1421 = vld [vmem:[%s1420] ss:$2 sm:$0xff]
      %s1422 = scalar_lea.vmem %s1412, 240 [#allocation2]
      %v1423 = vld [vmem:[%s1422] ss:$2 sm:$0xff]
      %s1424 = scalar_lea.vmem %s1412, 288 [#allocation2]
      %v1425 = vld [vmem:[%s1424] ss:$2 sm:$0xff]
      %s1426 = scalar_lea.vmem %s1412, 336 [#allocation2]
      %v1427 = vld [vmem:[%s1426] ss:$2 sm:$0xff]
      %s1428 = scalar_lea.vmem %s4, 768
      %v1429 = vld [vmem:[%s1428] sm:$0xff]
      %v1430 = vld [vmem:[%s1428 + $0x8] sm:$0xff]
      %v1431 = vld [vmem:[%s1428 + $0x10] sm:$0xff]
      %v1432 = vld [vmem:[%s1428 + $0x18] sm:$0xff]
      %v1433 = vld [vmem:[%s1428 + $0x20] sm:$0xff]
      %v1434 = vld [vmem:[%s1428 + $0x28] sm:$0xff]
      %v1435 = vld [vmem:[%s1428 + $0x30] sm:$0xff]
      %v1436 = vld [vmem:[%s1428 + $0x38] sm:$0xff]
      %v1437 = vld [vmem:[%s1428 + $0x40] sm:$0xff]
      %v1438 = vld [vmem:[%s1428 + $0x48] sm:$0xff]
      %v1439 = vld [vmem:[%s1428 + $0x50] sm:$0xff]
      %v1440 = vld [vmem:[%s1428 + $0x58] sm:$0xff]
      %v1441 = vld [vmem:[%s1428 + $0x60] sm:$0xff]
      %v1442 = vld [vmem:[%s1428 + $0x68] sm:$0xff]
      %v1443 = vld [vmem:[%s1428 + $0x70] sm:$0xff]
      %v1444 = vld [vmem:[%s1428 + $0x78] sm:$0xff]
      %1445 = vmatprep.subr.mxu0 0.0
      %1446 = vmatpush1.msra.mxu0 %v1429
      %1447 = vmatprep.subr.mxu0 0.0
      %1448 = vmatpush1.msra.mxu0 %v1430
      %1449 = vmatprep.subr.mxu0 0.0
      %1450 = vmatpush1.msra.mxu0 %v1431
      %1451 = vmatprep.subr.mxu0 0.0
      %1452 = vmatpush1.msra.mxu0 %v1432
      %1453 = vmatprep.subr.mxu0 0.0
      %1454 = vmatpush1.msra.mxu0 %v1433
      %1455 = vmatprep.subr.mxu0 0.0
      %1456 = vmatpush1.msra.mxu0 %v1434
      %1457 = vmatprep.subr.mxu0 0.0
      %1458 = vmatpush1.msra.mxu0 %v1435
      %1459 = vmatprep.subr.mxu0 0.0
      %1460 = vmatpush1.msra.mxu0 %v1436
      %1461 = vmatprep.subr.mxu0 0.0
      %1462 = vmatpush1.msra.mxu0 %v1437
      %1463 = vmatprep.subr.mxu0 0.0
      %1464 = vmatpush1.msra.mxu0 %v1438
      %1465 = vmatprep.subr.mxu0 0.0
      %1466 = vmatpush1.msra.mxu0 %v1439
      %1467 = vmatprep.subr.mxu0 0.0
      %1468 = vmatpush1.msra.mxu0 %v1440
      %1469 = vmatprep.subr.mxu0 0.0
      %1470 = vmatpush1.msra.mxu0 %v1441
      %1471 = vmatprep.subr.mxu0 0.0
      %1472 = vmatpush1.msra.mxu0 %v1442
      %1473 = vmatprep.subr.mxu0 0.0
      %1474 = vmatpush1.msra.mxu0 %v1443
      %1475 = vmatprep.subr.mxu0 0.0
      %1476 = vmatpush1.msra.mxu0 %v1444
      %1477 = vmatprep.subr.mxu0 0.0
      %1478 = vmatpush1.msra.mxu0 0.0
      %1479 = vmatprep.subr.mxu0 0.0
      %1480 = vmatpush1.msra.mxu0 0.0
      %1481 = vmatprep.subr.mxu0 0.0
      %1482 = vmatpush1.msra.mxu0 0.0
      %1483 = vmatprep.subr.mxu0 0.0
      %1484 = vmatpush1.msra.mxu0 0.0
      %1485 = vmatprep.subr.mxu0 0.0
      %1486 = vmatpush1.msra.mxu0 0.0
      %1487 = vmatprep.subr.mxu0 0.0
      %1488 = vmatpush1.msra.mxu0 0.0
      %1489 = vmatprep.subr.mxu0 0.0
      %1490 = vmatpush1.msra.mxu0 0.0
      %1491 = vmatprep.subr.mxu0 0.0
      %1492 = vmatpush1.msra.mxu0 0.0
      %1493 = vmatprep.subr.mxu0 0.0
      %1494 = vmatpush1.msra.mxu0 0.0
      %1495 = vmatprep.subr.mxu0 0.0
      %1496 = vmatpush1.msra.mxu0 0.0
      %1497 = vmatprep.subr.mxu0 0.0
      %1498 = vmatpush1.msra.mxu0 0.0
      %1499 = vmatprep.subr.mxu0 0.0
      %1500 = vmatpush1.msra.mxu0 0.0
      %1501 = vmatprep.subr.mxu0 0.0
      %1502 = vmatpush1.msra.mxu0 0.0
      %1503 = vmatprep.subr.mxu0 0.0
      %1504 = vmatpush1.msra.mxu0 0.0
      %1505 = vmatprep.subr.mxu0 0.0
      %1506 = vmatpush1.msra.mxu0 0.0
      %1507 = vmatprep.subr.mxu0 0.0
      %1508 = vmatpush1.msra.mxu0 0.0
      %1509 = vmatprep.mubr.f32.mxu0 0.0
      %1510 = vmatmul.mubr.f32.gmra.mrb[0].mxu0 %v1413
      %v1511 = vpop.f32.mrb[0].mxu0
      %v1512 = vadd.f32 0.0, %v1511
      %v1513 = vpop.f32.mrb[0].mxu0
      %1514 = vmatprep.mubr.f32.mxu0 0.0
      %1515 = vmatmul.mubr.f32.gmra.mrb[0].mxu0 %v1415
      %v1516 = vpop.f32.mrb[0].mxu0
      %v1517 = vadd.f32 0.0, %v1516
      %v1518 = vpop.f32.mrb[0].mxu0
      %1519 = vmatprep.mubr.f32.mxu0 0.0
      %1520 = vmatmul.mubr.f32.gmra.mrb[0].mxu0 %v1417
      %v1521 = vpop.f32.mrb[0].mxu0
      %v1522 = vadd.f32 0.0, %v1521
      %v1523 = vpop.f32.mrb[0].mxu0
      %1524 = vmatprep.mubr.f32.mxu0 0.0
      %1525 = vmatmul.mubr.f32.gmra.mrb[0].mxu0 %v1419
      %v1526 = vpop.f32.mrb[0].mxu0
      %v1527 = vadd.f32 0.0, %v1526
      %v1528 = vpop.f32.mrb[0].mxu0
      %1529 = vmatprep.mubr.f32.mxu0 0.0
      %1530 = vmatmul.mubr.f32.gmra.mrb[0].mxu0 %v1421
      %v1531 = vpop.f32.mrb[0].mxu0
      %v1532 = vadd.f32 0.0, %v1531
      %v1533 = vpop.f32.mrb[0].mxu0
      %1534 = vmatprep.mubr.f32.mxu0 0.0
      %1535 = vmatmul.mubr.f32.gmra.mrb[0].mxu0 %v1423
      %v1536 = vpop.f32.mrb[0].mxu0
      %v1537 = vadd.f32 0.0, %v1536
      %v1538 = vpop.f32.mrb[0].mxu0
      %1539 = vmatprep.mubr.f32.mxu0 0.0
      %1540 = vmatmul.mubr.f32.gmra.mrb[0].mxu0 %v1425
      %v1541 = vpop.f32.mrb[0].mxu0
      %v1542 = vadd.f32 0.0, %v1541
      %v1543 = vpop.f32.mrb[0].mxu0
      %1544 = vmatprep.mubr.f32.mxu0 0.0
      %1545 = vmatmul.mubr.f32.gmra.mrb[0].mxu0 %v1427
      %v1546 = vpop.f32.mrb[0].mxu0
      %v1547 = vadd.f32 0.0, %v1546
      %v1548 = vpop.f32.mrb[0].mxu0
      %1549 = vdwg.mxu0
      %v1550 = vadd.f32 %v1404, %v1512
      %v1551 = vadd.f32 %v1405, %v1517
      %v1552 = vadd.f32 %v1406, %v1522
      %v1553 = vadd.f32 %v1407, %v1527
      %v1554 = vadd.f32 %v1408, %v1532
      %v1555 = vadd.f32 %v1409, %v1537
      %v1556 = vadd.f32 %v1410, %v1542
      %v1557 = vadd.f32 %v1411, %v1547
      %s1558 = scalar_lea.vmem %s1412, 1 [#allocation2]
      %v1559 = vld [vmem:[%s1558] ss:$2 sm:$0xff]
      %s1560 = scalar_lea.vmem %s1412, 49 [#allocation2]
      %v1561 = vld [vmem:[%s1560] ss:$2 sm:$0xff]
      %s1562 = scalar_lea.vmem %s1412, 97 [#allocation2]
      %v1563 = vld [vmem:[%s1562] ss:$2 sm:$0xff]
      %s1564 = scalar_lea.vmem %s1412, 145 [#allocation2]
      %v1565 = vld [vmem:[%s1564] ss:$2 sm:$0xff]
      %s1566 = scalar_lea.vmem %s1412, 193 [#allocation2]
      %v1567 = vld [vmem:[%s1566] ss:$2 sm:$0xff]
      %s1568 = scalar_lea.vmem %s1412, 241 [#allocation2]
      %v1569 = vld [vmem:[%s1568] ss:$2 sm:$0xff]
      %s1570 = scalar_lea.vmem %s1412, 289 [#allocation2]
      %v1571 = vld [vmem:[%s1570] ss:$2 sm:$0xff]
      %s1572 = scalar_lea.vmem %s1412, 337 [#allocation2]
      %v1573 = vld [vmem:[%s1572] ss:$2 sm:$0xff]
      %s1574 = scalar_lea.vmem %s4, 896
      %v1575 = vld [vmem:[%s1574] sm:$0xff]
      %v1576 = vld [vmem:[%s1574 + $0x8] sm:$0xff]
      %v1577 = vld [vmem:[%s1574 + $0x10] sm:$0xff]
      %v1578 = vld [vmem:[%s1574 + $0x18] sm:$0xff]
      %v1579 = vld [vmem:[%s1574 + $0x20] sm:$0xff]
      %v1580 = vld [vmem:[%s1574 + $0x28] sm:$0xff]
      %v1581 = vld [vmem:[%s1574 + $0x30] sm:$0xff]
      %v1582 = vld [vmem:[%s1574 + $0x38] sm:$0xff]
      %v1583 = vld [vmem:[%s1574 + $0x40] sm:$0xff]
      %v1584 = vld [vmem:[%s1574 + $0x48] sm:$0xff]
      %v1585 = vld [vmem:[%s1574 + $0x50] sm:$0xff]
      %v1586 = vld [vmem:[%s1574 + $0x58] sm:$0xff]
      %v1587 = vld [vmem:[%s1574 + $0x60] sm:$0xff]
      %v1588 = vld [vmem:[%s1574 + $0x68] sm:$0xff]
      %v1589 = vld [vmem:[%s1574 + $0x70] sm:$0xff]
      %v1590 = vld [vmem:[%s1574 + $0x78] sm:$0xff]
      %1591 = vmatprep.subr.mxu0 0.0
      %1592 = vmatpush1.msra.mxu0 %v1575
      %1593 = vmatprep.subr.mxu0 0.0
      %1594 = vmatpush1.msra.mxu0 %v1576
      %1595 = vmatprep.subr.mxu0 0.0
      %1596 = vmatpush1.msra.mxu0 %v1577
      %1597 = vmatprep.subr.mxu0 0.0
      %1598 = vmatpush1.msra.mxu0 %v1578
      %1599 = vmatprep.subr.mxu0 0.0
      %1600 = vmatpush1.msra.mxu0 %v1579
      %1601 = vmatprep.subr.mxu0 0.0
      %1602 = vmatpush1.msra.mxu0 %v1580
      %1603 = vmatprep.subr.mxu0 0.0
      %1604 = vmatpush1.msra.mxu0 %v1581
      %1605 = vmatprep.subr.mxu0 0.0
      %1606 = vmatpush1.msra.mxu0 %v1582
      %1607 = vmatprep.subr.mxu0 0.0
      %1608 = vmatpush1.msra.mxu0 %v1583
      %1609 = vmatprep.subr.mxu0 0.0
      %1610 = vmatpush1.msra.mxu0 %v1584
      %1611 = vmatprep.subr.mxu0 0.0
      %1612 = vmatpush1.msra.mxu0 %v1585
      %1613 = vmatprep.subr.mxu0 0.0
      %1614 = vmatpush1.msra.mxu0 %v1586
      %1615 = vmatprep.subr.mxu0 0.0
      %1616 = vmatpush1.msra.mxu0 %v1587
      %1617 = vmatprep.subr.mxu0 0.0
      %1618 = vmatpush1.msra.mxu0 %v1588
      %1619 = vmatprep.subr.mxu0 0.0
      %1620 = vmatpush1.msra.mxu0 %v1589
      %1621 = vmatprep.subr.mxu0 0.0
      %1622 = vmatpush1.msra.mxu0 %v1590
      %1623 = vmatprep.subr.mxu0 0.0
      %1624 = vmatpush1.msra.mxu0 0.0
      %1625 = vmatprep.subr.mxu0 0.0
      %1626 = vmatpush1.msra.mxu0 0.0
      %1627 = vmatprep.subr.mxu0 0.0
      %1628 = vmatpush1.msra.mxu0 0.0
      %1629 = vmatprep.subr.mxu0 0.0
      %1630 = vmatpush1.msra.mxu0 0.0
      %1631 = vmatprep.subr.mxu0 0.0
      %1632 = vmatpush1.msra.mxu0 0.0
      %1633 = vmatprep.subr.mxu0 0.0
      %1634 = vmatpush1.msra.mxu0 0.0
      %1635 = vmatprep.subr.mxu0 0.0
      %1636 = vmatpush1.msra.mxu0 0.0
      %1637 = vmatprep.subr.mxu0 0.0
      %1638 = vmatpush1.msra.mxu0 0.0
      %1639 = vmatprep.subr.mxu0 0.0
      %1640 = vmatpush1.msra.mxu0 0.0
      %1641 = vmatprep.subr.mxu0 0.0
      %1642 = vmatpush1.msra.mxu0 0.0
      %1643 = vmatprep.subr.mxu0 0.0
      %1644 = vmatpush1.msra.mxu0 0.0
      %1645 = vmatprep.subr.mxu0 0.0
      %1646 = vmatpush1.msra.mxu0 0.0
      %1647 = vmatprep.subr.mxu0 0.0
      %1648 = vmatpush1.msra.mxu0 0.0
      %1649 = vmatprep.subr.mxu0 0.0
      %1650 = vmatpush1.msra.mxu0 0.0
      %1651 = vmatprep.subr.mxu0 0.0
      %1652 = vmatpush1.msra.mxu0 0.0
      %1653 = vmatprep.subr.mxu0 0.0
      %1654 = vmatpush1.msra.mxu0 0.0
      %1655 = vmatprep.mubr.f32.mxu0 0.0
      %1656 = vmatmul.mubr.f32.gmra.mrb[0].mxu0 %v1559
      %v1657 = vpop.f32.mrb[0].mxu0
      %v1658 = vadd.f32 0.0, %v1657
      %v1659 = vpop.f32.mrb[0].mxu0
      %1660 = vmatprep.mubr.f32.mxu0 0.0
      %1661 = vmatmul.mubr.f32.gmra.mrb[0].mxu0 %v1561
      %v1662 = vpop.f32.mrb[0].mxu0
      %v1663 = vadd.f32 0.0, %v1662
      %v1664 = vpop.f32.mrb[0].mxu0
      %1665 = vmatprep.mubr.f32.mxu0 0.0
      %1666 = vmatmul.mubr.f32.gmra.mrb[0].mxu0 %v1563
      %v1667 = vpop.f32.mrb[0].mxu0
      %v1668 = vadd.f32 0.0, %v1667
      %v1669 = vpop.f32.mrb[0].mxu0
      %1670 = vmatprep.mubr.f32.mxu0 0.0
      %1671 = vmatmul.mubr.f32.gmra.mrb[0].mxu0 %v1565
      %v1672 = vpop.f32.mrb[0].mxu0
      %v1673 = vadd.f32 0.0, %v1672
      %v1674 = vpop.f32.mrb[0].mxu0
      %1675 = vmatprep.mubr.f32.mxu0 0.0
      %1676 = vmatmul.mubr.f32.gmra.mrb[0].mxu0 %v1567
      %v1677 = vpop.f32.mrb[0].mxu0
      %v1678 = vadd.f32 0.0, %v1677
      %v1679 = vpop.f32.mrb[0].mxu0
      %1680 = vmatprep.mubr.f32.mxu0 0.0
      %1681 = vmatmul.mubr.f32.gmra.mrb[0].mxu0 %v1569
      %v1682 = vpop.f32.mrb[0].mxu0
      %v1683 = vadd.f32 0.0, %v1682
      %v1684 = vpop.f32.mrb[0].mxu0
      %1685 = vmatprep.mubr.f32.mxu0 0.0
      %1686 = vmatmul.mubr.f32.gmra.mrb[0].mxu0 %v1571
      %v1687 = vpop.f32.mrb[0].mxu0
      %v1688 = vadd.f32 0.0, %v1687
      %v1689 = vpop.f32.mrb[0].mxu0
      %1690 = vmatprep.mubr.f32.mxu0 0.0
      %1691 = vmatmul.mubr.f32.gmra.mrb[0].mxu0 %v1573
      %v1692 = vpop.f32.mrb[0].mxu0
      %v1693 = vadd.f32 0.0, %v1692
      %v1694 = vpop.f32.mrb[0].mxu0
      %1695 = vdwg.mxu0
      %v1696 = vadd.f32 %v1550, %v1658
      %v1697 = vadd.f32 %v1551, %v1663
      %v1698 = vadd.f32 %v1552, %v1668
      %v1699 = vadd.f32 %v1553, %v1673
      %v1700 = vadd.f32 %v1554, %v1678
      %v1701 = vadd.f32 %v1555, %v1683
      %v1702 = vadd.f32 %v1556, %v1688
      %v1703 = vadd.f32 %v1557, %v1693
      %s1704 = scalar_lea.vmem %s1412, 2 [#allocation2]
      %v1705 = vld [vmem:[%s1704] ss:$2 sm:$0xff]
      %s1706 = scalar_lea.vmem %s1412, 50 [#allocation2]
      %v1707 = vld [vmem:[%s1706] ss:$2 sm:$0xff]
      %s1708 = scalar_lea.vmem %s1412, 98 [#allocation2]
      %v1709 = vld [vmem:[%s1708] ss:$2 sm:$0xff]
      %s1710 = scalar_lea.vmem %s1412, 146 [#allocation2]
      %v1711 = vld [vmem:[%s1710] ss:$2 sm:$0xff]
      %s1712 = scalar_lea.vmem %s1412, 194 [#allocation2]
      %v1713 = vld [vmem:[%s1712] ss:$2 sm:$0xff]
      %s1714 = scalar_lea.vmem %s1412, 242 [#allocation2]
      %v1715 = vld [vmem:[%s1714] ss:$2 sm:$0xff]
      %s1716 = scalar_lea.vmem %s1412, 290 [#allocation2]
      %v1717 = vld [vmem:[%s1716] ss:$2 sm:$0xff]
      %s1718 = scalar_lea.vmem %s1412, 338 [#allocation2]
      %v1719 = vld [vmem:[%s1718] ss:$2 sm:$0xff]
      %s1720 = scalar_lea.vmem %s4, 1024
      %v1721 = vld [vmem:[%s1720] sm:$0xff]
      %v1722 = vld [vmem:[%s1720 + $0x8] sm:$0xff]
      %v1723 = vld [vmem:[%s1720 + $0x10] sm:$0xff]
      %v1724 = vld [vmem:[%s1720 + $0x18] sm:$0xff]
      %v1725 = vld [vmem:[%s1720 + $0x20] sm:$0xff]
      %v1726 = vld [vmem:[%s1720 + $0x28] sm:$0xff]
      %v1727 = vld [vmem:[%s1720 + $0x30] sm:$0xff]
      %v1728 = vld [vmem:[%s1720 + $0x38] sm:$0xff]
      %v1729 = vld [vmem:[%s1720 + $0x40] sm:$0xff]
      %v1730 = vld [vmem:[%s1720 + $0x48] sm:$0xff]
      %v1731 = vld [vmem:[%s1720 + $0x50] sm:$0xff]
      %v1732 = vld [vmem:[%s1720 + $0x58] sm:$0xff]
      %v1733 = vld [vmem:[%s1720 + $0x60] sm:$0xff]
      %v1734 = vld [vmem:[%s1720 + $0x68] sm:$0xff]
      %v1735 = vld [vmem:[%s1720 + $0x70] sm:$0xff]
      %v1736 = vld [vmem:[%s1720 + $0x78] sm:$0xff]
      %1737 = vmatprep.subr.mxu0 0.0
      %1738 = vmatpush1.msra.mxu0 %v1721
      %1739 = vmatprep.subr.mxu0 0.0
      %1740 = vmatpush1.msra.mxu0 %v1722
      %1741 = vmatprep.subr.mxu0 0.0
      %1742 = vmatpush1.msra.mxu0 %v1723
      %1743 = vmatprep.subr.mxu0 0.0
      %1744 = vmatpush1.msra.mxu0 %v1724
      %1745 = vmatprep.subr.mxu0 0.0
      %1746 = vmatpush1.msra.mxu0 %v1725
      %1747 = vmatprep.subr.mxu0 0.0
      %1748 = vmatpush1.msra.mxu0 %v1726
      %1749 = vmatprep.subr.mxu0 0.0
      %1750 = vmatpush1.msra.mxu0 %v1727
      %1751 = vmatprep.subr.mxu0 0.0
      %1752 = vmatpush1.msra.mxu0 %v1728
      %1753 = vmatprep.subr.mxu0 0.0
      %1754 = vmatpush1.msra.mxu0 %v1729
      %1755 = vmatprep.subr.mxu0 0.0
      %1756 = vmatpush1.msra.mxu0 %v1730
      %1757 = vmatprep.subr.mxu0 0.0
      %1758 = vmatpush1.msra.mxu0 %v1731
      %1759 = vmatprep.subr.mxu0 0.0
      %1760 = vmatpush1.msra.mxu0 %v1732
      %1761 = vmatprep.subr.mxu0 0.0
      %1762 = vmatpush1.msra.mxu0 %v1733
      %1763 = vmatprep.subr.mxu0 0.0
      %1764 = vmatpush1.msra.mxu0 %v1734
      %1765 = vmatprep.subr.mxu0 0.0
      %1766 = vmatpush1.msra.mxu0 %v1735
      %1767 = vmatprep.subr.mxu0 0.0
      %1768 = vmatpush1.msra.mxu0 %v1736
      %1769 = vmatprep.subr.mxu0 0.0
      %1770 = vmatpush1.msra.mxu0 0.0
      %1771 = vmatprep.subr.mxu0 0.0
      %1772 = vmatpush1.msra.mxu0 0.0
      %1773 = vmatprep.subr.mxu0 0.0
      %1774 = vmatpush1.msra.mxu0 0.0
      %1775 = vmatprep.subr.mxu0 0.0
      %1776 = vmatpush1.msra.mxu0 0.0
      %1777 = vmatprep.subr.mxu0 0.0
      %1778 = vmatpush1.msra.mxu0 0.0
      %1779 = vmatprep.subr.mxu0 0.0
      %1780 = vmatpush1.msra.mxu0 0.0
      %1781 = vmatprep.subr.mxu0 0.0
      %1782 = vmatpush1.msra.mxu0 0.0
      %1783 = vmatprep.subr.mxu0 0.0
      %1784 = vmatpush1.msra.mxu0 0.0
      %1785 = vmatprep.subr.mxu0 0.0
      %1786 = vmatpush1.msra.mxu0 0.0
      %1787 = vmatprep.subr.mxu0 0.0
      %1788 = vmatpush1.msra.mxu0 0.0
      %1789 = vmatprep.subr.mxu0 0.0
      %1790 = vmatpush1.msra.mxu0 0.0
      %1791 = vmatprep.subr.mxu0 0.0
      %1792 = vmatpush1.msra.mxu0 0.0
      %1793 = vmatprep.subr.mxu0 0.0
      %1794 = vmatpush1.msra.mxu0 0.0
      %1795 = vmatprep.subr.mxu0 0.0
      %1796 = vmatpush1.msra.mxu0 0.0
      %1797 = vmatprep.subr.mxu0 0.0
      %1798 = vmatpush1.msra.mxu0 0.0
      %1799 = vmatprep.subr.mxu0 0.0
      %1800 = vmatpush1.msra.mxu0 0.0
      %1801 = vmatprep.mubr.f32.mxu0 0.0
      %1802 = vmatmul.mubr.f32.gmra.mrb[0].mxu0 %v1705
      %v1803 = vpop.f32.mrb[0].mxu0
      %v1804 = vadd.f32 0.0, %v1803
      %v1805 = vpop.f32.mrb[0].mxu0
      %1806 = vmatprep.mubr.f32.mxu0 0.0
      %1807 = vmatmul.mubr.f32.gmra.mrb[0].mxu0 %v1707
      %v1808 = vpop.f32.mrb[0].mxu0
      %v1809 = vadd.f32 0.0, %v1808
      %v1810 = vpop.f32.mrb[0].mxu0
      %1811 = vmatprep.mubr.f32.mxu0 0.0
      %1812 = vmatmul.mubr.f32.gmra.mrb[0].mxu0 %v1709
      %v1813 = vpop.f32.mrb[0].mxu0
      %v1814 = vadd.f32 0.0, %v1813
      %v1815 = vpop.f32.mrb[0].mxu0
      %1816 = vmatprep.mubr.f32.mxu0 0.0
      %1817 = vmatmul.mubr.f32.gmra.mrb[0].mxu0 %v1711
      %v1818 = vpop.f32.mrb[0].mxu0
      %v1819 = vadd.f32 0.0, %v1818
      %v1820 = vpop.f32.mrb[0].mxu0
      %1821 = vmatprep.mubr.f32.mxu0 0.0
      %1822 = vmatmul.mubr.f32.gmra.mrb[0].mxu0 %v1713
      %v1823 = vpop.f32.mrb[0].mxu0
      %v1824 = vadd.f32 0.0, %v1823
      %v1825 = vpop.f32.mrb[0].mxu0
      %1826 = vmatprep.mubr.f32.mxu0 0.0
      %1827 = vmatmul.mubr.f32.gmra.mrb[0].mxu0 %v1715
      %v1828 = vpop.f32.mrb[0].mxu0
      %v1829 = vadd.f32 0.0, %v1828
      %v1830 = vpop.f32.mrb[0].mxu0
      %1831 = vmatprep.mubr.f32.mxu0 0.0
      %1832 = vmatmul.mubr.f32.gmra.mrb[0].mxu0 %v1717
      %v1833 = vpop.f32.mrb[0].mxu0
      %v1834 = vadd.f32 0.0, %v1833
      %v1835 = vpop.f32.mrb[0].mxu0
      %1836 = vmatprep.mubr.f32.mxu0 0.0
      %1837 = vmatmul.mubr.f32.gmra.mrb[0].mxu0 %v1719
      %v1838 = vpop.f32.mrb[0].mxu0
      %v1839 = vadd.f32 0.0, %v1838
      %v1840 = vpop.f32.mrb[0].mxu0
      %1841 = vdwg.mxu0
      %v1842 = vadd.f32 %v1696, %v1804
      %v1843 = vadd.f32 %v1697, %v1809
      %v1844 = vadd.f32 %v1698, %v1814
      %v1845 = vadd.f32 %v1699, %v1819
      %v1846 = vadd.f32 %v1700, %v1824
      %v1847 = vadd.f32 %v1701, %v1829
      %v1848 = vadd.f32 %v1702, %v1834
      %v1849 = vadd.f32 %v1703, %v1839
      %v1850 = vld [vmem:[%s320] ss:$2 sm:$0xff]
      %s1851 = scalar_lea.vmem %s320, 32
      %v1852 = vld [vmem:[%s1851] ss:$2 sm:$0xff]
      %s1853 = scalar_lea.vmem %s320, 64
      %v1854 = vld [vmem:[%s1853] ss:$2 sm:$0xff]
      %s1855 = scalar_lea.vmem %s320, 96
      %v1856 = vld [vmem:[%s1855] ss:$2 sm:$0xff]
      %s1857 = scalar_lea.vmem %s320, 128
      %v1858 = vld [vmem:[%s1857] ss:$2 sm:$0xff]
      %s1859 = scalar_lea.vmem %s320, 160
      %v1860 = vld [vmem:[%s1859] ss:$2 sm:$0xff]
      %s1861 = scalar_lea.vmem %s320, 192
      %v1862 = vld [vmem:[%s1861] ss:$2 sm:$0xff]
      %s1863 = scalar_lea.vmem %s320, 224
      %v1864 = vld [vmem:[%s1863] ss:$2 sm:$0xff]
      %v1865 = vld [vmem:[%s6] sm:$0xff]
      %v1866 = vld [vmem:[%s6 + $0x8] sm:$0xff]
      %v1867 = vld [vmem:[%s6 + $0x10] sm:$0xff]
      %v1868 = vld [vmem:[%s6 + $0x18] sm:$0xff]
      %v1869 = vld [vmem:[%s6 + $0x20] sm:$0xff]
      %v1870 = vld [vmem:[%s6 + $0x28] sm:$0xff]
      %v1871 = vld [vmem:[%s6 + $0x30] sm:$0xff]
      %v1872 = vld [vmem:[%s6 + $0x38] sm:$0xff]
      %v1873 = vld [vmem:[%s6 + $0x40] sm:$0xff]
      %v1874 = vld [vmem:[%s6 + $0x48] sm:$0xff]
      %v1875 = vld [vmem:[%s6 + $0x50] sm:$0xff]
      %v1876 = vld [vmem:[%s6 + $0x58] sm:$0xff]
      %v1877 = vld [vmem:[%s6 + $0x60] sm:$0xff]
      %v1878 = vld [vmem:[%s6 + $0x68] sm:$0xff]
      %v1879 = vld [vmem:[%s6 + $0x70] sm:$0xff]
      %v1880 = vld [vmem:[%s6 + $0x78] sm:$0xff]
      %1881 = vmatprep.subr.mxu0 0.0
      %1882 = vmatpush1.msra.mxu0 %v1865
      %1883 = vmatprep.subr.mxu0 0.0
      %1884 = vmatpush1.msra.mxu0 %v1866
      %1885 = vmatprep.subr.mxu0 0.0
      %1886 = vmatpush1.msra.mxu0 %v1867
      %1887 = vmatprep.subr.mxu0 0.0
      %1888 = vmatpush1.msra.mxu0 %v1868
      %1889 = vmatprep.subr.mxu0 0.0
      %1890 = vmatpush1.msra.mxu0 %v1869
      %1891 = vmatprep.subr.mxu0 0.0
      %1892 = vmatpush1.msra.mxu0 %v1870
      %1893 = vmatprep.subr.mxu0 0.0
      %1894 = vmatpush1.msra.mxu0 %v1871
      %1895 = vmatprep.subr.mxu0 0.0
      %1896 = vmatpush1.msra.mxu0 %v1872
      %1897 = vmatprep.subr.mxu0 0.0
      %1898 = vmatpush1.msra.mxu0 %v1873
      %1899 = vmatprep.subr.mxu0 0.0
      %1900 = vmatpush1.msra.mxu0 %v1874
      %1901 = vmatprep.subr.mxu0 0.0
      %1902 = vmatpush1.msra.mxu0 %v1875
      %1903 = vmatprep.subr.mxu0 0.0
      %1904 = vmatpush1.msra.mxu0 %v1876
      %1905 = vmatprep.subr.mxu0 0.0
      %1906 = vmatpush1.msra.mxu0 %v1877
      %1907 = vmatprep.subr.mxu0 0.0
      %1908 = vmatpush1.msra.mxu0 %v1878
      %1909 = vmatprep.subr.mxu0 0.0
      %1910 = vmatpush1.msra.mxu0 %v1879
      %1911 = vmatprep.subr.mxu0 0.0
      %1912 = vmatpush1.msra.mxu0 %v1880
      %1913 = vmatprep.subr.mxu0 0.0
      %1914 = vmatpush1.msra.mxu0 0.0
      %1915 = vmatprep.subr.mxu0 0.0
      %1916 = vmatpush1.msra.mxu0 0.0
      %1917 = vmatprep.subr.mxu0 0.0
      %1918 = vmatpush1.msra.mxu0 0.0
      %1919 = vmatprep.subr.mxu0 0.0
      %1920 = vmatpush1.msra.mxu0 0.0
      %1921 = vmatprep.subr.mxu0 0.0
      %1922 = vmatpush1.msra.mxu0 0.0
      %1923 = vmatprep.subr.mxu0 0.0
      %1924 = vmatpush1.msra.mxu0 0.0
      %1925 = vmatprep.subr.mxu0 0.0
      %1926 = vmatpush1.msra.mxu0 0.0
      %1927 = vmatprep.subr.mxu0 0.0
      %1928 = vmatpush1.msra.mxu0 0.0
      %1929 = vmatprep.subr.mxu0 0.0
      %1930 = vmatpush1.msra.mxu0 0.0
      %1931 = vmatprep.subr.mxu0 0.0
      %1932 = vmatpush1.msra.mxu0 0.0
      %1933 = vmatprep.subr.mxu0 0.0
      %1934 = vmatpush1.msra.mxu0 0.0
      %1935 = vmatprep.subr.mxu0 0.0
      %1936 = vmatpush1.msra.mxu0 0.0
      %1937 = vmatprep.subr.mxu0 0.0
      %1938 = vmatpush1.msra.mxu0 0.0
      %1939 = vmatprep.subr.mxu0 0.0
      %1940 = vmatpush1.msra.mxu0 0.0
      %1941 = vmatprep.subr.mxu0 0.0
      %1942 = vmatpush1.msra.mxu0 0.0
      %1943 = vmatprep.subr.mxu0 0.0
      %1944 = vmatpush1.msra.mxu0 0.0
      %1945 = vmatprep.mubr.f32.mxu0 0.0
      %1946 = vmatmul.mubr.f32.gmra.mrb[0].mxu0 %v1850
      %v1947 = vpop.f32.mrb[0].mxu0
      %v1948 = vadd.f32 0.0, %v1947
      %v1949 = vpop.f32.mrb[0].mxu0
      %1950 = vmatprep.mubr.f32.mxu0 0.0
      %1951 = vmatmul.mubr.f32.gmra.mrb[0].mxu0 %v1852
      %v1952 = vpop.f32.mrb[0].mxu0
      %v1953 = vadd.f32 0.0, %v1952
      %v1954 = vpop.f32.mrb[0].mxu0
      %1955 = vmatprep.mubr.f32.mxu0 0.0
      %1956 = vmatmul.mubr.f32.gmra.mrb[0].mxu0 %v1854
      %v1957 = vpop.f32.mrb[0].mxu0
      %v1958 = vadd.f32 0.0, %v1957
      %v1959 = vpop.f32.mrb[0].mxu0
      %1960 = vmatprep.mubr.f32.mxu0 0.0
      %1961 = vmatmul.mubr.f32.gmra.mrb[0].mxu0 %v1856
      %v1962 = vpop.f32.mrb[0].mxu0
      %v1963 = vadd.f32 0.0, %v1962
      %v1964 = vpop.f32.mrb[0].mxu0
      %1965 = vmatprep.mubr.f32.mxu0 0.0
      %1966 = vmatmul.mubr.f32.gmra.mrb[0].mxu0 %v1858
      %v1967 = vpop.f32.mrb[0].mxu0
      %v1968 = vadd.f32 0.0, %v1967
      %v1969 = vpop.f32.mrb[0].mxu0
      %1970 = vmatprep.mubr.f32.mxu0 0.0
      %1971 = vmatmul.mubr.f32.gmra.mrb[0].mxu0 %v1860
      %v1972 = vpop.f32.mrb[0].mxu0
      %v1973 = vadd.f32 0.0, %v1972
      %v1974 = vpop.f32.mrb[0].mxu0
      %1975 = vmatprep.mubr.f32.mxu0 0.0
      %1976 = vmatmul.mubr.f32.gmra.mrb[0].mxu0 %v1862
      %v1977 = vpop.f32.mrb[0].mxu0
      %v1978 = vadd.f32 0.0, %v1977
      %v1979 = vpop.f32.mrb[0].mxu0
      %1980 = vmatprep.mubr.f32.mxu0 0.0
      %1981 = vmatmul.mubr.f32.gmra.mrb[0].mxu0 %v1864
      %v1982 = vpop.f32.mrb[0].mxu0
      %v1983 = vadd.f32 0.0, %v1982
      %v1984 = vpop.f32.mrb[0].mxu0
      %1985 = vdwg.mxu0
      %v1986 = vadd.f32 %v1842, %v1948
      %v1987 = vadd.f32 %v1843, %v1953
      %v1988 = vadd.f32 %v1844, %v1958
      %v1989 = vadd.f32 %v1845, %v1963
      %v1990 = vadd.f32 %v1846, %v1968
      %v1991 = vadd.f32 %v1847, %v1973
      %v1992 = vadd.f32 %v1848, %v1978
      %v1993 = vadd.f32 %v1849, %v1983
      %v1994 = vld [vmem:[%s5] sm:$0x1]
      %v1995 = vld [vmem:[%s7] sm:$0x1]
      %v1996 = vadd.f32 %v1994, %v1995
      %v1998 = vlaneseq
      %v1999 = vshrl.u32 %v1998, 7
      %v2000 = vsub.s32 0, %v1999
      %v2001 = vrot.slane %v1996, %v2000
      %v2003 = vadd.f32 %v1986, %v2001
      %v2004 = vadd.f32 %v1987, %v2001
      %v2005 = vadd.f32 %v1988, %v2001
      %v2006 = vadd.f32 %v1989, %v2001
      %v2007 = vadd.f32 %v1990, %v2001
      %v2008 = vadd.f32 %v1991, %v2001
      %v2009 = vadd.f32 %v1992, %v2001
      %v2010 = vadd.f32 %v1993, %v2001
      %2011 = vst [vmem:[%s325] sm:$0xff] %v2003
      %2012 = vst [vmem:[%s325 + $0x8] sm:$0xff] %v2004
      %2013 = vst [vmem:[%s325 + $0x10] sm:$0xff] %v2005
      %2014 = vst [vmem:[%s325 + $0x18] sm:$0xff] %v2006
      %2015 = vst [vmem:[%s325 + $0x20] sm:$0xff] %v2007
      %2016 = vst [vmem:[%s325 + $0x28] sm:$0xff] %v2008
      %2017 = vst [vmem:[%s325 + $0x30] sm:$0xff] %v2009
      %2018 = vst [vmem:[%s325 + $0x38] sm:$0xff] %v2010
      %p2019 = scmp.lt.s32.totalorder %s19, 1
      %s2020 = scalar_select %p2019, %s19, 1
      %s2021 = smul.addr %s2020, 8
      %s2022 = smul.addr %s2021, 8
      %s2023 = scalar_lea.vmem %s8, %s2022
      // Predicated region
      $region53: #{wide_basic_forward.3} parent=51 // pred_check
        %p2024 = pneg %p215
      $region54: #{wide_basic_forward.3} parent=51 // pred_check_branch
        %2026 = sbr.rel (%p2024) target = $region56
      $region55: #{wide_basic_forward.3} parent=51 // pred_region
        _
      $region56: #{wide_basic_forward.3} parent=51 // pred_fallthru
        _
    $region52: #{wide_basic_forward.3} parent=5 // pred_fallthru
      _
    %p2027 = scmp.le.s32.totalorder 2, %s14
    // Predicated region
    $region57: #{wide_basic_forward.3} parent=5 // pred_check
      %p2028 = pneg %p2027
    $region58: #{wide_basic_forward.3} parent=5 // pred_check_branch
      %2030 = sbr.rel (%p2028) target = $region60
    $region59: #{wide_basic_forward.3} parent=5 // pred_region
      %s2031 = ssub.s32 %s14, 2
      // Predicated region
      $region61: #{wide_basic_forward.3} parent=59 // pred_check
        %p2032 = pneg %p221
      $region62: #{wide_basic_forward.3} parent=59 // pred_check_branch
        %2034 = sbr.rel (%p2032) target = $region64
      $region63: #{wide_basic_forward.3} parent=59 // pred_region
        %p2035 = scmp.lt.s32.totalorder %s20, 1
        %s2036 = scalar_select %p2035, %s20, 1
        %s2037 = smul.addr %s2036, 8
        %s2038 = smul.addr %s2037, 8
        %s2039 = scalar_lea.vmem %s8, %s2038
      $region64: #{wide_basic_forward.3} parent=59 // pred_fallthru
        _
    $region60: #{wide_basic_forward.3} parent=5 // pred_fallthru
      _
  $region6: #{wide_basic_forward.3} parent=0 // loop_footer
    %s18 = sadd.s32 1, %s14
  $region7: #{wide_basic_forward.3} parent=0 // loop_footer_branch
    %13 = sbr.rel target = $region3
  $region8: #{wide_basic_forward.3} parent=0 // loop_exit
    _

// kernel: wide_basic_forward.2
$region0: #{wide_basic_forward.2}
  #allocation0 [shape = 'u32[]', space=smem, size = 0x4, offset = 0x4, fixed_abs, tag = 'smem constant byte address 0x4 - core index']
  #allocation1 [shape = 'u32[144,128]{1,0:T(1,128)}', space=vmem, size = 0x12000, scoped, tag = 'internal scratch']
  #allocation2 [shape = 'f32[1,18,18,128]{3,2,1,0:T(8,128)}', space=vmem, size = 0x36000, scoped, tag = 'scratch operand']
  %s0 = inlined_call_operand.vmem [shape: f32[2,16,16,128], index: 0, kind: input, shape index: {}]
  %s1 = inlined_call_operand.vmem [shape: f32[1,1,1,128], index: 1, kind: input, shape index: {}]
  %s2 = inlined_call_operand.vmem [shape: f32[1,1,1,128], index: 2, kind: input, shape index: {}]
  %s3 = inlined_call_operand.vmem [shape: f32[9,128,128], index: 3, kind: input, shape index: {}]
  %s4 = inlined_call_operand.vmem [shape: f32[1,1,1,128], index: 4, kind: input, shape index: {}]
  %s5 = inlined_call_operand.vmem [shape: f32[2,16,16,128], index: 5, kind: output, shape index: {}]
  %s6 = sld [smem:[#allocation0]]
  $region53: #{wide_basic_forward.2} parent=0
    _
  %s8 = ssub.s32 1, %s6
  %s9 = scalar_select 0, %s8, %s6
  loop: start=0, step=1, limit=4
  $region2: #{wide_basic_forward.2} parent=0 // loop_pre_header
    _
  $region3: #{wide_basic_forward.2} parent=0 // loop_header
    %s11 = sphi 0, %s15
    %p12 = scmp.ge.s32.totalorder %s11, 4
    %s21 = sphi 0, %s23
    %s24 = sphi 0, %s21
    %s25 = sphi 0, %s24
    %s41 = sphi 0, %s25
    %s45 = sphi 0, %s45
    %s47 = sphi 0, %s45
    %s48 = sphi 0, %s47
    %s62 = sphi 0, %s48
    %s66 = sphi 0, %s66
    %s68 = sphi 0, %s66
    %s69 = sphi 0, %s68
    %s83 = sphi 0, %s69
    %s87 = sphi 0, %s87
    %s89 = sphi 0, %s87
    %s90 = sphi 0, %s89
    %s104 = sphi 0, %s90
    %s108 = sphi 0, %s108
    %s110 = sphi 0, %s108
    %s111 = sphi 0, %s110
    %s125 = sphi 0, %s111
    %s131 = sphi 0, %s133
    %s134 = sphi 0, %s131
    %s135 = sphi 0, %s134
    %s151 = sphi 0, %s135
  $region4: #{wide_basic_forward.2} parent=0 // loop_header_branch
    %14 = sbr.rel (%p12) target = $region8
  $region5: #{wide_basic_forward.2} parent=0 // loop_body
    %s16 = ssub.s32 %s11, 1
    %s17 = ssub.s32 %s11, 2
    %s18 = sadd.s32 %s11, 1
    %s19 = ssub.s32 %s11, %s18
    %p20 = scmp.eq.s32.totalorder %s19, 0
    %s22 = sadd.s32 %s21, 1
    %s23 = scalar_select %p20, %s21, %s22
    %p26 = pneg %p20
    %p27 = scmp.eq.s32.totalorder %s11, 1
    %p28 = por %p26, %p27
    %p29 = scmp.ne.s32.totalorder %s21, %s24
    %p30 = scmp.eq.s32.totalorder %s11, 0
    %p31 = por %p29, %p30
    %p32 = scmp.ne.s32.totalorder %s21, %s24
    %p33 = scmp.eq.s32.totalorder %s16, 1
    %p34 = por %p32, %p33
    %p35 = scmp.ne.s32.totalorder %s24, %s25
    %p36 = scmp.eq.s32.totalorder %s16, 0
    %p37 = por %p35, %p36
    %p38 = scmp.ne.s32.totalorder %s24, %s25
    %p39 = scmp.eq.s32.totalorder %s17, 1
    %p40 = por %p38, %p39
    %p42 = scmp.ne.s32.totalorder %s25, %s41
    %p43 = scmp.eq.s32.totalorder %s17, 0
    %p44 = por %p42, %p43
    %s46 = sadd.s32 %s45, 1
    %p49 = scmp.eq.s32.totalorder %s11, 1
    %p50 = scmp.ne.s32.totalorder %s45, %s47
    %p51 = scmp.eq.s32.totalorder %s11, 0
    %p52 = por %p50, %p51
    %p53 = scmp.ne.s32.totalorder %s45, %s47
    %p54 = scmp.eq.s32.totalorder %s16, 1
    %p55 = por %p53, %p54
    %p56 = scmp.ne.s32.totalorder %s47, %s48
    %p57 = scmp.eq.s32.totalorder %s16, 0
    %p58 = por %p56, %p57
    %p59 = scmp.ne.s32.totalorder %s47, %s48
    %p60 = scmp.eq.s32.totalorder %s17, 1
    %p61 = por %p59, %p60
    %p63 = scmp.ne.s32.totalorder %s48, %s62
    %p64 = scmp.eq.s32.totalorder %s17, 0
    %p65 = por %p63, %p64
    %s67 = sadd.s32 %s66, 1
    %p70 = scmp.eq.s32.totalorder %s11, 1
    %p71 = scmp.ne.s32.totalorder %s66, %s68
    %p72 = scmp.eq.s32.totalorder %s11, 0
    %p73 = por %p71, %p72
    %p74 = scmp.ne.s32.totalorder %s66, %s68
    %p75 = scmp.eq.s32.totalorder %s16, 1
    %p76 = por %p74, %p75
    %p77 = scmp.ne.s32.totalorder %s68, %s69
    %p78 = scmp.eq.s32.totalorder %s16, 0
    %p79 = por %p77, %p78
    %p80 = scmp.ne.s32.totalorder %s68, %s69
    %p81 = scmp.eq.s32.totalorder %s17, 1
    %p82 = por %p80, %p81
    %p84 = scmp.ne.s32.totalorder %s69, %s83
    %p85 = scmp.eq.s32.totalorder %s17, 0
    %p86 = por %p84, %p85
    %s88 = sadd.s32 %s87, 1
    %p91 = scmp.eq.s32.totalorder %s11, 1
    %p92 = scmp.ne.s32.totalorder %s87, %s89
    %p93 = scmp.eq.s32.totalorder %s11, 0
    %p94 = por %p92, %p93
    %p95 = scmp.ne.s32.totalorder %s87, %s89
    %p96 = scmp.eq.s32.totalorder %s16, 1
    %p97 = por %p95, %p96
    %p98 = scmp.ne.s32.totalorder %s89, %s90
    %p99 = scmp.eq.s32.totalorder %s16, 0
    %p100 = por %p98, %p99
    %p101 = scmp.ne.s32.totalorder %s89, %s90
    %p102 = scmp.eq.s32.totalorder %s17, 1
    %p103 = por %p101, %p102
    %p105 = scmp.ne.s32.totalorder %s90, %s104
    %p106 = scmp.eq.s32.totalorder %s17, 0
    %p107 = por %p105, %p106
    %s109 = sadd.s32 %s108, 1
    %p112 = scmp.eq.s32.totalorder %s11, 1
    %p113 = scmp.ne.s32.totalorder %s108, %s110
    %p114 = scmp.eq.s32.totalorder %s11, 0
    %p115 = por %p113, %p114
    %p116 = scmp.ne.s32.totalorder %s108, %s110
    %p117 = scmp.eq.s32.totalorder %s16, 1
    %p118 = por %p116, %p117
    %p119 = scmp.ne.s32.totalorder %s110, %s111
    %p120 = scmp.eq.s32.totalorder %s16, 0
    %p121 = por %p119, %p120
    %p122 = scmp.ne.s32.totalorder %s110, %s111
    %p123 = scmp.eq.s32.totalorder %s17, 1
    %p124 = por %p122, %p123
    %p126 = scmp.ne.s32.totalorder %s111, %s125
    %p127 = scmp.eq.s32.totalorder %s17, 0
    %p128 = por %p126, %p127
    %s129 = ssub.s32 %s11, %s18
    %p130 = scmp.eq.s32.totalorder %s129, 0
    %s132 = sadd.s32 %s131, 1
    %s133 = scalar_select %p130, %s131, %s132
    %p136 = pneg %p130
    %p137 = scmp.eq.s32.totalorder %s11, 1
    %p138 = por %p136, %p137
    %p139 = scmp.ne.s32.totalorder %s131, %s134
    %p140 = scmp.eq.s32.totalorder %s11, 0
    %p141 = por %p139, %p140
    %p142 = scmp.ne.s32.totalorder %s131, %s134
    %p143 = scmp.eq.s32.totalorder %s16, 1
    %p144 = por %p142, %p143
    %p145 = scmp.ne.s32.totalorder %s134, %s135
    %p146 = scmp.eq.s32.totalorder %s16, 0
    %p147 = por %p145, %p146
    %p148 = scmp.ne.s32.totalorder %s134, %s135
    %p149 = scmp.eq.s32.totalorder %s17, 1
    %p150 = por %p148, %p149
    %p152 = scmp.ne.s32.totalorder %s135, %s151
    %p153 = scmp.eq.s32.totalorder %s17, 0
    %p154 = por %p152, %p153
    %p155 = scmp.le.s32.totalorder 1, %s11
    %p156 = scmp.lt.s32.totalorder %s11, 3
    %p157 = pnand %p155, %p156
    %p158 = pneg %p157
    // Predicated region
    $region9: #{wide_basic_forward.2} parent=5 // pred_check
      _
    $region10: #{wide_basic_forward.2} parent=5 // pred_check_branch
      %160 = sbr.rel (%p157) target = $region12
    $region11: #{wide_basic_forward.2} parent=5 // pred_region
      %s161 = ssub.s32 %s11, 1
      // Predicated region
      $region13: #{wide_basic_forward.2} parent=11 // pred_check
        %p162 = pneg %p58
      $region14: #{wide_basic_forward.2} parent=11 // pred_check_branch
        %164 = sbr.rel (%p162) target = $region16
      $region15: #{wide_basic_forward.2} parent=11 // pred_region
        _
      $region16: #{wide_basic_forward.2} parent=11 // pred_fallthru
        _
      // Predicated region
      $region17: #{wide_basic_forward.2} parent=11 // pred_check
        %p165 = pneg %p79
      $region18: #{wide_basic_forward.2} parent=11 // pred_check_branch
        %167 = sbr.rel (%p165) target = $region20
      $region19: #{wide_basic_forward.2} parent=11 // pred_region
        _
      $region20: #{wide_basic_forward.2} parent=11 // pred_fallthru
        _
      // Predicated region
      $region21: #{wide_basic_forward.2} parent=11 // pred_check
        %p168 = pneg %p100
      $region22: #{wide_basic_forward.2} parent=11 // pred_check_branch
        %170 = sbr.rel (%p168) target = $region24
      $region23: #{wide_basic_forward.2} parent=11 // pred_region
        _
      $region24: #{wide_basic_forward.2} parent=11 // pred_fallthru
        _
      // Predicated region
      $region25: #{wide_basic_forward.2} parent=11 // pred_check
        %p171 = pneg %p121
      $region26: #{wide_basic_forward.2} parent=11 // pred_check_branch
        %173 = sbr.rel (%p171) target = $region28
      $region27: #{wide_basic_forward.2} parent=11 // pred_region
        _
      $region28: #{wide_basic_forward.2} parent=11 // pred_fallthru
        _
    $region12: #{wide_basic_forward.2} parent=5 // pred_fallthru
      _
    %p174 = scmp.lt.s32.totalorder %s11, 2
    // Predicated region
    $region29: #{wide_basic_forward.2} parent=5 // pred_check
      %p175 = pneg %p174
    $region30: #{wide_basic_forward.2} parent=5 // pred_check_branch
      %177 = sbr.rel (%p175) target = $region32
    $region31: #{wide_basic_forward.2} parent=5 // pred_region
      // Predicated region
      $region33: #{wide_basic_forward.2} parent=31 // pred_check
        %p178 = pneg %p31
      $region34: #{wide_basic_forward.2} parent=31 // pred_check_branch
        %180 = sbr.rel (%p178) target = $region36
      $region35: #{wide_basic_forward.2} parent=31 // pred_region
        %p181 = scmp.lt.s32.totalorder %s11, 1
        %s182 = scalar_select %p181, %s11, 1
        %s183 = smul.addr %s182, 32
        %s184 = smul.addr %s183, 8
        %s185 = scalar_lea.vmem %s0, %s184
      $region36: #{wide_basic_forward.2} parent=31 // pred_fallthru
        _
    $region32: #{wide_basic_forward.2} parent=5 // pred_fallthru
      _
    %p186 = scmp.le.s32.totalorder 1, %s11
    %p187 = scmp.lt.s32.totalorder %s11, 3
    %p188 = pnand %p186, %p187
    %p189 = pneg %p188
    // Predicated region
    $region37: #{wide_basic_forward.2} parent=5 // pred_check
      _
    $region38: #{wide_basic_forward.2} parent=5 // pred_check_branch
      %191 = sbr.rel (%p188) target = $region40
    $region39: #{wide_basic_forward.2} parent=5 // pred_region
      %s192 = ssub.s32 %s11, 1
      %p193 = scmp.lt.s32.totalorder %s16, 1
      %s194 = scalar_select %p193, %s16, 1
      %s195 = smul.addr %s194, 32
      %s196 = smul.addr %s195, 8
      %s197 = scalar_lea.vmem %s0, %s196
      %p198 = pneg %p37
      %p199 = pneg %p34
      %p200 = pneg %p58
      %p201 = pneg %p55
      %p202 = pneg %p79
      %p203 = pneg %p76
      %p204 = pneg %p100
      %p205 = pneg %p97
      %p206 = pneg %p121
      %p207 = pneg %p118
      %p208 = pneg %p147
      %p209 = pneg %p144
      %p210 = scmp.lt.s32.totalorder %s16, 1
      %s211 = scalar_select %p210, %s16, 1
      %s212 = smul.addr %s211, 32
      %s213 = smul.addr %s212, 8
      %s214 = scalar_lea.vmem %s5, %s213
      %p215 = scmp.lt.s32.totalorder %s16, 1
      %s216 = scalar_select %p215, %s16, 1
      %s217 = smul.addr %s216, 32
      %s218 = smul.addr %s217, 8
      %s219 = scalar_lea.vmem %s0, %s218
      %p220 = scmp.lt.s32.totalorder %s16, 1
      %s221 = scalar_select %p220, %s16, 1
      %s222 = smul.addr %s221, 32
      %s223 = smul.addr %s222, 8
      %s224 = scalar_lea.vmem %s5, %s223
      %225 = vst [vmem:[#allocation2] sm:$0xff] 0.0
      %226 = vst [vmem:[#allocation2 + $0x8] sm:$0xff] 0.0
      %227 = vst [vmem:[#allocation2 + $0x10] sm:$0x3] 0.0
      %228 = vst [vmem:[#allocation2 + $0x18] sm:$0xff] 0.0
      %229 = vst [vmem:[#allocation2 + $0x20] sm:$0xff] 0.0
      %230 = vst [vmem:[#allocation2 + $0x28] sm:$0x3] 0.0
      %231 = vst [vmem:[#allocation2 + $0x30] sm:$0xff] 0.0
      %232 = vst [vmem:[#allocation2 + $0x38] sm:$0xff] 0.0
      %233 = vst [vmem:[#allocation2 + $0x40] sm:$0x3] 0.0
      %234 = vst [vmem:[#allocation2 + $0x48] sm:$0xff] 0.0
      %235 = vst [vmem:[#allocation2 + $0x50] sm:$0xff] 0.0
      %236 = vst [vmem:[#allocation2 + $0x58] sm:$0x3] 0.0
      %237 = vst [vmem:[#allocation2 + $0x60] sm:$0xff] 0.0
      %238 = vst [vmem:[#allocation2 + $0x68] sm:$0xff] 0.0
      %239 = vst [vmem:[#allocation2 + $0x70] sm:$0x3] 0.0
      %240 = vst [vmem:[#allocation2 + $0x78] sm:$0xff] 0.0
      %241 = vst [vmem:[#allocation2 + $0x80] sm:$0xff] 0.0
      %242 = vst [vmem:[#allocation2 + $0x88] sm:$0x3] 0.0
      %243 = vst [vmem:[#allocation2 + $0x90] sm:$0xff] 0.0
      %244 = vst [vmem:[#allocation2 + $0x98] sm:$0xff] 0.0
      %245 = vst [vmem:[#allocation2 + $0xa0] sm:$0x3] 0.0
      %246 = vst [vmem:[#allocation2 + $0xa8] sm:$0xff] 0.0
      %247 = vst [vmem:[#allocation2 + $0xb0] sm:$0xff] 0.0
      %248 = vst [vmem:[#allocation2 + $0xb8] sm:$0x3] 0.0
      %249 = vst [vmem:[#allocation2 + $0xc0] sm:$0xff] 0.0
      %250 = vst [vmem:[#allocation2 + $0xc8] sm:$0xff] 0.0
      %251 = vst [vmem:[#allocation2 + $0xd0] sm:$0x3] 0.0
      %252 = vst [vmem:[#allocation2 + $0xd8] sm:$0xff] 0.0
      %253 = vst [vmem:[#allocation2 + $0xe0] sm:$0xff] 0.0
      %254 = vst [vmem:[#allocation2 + $0xe8] sm:$0x3] 0.0
      %255 = vst [vmem:[#allocation2 + $0xf0] sm:$0xff] 0.0
      %256 = vst [vmem:[#allocation2 + $0xf8] sm:$0xff] 0.0
      %257 = vst [vmem:[#allocation2 + $0x100] sm:$0x3] 0.0
      %258 = vst [vmem:[#allocation2 + $0x108] sm:$0xff] 0.0
      %259 = vst [vmem:[#allocation2 + $0x110] sm:$0xff] 0.0
      %260 = vst [vmem:[#allocation2 + $0x118] sm:$0x3] 0.0
      %261 = vst [vmem:[#allocation2 + $0x120] sm:$0xff] 0.0
      %262 = vst [vmem:[#allocation2 + $0x128] sm:$0xff] 0.0
      %263 = vst [vmem:[#allocation2 + $0x130] sm:$0x3] 0.0
      %264 = vst [vmem:[#allocation2 + $0x138] sm:$0xff] 0.0
      %265 = vst [vmem:[#allocation2 + $0x140] sm:$0xff] 0.0
      %266 = vst [vmem:[#allocation2 + $0x148] sm:$0x3] 0.0
      %267 = vst [vmem:[#allocation2 + $0x150] sm:$0xff] 0.0
      %268 = vst [vmem:[#allocation2 + $0x158] sm:$0xff] 0.0
      %269 = vst [vmem:[#allocation2 + $0x160] sm:$0x3] 0.0
      %270 = vst [vmem:[#allocation2 + $0x168] sm:$0xff] 0.0
      %271 = vst [vmem:[#allocation2 + $0x170] sm:$0xff] 0.0
      %272 = vst [vmem:[#allocation2 + $0x178] sm:$0x3] 0.0
      %273 = vst [vmem:[#allocation2 + $0x180] sm:$0xff] 0.0
      %274 = vst [vmem:[#allocation2 + $0x188] sm:$0xff] 0.0
      %275 = vst [vmem:[#allocation2 + $0x190] sm:$0x3] 0.0
      %276 = vst [vmem:[#allocation2 + $0x198] sm:$0xff] 0.0
      %277 = vst [vmem:[#allocation2 + $0x1a0] sm:$0xff] 0.0
      %278 = vst [vmem:[#allocation2 + $0x1a8] sm:$0x3] 0.0
      %v279 = vld [vmem:[%s219] sm:$0xff]
      %v280 = vld [vmem:[%s219 + $0x8] sm:$0xff]
      %v281 = vld [vmem:[%s219 + $0x10] sm:$0xff]
      %v282 = vld [vmem:[%s219 + $0x18] sm:$0xff]
      %v283 = vld [vmem:[%s219 + $0x20] sm:$0xff]
      %v284 = vld [vmem:[%s219 + $0x28] sm:$0xff]
      %v285 = vld [vmem:[%s219 + $0x30] sm:$0xff]
      %v286 = vld [vmem:[%s219 + $0x38] sm:$0xff]
      %v287 = vld [vmem:[%s219 + $0x40] sm:$0xff]
      %v288 = vld [vmem:[%s219 + $0x48] sm:$0xff]
      %v289 = vld [vmem:[%s219 + $0x50] sm:$0xff]
      %v290 = vld [vmem:[%s219 + $0x58] sm:$0xff]
      %v291 = vld [vmem:[%s219 + $0x60] sm:$0xff]
      %v292 = vld [vmem:[%s219 + $0x68] sm:$0xff]
      %v293 = vld [vmem:[%s219 + $0x70] sm:$0xff]
      %v294 = vld [vmem:[%s219 + $0x78] sm:$0xff]
      %v295 = vld [vmem:[%s219 + $0x80] sm:$0xff]
      %v296 = vld [vmem:[%s219 + $0x88] sm:$0xff]
      %v297 = vld [vmem:[%s219 + $0x90] sm:$0xff]
      %v298 = vld [vmem:[%s219 + $0x98] sm:$0xff]
      %v299 = vld [vmem:[%s219 + $0xa0] sm:$0xff]
      %v300 = vld [vmem:[%s219 + $0xa8] sm:$0xff]
      %v301 = vld [vmem:[%s219 + $0xb0] sm:$0xff]
      %v302 = vld [vmem:[%s219 + $0xb8] sm:$0xff]
      %v303 = vld [vmem:[%s219 + $0xc0] sm:$0xff]
      %v304 = vld [vmem:[%s219 + $0xc8] sm:$0xff]
      %v305 = vld [vmem:[%s219 + $0xd0] sm:$0xff]
      %v306 = vld [vmem:[%s219 + $0xd8] sm:$0xff]
      %v307 = vld [vmem:[%s219 + $0xe0] sm:$0xff]
      %v308 = vld [vmem:[%s219 + $0xe8] sm:$0xff]
      %v309 = vld [vmem:[%s219 + $0xf0] sm:$0xff]
      %v310 = vld [vmem:[%s219 + $0xf8] sm:$0xff]
      %v311 = vld [vmem:[%s1] sm:$0x1]
      %v313 = vlaneseq
      %v314 = vshrl.u32 %v313, 7
      %v315 = vsub.s32 0, %v314
      %v316 = vrot.slane %v311, %v315
      %v318 = vmul.f32 %v279, %v316
      %v319 = vmul.f32 %v280, %v316
      %v320 = vmul.f32 %v281, %v316
      %v321 = vmul.f32 %v282, %v316
      %v322 = vmul.f32 %v283, %v316
      %v323 = vmul.f32 %v284, %v316
      %v324 = vmul.f32 %v285, %v316
      %v325 = vmul.f32 %v286, %v316
      %v326 = vmul.f32 %v287, %v316
      %v327 = vmul.f32 %v288, %v316
      %v328 = vmul.f32 %v289, %v316
      %v329 = vmul.f32 %v290, %v316
      %v330 = vmul.f32 %v291, %v316
      %v331 = vmul.f32 %v292, %v316
      %v332 = vmul.f32 %v293, %v316
      %v333 = vmul.f32 %v294, %v316
      %v334 = vmul.f32 %v295, %v316
      %v335 = vmul.f32 %v296, %v316
      %v336 = vmul.f32 %v297, %v316
      %v337 = vmul.f32 %v298, %v316
      %v338 = vmul.f32 %v299, %v316
      %v339 = vmul.f32 %v300, %v316
      %v340 = vmul.f32 %v301, %v316
      %v341 = vmul.f32 %v302, %v316
      %v342 = vmul.f32 %v303, %v316
      %v343 = vmul.f32 %v304, %v316
      %v344 = vmul.f32 %v305, %v316
      %v345 = vmul.f32 %v306, %v316
      %v346 = vmul.f32 %v307, %v316
      %v347 = vmul.f32 %v308, %v316
      %v348 = vmul.f32 %v309, %v316
      %v349 = vmul.f32 %v310, %v316
      %v350 = vld [vmem:[%s2] sm:$0x1]
      %v352 = vlaneseq
      %v353 = vshrl.u32 %v352, 7
      %v354 = vsub.s32 0, %v353
      %v355 = vrot.slane %v350, %v354
      %v357 = vadd.f32 %v318, %v355
      %v358 = vadd.f32 %v319, %v355
      %v359 = vadd.f32 %v320, %v355
      %v360 = vadd.f32 %v321, %v355
      %v361 = vadd.f32 %v322, %v355
      %v362 = vadd.f32 %v323, %v355
      %v363 = vadd.f32 %v324, %v355
      %v364 = vadd.f32 %v325, %v355
      %v365 = vadd.f32 %v326, %v355
      %v366 = vadd.f32 %v327, %v355
      %v367 = vadd.f32 %v328, %v355
      %v368 = vadd.f32 %v329, %v355
      %v369 = vadd.f32 %v330, %v355
      %v370 = vadd.f32 %v331, %v355
      %v371 = vadd.f32 %v332, %v355
      %v372 = vadd.f32 %v333, %v355
      %v373 = vadd.f32 %v334, %v355
      %v374 = vadd.f32 %v335, %v355
      %v375 = vadd.f32 %v336, %v355
      %v376 = vadd.f32 %v337, %v355
      %v377 = vadd.f32 %v338, %v355
      %v378 = vadd.f32 %v339, %v355
      %v379 = vadd.f32 %v340, %v355
      %v380 = vadd.f32 %v341, %v355
      %v381 = vadd.f32 %v342, %v355
      %v382 = vadd.f32 %v343, %v355
      %v383 = vadd.f32 %v344, %v355
      %v384 = vadd.f32 %v345, %v355
      %v385 = vadd.f32 %v346, %v355
      %v386 = vadd.f32 %v347, %v355
      %v387 = vadd.f32 %v348, %v355
      %v388 = vadd.f32 %v349, %v355
      %v389 = vmax.f32 %v357, 0.0
      %v390 = vmax.f32 %v358, 0.0
      %v391 = vmax.f32 %v359, 0.0
      %v392 = vmax.f32 %v360, 0.0
      %v393 = vmax.f32 %v361, 0.0
      %v394 = vmax.f32 %v362, 0.0
      %v395 = vmax.f32 %v363, 0.0
      %v396 = vmax.f32 %v364, 0.0
      %v397 = vmax.f32 %v365, 0.0
      %v398 = vmax.f32 %v366, 0.0
      %v399 = vmax.f32 %v367, 0.0
      %v400 = vmax.f32 %v368, 0.0
      %v401 = vmax.f32 %v369, 0.0
      %v402 = vmax.f32 %v370, 0.0
      %v403 = vmax.f32 %v371, 0.0
      %v404 = vmax.f32 %v372, 0.0
      %v405 = vmax.f32 %v373, 0.0
      %v406 = vmax.f32 %v374, 0.0
      %v407 = vmax.f32 %v375, 0.0
      %v408 = vmax.f32 %v376, 0.0
      %v409 = vmax.f32 %v377, 0.0
      %v410 = vmax.f32 %v378, 0.0
      %v411 = vmax.f32 %v379, 0.0
      %v412 = vmax.f32 %v380, 0.0
      %v413 = vmax.f32 %v381, 0.0
      %v414 = vmax.f32 %v382, 0.0
      %v415 = vmax.f32 %v383, 0.0
      %v416 = vmax.f32 %v384, 0.0
      %v417 = vmax.f32 %v385, 0.0
      %v418 = vmax.f32 %v386, 0.0
      %v419 = vmax.f32 %v387, 0.0
      %v420 = vmax.f32 %v388, 0.0
      %s421 = scalar_lea.vmem [#allocation2], 24
      %422 = vst [vmem:[%s421 + $0x1] sm:$0xff] %v389
      %423 = vst [vmem:[%s421 + $0x9] sm:$0xff] %v390
      %424 = vst [vmem:[%s421 + $0x19] sm:$0xff] %v391
      %425 = vst [vmem:[%s421 + $0x21] sm:$0xff] %v392
      %426 = vst [vmem:[%s421 + $0x31] sm:$0xff] %v393
      %427 = vst [vmem:[%s421 + $0x39] sm:$0xff] %v394
      %428 = vst [vmem:[%s421 + $0x49] sm:$0xff] %v395
      %429 = vst [vmem:[%s421 + $0x51] sm:$0xff] %v396
      %430 = vst [vmem:[%s421 + $0x61] sm:$0xff] %v397
      %431 = vst [vmem:[%s421 + $0x69] sm:$0xff] %v398
      %432 = vst [vmem:[%s421 + $0x79] sm:$0xff] %v399
      %433 = vst [vmem:[%s421 + $0x81] sm:$0xff] %v400
      %434 = vst [vmem:[%s421 + $0x91] sm:$0xff] %v401
      %435 = vst [vmem:[%s421 + $0x99] sm:$0xff] %v402
      %436 = vst [vmem:[%s421 + $0xa9] sm:$0xff] %v403
      %437 = vst [vmem:[%s421 + $0xb1] sm:$0xff] %v404
      %438 = vst [vmem:[%s421 + $0xc1] sm:$0xff] %v405
      %439 = vst [vmem:[%s421 + $0xc9] sm:$0xff] %v406
      %440 = vst [vmem:[%s421 + $0xd9] sm:$0xff] %v407
      %441 = vst [vmem:[%s421 + $0xe1] sm:$0xff] %v408
      %442 = vst [vmem:[%s421 + $0xf1] sm:$0xff] %v409
      %443 = vst [vmem:[%s421 + $0xf9] sm:$0xff] %v410
      %444 = vst [vmem:[%s421 + $0x109] sm:$0xff] %v411
      %445 = vst [vmem:[%s421 + $0x111] sm:$0xff] %v412
      %446 = vst [vmem:[%s421 + $0x121] sm:$0xff] %v413
      %447 = vst [vmem:[%s421 + $0x129] sm:$0xff] %v414
      %448 = vst [vmem:[%s421 + $0x139] sm:$0xff] %v415
      %449 = vst [vmem:[%s421 + $0x141] sm:$0xff] %v416
      %450 = vst [vmem:[%s421 + $0x151] sm:$0xff] %v417
      %451 = vst [vmem:[%s421 + $0x159] sm:$0xff] %v418
      %452 = vst [vmem:[%s421 + $0x169] sm:$0xff] %v419
      %453 = vst [vmem:[%s421 + $0x171] sm:$0xff] %v420
      %v454 = vld [vmem:[#allocation2] sm:$0xff]
      %v455 = vld [vmem:[#allocation2 + $0x8] sm:$0xff]
      %v456 = vld [vmem:[#allocation2 + $0x18] sm:$0xff]
      %v457 = vld [vmem:[#allocation2 + $0x20] sm:$0xff]
      %v458 = vld [vmem:[#allocation2 + $0x30] sm:$0xff]
      %v459 = vld [vmem:[#allocation2 + $0x38] sm:$0xff]
      %v460 = vld [vmem:[#allocation2 + $0x48] sm:$0xff]
      %v461 = vld [vmem:[#allocation2 + $0x50] sm:$0xff]
      %v462 = vld [vmem:[#allocation2 + $0x60] sm:$0xff]
      %v463 = vld [vmem:[#allocation2 + $0x68] sm:$0xff]
      %v464 = vld [vmem:[#allocation2 + $0x78] sm:$0xff]
      %v465 = vld [vmem:[#allocation2 + $0x80] sm:$0xff]
      %v466 = vld [vmem:[#allocation2 + $0x90] sm:$0xff]
      %v467 = vld [vmem:[#allocation2 + $0x98] sm:$0xff]
      %v468 = vld [vmem:[#allocation2 + $0xa8] sm:$0xff]
      %v469 = vld [vmem:[#allocation2 + $0xb0] sm:$0xff]
      %v470 = vld [vmem:[#allocation2 + $0xc0] sm:$0xff]
      %v471 = vld [vmem:[#allocation2 + $0xc8] sm:$0xff]
      %v472 = vld [vmem:[#allocation2 + $0xd8] sm:$0xff]
      %v473 = vld [vmem:[#allocation2 + $0xe0] sm:$0xff]
      %v474 = vld [vmem:[#allocation2 + $0xf0] sm:$0xff]
      %v475 = vld [vmem:[#allocation2 + $0xf8] sm:$0xff]
      %v476 = vld [vmem:[#allocation2 + $0x108] sm:$0xff]
      %v477 = vld [vmem:[#allocation2 + $0x110] sm:$0xff]
      %v478 = vld [vmem:[#allocation2 + $0x120] sm:$0xff]
      %v479 = vld [vmem:[#allocation2 + $0x128] sm:$0xff]
      %v480 = vld [vmem:[#allocation2 + $0x138] sm:$0xff]
      %v481 = vld [vmem:[#allocation2 + $0x140] sm:$0xff]
      %v482 = vld [vmem:[#allocation2 + $0x150] sm:$0xff]
      %v483 = vld [vmem:[#allocation2 + $0x158] sm:$0xff]
      %v484 = vld [vmem:[#allocation2 + $0x168] sm:$0xff]
      %v485 = vld [vmem:[#allocation2 + $0x170] sm:$0xff]
      %v486 = vld [vmem:[%s3] sm:$0xff]
      %v487 = vld [vmem:[%s3 + $0x8] sm:$0xff]
      %v488 = vld [vmem:[%s3 + $0x10] sm:$0xff]
      %v489 = vld [vmem:[%s3 + $0x18] sm:$0xff]
      %v490 = vld [vmem:[%s3 + $0x20] sm:$0xff]
      %v491 = vld [vmem:[%s3 + $0x28] sm:$0xff]
      %v492 = vld [vmem:[%s3 + $0x30] sm:$0xff]
      %v493 = vld [vmem:[%s3 + $0x38] sm:$0xff]
      %v494 = vld [vmem:[%s3 + $0x40] sm:$0xff]
      %v495 = vld [vmem:[%s3 + $0x48] sm:$0xff]
      %v496 = vld [vmem:[%s3 + $0x50] sm:$0xff]
      %v497 = vld [vmem:[%s3 + $0x58] sm:$0xff]
      %v498 = vld [vmem:[%s3 + $0x60] sm:$0xff]
      %v499 = vld [vmem:[%s3 + $0x68] sm:$0xff]
      %v500 = vld [vmem:[%s3 + $0x70] sm:$0xff]
      %v501 = vld [vmem:[%s3 + $0x78] sm:$0xff]
      %v502 = vld [vmem:[#allocation2 + $0x1] sm:$0xff]
      %v503 = vld [vmem:[#allocation2 + $0x9] sm:$0xff]
      %v504 = vld [vmem:[#allocation2 + $0x19] sm:$0xff]
      %v505 = vld [vmem:[#allocation2 + $0x21] sm:$0xff]
      %v506 = vld [vmem:[#allocation2 + $0x31] sm:$0xff]
      %v507 = vld [vmem:[#allocation2 + $0x39] sm:$0xff]
      %v508 = vld [vmem:[#allocation2 + $0x49] sm:$0xff]
      %v509 = vld [vmem:[#allocation2 + $0x51] sm:$0xff]
      %v510 = vld [vmem:[#allocation2 + $0x61] sm:$0xff]
      %v511 = vld [vmem:[#allocation2 + $0x69] sm:$0xff]
      %v512 = vld [vmem:[#allocation2 + $0x79] sm:$0xff]
      %v513 = vld [vmem:[#allocation2 + $0x81] sm:$0xff]
      %v514 = vld [vmem:[#allocation2 + $0x91] sm:$0xff]
      %v515 = vld [vmem:[#allocation2 + $0x99] sm:$0xff]
      %v516 = vld [vmem:[#allocation2 + $0xa9] sm:$0xff]
      %v517 = vld [vmem:[#allocation2 + $0xb1] sm:$0xff]
      %v518 = vld [vmem:[#allocation2 + $0xc1] sm:$0xff]
      %v519 = vld [vmem:[#allocation2 + $0xc9] sm:$0xff]
      %v520 = vld [vmem:[#allocation2 + $0xd9] sm:$0xff]
      %v521 = vld [vmem:[#allocation2 + $0xe1] sm:$0xff]
      %v522 = vld [vmem:[#allocation2 + $0xf1] sm:$0xff]
      %v523 = vld [vmem:[#allocation2 + $0xf9] sm:$0xff]
      %v524 = vld [vmem:[#allocation2 + $0x109] sm:$0xff]
      %v525 = vld [vmem:[#allocation2 + $0x111] sm:$0xff]
      %v526 = vld [vmem:[#allocation2 + $0x121] sm:$0xff]
      %v527 = vld [vmem:[#allocation2 + $0x129] sm:$0xff]
      %v528 = vld [vmem:[#allocation2 + $0x139] sm:$0xff]
      %v529 = vld [vmem:[#allocation2 + $0x141] sm:$0xff]
      %v530 = vld [vmem:[#allocation2 + $0x151] sm:$0xff]
      %v531 = vld [vmem:[#allocation2 + $0x159] sm:$0xff]
      %v532 = vld [vmem:[#allocation2 + $0x169] sm:$0xff]
      %v533 = vld [vmem:[#allocation2 + $0x171] sm:$0xff]
      %s534 = scalar_lea.vmem %s3, 128
      %v535 = vld [vmem:[%s534] sm:$0xff]
      %v536 = vld [vmem:[%s534 + $0x8] sm:$0xff]
      %v537 = vld [vmem:[%s534 + $0x10] sm:$0xff]
      %v538 = vld [vmem:[%s534 + $0x18] sm:$0xff]
      %v539 = vld [vmem:[%s534 + $0x20] sm:$0xff]
      %v540 = vld [vmem:[%s534 + $0x28] sm:$0xff]
      %v541 = vld [vmem:[%s534 + $0x30] sm:$0xff]
      %v542 = vld [vmem:[%s534 + $0x38] sm:$0xff]
      %v543 = vld [vmem:[%s534 + $0x40] sm:$0xff]
      %v544 = vld [vmem:[%s534 + $0x48] sm:$0xff]
      %v545 = vld [vmem:[%s534 + $0x50] sm:$0xff]
      %v546 = vld [vmem:[%s534 + $0x58] sm:$0xff]
      %v547 = vld [vmem:[%s534 + $0x60] sm:$0xff]
      %v548 = vld [vmem:[%s534 + $0x68] sm:$0xff]
      %v549 = vld [vmem:[%s534 + $0x70] sm:$0xff]
      %v550 = vld [vmem:[%s534 + $0x78] sm:$0xff]
      %551 = vmatprep.subr.mxu0 0.0
      %552 = vmatpush1.msra.mxu0 %v535
      %553 = vmatprep.subr.mxu0 0.0
      %554 = vmatpush1.msra.mxu0 %v536
      %555 = vmatprep.subr.mxu0 0.0
      %556 = vmatpush1.msra.mxu0 %v537
      %557 = vmatprep.subr.mxu0 0.0
      %558 = vmatpush1.msra.mxu0 %v538
      %559 = vmatprep.subr.mxu0 0.0
      %560 = vmatpush1.msra.mxu0 %v539
      %561 = vmatprep.subr.mxu0 0.0
      %562 = vmatpush1.msra.mxu0 %v540
      %563 = vmatprep.subr.mxu0 0.0
      %564 = vmatpush1.msra.mxu0 %v541
      %565 = vmatprep.subr.mxu0 0.0
      %566 = vmatpush1.msra.mxu0 %v542
      %567 = vmatprep.subr.mxu0 0.0
      %568 = vmatpush1.msra.mxu0 %v543
      %569 = vmatprep.subr.mxu0 0.0
      %570 = vmatpush1.msra.mxu0 %v544
      %571 = vmatprep.subr.mxu0 0.0
      %572 = vmatpush1.msra.mxu0 %v545
      %573 = vmatprep.subr.mxu0 0.0
      %574 = vmatpush1.msra.mxu0 %v546
      %575 = vmatprep.subr.mxu0 0.0
      %576 = vmatpush1.msra.mxu0 %v547
      %577 = vmatprep.subr.mxu0 0.0
      %578 = vmatpush1.msra.mxu0 %v548
      %579 = vmatprep.subr.mxu0 0.0
      %580 = vmatpush1.msra.mxu0 %v549
      %581 = vmatprep.subr.mxu0 0.0
      %582 = vmatpush1.msra.mxu0 %v550
      %583 = vmatprep.subr.mxu0 0.0
      %584 = vmatpush1.msra.mxu0 0.0
      %585 = vmatprep.subr.mxu0 0.0
      %586 = vmatpush1.msra.mxu0 0.0
      %587 = vmatprep.subr.mxu0 0.0
      %588 = vmatpush1.msra.mxu0 0.0
      %589 = vmatprep.subr.mxu0 0.0
      %590 = vmatpush1.msra.mxu0 0.0
      %591 = vmatprep.subr.mxu0 0.0
      %592 = vmatpush1.msra.mxu0 0.0
      %593 = vmatprep.subr.mxu0 0.0
      %594 = vmatpush1.msra.mxu0 0.0
      %595 = vmatprep.subr.mxu0 0.0
      %596 = vmatpush1.msra.mxu0 0.0
      %597 = vmatprep.subr.mxu0 0.0
      %598 = vmatpush1.msra.mxu0 0.0
      %599 = vmatprep.subr.mxu0 0.0
      %600 = vmatpush1.msra.mxu0 0.0
      %601 = vmatprep.subr.mxu0 0.0
      %602 = vmatpush1.msra.mxu0 0.0
      %603 = vmatprep.subr.mxu0 0.0
      %604 = vmatpush1.msra.mxu0 0.0
      %605 = vmatprep.subr.mxu0 0.0
      %606 = vmatpush1.msra.mxu0 0.0
      %607 = vmatprep.subr.mxu0 0.0
      %608 = vmatpush1.msra.mxu0 0.0
      %609 = vmatprep.subr.mxu0 0.0
      %610 = vmatpush1.msra.mxu0 0.0
      %611 = vmatprep.subr.mxu0 0.0
      %612 = vmatpush1.msra.mxu0 0.0
      %613 = vmatprep.subr.mxu0 0.0
      %614 = vmatpush1.msra.mxu0 0.0
      %615 = vmatprep.mubr.f32.mxu0 0.0
      %616 = vmatmul.mubr.f32.gmra.mrb[0].mxu0 %v502
      %v617 = vpop.f32.mrb[0].mxu0
      %v618 = vadd.f32 0.0, %v617
      %v619 = vpop.f32.mrb[0].mxu0
      %620 = vmatprep.mubr.f32.mxu0 0.0
      %621 = vmatmul.mubr.f32.gmra.mrb[0].mxu0 %v503
      %v622 = vpop.f32.mrb[0].mxu0
      %v623 = vadd.f32 0.0, %v622
      %v624 = vpop.f32.mrb[0].mxu0
      %625 = vmatprep.mubr.f32.mxu0 0.0
      %626 = vmatmul.mubr.f32.gmra.mrb[0].mxu0 %v504
      %v627 = vpop.f32.mrb[0].mxu0
      %v628 = vadd.f32 0.0, %v627
      %v629 = vpop.f32.mrb[0].mxu0
      %630 = vmatprep.mubr.f32.mxu0 0.0
      %631 = vmatmul.mubr.f32.gmra.mrb[0].mxu0 %v505
      %v632 = vpop.f32.mrb[0].mxu0
      %v633 = vadd.f32 0.0, %v632
      %v634 = vpop.f32.mrb[0].mxu0
      %635 = vmatprep.mubr.f32.mxu0 0.0
      %636 = vmatmul.mubr.f32.gmra.mrb[0].mxu0 %v506
      %v637 = vpop.f32.mrb[0].mxu0
      %v638 = vadd.f32 0.0, %v637
      %v639 = vpop.f32.mrb[0].mxu0
      %640 = vmatprep.mubr.f32.mxu0 0.0
      %641 = vmatmul.mubr.f32.gmra.mrb[0].mxu0 %v507
      %v642 = vpop.f32.mrb[0].mxu0
      %v643 = vadd.f32 0.0, %v642
      %v644 = vpop.f32.mrb[0].mxu0
      %645 = vmatprep.mubr.f32.mxu0 0.0
      %646 = vmatmul.mubr.f32.gmra.mrb[0].mxu0 %v508
      %v647 = vpop.f32.mrb[0].mxu0
      %v648 = vadd.f32 0.0, %v647
      %v649 = vpop.f32.mrb[0].mxu0
      %650 = vmatprep.mubr.f32.mxu0 0.0
      %651 = vmatmul.mubr.f32.gmra.mrb[0].mxu0 %v509
      %v652 = vpop.f32.mrb[0].mxu0
      %v653 = vadd.f32 0.0, %v652
      %v654 = vpop.f32.mrb[0].mxu0
      %655 = vmatprep.mubr.f32.mxu0 0.0
      %656 = vmatmul.mubr.f32.gmra.mrb[0].mxu0 %v510
      %v657 = vpop.f32.mrb[0].mxu0
      %v658 = vadd.f32 0.0, %v657
      %v659 = vpop.f32.mrb[0].mxu0
      %660 = vmatprep.mubr.f32.mxu0 0.0
      %661 = vmatmul.mubr.f32.gmra.mrb[0].mxu0 %v511
      %v662 = vpop.f32.mrb[0].mxu0
      %v663 = vadd.f32 0.0, %v662
      %v664 = vpop.f32.mrb[0].mxu0
      %665 = vmatprep.mubr.f32.mxu0 0.0
      %666 = vmatmul.mubr.f32.gmra.mrb[0].mxu0 %v512
      %v667 = vpop.f32.mrb[0].mxu0
      %v668 = vadd.f32 0.0, %v667
      %v669 = vpop.f32.mrb[0].mxu0
      %670 = vmatprep.mubr.f32.mxu0 0.0
      %671 = vmatmul.mubr.f32.gmra.mrb[0].mxu0 %v513
      %v672 = vpop.f32.mrb[0].mxu0
      %v673 = vadd.f32 0.0, %v672
      %v674 = vpop.f32.mrb[0].mxu0
      %675 = vmatprep.mubr.f32.mxu0 0.0
      %676 = vmatmul.mubr.f32.gmra.mrb[0].mxu0 %v514
      %v677 = vpop.f32.mrb[0].mxu0
      %v678 = vadd.f32 0.0, %v677
      %v679 = vpop.f32.mrb[0].mxu0
      %680 = vmatprep.mubr.f32.mxu0 0.0
      %681 = vmatmul.mubr.f32.gmra.mrb[0].mxu0 %v515
      %v682 = vpop.f32.mrb[0].mxu0
      %v683 = vadd.f32 0.0, %v682
      %v684 = vpop.f32.mrb[0].mxu0
      %685 = vmatprep.mubr.f32.mxu0 0.0
      %686 = vmatmul.mubr.f32.gmra.mrb[0].mxu0 %v516
      %v687 = vpop.f32.mrb[0].mxu0
      %v688 = vadd.f32 0.0, %v687
      %v689 = vpop.f32.mrb[0].mxu0
      %690 = vmatprep.mubr.f32.mxu0 0.0
      %691 = vmatmul.mubr.f32.gmra.mrb[0].mxu0 %v517
      %v692 = vpop.f32.mrb[0].mxu0
      %v693 = vadd.f32 0.0, %v692
      %v694 = vpop.f32.mrb[0].mxu0
      %695 = vmatprep.mubr.f32.mxu0 0.0
      %696 = vmatmul.mubr.f32.gmra.mrb[0].mxu0 %v518
      %v697 = vpop.f32.mrb[0].mxu0
      %v698 = vadd.f32 0.0, %v697
      %v699 = vpop.f32.mrb[0].mxu0
      %700 = vmatprep.mubr.f32.mxu0 0.0
      %701 = vmatmul.mubr.f32.gmra.mrb[0].mxu0 %v519
      %v702 = vpop.f32.mrb[0].mxu0
      %v703 = vadd.f32 0.0, %v702
      %v704 = vpop.f32.mrb[0].mxu0
      %705 = vmatprep.mubr.f32.mxu0 0.0
      %706 = vmatmul.mubr.f32.gmra.mrb[0].mxu0 %v520
      %v707 = vpop.f32.mrb[0].mxu0
      %v708 = vadd.f32 0.0, %v707
      %v709 = vpop.f32.mrb[0].mxu0
      %710 = vmatprep.mubr.f32.mxu0 0.0
      %711 = vmatmul.mubr.f32.gmra.mrb[0].mxu0 %v521
      %v712 = vpop.f32.mrb[0].mxu0
      %v713 = vadd.f32 0.0, %v712
      %v714 = vpop.f32.mrb[0].mxu0
      %715 = vmatprep.mubr.f32.mxu0 0.0
      %716 = vmatmul.mubr.f32.gmra.mrb[0].mxu0 %v522
      %v717 = vpop.f32.mrb[0].mxu0
      %v718 = vadd.f32 0.0, %v717
      %v719 = vpop.f32.mrb[0].mxu0
      %720 = vmatprep.mubr.f32.mxu0 0.0
      %721 = vmatmul.mubr.f32.gmra.mrb[0].mxu0 %v523
      %v722 = vpop.f32.mrb[0].mxu0
      %v723 = vadd.f32 0.0, %v722
      %v724 = vpop.f32.mrb[0].mxu0
      %725 = vmatprep.mubr.f32.mxu0 0.0
      %726 = vmatmul.mubr.f32.gmra.mrb[0].mxu0 %v524
      %v727 = vpop.f32.mrb[0].mxu0
      %v728 = vadd.f32 0.0, %v727
      %v729 = vpop.f32.mrb[0].mxu0
      %730 = vmatprep.mubr.f32.mxu0 0.0
      %731 = vmatmul.mubr.f32.gmra.mrb[0].mxu0 %v525
      %v732 = vpop.f32.mrb[0].mxu0
      %v733 = vadd.f32 0.0, %v732
      %v734 = vpop.f32.mrb[0].mxu0
      %735 = vmatprep.mubr.f32.mxu0 0.0
      %736 = vmatmul.mubr.f32.gmra.mrb[0].mxu0 %v526
      %v737 = vpop.f32.mrb[0].mxu0
      %v738 = vadd.f32 0.0, %v737
      %v739 = vpop.f32.mrb[0].mxu0
      %740 = vmatprep.mubr.f32.mxu0 0.0
      %741 = vmatmul.mubr.f32.gmra.mrb[0].mxu0 %v527
      %v742 = vpop.f32.mrb[0].mxu0
      %v743 = vadd.f32 0.0, %v742
      %v744 = vpop.f32.mrb[0].mxu0
      %745 = vmatprep.mubr.f32.mxu0 0.0
      %746 = vmatmul.mubr.f32.gmra.mrb[0].mxu0 %v528
      %v747 = vpop.f32.mrb[0].mxu0
      %v748 = vadd.f32 0.0, %v747
      %v749 = vpop.f32.mrb[0].mxu0
      %750 = vmatprep.mubr.f32.mxu0 0.0
      %751 = vmatmul.mubr.f32.gmra.mrb[0].mxu0 %v529
      %v752 = vpop.f32.mrb[0].mxu0
      %v753 = vadd.f32 0.0, %v752
      %v754 = vpop.f32.mrb[0].mxu0
      %755 = vmatprep.mubr.f32.mxu0 0.0
      %756 = vmatmul.mubr.f32.gmra.mrb[0].mxu0 %v530
      %v757 = vpop.f32.mrb[0].mxu0
      %v758 = vadd.f32 0.0, %v757
      %v759 = vpop.f32.mrb[0].mxu0
      %760 = vmatprep.mubr.f32.mxu0 0.0
      %761 = vmatmul.mubr.f32.gmra.mrb[0].mxu0 %v531
      %v762 = vpop.f32.mrb[0].mxu0
      %v763 = vadd.f32 0.0, %v762
      %v764 = vpop.f32.mrb[0].mxu0
      %765 = vmatprep.mubr.f32.mxu0 0.0
      %766 = vmatmul.mubr.f32.gmra.mrb[0].mxu0 %v532
      %v767 = vpop.f32.mrb[0].mxu0
      %v768 = vadd.f32 0.0, %v767
      %v769 = vpop.f32.mrb[0].mxu0
      %770 = vmatprep.mubr.f32.mxu0 0.0
      %771 = vmatmul.mubr.f32.gmra.mrb[0].mxu0 %v533
      %v772 = vpop.f32.mrb[0].mxu0
      %v773 = vadd.f32 0.0, %v772
      %v774 = vpop.f32.mrb[0].mxu0
      %775 = vdwg.mxu0
      %776 = vmatprep.subr.mxu0 0.0
      %777 = vmatpush1.msra.mxu0 %v486
      %778 = vmatprep.subr.mxu0 0.0
      %779 = vmatpush1.msra.mxu0 %v487
      %780 = vmatprep.subr.mxu0 0.0
      %781 = vmatpush1.msra.mxu0 %v488
      %782 = vmatprep.subr.mxu0 0.0
      %783 = vmatpush1.msra.mxu0 %v489
      %784 = vmatprep.subr.mxu0 0.0
      %785 = vmatpush1.msra.mxu0 %v490
      %786 = vmatprep.subr.mxu0 0.0
      %787 = vmatpush1.msra.mxu0 %v491
      %788 = vmatprep.subr.mxu0 0.0
      %789 = vmatpush1.msra.mxu0 %v492
      %790 = vmatprep.subr.mxu0 0.0
      %791 = vmatpush1.msra.mxu0 %v493
      %792 = vmatprep.subr.mxu0 0.0
      %793 = vmatpush1.msra.mxu0 %v494
      %794 = vmatprep.subr.mxu0 0.0
      %795 = vmatpush1.msra.mxu0 %v495
      %796 = vmatprep.subr.mxu0 0.0
      %797 = vmatpush1.msra.mxu0 %v496
      %798 = vmatprep.subr.mxu0 0.0
      %799 = vmatpush1.msra.mxu0 %v497
      %800 = vmatprep.subr.mxu0 0.0
      %801 = vmatpush1.msra.mxu0 %v498
      %802 = vmatprep.subr.mxu0 0.0
      %803 = vmatpush1.msra.mxu0 %v499
      %804 = vmatprep.subr.mxu0 0.0
      %805 = vmatpush1.msra.mxu0 %v500
      %806 = vmatprep.subr.mxu0 0.0
      %807 = vmatpush1.msra.mxu0 %v501
      %808 = vmatprep.subr.mxu0 0.0
      %809 = vmatpush1.msra.mxu0 0.0
      %810 = vmatprep.subr.mxu0 0.0
      %811 = vmatpush1.msra.mxu0 0.0
      %812 = vmatprep.subr.mxu0 0.0
      %813 = vmatpush1.msra.mxu0 0.0
      %814 = vmatprep.subr.mxu0 0.0
      %815 = vmatpush1.msra.mxu0 0.0
      %816 = vmatprep.subr.mxu0 0.0
      %817 = vmatpush1.msra.mxu0 0.0
      %818 = vmatprep.subr.mxu0 0.0
      %819 = vmatpush1.msra.mxu0 0.0
      %820 = vmatprep.subr.mxu0 0.0
      %821 = vmatpush1.msra.mxu0 0.0
      %822 = vmatprep.subr.mxu0 0.0
      %823 = vmatpush1.msra.mxu0 0.0
      %824 = vmatprep.subr.mxu0 0.0
      %825 = vmatpush1.msra.mxu0 0.0
      %826 = vmatprep.subr.mxu0 0.0
      %827 = vmatpush1.msra.mxu0 0.0
      %828 = vmatprep.subr.mxu0 0.0
      %829 = vmatpush1.msra.mxu0 0.0
      %830 = vmatprep.subr.mxu0 0.0
      %831 = vmatpush1.msra.mxu0 0.0
      %832 = vmatprep.subr.mxu0 0.0
      %833 = vmatpush1.msra.mxu0 0.0
      %834 = vmatprep.subr.mxu0 0.0
      %835 = vmatpush1.msra.mxu0 0.0
      %836 = vmatprep.subr.mxu0 0.0
      %837 = vmatpush1.msra.mxu0 0.0
      %838 = vmatprep.subr.mxu0 0.0
      %839 = vmatpush1.msra.mxu0 0.0
      %840 = vmatprep.mubr.f32.mxu0 0.0
      %841 = vmatmul.mubr.f32.gmra.mrb[0].mxu0 %v454
      %v842 = vpop.f32.mrb[0].mxu0
      %v843 = vadd.f32 %v618, %v842
      %v844 = vpop.f32.mrb[0].mxu0
      %845 = vmatprep.mubr.f32.mxu0 0.0
      %846 = vmatmul.mubr.f32.gmra.mrb[0].mxu0 %v455
      %v847 = vpop.f32.mrb[0].mxu0
      %v848 = vadd.f32 %v623, %v847
      %v849 = vpop.f32.mrb[0].mxu0
      %850 = vmatprep.mubr.f32.mxu0 0.0
      %851 = vmatmul.mubr.f32.gmra.mrb[0].mxu0 %v456
      %v852 = vpop.f32.mrb[0].mxu0
      %v853 = vadd.f32 %v628, %v852
      %v854 = vpop.f32.mrb[0].mxu0
      %855 = vmatprep.mubr.f32.mxu0 0.0
      %856 = vmatmul.mubr.f32.gmra.mrb[0].mxu0 %v457
      %v857 = vpop.f32.mrb[0].mxu0
      %v858 = vadd.f32 %v633, %v857
      %v859 = vpop.f32.mrb[0].mxu0
      %860 = vmatprep.mubr.f32.mxu0 0.0
      %861 = vmatmul.mubr.f32.gmra.mrb[0].mxu0 %v458
      %v862 = vpop.f32.mrb[0].mxu0
      %v863 = vadd.f32 %v638, %v862
      %v864 = vpop.f32.mrb[0].mxu0
      %865 = vmatprep.mubr.f32.mxu0 0.0
      %866 = vmatmul.mubr.f32.gmra.mrb[0].mxu0 %v459
      %v867 = vpop.f32.mrb[0].mxu0
      %v868 = vadd.f32 %v643, %v867
      %v869 = vpop.f32.mrb[0].mxu0
      %870 = vmatprep.mubr.f32.mxu0 0.0
      %871 = vmatmul.mubr.f32.gmra.mrb[0].mxu0 %v460
      %v872 = vpop.f32.mrb[0].mxu0
      %v873 = vadd.f32 %v648, %v872
      %v874 = vpop.f32.mrb[0].mxu0
      %875 = vmatprep.mubr.f32.mxu0 0.0
      %876 = vmatmul.mubr.f32.gmra.mrb[0].mxu0 %v461
      %v877 = vpop.f32.mrb[0].mxu0
      %v878 = vadd.f32 %v653, %v877
      %v879 = vpop.f32.mrb[0].mxu0
      %880 = vmatprep.mubr.f32.mxu0 0.0
      %881 = vmatmul.mubr.f32.gmra.mrb[0].mxu0 %v462
      %v882 = vpop.f32.mrb[0].mxu0
      %v883 = vadd.f32 %v658, %v882
      %v884 = vpop.f32.mrb[0].mxu0
      %885 = vmatprep.mubr.f32.mxu0 0.0
      %886 = vmatmul.mubr.f32.gmra.mrb[0].mxu0 %v463
      %v887 = vpop.f32.mrb[0].mxu0
      %v888 = vadd.f32 %v663, %v887
      %v889 = vpop.f32.mrb[0].mxu0
      %890 = vmatprep.mubr.f32.mxu0 0.0
      %891 = vmatmul.mubr.f32.gmra.mrb[0].mxu0 %v464
      %v892 = vpop.f32.mrb[0].mxu0
      %v893 = vadd.f32 %v668, %v892
      %v894 = vpop.f32.mrb[0].mxu0
      %895 = vmatprep.mubr.f32.mxu0 0.0
      %896 = vmatmul.mubr.f32.gmra.mrb[0].mxu0 %v465
      %v897 = vpop.f32.mrb[0].mxu0
      %v898 = vadd.f32 %v673, %v897
      %v899 = vpop.f32.mrb[0].mxu0
      %900 = vmatprep.mubr.f32.mxu0 0.0
      %901 = vmatmul.mubr.f32.gmra.mrb[0].mxu0 %v466
      %v902 = vpop.f32.mrb[0].mxu0
      %v903 = vadd.f32 %v678, %v902
      %v904 = vpop.f32.mrb[0].mxu0
      %905 = vmatprep.mubr.f32.mxu0 0.0
      %906 = vmatmul.mubr.f32.gmra.mrb[0].mxu0 %v467
      %v907 = vpop.f32.mrb[0].mxu0
      %v908 = vadd.f32 %v683, %v907
      %v909 = vpop.f32.mrb[0].mxu0
      %910 = vmatprep.mubr.f32.mxu0 0.0
      %911 = vmatmul.mubr.f32.gmra.mrb[0].mxu0 %v468
      %v912 = vpop.f32.mrb[0].mxu0
      %v913 = vadd.f32 %v688, %v912
      %v914 = vpop.f32.mrb[0].mxu0
      %915 = vmatprep.mubr.f32.mxu0 0.0
      %916 = vmatmul.mubr.f32.gmra.mrb[0].mxu0 %v469
      %v917 = vpop.f32.mrb[0].mxu0
      %v918 = vadd.f32 %v693, %v917
      %v919 = vpop.f32.mrb[0].mxu0
      %920 = vmatprep.mubr.f32.mxu0 0.0
      %921 = vmatmul.mubr.f32.gmra.mrb[0].mxu0 %v470
      %v922 = vpop.f32.mrb[0].mxu0
      %v923 = vadd.f32 %v698, %v922
      %v924 = vpop.f32.mrb[0].mxu0
      %925 = vmatprep.mubr.f32.mxu0 0.0
      %926 = vmatmul.mubr.f32.gmra.mrb[0].mxu0 %v471
      %v927 = vpop.f32.mrb[0].mxu0
      %v928 = vadd.f32 %v703, %v927
      %v929 = vpop.f32.mrb[0].mxu0
      %930 = vmatprep.mubr.f32.mxu0 0.0
      %931 = vmatmul.mubr.f32.gmra.mrb[0].mxu0 %v472
      %v932 = vpop.f32.mrb[0].mxu0
      %v933 = vadd.f32 %v708, %v932
      %v934 = vpop.f32.mrb[0].mxu0
      %935 = vmatprep.mubr.f32.mxu0 0.0
      %936 = vmatmul.mubr.f32.gmra.mrb[0].mxu0 %v473
      %v937 = vpop.f32.mrb[0].mxu0
      %v938 = vadd.f32 %v713, %v937
      %v939 = vpop.f32.mrb[0].mxu0
      %940 = vmatprep.mubr.f32.mxu0 0.0
      %941 = vmatmul.mubr.f32.gmra.mrb[0].mxu0 %v474
      %v942 = vpop.f32.mrb[0].mxu0
      %v943 = vadd.f32 %v718, %v942
      %v944 = vpop.f32.mrb[0].mxu0
      %945 = vmatprep.mubr.f32.mxu0 0.0
      %946 = vmatmul.mubr.f32.gmra.mrb[0].mxu0 %v475
      %v947 = vpop.f32.mrb[0].mxu0
      %v948 = vadd.f32 %v723, %v947
      %v949 = vpop.f32.mrb[0].mxu0
      %950 = vmatprep.mubr.f32.mxu0 0.0
      %951 = vmatmul.mubr.f32.gmra.mrb[0].mxu0 %v476
      %v952 = vpop.f32.mrb[0].mxu0
      %v953 = vadd.f32 %v728, %v952
      %v954 = vpop.f32.mrb[0].mxu0
      %955 = vmatprep.mubr.f32.mxu0 0.0
      %956 = vmatmul.mubr.f32.gmra.mrb[0].mxu0 %v477
      %v957 = vpop.f32.mrb[0].mxu0
      %v958 = vadd.f32 %v733, %v957
      %v959 = vpop.f32.mrb[0].mxu0
      %960 = vmatprep.mubr.f32.mxu0 0.0
      %961 = vmatmul.mubr.f32.gmra.mrb[0].mxu0 %v478
      %v962 = vpop.f32.mrb[0].mxu0
      %v963 = vadd.f32 %v738, %v962
      %v964 = vpop.f32.mrb[0].mxu0
      %965 = vmatprep.mubr.f32.mxu0 0.0
      %966 = vmatmul.mubr.f32.gmra.mrb[0].mxu0 %v479
      %v967 = vpop.f32.mrb[0].mxu0
      %v968 = vadd.f32 %v743, %v967
      %v969 = vpop.f32.mrb[0].mxu0
      %970 = vmatprep.mubr.f32.mxu0 0.0
      %971 = vmatmul.mubr.f32.gmra.mrb[0].mxu0 %v480
      %v972 = vpop.f32.mrb[0].mxu0
      %v973 = vadd.f32 %v748, %v972
      %v974 = vpop.f32.mrb[0].mxu0
      %975 = vmatprep.mubr.f32.mxu0 0.0
      %976 = vmatmul.mubr.f32.gmra.mrb[0].mxu0 %v481
      %v977 = vpop.f32.mrb[0].mxu0
      %v978 = vadd.f32 %v753, %v977
      %v979 = vpop.f32.mrb[0].mxu0
      %980 = vmatprep.mubr.f32.mxu0 0.0
      %981 = vmatmul.mubr.f32.gmra.mrb[0].mxu0 %v482
      %v982 = vpop.f32.mrb[0].mxu0
      %v983 = vadd.f32 %v758, %v982
      %v984 = vpop.f32.mrb[0].mxu0
      %985 = vmatprep.mubr.f32.mxu0 0.0
      %986 = vmatmul.mubr.f32.gmra.mrb[0].mxu0 %v483
      %v987 = vpop.f32.mrb[0].mxu0
      %v988 = vadd.f32 %v763, %v987
      %v989 = vpop.f32.mrb[0].mxu0
      %990 = vmatprep.mubr.f32.mxu0 0.0
      %991 = vmatmul.mubr.f32.gmra.mrb[0].mxu0 %v484
      %v992 = vpop.f32.mrb[0].mxu0
      %v993 = vadd.f32 %v768, %v992
      %v994 = vpop.f32.mrb[0].mxu0
      %995 = vmatprep.mubr.f32.mxu0 0.0
      %996 = vmatmul.mubr.f32.gmra.mrb[0].mxu0 %v485
      %v997 = vpop.f32.mrb[0].mxu0
      %v998 = vadd.f32 %v773, %v997
      %v999 = vpop.f32.mrb[0].mxu0
      %1000 = vdwg.mxu0
      %v1001 = vld [vmem:[#allocation2 + $0x2] sm:$0xff]
      %v1002 = vld [vmem:[#allocation2 + $0xa] sm:$0xff]
      %v1003 = vld [vmem:[#allocation2 + $0x1a] sm:$0xff]
      %v1004 = vld [vmem:[#allocation2 + $0x22] sm:$0xff]
      %v1005 = vld [vmem:[#allocation2 + $0x32] sm:$0xff]
      %v1006 = vld [vmem:[#allocation2 + $0x3a] sm:$0xff]
      %v1007 = vld [vmem:[#allocation2 + $0x4a] sm:$0xff]
      %v1008 = vld [vmem:[#allocation2 + $0x52] sm:$0xff]
      %v1009 = vld [vmem:[#allocation2 + $0x62] sm:$0xff]
      %v1010 = vld [vmem:[#allocation2 + $0x6a] sm:$0xff]
      %v1011 = vld [vmem:[#allocation2 + $0x7a] sm:$0xff]
      %v1012 = vld [vmem:[#allocation2 + $0x82] sm:$0xff]
      %v1013 = vld [vmem:[#allocation2 + $0x92] sm:$0xff]
      %v1014 = vld [vmem:[#allocation2 + $0x9a] sm:$0xff]
      %v1015 = vld [vmem:[#allocation2 + $0xaa] sm:$0xff]
      %v1016 = vld [vmem:[#allocation2 + $0xb2] sm:$0xff]
      %v1017 = vld [vmem:[#allocation2 + $0xc2] sm:$0xff]
      %v1018 = vld [vmem:[#allocation2 + $0xca] sm:$0xff]
      %v1019 = vld [vmem:[#allocation2 + $0xda] sm:$0xff]
      %v1020 = vld [vmem:[#allocation2 + $0xe2] sm:$0xff]
      %v1021 = vld [vmem:[#allocation2 + $0xf2] sm:$0xff]
      %v1022 = vld [vmem:[#allocation2 + $0xfa] sm:$0xff]
      %v1023 = vld [vmem:[#allocation2 + $0x10a] sm:$0xff]
      %v1024 = vld [vmem:[#allocation2 + $0x112] sm:$0xff]
      %v1025 = vld [vmem:[#allocation2 + $0x122] sm:$0xff]
      %v1026 = vld [vmem:[#allocation2 + $0x12a] sm:$0xff]
      %v1027 = vld [vmem:[#allocation2 + $0x13a] sm:$0xff]
      %v1028 = vld [vmem:[#allocation2 + $0x142] sm:$0xff]
      %v1029 = vld [vmem:[#allocation2 + $0x152] sm:$0xff]
      %v1030 = vld [vmem:[#allocation2 + $0x15a] sm:$0xff]
      %v1031 = vld [vmem:[#allocation2 + $0x16a] sm:$0xff]
      %v1032 = vld [vmem:[#allocation2 + $0x172] sm:$0xff]
      %s1033 = scalar_lea.vmem %s3, 256
      %v1034 = vld [vmem:[%s1033] sm:$0xff]
      %v1035 = vld [vmem:[%s1033 + $0x8] sm:$0xff]
      %v1036 = vld [vmem:[%s1033 + $0x10] sm:$0xff]
      %v1037 = vld [vmem:[%s1033 + $0x18] sm:$0xff]
      %v1038 = vld [vmem:[%s1033 + $0x20] sm:$0xff]
      %v1039 = vld [vmem:[%s1033 + $0x28] sm:$0xff]
      %v1040 = vld [vmem:[%s1033 + $0x30] sm:$0xff]
      %v1041 = vld [vmem:[%s1033 + $0x38] sm:$0xff]
      %v1042 = vld [vmem:[%s1033 + $0x40] sm:$0xff]
      %v1043 = vld [vmem:[%s1033 + $0x48] sm:$0xff]
      %v1044 = vld [vmem:[%s1033 + $0x50] sm:$0xff]
      %v1045 = vld [vmem:[%s1033 + $0x58] sm:$0xff]
      %v1046 = vld [vmem:[%s1033 + $0x60] sm:$0xff]
      %v1047 = vld [vmem:[%s1033 + $0x68] sm:$0xff]
      %v1048 = vld [vmem:[%s1033 + $0x70] sm:$0xff]
      %v1049 = vld [vmem:[%s1033 + $0x78] sm:$0xff]
      %1050 = vmatprep.subr.mxu0 0.0
      %1051 = vmatpush1.msra.mxu0 %v1034
      %1052 = vmatprep.subr.mxu0 0.0
      %1053 = vmatpush1.msra.mxu0 %v1035
      %1054 = vmatprep.subr.mxu0 0.0
      %1055 = vmatpush1.msra.mxu0 %v1036
      %1056 = vmatprep.subr.mxu0 0.0
      %1057 = vmatpush1.msra.mxu0 %v1037
      %1058 = vmatprep.subr.mxu0 0.0
      %1059 = vmatpush1.msra.mxu0 %v1038
      %1060 = vmatprep.subr.mxu0 0.0
      %1061 = vmatpush1.msra.mxu0 %v1039
      %1062 = vmatprep.subr.mxu0 0.0
      %1063 = vmatpush1.msra.mxu0 %v1040
      %1064 = vmatprep.subr.mxu0 0.0
      %1065 = vmatpush1.msra.mxu0 %v1041
      %1066 = vmatprep.subr.mxu0 0.0
      %1067 = vmatpush1.msra.mxu0 %v1042
      %1068 = vmatprep.subr.mxu0 0.0
      %1069 = vmatpush1.msra.mxu0 %v1043
      %1070 = vmatprep.subr.mxu0 0.0
      %1071 = vmatpush1.msra.mxu0 %v1044
      %1072 = vmatprep.subr.mxu0 0.0
      %1073 = vmatpush1.msra.mxu0 %v1045
      %1074 = vmatprep.subr.mxu0 0.0
      %1075 = vmatpush1.msra.mxu0 %v1046
      %1076 = vmatprep.subr.mxu0 0.0
      %1077 = vmatpush1.msra.mxu0 %v1047
      %1078 = vmatprep.subr.mxu0 0.0
      %1079 = vmatpush1.msra.mxu0 %v1048
      %1080 = vmatprep.subr.mxu0 0.0
      %1081 = vmatpush1.msra.mxu0 %v1049
      %1082 = vmatprep.subr.mxu0 0.0
      %1083 = vmatpush1.msra.mxu0 0.0
      %1084 = vmatprep.subr.mxu0 0.0
      %1085 = vmatpush1.msra.mxu0 0.0
      %1086 = vmatprep.subr.mxu0 0.0
      %1087 = vmatpush1.msra.mxu0 0.0
      %1088 = vmatprep.subr.mxu0 0.0
      %1089 = vmatpush1.msra.mxu0 0.0
      %1090 = vmatprep.subr.mxu0 0.0
      %1091 = vmatpush1.msra.mxu0 0.0
      %1092 = vmatprep.subr.mxu0 0.0
      %1093 = vmatpush1.msra.mxu0 0.0
      %1094 = vmatprep.subr.mxu0 0.0
      %1095 = vmatpush1.msra.mxu0 0.0
      %1096 = vmatprep.subr.mxu0 0.0
      %1097 = vmatpush1.msra.mxu0 0.0
      %1098 = vmatprep.subr.mxu0 0.0
      %1099 = vmatpush1.msra.mxu0 0.0
      %1100 = vmatprep.subr.mxu0 0.0
      %1101 = vmatpush1.msra.mxu0 0.0
      %1102 = vmatprep.subr.mxu0 0.0
      %1103 = vmatpush1.msra.mxu0 0.0
      %1104 = vmatprep.subr.mxu0 0.0
      %1105 = vmatpush1.msra.mxu0 0.0
      %1106 = vmatprep.subr.mxu0 0.0
      %1107 = vmatpush1.msra.mxu0 0.0
      %1108 = vmatprep.subr.mxu0 0.0
      %1109 = vmatpush1.msra.mxu0 0.0
      %1110 = vmatprep.subr.mxu0 0.0
      %1111 = vmatpush1.msra.mxu0 0.0
      %1112 = vmatprep.subr.mxu0 0.0
      %1113 = vmatpush1.msra.mxu0 0.0
      %1114 = vmatprep.mubr.f32.mxu0 0.0
      %1115 = vmatmul.mubr.f32.gmra.mrb[0].mxu0 %v1001
      %v1116 = vpop.f32.mrb[0].mxu0
      %v1117 = vadd.f32 0.0, %v1116
      %v1118 = vpop.f32.mrb[0].mxu0
      %1119 = vmatprep.mubr.f32.mxu0 0.0
      %1120 = vmatmul.mubr.f32.gmra.mrb[0].mxu0 %v1002
      %v1121 = vpop.f32.mrb[0].mxu0
      %v1122 = vadd.f32 0.0, %v1121
      %v1123 = vpop.f32.mrb[0].mxu0
      %1124 = vmatprep.mubr.f32.mxu0 0.0
      %1125 = vmatmul.mubr.f32.gmra.mrb[0].mxu0 %v1003
      %v1126 = vpop.f32.mrb[0].mxu0
      %v1127 = vadd.f32 0.0, %v1126
      %v1128 = vpop.f32.mrb[0].mxu0
      %1129 = vmatprep.mubr.f32.mxu0 0.0
      %1130 = vmatmul.mubr.f32.gmra.mrb[0].mxu0 %v1004
      %v1131 = vpop.f32.mrb[0].mxu0
      %v1132 = vadd.f32 0.0, %v1131
      %v1133 = vpop.f32.mrb[0].mxu0
      %1134 = vmatprep.mubr.f32.mxu0 0.0
      %1135 = vmatmul.mubr.f32.gmra.mrb[0].mxu0 %v1005
      %v1136 = vpop.f32.mrb[0].mxu0
      %v1137 = vadd.f32 0.0, %v1136
      %v1138 = vpop.f32.mrb[0].mxu0
      %1139 = vmatprep.mubr.f32.mxu0 0.0
      %1140 = vmatmul.mubr.f32.gmra.mrb[0].mxu0 %v1006
      %v1141 = vpop.f32.mrb[0].mxu0
      %v1142 = vadd.f32 0.0, %v1141
      %v1143 = vpop.f32.mrb[0].mxu0
      %1144 = vmatprep.mubr.f32.mxu0 0.0
      %1145 = vmatmul.mubr.f32.gmra.mrb[0].mxu0 %v1007
      %v1146 = vpop.f32.mrb[0].mxu0
      %v1147 = vadd.f32 0.0, %v1146
      %v1148 = vpop.f32.mrb[0].mxu0
      %1149 = vmatprep.mubr.f32.mxu0 0.0
      %1150 = vmatmul.mubr.f32.gmra.mrb[0].mxu0 %v1008
      %v1151 = vpop.f32.mrb[0].mxu0
      %v1152 = vadd.f32 0.0, %v1151
      %v1153 = vpop.f32.mrb[0].mxu0
      %1154 = vmatprep.mubr.f32.mxu0 0.0
      %1155 = vmatmul.mubr.f32.gmra.mrb[0].mxu0 %v1009
      %v1156 = vpop.f32.mrb[0].mxu0
      %v1157 = vadd.f32 0.0, %v1156
      %v1158 = vpop.f32.mrb[0].mxu0
      %1159 = vmatprep.mubr.f32.mxu0 0.0
      %1160 = vmatmul.mubr.f32.gmra.mrb[0].mxu0 %v1010
      %v1161 = vpop.f32.mrb[0].mxu0
      %v1162 = vadd.f32 0.0, %v1161
      %v1163 = vpop.f32.mrb[0].mxu0
      %1164 = vmatprep.mubr.f32.mxu0 0.0
      %1165 = vmatmul.mubr.f32.gmra.mrb[0].mxu0 %v1011
      %v1166 = vpop.f32.mrb[0].mxu0
      %v1167 = vadd.f32 0.0, %v1166
      %v1168 = vpop.f32.mrb[0].mxu0
      %1169 = vmatprep.mubr.f32.mxu0 0.0
      %1170 = vmatmul.mubr.f32.gmra.mrb[0].mxu0 %v1012
      %v1171 = vpop.f32.mrb[0].mxu0
      %v1172 = vadd.f32 0.0, %v1171
      %v1173 = vpop.f32.mrb[0].mxu0
      %1174 = vmatprep.mubr.f32.mxu0 0.0
      %1175 = vmatmul.mubr.f32.gmra.mrb[0].mxu0 %v1013
      %v1176 = vpop.f32.mrb[0].mxu0
      %v1177 = vadd.f32 0.0, %v1176
      %v1178 = vpop.f32.mrb[0].mxu0
      %1179 = vmatprep.mubr.f32.mxu0 0.0
      %1180 = vmatmul.mubr.f32.gmra.mrb[0].mxu0 %v1014
      %v1181 = vpop.f32.mrb[0].mxu0
      %v1182 = vadd.f32 0.0, %v1181
      %v1183 = vpop.f32.mrb[0].mxu0
      %1184 = vmatprep.mubr.f32.mxu0 0.0
      %1185 = vmatmul.mubr.f32.gmra.mrb[0].mxu0 %v1015
      %v1186 = vpop.f32.mrb[0].mxu0
      %v1187 = vadd.f32 0.0, %v1186
      %v1188 = vpop.f32.mrb[0].mxu0
      %1189 = vmatprep.mubr.f32.mxu0 0.0
      %1190 = vmatmul.mubr.f32.gmra.mrb[0].mxu0 %v1016
      %v1191 = vpop.f32.mrb[0].mxu0
      %v1192 = vadd.f32 0.0, %v1191
      %v1193 = vpop.f32.mrb[0].mxu0
      %1194 = vmatprep.mubr.f32.mxu0 0.0
      %1195 = vmatmul.mubr.f32.gmra.mrb[0].mxu0 %v1017
      %v1196 = vpop.f32.mrb[0].mxu0
      %v1197 = vadd.f32 0.0, %v1196
      %v1198 = vpop.f32.mrb[0].mxu0
      %1199 = vmatprep.mubr.f32.mxu0 0.0
      %1200 = vmatmul.mubr.f32.gmra.mrb[0].mxu0 %v1018
      %v1201 = vpop.f32.mrb[0].mxu0
      %v1202 = vadd.f32 0.0, %v1201
      %v1203 = vpop.f32.mrb[0].mxu0
      %1204 = vmatprep.mubr.f32.mxu0 0.0
      %1205 = vmatmul.mubr.f32.gmra.mrb[0].mxu0 %v1019
      %v1206 = vpop.f32.mrb[0].mxu0
      %v1207 = vadd.f32 0.0, %v1206
      %v1208 = vpop.f32.mrb[0].mxu0
      %1209 = vmatprep.mubr.f32.mxu0 0.0
      %1210 = vmatmul.mubr.f32.gmra.mrb[0].mxu0 %v1020
      %v1211 = vpop.f32.mrb[0].mxu0
      %v1212 = vadd.f32 0.0, %v1211
      %v1213 = vpop.f32.mrb[0].mxu0
      %1214 = vmatprep.mubr.f32.mxu0 0.0
      %1215 = vmatmul.mubr.f32.gmra.mrb[0].mxu0 %v1021
      %v1216 = vpop.f32.mrb[0].mxu0
      %v1217 = vadd.f32 0.0, %v1216
      %v1218 = vpop.f32.mrb[0].mxu0
      %1219 = vmatprep.mubr.f32.mxu0 0.0
      %1220 = vmatmul.mubr.f32.gmra.mrb[0].mxu0 %v1022
      %v1221 = vpop.f32.mrb[0].mxu0
      %v1222 = vadd.f32 0.0, %v1221
      %v1223 = vpop.f32.mrb[0].mxu0
      %1224 = vmatprep.mubr.f32.mxu0 0.0
      %1225 = vmatmul.mubr.f32.gmra.mrb[0].mxu0 %v1023
      %v1226 = vpop.f32.mrb[0].mxu0
      %v1227 = vadd.f32 0.0, %v1226
      %v1228 = vpop.f32.mrb[0].mxu0
      %1229 = vmatprep.mubr.f32.mxu0 0.0
      %1230 = vmatmul.mubr.f32.gmra.mrb[0].mxu0 %v1024
      %v1231 = vpop.f32.mrb[0].mxu0
      %v1232 = vadd.f32 0.0, %v1231
      %v1233 = vpop.f32.mrb[0].mxu0
      %1234 = vmatprep.mubr.f32.mxu0 0.0
      %1235 = vmatmul.mubr.f32.gmra.mrb[0].mxu0 %v1025
      %v1236 = vpop.f32.mrb[0].mxu0
      %v1237 = vadd.f32 0.0, %v1236
      %v1238 = vpop.f32.mrb[0].mxu0
      %1239 = vmatprep.mubr.f32.mxu0 0.0
      %1240 = vmatmul.mubr.f32.gmra.mrb[0].mxu0 %v1026
      %v1241 = vpop.f32.mrb[0].mxu0
      %v1242 = vadd.f32 0.0, %v1241
      %v1243 = vpop.f32.mrb[0].mxu0
      %1244 = vmatprep.mubr.f32.mxu0 0.0
      %1245 = vmatmul.mubr.f32.gmra.mrb[0].mxu0 %v1027
      %v1246 = vpop.f32.mrb[0].mxu0
      %v1247 = vadd.f32 0.0, %v1246
      %v1248 = vpop.f32.mrb[0].mxu0
      %1249 = vmatprep.mubr.f32.mxu0 0.0
      %1250 = vmatmul.mubr.f32.gmra.mrb[0].mxu0 %v1028
      %v1251 = vpop.f32.mrb[0].mxu0
      %v1252 = vadd.f32 0.0, %v1251
      %v1253 = vpop.f32.mrb[0].mxu0
      %1254 = vmatprep.mubr.f32.mxu0 0.0
      %1255 = vmatmul.mubr.f32.gmra.mrb[0].mxu0 %v1029
      %v1256 = vpop.f32.mrb[0].mxu0
      %v1257 = vadd.f32 0.0, %v1256
      %v1258 = vpop.f32.mrb[0].mxu0
      %1259 = vmatprep.mubr.f32.mxu0 0.0
      %1260 = vmatmul.mubr.f32.gmra.mrb[0].mxu0 %v1030
      %v1261 = vpop.f32.mrb[0].mxu0
      %v1262 = vadd.f32 0.0, %v1261
      %v1263 = vpop.f32.mrb[0].mxu0
      %1264 = vmatprep.mubr.f32.mxu0 0.0
      %1265 = vmatmul.mubr.f32.gmra.mrb[0].mxu0 %v1031
      %v1266 = vpop.f32.mrb[0].mxu0
      %v1267 = vadd.f32 0.0, %v1266
      %v1268 = vpop.f32.mrb[0].mxu0
      %1269 = vmatprep.mubr.f32.mxu0 0.0
      %1270 = vmatmul.mubr.f32.gmra.mrb[0].mxu0 %v1032
      %v1271 = vpop.f32.mrb[0].mxu0
      %v1272 = vadd.f32 0.0, %v1271
      %v1273 = vpop.f32.mrb[0].mxu0
      %1274 = vdwg.mxu0
      %v1275 = vadd.f32 %v843, %v1117
      %v1276 = vadd.f32 %v848, %v1122
      %v1277 = vadd.f32 %v853, %v1127
      %v1278 = vadd.f32 %v858, %v1132
      %v1279 = vadd.f32 %v863, %v1137
      %v1280 = vadd.f32 %v868, %v1142
      %v1281 = vadd.f32 %v873, %v1147
      %v1282 = vadd.f32 %v878, %v1152
      %v1283 = vadd.f32 %v883, %v1157
      %v1284 = vadd.f32 %v888, %v1162
      %v1285 = vadd.f32 %v893, %v1167
      %v1286 = vadd.f32 %v898, %v1172
      %v1287 = vadd.f32 %v903, %v1177
      %v1288 = vadd.f32 %v908, %v1182
      %v1289 = vadd.f32 %v913, %v1187
      %v1290 = vadd.f32 %v918, %v1192
      %v1291 = vadd.f32 %v923, %v1197
      %v1292 = vadd.f32 %v928, %v1202
      %v1293 = vadd.f32 %v933, %v1207
      %v1294 = vadd.f32 %v938, %v1212
      %v1295 = vadd.f32 %v943, %v1217
      %v1296 = vadd.f32 %v948, %v1222
      %v1297 = vadd.f32 %v953, %v1227
      %v1298 = vadd.f32 %v958, %v1232
      %v1299 = vadd.f32 %v963, %v1237
      %v1300 = vadd.f32 %v968, %v1242
      %v1301 = vadd.f32 %v973, %v1247
      %v1302 = vadd.f32 %v978, %v1252
      %v1303 = vadd.f32 %v983, %v1257
      %v1304 = vadd.f32 %v988, %v1262
      %v1305 = vadd.f32 %v993, %v1267
      %v1306 = vadd.f32 %v998, %v1272
      %v1307 = vld [vmem:[%s421] sm:$0xff]
      %v1308 = vld [vmem:[%s421 + $0x8] sm:$0xff]
      %v1309 = vld [vmem:[%s421 + $0x18] sm:$0xff]
      %v1310 = vld [vmem:[%s421 + $0x20] sm:$0xff]
      %v1311 = vld [vmem:[%s421 + $0x30] sm:$0xff]
      %v1312 = vld [vmem:[%s421 + $0x38] sm:$0xff]
      %v1313 = vld [vmem:[%s421 + $0x48] sm:$0xff]
      %v1314 = vld [vmem:[%s421 + $0x50] sm:$0xff]
      %v1315 = vld [vmem:[%s421 + $0x60] sm:$0xff]
      %v1316 = vld [vmem:[%s421 + $0x68] sm:$0xff]
      %v1317 = vld [vmem:[%s421 + $0x78] sm:$0xff]
      %v1318 = vld [vmem:[%s421 + $0x80] sm:$0xff]
      %v1319 = vld [vmem:[%s421 + $0x90] sm:$0xff]
      %v1320 = vld [vmem:[%s421 + $0x98] sm:$0xff]
      %v1321 = vld [vmem:[%s421 + $0xa8] sm:$0xff]
      %v1322 = vld [vmem:[%s421 + $0xb0] sm:$0xff]
      %v1323 = vld [vmem:[%s421 + $0xc0] sm:$0xff]
      %v1324 = vld [vmem:[%s421 + $0xc8] sm:$0xff]
      %v1325 = vld [vmem:[%s421 + $0xd8] sm:$0xff]
      %v1326 = vld [vmem:[%s421 + $0xe0] sm:$0xff]
      %v1327 = vld [vmem:[%s421 + $0xf0] sm:$0xff]
      %v1328 = vld [vmem:[%s421 + $0xf8] sm:$0xff]
      %v1329 = vld [vmem:[%s421 + $0x108] sm:$0xff]
      %v1330 = vld [vmem:[%s421 + $0x110] sm:$0xff]
      %v1331 = vld [vmem:[%s421 + $0x120] sm:$0xff]
      %v1332 = vld [vmem:[%s421 + $0x128] sm:$0xff]
      %v1333 = vld [vmem:[%s421 + $0x138] sm:$0xff]
      %v1334 = vld [vmem:[%s421 + $0x140] sm:$0xff]
      %v1335 = vld [vmem:[%s421 + $0x150] sm:$0xff]
      %v1336 = vld [vmem:[%s421 + $0x158] sm:$0xff]
      %v1337 = vld [vmem:[%s421 + $0x168] sm:$0xff]
      %v1338 = vld [vmem:[%s421 + $0x170] sm:$0xff]
      %s1339 = scalar_lea.vmem %s3, 384
      %v1340 = vld [vmem:[%s1339] sm:$0xff]
      %v1341 = vld [vmem:[%s1339 + $0x8] sm:$0xff]
      %v1342 = vld [vmem:[%s1339 + $0x10] sm:$0xff]
      %v1343 = vld [vmem:[%s1339 + $0x18] sm:$0xff]
      %v1344 = vld [vmem:[%s1339 + $0x20] sm:$0xff]
      %v1345 = vld [vmem:[%s1339 + $0x28] sm:$0xff]
      %v1346 = vld [vmem:[%s1339 + $0x30] sm:$0xff]
      %v1347 = vld [vmem:[%s1339 + $0x38] sm:$0xff]
      %v1348 = vld [vmem:[%s1339 + $0x40] sm:$0xff]
      %v1349 = vld [vmem:[%s1339 + $0x48] sm:$0xff]
      %v1350 = vld [vmem:[%s1339 + $0x50] sm:$0xff]
      %v1351 = vld [vmem:[%s1339 + $0x58] sm:$0xff]
      %v1352 = vld [vmem:[%s1339 + $0x60] sm:$0xff]
      %v1353 = vld [vmem:[%s1339 + $0x68] sm:$0xff]
      %v1354 = vld [vmem:[%s1339 + $0x70] sm:$0xff]
      %v1355 = vld [vmem:[%s1339 + $0x78] sm:$0xff]
      %1356 = vmatprep.subr.mxu0 0.0
      %1357 = vmatpush1.msra.mxu0 %v1340
      %1358 = vmatprep.subr.mxu0 0.0
      %1359 = vmatpush1.msra.mxu0 %v1341
      %1360 = vmatprep.subr.mxu0 0.0
      %1361 = vmatpush1.msra.mxu0 %v1342
      %1362 = vmatprep.subr.mxu0 0.0
      %1363 = vmatpush1.msra.mxu0 %v1343
      %1364 = vmatprep.subr.mxu0 0.0
      %1365 = vmatpush1.msra.mxu0 %v1344
      %1366 = vmatprep.subr.mxu0 0.0
      %1367 = vmatpush1.msra.mxu0 %v1345
      %1368 = vmatprep.subr.mxu0 0.0
      %1369 = vmatpush1.msra.mxu0 %v1346
      %1370 = vmatprep.subr.mxu0 0.0
      %1371 = vmatpush1.msra.mxu0 %v1347
      %1372 = vmatprep.subr.mxu0 0.0
      %1373 = vmatpush1.msra.mxu0 %v1348
      %1374 = vmatprep.subr.mxu0 0.0
      %1375 = vmatpush1.msra.mxu0 %v1349
      %1376 = vmatprep.subr.mxu0 0.0
      %1377 = vmatpush1.msra.mxu0 %v1350
      %1378 = vmatprep.subr.mxu0 0.0
      %1379 = vmatpush1.msra.mxu0 %v1351
      %1380 = vmatprep.subr.mxu0 0.0
      %1381 = vmatpush1.msra.mxu0 %v1352
      %1382 = vmatprep.subr.mxu0 0.0
      %1383 = vmatpush1.msra.mxu0 %v1353
      %1384 = vmatprep.subr.mxu0 0.0
      %1385 = vmatpush1.msra.mxu0 %v1354
      %1386 = vmatprep.subr.mxu0 0.0
      %1387 = vmatpush1.msra.mxu0 %v1355
      %1388 = vmatprep.subr.mxu0 0.0
      %1389 = vmatpush1.msra.mxu0 0.0
      %1390 = vmatprep.subr.mxu0 0.0
      %1391 = vmatpush1.msra.mxu0 0.0
      %1392 = vmatprep.subr.mxu0 0.0
      %1393 = vmatpush1.msra.mxu0 0.0
      %1394 = vmatprep.subr.mxu0 0.0
      %1395 = vmatpush1.msra.mxu0 0.0
      %1396 = vmatprep.subr.mxu0 0.0
      %1397 = vmatpush1.msra.mxu0 0.0
      %1398 = vmatprep.subr.mxu0 0.0
      %1399 = vmatpush1.msra.mxu0 0.0
      %1400 = vmatprep.subr.mxu0 0.0
      %1401 = vmatpush1.msra.mxu0 0.0
      %1402 = vmatprep.subr.mxu0 0.0
      %1403 = vmatpush1.msra.mxu0 0.0
      %1404 = vmatprep.subr.mxu0 0.0
      %1405 = vmatpush1.msra.mxu0 0.0
      %1406 = vmatprep.subr.mxu0 0.0
      %1407 = vmatpush1.msra.mxu0 0.0
      %1408 = vmatprep.subr.mxu0 0.0
      %1409 = vmatpush1.msra.mxu0 0.0
      %1410 = vmatprep.subr.mxu0 0.0
      %1411 = vmatpush1.msra.mxu0 0.0
      %1412 = vmatprep.subr.mxu0 0.0
      %1413 = vmatpush1.msra.mxu0 0.0
      %1414 = vmatprep.subr.mxu0 0.0
      %1415 = vmatpush1.msra.mxu0 0.0
      %1416 = vmatprep.subr.mxu0 0.0
      %1417 = vmatpush1.msra.mxu0 0.0
      %1418 = vmatprep.subr.mxu0 0.0
      %1419 = vmatpush1.msra.mxu0 0.0
      %1420 = vmatprep.mubr.f32.mxu0 0.0
      %1421 = vmatmul.mubr.f32.gmra.mrb[0].mxu0 %v1307
      %v1422 = vpop.f32.mrb[0].mxu0
      %v1423 = vadd.f32 0.0, %v1422
      %v1424 = vpop.f32.mrb[0].mxu0
      %1425 = vmatprep.mubr.f32.mxu0 0.0
      %1426 = vmatmul.mubr.f32.gmra.mrb[0].mxu0 %v1308
      %v1427 = vpop.f32.mrb[0].mxu0
      %v1428 = vadd.f32 0.0, %v1427
      %v1429 = vpop.f32.mrb[0].mxu0
      %1430 = vmatprep.mubr.f32.mxu0 0.0
      %1431 = vmatmul.mubr.f32.gmra.mrb[0].mxu0 %v1309
      %v1432 = vpop.f32.mrb[0].mxu0
      %v1433 = vadd.f32 0.0, %v1432
      %v1434 = vpop.f32.mrb[0].mxu0
      %1435 = vmatprep.mubr.f32.mxu0 0.0
      %1436 = vmatmul.mubr.f32.gmra.mrb[0].mxu0 %v1310
      %v1437 = vpop.f32.mrb[0].mxu0
      %v1438 = vadd.f32 0.0, %v1437
      %v1439 = vpop.f32.mrb[0].mxu0
      %1440 = vmatprep.mubr.f32.mxu0 0.0
      %1441 = vmatmul.mubr.f32.gmra.mrb[0].mxu0 %v1311
      %v1442 = vpop.f32.mrb[0].mxu0
      %v1443 = vadd.f32 0.0, %v1442
      %v1444 = vpop.f32.mrb[0].mxu0
      %1445 = vmatprep.mubr.f32.mxu0 0.0
      %1446 = vmatmul.mubr.f32.gmra.mrb[0].mxu0 %v1312
      %v1447 = vpop.f32.mrb[0].mxu0
      %v1448 = vadd.f32 0.0, %v1447
      %v1449 = vpop.f32.mrb[0].mxu0
      %1450 = vmatprep.mubr.f32.mxu0 0.0
      %1451 = vmatmul.mubr.f32.gmra.mrb[0].mxu0 %v1313
      %v1452 = vpop.f32.mrb[0].mxu0
      %v1453 = vadd.f32 0.0, %v1452
      %v1454 = vpop.f32.mrb[0].mxu0
      %1455 = vmatprep.mubr.f32.mxu0 0.0
      %1456 = vmatmul.mubr.f32.gmra.mrb[0].mxu0 %v1314
      %v1457 = vpop.f32.mrb[0].mxu0
      %v1458 = vadd.f32 0.0, %v1457
      %v1459 = vpop.f32.mrb[0].mxu0
      %1460 = vmatprep.mubr.f32.mxu0 0.0
      %1461 = vmatmul.mubr.f32.gmra.mrb[0].mxu0 %v1315
      %v1462 = vpop.f32.mrb[0].mxu0
      %v1463 = vadd.f32 0.0, %v1462
      %v1464 = vpop.f32.mrb[0].mxu0
      %1465 = vmatprep.mubr.f32.mxu0 0.0
      %1466 = vmatmul.mubr.f32.gmra.mrb[0].mxu0 %v1316
      %v1467 = vpop.f32.mrb[0].mxu0
      %v1468 = vadd.f32 0.0, %v1467
      %v1469 = vpop.f32.mrb[0].mxu0
      %1470 = vmatprep.mubr.f32.mxu0 0.0
      %1471 = vmatmul.mubr.f32.gmra.mrb[0].mxu0 %v1317
      %v1472 = vpop.f32.mrb[0].mxu0
      %v1473 = vadd.f32 0.0, %v1472
      %v1474 = vpop.f32.mrb[0].mxu0
      %1475 = vmatprep.mubr.f32.mxu0 0.0
      %1476 = vmatmul.mubr.f32.gmra.mrb[0].mxu0 %v1318
      %v1477 = vpop.f32.mrb[0].mxu0
      %v1478 = vadd.f32 0.0, %v1477
      %v1479 = vpop.f32.mrb[0].mxu0
      %1480 = vmatprep.mubr.f32.mxu0 0.0
      %1481 = vmatmul.mubr.f32.gmra.mrb[0].mxu0 %v1319
      %v1482 = vpop.f32.mrb[0].mxu0
      %v1483 = vadd.f32 0.0, %v1482
      %v1484 = vpop.f32.mrb[0].mxu0
      %1485 = vmatprep.mubr.f32.mxu0 0.0
      %1486 = vmatmul.mubr.f32.gmra.mrb[0].mxu0 %v1320
      %v1487 = vpop.f32.mrb[0].mxu0
      %v1488 = vadd.f32 0.0, %v1487
      %v1489 = vpop.f32.mrb[0].mxu0
      %1490 = vmatprep.mubr.f32.mxu0 0.0
      %1491 = vmatmul.mubr.f32.gmra.mrb[0].mxu0 %v1321
      %v1492 = vpop.f32.mrb[0].mxu0
      %v1493 = vadd.f32 0.0, %v1492
      %v1494 = vpop.f32.mrb[0].mxu0
      %1495 = vmatprep.mubr.f32.mxu0 0.0
      %1496 = vmatmul.mubr.f32.gmra.mrb[0].mxu0 %v1322
      %v1497 = vpop.f32.mrb[0].mxu0
      %v1498 = vadd.f32 0.0, %v1497
      %v1499 = vpop.f32.mrb[0].mxu0
      %1500 = vmatprep.mubr.f32.mxu0 0.0
      %1501 = vmatmul.mubr.f32.gmra.mrb[0].mxu0 %v1323
      %v1502 = vpop.f32.mrb[0].mxu0
      %v1503 = vadd.f32 0.0, %v1502
      %v1504 = vpop.f32.mrb[0].mxu0
      %1505 = vmatprep.mubr.f32.mxu0 0.0
      %1506 = vmatmul.mubr.f32.gmra.mrb[0].mxu0 %v1324
      %v1507 = vpop.f32.mrb[0].mxu0
      %v1508 = vadd.f32 0.0, %v1507
      %v1509 = vpop.f32.mrb[0].mxu0
      %1510 = vmatprep.mubr.f32.mxu0 0.0
      %1511 = vmatmul.mubr.f32.gmra.mrb[0].mxu0 %v1325
      %v1512 = vpop.f32.mrb[0].mxu0
      %v1513 = vadd.f32 0.0, %v1512
      %v1514 = vpop.f32.mrb[0].mxu0
      %1515 = vmatprep.mubr.f32.mxu0 0.0
      %1516 = vmatmul.mubr.f32.gmra.mrb[0].mxu0 %v1326
      %v1517 = vpop.f32.mrb[0].mxu0
      %v1518 = vadd.f32 0.0, %v1517
      %v1519 = vpop.f32.mrb[0].mxu0
      %1520 = vmatprep.mubr.f32.mxu0 0.0
      %1521 = vmatmul.mubr.f32.gmra.mrb[0].mxu0 %v1327
      %v1522 = vpop.f32.mrb[0].mxu0
      %v1523 = vadd.f32 0.0, %v1522
      %v1524 = vpop.f32.mrb[0].mxu0
      %1525 = vmatprep.mubr.f32.mxu0 0.0
      %1526 = vmatmul.mubr.f32.gmra.mrb[0].mxu0 %v1328
      %v1527 = vpop.f32.mrb[0].mxu0
      %v1528 = vadd.f32 0.0, %v1527
      %v1529 = vpop.f32.mrb[0].mxu0
      %1530 = vmatprep.mubr.f32.mxu0 0.0
      %1531 = vmatmul.mubr.f32.gmra.mrb[0].mxu0 %v1329
      %v1532 = vpop.f32.mrb[0].mxu0
      %v1533 = vadd.f32 0.0, %v1532
      %v1534 = vpop.f32.mrb[0].mxu0
      %1535 = vmatprep.mubr.f32.mxu0 0.0
      %1536 = vmatmul.mubr.f32.gmra.mrb[0].mxu0 %v1330
      %v1537 = vpop.f32.mrb[0].mxu0
      %v1538 = vadd.f32 0.0, %v1537
      %v1539 = vpop.f32.mrb[0].mxu0
      %1540 = vmatprep.mubr.f32.mxu0 0.0
      %1541 = vmatmul.mubr.f32.gmra.mrb[0].mxu0 %v1331
      %v1542 = vpop.f32.mrb[0].mxu0
      %v1543 = vadd.f32 0.0, %v1542
      %v1544 = vpop.f32.mrb[0].mxu0
      %1545 = vmatprep.mubr.f32.mxu0 0.0
      %1546 = vmatmul.mubr.f32.gmra.mrb[0].mxu0 %v1332
      %v1547 = vpop.f32.mrb[0].mxu0
      %v1548 = vadd.f32 0.0, %v1547
      %v1549 = vpop.f32.mrb[0].mxu0
      %1550 = vmatprep.mubr.f32.mxu0 0.0
      %1551 = vmatmul.mubr.f32.gmra.mrb[0].mxu0 %v1333
      %v1552 = vpop.f32.mrb[0].mxu0
      %v1553 = vadd.f32 0.0, %v1552
      %v1554 = vpop.f32.mrb[0].mxu0
      %1555 = vmatprep.mubr.f32.mxu0 0.0
      %1556 = vmatmul.mubr.f32.gmra.mrb[0].mxu0 %v1334
      %v1557 = vpop.f32.mrb[0].mxu0
      %v1558 = vadd.f32 0.0, %v1557
      %v1559 = vpop.f32.mrb[0].mxu0
      %1560 = vmatprep.mubr.f32.mxu0 0.0
      %1561 = vmatmul.mubr.f32.gmra.mrb[0].mxu0 %v1335
      %v1562 = vpop.f32.mrb[0].mxu0
      %v1563 = vadd.f32 0.0, %v1562
      %v1564 = vpop.f32.mrb[0].mxu0
      %1565 = vmatprep.mubr.f32.mxu0 0.0
      %1566 = vmatmul.mubr.f32.gmra.mrb[0].mxu0 %v1336
      %v1567 = vpop.f32.mrb[0].mxu0
      %v1568 = vadd.f32 0.0, %v1567
      %v1569 = vpop.f32.mrb[0].mxu0
      %1570 = vmatprep.mubr.f32.mxu0 0.0
      %1571 = vmatmul.mubr.f32.gmra.mrb[0].mxu0 %v1337
      %v1572 = vpop.f32.mrb[0].mxu0
      %v1573 = vadd.f32 0.0, %v1572
      %v1574 = vpop.f32.mrb[0].mxu0
      %1575 = vmatprep.mubr.f32.mxu0 0.0
      %1576 = vmatmul.mubr.f32.gmra.mrb[0].mxu0 %v1338
      %v1577 = vpop.f32.mrb[0].mxu0
      %v1578 = vadd.f32 0.0, %v1577
      %v1579 = vpop.f32.mrb[0].mxu0
      %1580 = vdwg.mxu0
      %v1581 = vadd.f32 %v1275, %v1423
      %v1582 = vadd.f32 %v1276, %v1428
      %v1583 = vadd.f32 %v1277, %v1433
      %v1584 = vadd.f32 %v1278, %v1438
      %v1585 = vadd.f32 %v1279, %v1443
      %v1586 = vadd.f32 %v1280, %v1448
      %v1587 = vadd.f32 %v1281, %v1453
      %v1588 = vadd.f32 %v1282, %v1458
      %v1589 = vadd.f32 %v1283, %v1463
      %v1590 = vadd.f32 %v1284, %v1468
      %v1591 = vadd.f32 %v1285, %v1473
      %v1592 = vadd.f32 %v1286, %v1478
      %v1593 = vadd.f32 %v1287, %v1483
      %v1594 = vadd.f32 %v1288, %v1488
      %v1595 = vadd.f32 %v1289, %v1493
      %v1596 = vadd.f32 %v1290, %v1498
      %v1597 = vadd.f32 %v1291, %v1503
      %v1598 = vadd.f32 %v1292, %v1508
      %v1599 = vadd.f32 %v1293, %v1513
      %v1600 = vadd.f32 %v1294, %v1518
      %v1601 = vadd.f32 %v1295, %v1523
      %v1602 = vadd.f32 %v1296, %v1528
      %v1603 = vadd.f32 %v1297, %v1533
      %v1604 = vadd.f32 %v1298, %v1538
      %v1605 = vadd.f32 %v1299, %v1543
      %v1606 = vadd.f32 %v1300, %v1548
      %v1607 = vadd.f32 %v1301, %v1553
      %v1608 = vadd.f32 %v1302, %v1558
      %v1609 = vadd.f32 %v1303, %v1563
      %v1610 = vadd.f32 %v1304, %v1568
      %v1611 = vadd.f32 %v1305, %v1573
      %v1612 = vadd.f32 %v1306, %v1578
      %v1613 = vld [vmem:[%s421 + $0x1] sm:$0xff]
      %v1614 = vld [vmem:[%s421 + $0x9] sm:$0xff]
      %v1615 = vld [vmem:[%s421 + $0x19] sm:$0xff]
      %v1616 = vld [vmem:[%s421 + $0x21] sm:$0xff]
      %v1617 = vld [vmem:[%s421 + $0x31] sm:$0xff]
      %v1618 = vld [vmem:[%s421 + $0x39] sm:$0xff]
      %v1619 = vld [vmem:[%s421 + $0x49] sm:$0xff]
      %v1620 = vld [vmem:[%s421 + $0x51] sm:$0xff]
      %v1621 = vld [vmem:[%s421 + $0x61] sm:$0xff]
      %v1622 = vld [vmem:[%s421 + $0x69] sm:$0xff]
      %v1623 = vld [vmem:[%s421 + $0x79] sm:$0xff]
      %v1624 = vld [vmem:[%s421 + $0x81] sm:$0xff]
      %v1625 = vld [vmem:[%s421 + $0x91] sm:$0xff]
      %v1626 = vld [vmem:[%s421 + $0x99] sm:$0xff]
      %v1627 = vld [vmem:[%s421 + $0xa9] sm:$0xff]
      %v1628 = vld [vmem:[%s421 + $0xb1] sm:$0xff]
      %v1629 = vld [vmem:[%s421 + $0xc1] sm:$0xff]
      %v1630 = vld [vmem:[%s421 + $0xc9] sm:$0xff]
      %v1631 = vld [vmem:[%s421 + $0xd9] sm:$0xff]
      %v1632 = vld [vmem:[%s421 + $0xe1] sm:$0xff]
      %v1633 = vld [vmem:[%s421 + $0xf1] sm:$0xff]
      %v1634 = vld [vmem:[%s421 + $0xf9] sm:$0xff]
      %v1635 = vld [vmem:[%s421 + $0x109] sm:$0xff]
      %v1636 = vld [vmem:[%s421 + $0x111] sm:$0xff]
      %v1637 = vld [vmem:[%s421 + $0x121] sm:$0xff]
      %v1638 = vld [vmem:[%s421 + $0x129] sm:$0xff]
      %v1639 = vld [vmem:[%s421 + $0x139] sm:$0xff]
      %v1640 = vld [vmem:[%s421 + $0x141] sm:$0xff]
      %v1641 = vld [vmem:[%s421 + $0x151] sm:$0xff]
      %v1642 = vld [vmem:[%s421 + $0x159] sm:$0xff]
      %v1643 = vld [vmem:[%s421 + $0x169] sm:$0xff]
      %v1644 = vld [vmem:[%s421 + $0x171] sm:$0xff]
      %s1645 = scalar_lea.vmem %s3, 512
      %v1646 = vld [vmem:[%s1645] sm:$0xff]
      %v1647 = vld [vmem:[%s1645 + $0x8] sm:$0xff]
      %v1648 = vld [vmem:[%s1645 + $0x10] sm:$0xff]
      %v1649 = vld [vmem:[%s1645 + $0x18] sm:$0xff]
      %v1650 = vld [vmem:[%s1645 + $0x20] sm:$0xff]
      %v1651 = vld [vmem:[%s1645 + $0x28] sm:$0xff]
      %v1652 = vld [vmem:[%s1645 + $0x30] sm:$0xff]
      %v1653 = vld [vmem:[%s1645 + $0x38] sm:$0xff]
      %v1654 = vld [vmem:[%s1645 + $0x40] sm:$0xff]
      %v1655 = vld [vmem:[%s1645 + $0x48] sm:$0xff]
      %v1656 = vld [vmem:[%s1645 + $0x50] sm:$0xff]
      %v1657 = vld [vmem:[%s1645 + $0x58] sm:$0xff]
      %v1658 = vld [vmem:[%s1645 + $0x60] sm:$0xff]
      %v1659 = vld [vmem:[%s1645 + $0x68] sm:$0xff]
      %v1660 = vld [vmem:[%s1645 + $0x70] sm:$0xff]
      %v1661 = vld [vmem:[%s1645 + $0x78] sm:$0xff]
      %1662 = vmatprep.subr.mxu0 0.0
      %1663 = vmatpush1.msra.mxu0 %v1646
      %1664 = vmatprep.subr.mxu0 0.0
      %1665 = vmatpush1.msra.mxu0 %v1647
      %1666 = vmatprep.subr.mxu0 0.0
      %1667 = vmatpush1.msra.mxu0 %v1648
      %1668 = vmatprep.subr.mxu0 0.0
      %1669 = vmatpush1.msra.mxu0 %v1649
      %1670 = vmatprep.subr.mxu0 0.0
      %1671 = vmatpush1.msra.mxu0 %v1650
      %1672 = vmatprep.subr.mxu0 0.0
      %1673 = vmatpush1.msra.mxu0 %v1651
      %1674 = vmatprep.subr.mxu0 0.0
      %1675 = vmatpush1.msra.mxu0 %v1652
      %1676 = vmatprep.subr.mxu0 0.0
      %1677 = vmatpush1.msra.mxu0 %v1653
      %1678 = vmatprep.subr.mxu0 0.0
      %1679 = vmatpush1.msra.mxu0 %v1654
      %1680 = vmatprep.subr.mxu0 0.0
      %1681 = vmatpush1.msra.mxu0 %v1655
      %1682 = vmatprep.subr.mxu0 0.0
      %1683 = vmatpush1.msra.mxu0 %v1656
      %1684 = vmatprep.subr.mxu0 0.0
      %1685 = vmatpush1.msra.mxu0 %v1657
      %1686 = vmatprep.subr.mxu0 0.0
      %1687 = vmatpush1.msra.mxu0 %v1658
      %1688 = vmatprep.subr.mxu0 0.0
      %1689 = vmatpush1.msra.mxu0 %v1659
      %1690 = vmatprep.subr.mxu0 0.0
      %1691 = vmatpush1.msra.mxu0 %v1660
      %1692 = vmatprep.subr.mxu0 0.0
      %1693 = vmatpush1.msra.mxu0 %v1661
      %1694 = vmatprep.subr.mxu0 0.0
      %1695 = vmatpush1.msra.mxu0 0.0
      %1696 = vmatprep.subr.mxu0 0.0
      %1697 = vmatpush1.msra.mxu0 0.0
      %1698 = vmatprep.subr.mxu0 0.0
      %1699 = vmatpush1.msra.mxu0 0.0
      %1700 = vmatprep.subr.mxu0 0.0
      %1701 = vmatpush1.msra.mxu0 0.0
      %1702 = vmatprep.subr.mxu0 0.0
      %1703 = vmatpush1.msra.mxu0 0.0
      %1704 = vmatprep.subr.mxu0 0.0
      %1705 = vmatpush1.msra.mxu0 0.0
      %1706 = vmatprep.subr.mxu0 0.0
      %1707 = vmatpush1.msra.mxu0 0.0
      %1708 = vmatprep.subr.mxu0 0.0
      %1709 = vmatpush1.msra.mxu0 0.0
      %1710 = vmatprep.subr.mxu0 0.0
      %1711 = vmatpush1.msra.mxu0 0.0
      %1712 = vmatprep.subr.mxu0 0.0
      %1713 = vmatpush1.msra.mxu0 0.0
      %1714 = vmatprep.subr.mxu0 0.0
      %1715 = vmatpush1.msra.mxu0 0.0
      %1716 = vmatprep.subr.mxu0 0.0
      %1717 = vmatpush1.msra.mxu0 0.0
      %1718 = vmatprep.subr.mxu0 0.0
      %1719 = vmatpush1.msra.mxu0 0.0
      %1720 = vmatprep.subr.mxu0 0.0
      %1721 = vmatpush1.msra.mxu0 0.0
      %1722 = vmatprep.subr.mxu0 0.0
      %1723 = vmatpush1.msra.mxu0 0.0
      %1724 = vmatprep.subr.mxu0 0.0
      %1725 = vmatpush1.msra.mxu0 0.0
      %1726 = vmatprep.mubr.f32.mxu0 0.0
      %1727 = vmatmul.mubr.f32.gmra.mrb[0].mxu0 %v1613
      %v1728 = vpop.f32.mrb[0].mxu0
      %v1729 = vadd.f32 0.0, %v1728
      %v1730 = vpop.f32.mrb[0].mxu0
      %1731 = vmatprep.mubr.f32.mxu0 0.0
      %1732 = vmatmul.mubr.f32.gmra.mrb[0].mxu0 %v1614
      %v1733 = vpop.f32.mrb[0].mxu0
      %v1734 = vadd.f32 0.0, %v1733
      %v1735 = vpop.f32.mrb[0].mxu0
      %1736 = vmatprep.mubr.f32.mxu0 0.0
      %1737 = vmatmul.mubr.f32.gmra.mrb[0].mxu0 %v1615
      %v1738 = vpop.f32.mrb[0].mxu0
      %v1739 = vadd.f32 0.0, %v1738
      %v1740 = vpop.f32.mrb[0].mxu0
      %1741 = vmatprep.mubr.f32.mxu0 0.0
      %1742 = vmatmul.mubr.f32.gmra.mrb[0].mxu0 %v1616
      %v1743 = vpop.f32.mrb[0].mxu0
      %v1744 = vadd.f32 0.0, %v1743
      %v1745 = vpop.f32.mrb[0].mxu0
      %1746 = vmatprep.mubr.f32.mxu0 0.0
      %1747 = vmatmul.mubr.f32.gmra.mrb[0].mxu0 %v1617
      %v1748 = vpop.f32.mrb[0].mxu0
      %v1749 = vadd.f32 0.0, %v1748
      %v1750 = vpop.f32.mrb[0].mxu0
      %1751 = vmatprep.mubr.f32.mxu0 0.0
      %1752 = vmatmul.mubr.f32.gmra.mrb[0].mxu0 %v1618
      %v1753 = vpop.f32.mrb[0].mxu0
      %v1754 = vadd.f32 0.0, %v1753
      %v1755 = vpop.f32.mrb[0].mxu0
      %1756 = vmatprep.mubr.f32.mxu0 0.0
      %1757 = vmatmul.mubr.f32.gmra.mrb[0].mxu0 %v1619
      %v1758 = vpop.f32.mrb[0].mxu0
      %v1759 = vadd.f32 0.0, %v1758
      %v1760 = vpop.f32.mrb[0].mxu0
      %1761 = vmatprep.mubr.f32.mxu0 0.0
      %1762 = vmatmul.mubr.f32.gmra.mrb[0].mxu0 %v1620
      %v1763 = vpop.f32.mrb[0].mxu0
      %v1764 = vadd.f32 0.0, %v1763
      %v1765 = vpop.f32.mrb[0].mxu0
      %1766 = vmatprep.mubr.f32.mxu0 0.0
      %1767 = vmatmul.mubr.f32.gmra.mrb[0].mxu0 %v1621
      %v1768 = vpop.f32.mrb[0].mxu0
      %v1769 = vadd.f32 0.0, %v1768
      %v1770 = vpop.f32.mrb[0].mxu0
      %1771 = vmatprep.mubr.f32.mxu0 0.0
      %1772 = vmatmul.mubr.f32.gmra.mrb[0].mxu0 %v1622
      %v1773 = vpop.f32.mrb[0].mxu0
      %v1774 = vadd.f32 0.0, %v1773
      %v1775 = vpop.f32.mrb[0].mxu0
      %1776 = vmatprep.mubr.f32.mxu0 0.0
      %1777 = vmatmul.mubr.f32.gmra.mrb[0].mxu0 %v1623
      %v1778 = vpop.f32.mrb[0].mxu0
      %v1779 = vadd.f32 0.0, %v1778
      %v1780 = vpop.f32.mrb[0].mxu0
      %1781 = vmatprep.mubr.f32.mxu0 0.0
      %1782 = vmatmul.mubr.f32.gmra.mrb[0].mxu0 %v1624
      %v1783 = vpop.f32.mrb[0].mxu0
      %v1784 = vadd.f32 0.0, %v1783
      %v1785 = vpop.f32.mrb[0].mxu0
      %1786 = vmatprep.mubr.f32.mxu0 0.0
      %1787 = vmatmul.mubr.f32.gmra.mrb[0].mxu0 %v1625
      %v1788 = vpop.f32.mrb[0].mxu0
      %v1789 = vadd.f32 0.0, %v1788
      %v1790 = vpop.f32.mrb[0].mxu0
      %1791 = vmatprep.mubr.f32.mxu0 0.0
      %1792 = vmatmul.mubr.f32.gmra.mrb[0].mxu0 %v1626
      %v1793 = vpop.f32.mrb[0].mxu0
      %v1794 = vadd.f32 0.0, %v1793
      %v1795 = vpop.f32.mrb[0].mxu0
      %1796 = vmatprep.mubr.f32.mxu0 0.0
      %1797 = vmatmul.mubr.f32.gmra.mrb[0].mxu0 %v1627
      %v1798 = vpop.f32.mrb[0].mxu0
      %v1799 = vadd.f32 0.0, %v1798
      %v1800 = vpop.f32.mrb[0].mxu0
      %1801 = vmatprep.mubr.f32.mxu0 0.0
      %1802 = vmatmul.mubr.f32.gmra.mrb[0].mxu0 %v1628
      %v1803 = vpop.f32.mrb[0].mxu0
      %v1804 = vadd.f32 0.0, %v1803
      %v1805 = vpop.f32.mrb[0].mxu0
      %1806 = vmatprep.mubr.f32.mxu0 0.0
      %1807 = vmatmul.mubr.f32.gmra.mrb[0].mxu0 %v1629
      %v1808 = vpop.f32.mrb[0].mxu0
      %v1809 = vadd.f32 0.0, %v1808
      %v1810 = vpop.f32.mrb[0].mxu0
      %1811 = vmatprep.mubr.f32.mxu0 0.0
      %1812 = vmatmul.mubr.f32.gmra.mrb[0].mxu0 %v1630
      %v1813 = vpop.f32.mrb[0].mxu0
      %v1814 = vadd.f32 0.0, %v1813
      %v1815 = vpop.f32.mrb[0].mxu0
      %1816 = vmatprep.mubr.f32.mxu0 0.0
      %1817 = vmatmul.mubr.f32.gmra.mrb[0].mxu0 %v1631
      %v1818 = vpop.f32.mrb[0].mxu0
      %v1819 = vadd.f32 0.0, %v1818
      %v1820 = vpop.f32.mrb[0].mxu0
      %1821 = vmatprep.mubr.f32.mxu0 0.0
      %1822 = vmatmul.mubr.f32.gmra.mrb[0].mxu0 %v1632
      %v1823 = vpop.f32.mrb[0].mxu0
      %v1824 = vadd.f32 0.0, %v1823
      %v1825 = vpop.f32.mrb[0].mxu0
      %1826 = vmatprep.mubr.f32.mxu0 0.0
      %1827 = vmatmul.mubr.f32.gmra.mrb[0].mxu0 %v1633
      %v1828 = vpop.f32.mrb[0].mxu0
      %v1829 = vadd.f32 0.0, %v1828
      %v1830 = vpop.f32.mrb[0].mxu0
      %1831 = vmatprep.mubr.f32.mxu0 0.0
      %1832 = vmatmul.mubr.f32.gmra.mrb[0].mxu0 %v1634
      %v1833 = vpop.f32.mrb[0].mxu0
      %v1834 = vadd.f32 0.0, %v1833
      %v1835 = vpop.f32.mrb[0].mxu0
      %1836 = vmatprep.mubr.f32.mxu0 0.0
      %1837 = vmatmul.mubr.f32.gmra.mrb[0].mxu0 %v1635
      %v1838 = vpop.f32.mrb[0].mxu0
      %v1839 = vadd.f32 0.0, %v1838
      %v1840 = vpop.f32.mrb[0].mxu0
      %1841 = vmatprep.mubr.f32.mxu0 0.0
      %1842 = vmatmul.mubr.f32.gmra.mrb[0].mxu0 %v1636
      %v1843 = vpop.f32.mrb[0].mxu0
      %v1844 = vadd.f32 0.0, %v1843
      %v1845 = vpop.f32.mrb[0].mxu0
      %1846 = vmatprep.mubr.f32.mxu0 0.0
      %1847 = vmatmul.mubr.f32.gmra.mrb[0].mxu0 %v1637
      %v1848 = vpop.f32.mrb[0].mxu0
      %v1849 = vadd.f32 0.0, %v1848
      %v1850 = vpop.f32.mrb[0].mxu0
      %1851 = vmatprep.mubr.f32.mxu0 0.0
      %1852 = vmatmul.mubr.f32.gmra.mrb[0].mxu0 %v1638
      %v1853 = vpop.f32.mrb[0].mxu0
      %v1854 = vadd.f32 0.0, %v1853
      %v1855 = vpop.f32.mrb[0].mxu0
      %1856 = vmatprep.mubr.f32.mxu0 0.0
      %1857 = vmatmul.mubr.f32.gmra.mrb[0].mxu0 %v1639
      %v1858 = vpop.f32.mrb[0].mxu0
      %v1859 = vadd.f32 0.0, %v1858
      %v1860 = vpop.f32.mrb[0].mxu0
      %1861 = vmatprep.mubr.f32.mxu0 0.0
      %1862 = vmatmul.mubr.f32.gmra.mrb[0].mxu0 %v1640
      %v1863 = vpop.f32.mrb[0].mxu0
      %v1864 = vadd.f32 0.0, %v1863
      %v1865 = vpop.f32.mrb[0].mxu0
      %1866 = vmatprep.mubr.f32.mxu0 0.0
      %1867 = vmatmul.mubr.f32.gmra.mrb[0].mxu0 %v1641
      %v1868 = vpop.f32.mrb[0].mxu0
      %v1869 = vadd.f32 0.0, %v1868
      %v1870 = vpop.f32.mrb[0].mxu0
      %1871 = vmatprep.mubr.f32.mxu0 0.0
      %1872 = vmatmul.mubr.f32.gmra.mrb[0].mxu0 %v1642
      %v1873 = vpop.f32.mrb[0].mxu0
      %v1874 = vadd.f32 0.0, %v1873
      %v1875 = vpop.f32.mrb[0].mxu0
      %1876 = vmatprep.mubr.f32.mxu0 0.0
      %1877 = vmatmul.mubr.f32.gmra.mrb[0].mxu0 %v1643
      %v1878 = vpop.f32.mrb[0].mxu0
      %v1879 = vadd.f32 0.0, %v1878
      %v1880 = vpop.f32.mrb[0].mxu0
      %1881 = vmatprep.mubr.f32.mxu0 0.0
      %1882 = vmatmul.mubr.f32.gmra.mrb[0].mxu0 %v1644
      %v1883 = vpop.f32.mrb[0].mxu0
      %v1884 = vadd.f32 0.0, %v1883
      %v1885 = vpop.f32.mrb[0].mxu0
      %1886 = vdwg.mxu0
      %v1887 = vadd.f32 %v1581, %v1729
      %v1888 = vadd.f32 %v1582, %v1734
      %v1889 = vadd.f32 %v1583, %v1739
      %v1890 = vadd.f32 %v1584, %v1744
      %v1891 = vadd.f32 %v1585, %v1749
      %v1892 = vadd.f32 %v1586, %v1754
      %v1893 = vadd.f32 %v1587, %v1759
      %v1894 = vadd.f32 %v1588, %v1764
      %v1895 = vadd.f32 %v1589, %v1769
      %v1896 = vadd.f32 %v1590, %v1774
      %v1897 = vadd.f32 %v1591, %v1779
      %v1898 = vadd.f32 %v1592, %v1784
      %v1899 = vadd.f32 %v1593, %v1789
      %v1900 = vadd.f32 %v1594, %v1794
      %v1901 = vadd.f32 %v1595, %v1799
      %v1902 = vadd.f32 %v1596, %v1804
      %v1903 = vadd.f32 %v1597, %v1809
      %v1904 = vadd.f32 %v1598, %v1814
      %v1905 = vadd.f32 %v1599, %v1819
      %v1906 = vadd.f32 %v1600, %v1824
      %v1907 = vadd.f32 %v1601, %v1829
      %v1908 = vadd.f32 %v1602, %v1834
      %v1909 = vadd.f32 %v1603, %v1839
      %v1910 = vadd.f32 %v1604, %v1844
      %v1911 = vadd.f32 %v1605, %v1849
      %v1912 = vadd.f32 %v1606, %v1854
      %v1913 = vadd.f32 %v1607, %v1859
      %v1914 = vadd.f32 %v1608, %v1864
      %v1915 = vadd.f32 %v1609, %v1869
      %v1916 = vadd.f32 %v1610, %v1874
      %v1917 = vadd.f32 %v1611, %v1879
      %v1918 = vadd.f32 %v1612, %v1884
      %v1919 = vld [vmem:[%s421 + $0x2] sm:$0xff]
      %v1920 = vld [vmem:[%s421 + $0xa] sm:$0xff]
      %v1921 = vld [vmem:[%s421 + $0x1a] sm:$0xff]
      %v1922 = vld [vmem:[%s421 + $0x22] sm:$0xff]
      %v1923 = vld [vmem:[%s421 + $0x32] sm:$0xff]
      %v1924 = vld [vmem:[%s421 + $0x3a] sm:$0xff]
      %v1925 = vld [vmem:[%s421 + $0x4a] sm:$0xff]
      %v1926 = vld [vmem:[%s421 + $0x52] sm:$0xff]
      %v1927 = vld [vmem:[%s421 + $0x62] sm:$0xff]
      %v1928 = vld [vmem:[%s421 + $0x6a] sm:$0xff]
      %v1929 = vld [vmem:[%s421 + $0x7a] sm:$0xff]
      %v1930 = vld [vmem:[%s421 + $0x82] sm:$0xff]
      %v1931 = vld [vmem:[%s421 + $0x92] sm:$0xff]
      %v1932 = vld [vmem:[%s421 + $0x9a] sm:$0xff]
      %v1933 = vld [vmem:[%s421 + $0xaa] sm:$0xff]
      %v1934 = vld [vmem:[%s421 + $0xb2] sm:$0xff]
      %v1935 = vld [vmem:[%s421 + $0xc2] sm:$0xff]
      %v1936 = vld [vmem:[%s421 + $0xca] sm:$0xff]
      %v1937 = vld [vmem:[%s421 + $0xda] sm:$0xff]
      %v1938 = vld [vmem:[%s421 + $0xe2] sm:$0xff]
      %v1939 = vld [vmem:[%s421 + $0xf2] sm:$0xff]
      %v1940 = vld [vmem:[%s421 + $0xfa] sm:$0xff]
      %v1941 = vld [vmem:[%s421 + $0x10a] sm:$0xff]
      %v1942 = vld [vmem:[%s421 + $0x112] sm:$0xff]
      %v1943 = vld [vmem:[%s421 + $0x122] sm:$0xff]
      %v1944 = vld [vmem:[%s421 + $0x12a] sm:$0xff]
      %v1945 = vld [vmem:[%s421 + $0x13a] sm:$0xff]
      %v1946 = vld [vmem:[%s421 + $0x142] sm:$0xff]
      %v1947 = vld [vmem:[%s421 + $0x152] sm:$0xff]
      %v1948 = vld [vmem:[%s421 + $0x15a] sm:$0xff]
      %v1949 = vld [vmem:[%s421 + $0x16a] sm:$0xff]
      %v1950 = vld [vmem:[%s421 + $0x172] sm:$0xff]
      %s1951 = scalar_lea.vmem %s3, 640
      %v1952 = vld [vmem:[%s1951] sm:$0xff]
      %v1953 = vld [vmem:[%s1951 + $0x8] sm:$0xff]
      %v1954 = vld [vmem:[%s1951 + $0x10] sm:$0xff]
      %v1955 = vld [vmem:[%s1951 + $0x18] sm:$0xff]
      %v1956 = vld [vmem:[%s1951 + $0x20] sm:$0xff]
      %v1957 = vld [vmem:[%s1951 + $0x28] sm:$0xff]
      %v1958 = vld [vmem:[%s1951 + $0x30] sm:$0xff]
      %v1959 = vld [vmem:[%s1951 + $0x38] sm:$0xff]
      %v1960 = vld [vmem:[%s1951 + $0x40] sm:$0xff]
      %v1961 = vld [vmem:[%s1951 + $0x48] sm:$0xff]
      %v1962 = vld [vmem:[%s1951 + $0x50] sm:$0xff]
      %v1963 = vld [vmem:[%s1951 + $0x58] sm:$0xff]
      %v1964 = vld [vmem:[%s1951 + $0x60] sm:$0xff]
      %v1965 = vld [vmem:[%s1951 + $0x68] sm:$0xff]
      %v1966 = vld [vmem:[%s1951 + $0x70] sm:$0xff]
      %v1967 = vld [vmem:[%s1951 + $0x78] sm:$0xff]
      %1968 = vmatprep.subr.mxu0 0.0
      %1969 = vmatpush1.msra.mxu0 %v1952
      %1970 = vmatprep.subr.mxu0 0.0
      %1971 = vmatpush1.msra.mxu0 %v1953
      %1972 = vmatprep.subr.mxu0 0.0
      %1973 = vmatpush1.msra.mxu0 %v1954
      %1974 = vmatprep.subr.mxu0 0.0
      %1975 = vmatpush1.msra.mxu0 %v1955
      %1976 = vmatprep.subr.mxu0 0.0
      %1977 = vmatpush1.msra.mxu0 %v1956
      %1978 = vmatprep.subr.mxu0 0.0
      %1979 = vmatpush1.msra.mxu0 %v1957
      %1980 = vmatprep.subr.mxu0 0.0
      %1981 = vmatpush1.msra.mxu0 %v1958
      %1982 = vmatprep.subr.mxu0 0.0
      %1983 = vmatpush1.msra.mxu0 %v1959
      %1984 = vmatprep.subr.mxu0 0.0
      %1985 = vmatpush1.msra.mxu0 %v1960
      %1986 = vmatprep.subr.mxu0 0.0
      %1987 = vmatpush1.msra.mxu0 %v1961
      %1988 = vmatprep.subr.mxu0 0.0
      %1989 = vmatpush1.msra.mxu0 %v1962
      %1990 = vmatprep.subr.mxu0 0.0
      %1991 = vmatpush1.msra.mxu0 %v1963
      %1992 = vmatprep.subr.mxu0 0.0
      %1993 = vmatpush1.msra.mxu0 %v1964
      %1994 = vmatprep.subr.mxu0 0.0
      %1995 = vmatpush1.msra.mxu0 %v1965
      %1996 = vmatprep.subr.mxu0 0.0
      %1997 = vmatpush1.msra.mxu0 %v1966
      %1998 = vmatprep.subr.mxu0 0.0
      %1999 = vmatpush1.msra.mxu0 %v1967
      %2000 = vmatprep.subr.mxu0 0.0
      %2001 = vmatpush1.msra.mxu0 0.0
      %2002 = vmatprep.subr.mxu0 0.0
      %2003 = vmatpush1.msra.mxu0 0.0
      %2004 = vmatprep.subr.mxu0 0.0
      %2005 = vmatpush1.msra.mxu0 0.0
      %2006 = vmatprep.subr.mxu0 0.0
      %2007 = vmatpush1.msra.mxu0 0.0
      %2008 = vmatprep.subr.mxu0 0.0
      %2009 = vmatpush1.msra.mxu0 0.0
      %2010 = vmatprep.subr.mxu0 0.0
      %2011 = vmatpush1.msra.mxu0 0.0
      %2012 = vmatprep.subr.mxu0 0.0
      %2013 = vmatpush1.msra.mxu0 0.0
      %2014 = vmatprep.subr.mxu0 0.0
      %2015 = vmatpush1.msra.mxu0 0.0
      %2016 = vmatprep.subr.mxu0 0.0
      %2017 = vmatpush1.msra.mxu0 0.0
      %2018 = vmatprep.subr.mxu0 0.0
      %2019 = vmatpush1.msra.mxu0 0.0
      %2020 = vmatprep.subr.mxu0 0.0
      %2021 = vmatpush1.msra.mxu0 0.0
      %2022 = vmatprep.subr.mxu0 0.0
      %2023 = vmatpush1.msra.mxu0 0.0
      %2024 = vmatprep.subr.mxu0 0.0
      %2025 = vmatpush1.msra.mxu0 0.0
      %2026 = vmatprep.subr.mxu0 0.0
      %2027 = vmatpush1.msra.mxu0 0.0
      %2028 = vmatprep.subr.mxu0 0.0
      %2029 = vmatpush1.msra.mxu0 0.0
      %2030 = vmatprep.subr.mxu0 0.0
      %2031 = vmatpush1.msra.mxu0 0.0
      %2032 = vmatprep.mubr.f32.mxu0 0.0
      %2033 = vmatmul.mubr.f32.gmra.mrb[0].mxu0 %v1919
      %v2034 = vpop.f32.mrb[0].mxu0
      %v2035 = vadd.f32 0.0, %v2034
      %v2036 = vpop.f32.mrb[0].mxu0
      %2037 = vmatprep.mubr.f32.mxu0 0.0
      %2038 = vmatmul.mubr.f32.gmra.mrb[0].mxu0 %v1920
      %v2039 = vpop.f32.mrb[0].mxu0
      %v2040 = vadd.f32 0.0, %v2039
      %v2041 = vpop.f32.mrb[0].mxu0
      %2042 = vmatprep.mubr.f32.mxu0 0.0
      %2043 = vmatmul.mubr.f32.gmra.mrb[0].mxu0 %v1921
      %v2044 = vpop.f32.mrb[0].mxu0
      %v2045 = vadd.f32 0.0, %v2044
      %v2046 = vpop.f32.mrb[0].mxu0
      %2047 = vmatprep.mubr.f32.mxu0 0.0
      %2048 = vmatmul.mubr.f32.gmra.mrb[0].mxu0 %v1922
      %v2049 = vpop.f32.mrb[0].mxu0
      %v2050 = vadd.f32 0.0, %v2049
      %v2051 = vpop.f32.mrb[0].mxu0
      %2052 = vmatprep.mubr.f32.mxu0 0.0
      %2053 = vmatmul.mubr.f32.gmra.mrb[0].mxu0 %v1923
      %v2054 = vpop.f32.mrb[0].mxu0
      %v2055 = vadd.f32 0.0, %v2054
      %v2056 = vpop.f32.mrb[0].mxu0
      %2057 = vmatprep.mubr.f32.mxu0 0.0
      %2058 = vmatmul.mubr.f32.gmra.mrb[0].mxu0 %v1924
      %v2059 = vpop.f32.mrb[0].mxu0
      %v2060 = vadd.f32 0.0, %v2059
      %v2061 = vpop.f32.mrb[0].mxu0
      %2062 = vmatprep.mubr.f32.mxu0 0.0
      %2063 = vmatmul.mubr.f32.gmra.mrb[0].mxu0 %v1925
      %v2064 = vpop.f32.mrb[0].mxu0
      %v2065 = vadd.f32 0.0, %v2064
      %v2066 = vpop.f32.mrb[0].mxu0
      %2067 = vmatprep.mubr.f32.mxu0 0.0
      %2068 = vmatmul.mubr.f32.gmra.mrb[0].mxu0 %v1926
      %v2069 = vpop.f32.mrb[0].mxu0
      %v2070 = vadd.f32 0.0, %v2069
      %v2071 = vpop.f32.mrb[0].mxu0
      %2072 = vmatprep.mubr.f32.mxu0 0.0
      %2073 = vmatmul.mubr.f32.gmra.mrb[0].mxu0 %v1927
      %v2074 = vpop.f32.mrb[0].mxu0
      %v2075 = vadd.f32 0.0, %v2074
      %v2076 = vpop.f32.mrb[0].mxu0
      %2077 = vmatprep.mubr.f32.mxu0 0.0
      %2078 = vmatmul.mubr.f32.gmra.mrb[0].mxu0 %v1928
      %v2079 = vpop.f32.mrb[0].mxu0
      %v2080 = vadd.f32 0.0, %v2079
      %v2081 = vpop.f32.mrb[0].mxu0
      %2082 = vmatprep.mubr.f32.mxu0 0.0
      %2083 = vmatmul.mubr.f32.gmra.mrb[0].mxu0 %v1929
      %v2084 = vpop.f32.mrb[0].mxu0
      %v2085 = vadd.f32 0.0, %v2084
      %v2086 = vpop.f32.mrb[0].mxu0
      %2087 = vmatprep.mubr.f32.mxu0 0.0
      %2088 = vmatmul.mubr.f32.gmra.mrb[0].mxu0 %v1930
      %v2089 = vpop.f32.mrb[0].mxu0
      %v2090 = vadd.f32 0.0, %v2089
      %v2091 = vpop.f32.mrb[0].mxu0
      %2092 = vmatprep.mubr.f32.mxu0 0.0
      %2093 = vmatmul.mubr.f32.gmra.mrb[0].mxu0 %v1931
      %v2094 = vpop.f32.mrb[0].mxu0
      %v2095 = vadd.f32 0.0, %v2094
      %v2096 = vpop.f32.mrb[0].mxu0
      %2097 = vmatprep.mubr.f32.mxu0 0.0
      %2098 = vmatmul.mubr.f32.gmra.mrb[0].mxu0 %v1932
      %v2099 = vpop.f32.mrb[0].mxu0
      %v2100 = vadd.f32 0.0, %v2099
      %v2101 = vpop.f32.mrb[0].mxu0
      %2102 = vmatprep.mubr.f32.mxu0 0.0
      %2103 = vmatmul.mubr.f32.gmra.mrb[0].mxu0 %v1933
      %v2104 = vpop.f32.mrb[0].mxu0
      %v2105 = vadd.f32 0.0, %v2104
      %v2106 = vpop.f32.mrb[0].mxu0
      %2107 = vmatprep.mubr.f32.mxu0 0.0
      %2108 = vmatmul.mubr.f32.gmra.mrb[0].mxu0 %v1934
      %v2109 = vpop.f32.mrb[0].mxu0
      %v2110 = vadd.f32 0.0, %v2109
      %v2111 = vpop.f32.mrb[0].mxu0
      %2112 = vmatprep.mubr.f32.mxu0 0.0
      %2113 = vmatmul.mubr.f32.gmra.mrb[0].mxu0 %v1935
      %v2114 = vpop.f32.mrb[0].mxu0
      %v2115 = vadd.f32 0.0, %v2114
      %v2116 = vpop.f32.mrb[0].mxu0
      %2117 = vmatprep.mubr.f32.mxu0 0.0
      %2118 = vmatmul.mubr.f32.gmra.mrb[0].mxu0 %v1936
      %v2119 = vpop.f32.mrb[0].mxu0
      %v2120 = vadd.f32 0.0, %v2119
      %v2121 = vpop.f32.mrb[0].mxu0
      %2122 = vmatprep.mubr.f32.mxu0 0.0
      %2123 = vmatmul.mubr.f32.gmra.mrb[0].mxu0 %v1937
      %v2124 = vpop.f32.mrb[0].mxu0
      %v2125 = vadd.f32 0.0, %v2124
      %v2126 = vpop.f32.mrb[0].mxu0
      %2127 = vmatprep.mubr.f32.mxu0 0.0
      %2128 = vmatmul.mubr.f32.gmra.mrb[0].mxu0 %v1938
      %v2129 = vpop.f32.mrb[0].mxu0
      %v2130 = vadd.f32 0.0, %v2129
      %v2131 = vpop.f32.mrb[0].mxu0
      %2132 = vmatprep.mubr.f32.mxu0 0.0
      %2133 = vmatmul.mubr.f32.gmra.mrb[0].mxu0 %v1939
      %v2134 = vpop.f32.mrb[0].mxu0
      %v2135 = vadd.f32 0.0, %v2134
      %v2136 = vpop.f32.mrb[0].mxu0
      %2137 = vmatprep.mubr.f32.mxu0 0.0
      %2138 = vmatmul.mubr.f32.gmra.mrb[0].mxu0 %v1940
      %v2139 = vpop.f32.mrb[0].mxu0
      %v2140 = vadd.f32 0.0, %v2139
      %v2141 = vpop.f32.mrb[0].mxu0
      %2142 = vmatprep.mubr.f32.mxu0 0.0
      %2143 = vmatmul.mubr.f32.gmra.mrb[0].mxu0 %v1941
      %v2144 = vpop.f32.mrb[0].mxu0
      %v2145 = vadd.f32 0.0, %v2144
      %v2146 = vpop.f32.mrb[0].mxu0
      %2147 = vmatprep.mubr.f32.mxu0 0.0
      %2148 = vmatmul.mubr.f32.gmra.mrb[0].mxu0 %v1942
      %v2149 = vpop.f32.mrb[0].mxu0
      %v2150 = vadd.f32 0.0, %v2149
      %v2151 = vpop.f32.mrb[0].mxu0
      %2152 = vmatprep.mubr.f32.mxu0 0.0
      %2153 = vmatmul.mubr.f32.gmra.mrb[0].mxu0 %v1943
      %v2154 = vpop.f32.mrb[0].mxu0
      %v2155 = vadd.f32 0.0, %v2154
      %v2156 = vpop.f32.mrb[0].mxu0
      %2157 = vmatprep.mubr.f32.mxu0 0.0
      %2158 = vmatmul.mubr.f32.gmra.mrb[0].mxu0 %v1944
      %v2159 = vpop.f32.mrb[0].mxu0
      %v2160 = vadd.f32 0.0, %v2159
      %v2161 = vpop.f32.mrb[0].mxu0
      %2162 = vmatprep.mubr.f32.mxu0 0.0
      %2163 = vmatmul.mubr.f32.gmra.mrb[0].mxu0 %v1945
      %v2164 = vpop.f32.mrb[0].mxu0
      %v2165 = vadd.f32 0.0, %v2164
      %v2166 = vpop.f32.mrb[0].mxu0
      %2167 = vmatprep.mubr.f32.mxu0 0.0
      %2168 = vmatmul.mubr.f32.gmra.mrb[0].mxu0 %v1946
      %v2169 = vpop.f32.mrb[0].mxu0
      %v2170 = vadd.f32 0.0, %v2169
      %v2171 = vpop.f32.mrb[0].mxu0
      %2172 = vmatprep.mubr.f32.mxu0 0.0
      %2173 = vmatmul.mubr.f32.gmra.mrb[0].mxu0 %v1947
      %v2174 = vpop.f32.mrb[0].mxu0
      %v2175 = vadd.f32 0.0, %v2174
      %v2176 = vpop.f32.mrb[0].mxu0
      %2177 = vmatprep.mubr.f32.mxu0 0.0
      %2178 = vmatmul.mubr.f32.gmra.mrb[0].mxu0 %v1948
      %v2179 = vpop.f32.mrb[0].mxu0
      %v2180 = vadd.f32 0.0, %v2179
      %v2181 = vpop.f32.mrb[0].mxu0
      %2182 = vmatprep.mubr.f32.mxu0 0.0
      %2183 = vmatmul.mubr.f32.gmra.mrb[0].mxu0 %v1949
      %v2184 = vpop.f32.mrb[0].mxu0
      %v2185 = vadd.f32 0.0, %v2184
      %v2186 = vpop.f32.mrb[0].mxu0
      %2187 = vmatprep.mubr.f32.mxu0 0.0
      %2188 = vmatmul.mubr.f32.gmra.mrb[0].mxu0 %v1950
      %v2189 = vpop.f32.mrb[0].mxu0
      %v2190 = vadd.f32 0.0, %v2189
      %v2191 = vpop.f32.mrb[0].mxu0
      %2192 = vdwg.mxu0
      %v2193 = vadd.f32 %v1887, %v2035
      %v2194 = vadd.f32 %v1888, %v2040
      %v2195 = vadd.f32 %v1889, %v2045
      %v2196 = vadd.f32 %v1890, %v2050
      %v2197 = vadd.f32 %v1891, %v2055
      %v2198 = vadd.f32 %v1892, %v2060
      %v2199 = vadd.f32 %v1893, %v2065
      %v2200 = vadd.f32 %v1894, %v2070
      %v2201 = vadd.f32 %v1895, %v2075
      %v2202 = vadd.f32 %v1896, %v2080
      %v2203 = vadd.f32 %v1897, %v2085
      %v2204 = vadd.f32 %v1898, %v2090
      %v2205 = vadd.f32 %v1899, %v2095
      %v2206 = vadd.f32 %v1900, %v2100
      %v2207 = vadd.f32 %v1901, %v2105
      %v2208 = vadd.f32 %v1902, %v2110
      %v2209 = vadd.f32 %v1903, %v2115
      %v2210 = vadd.f32 %v1904, %v2120
      %v2211 = vadd.f32 %v1905, %v2125
      %v2212 = vadd.f32 %v1906, %v2130
      %v2213 = vadd.f32 %v1907, %v2135
      %v2214 = vadd.f32 %v1908, %v2140
      %v2215 = vadd.f32 %v1909, %v2145
      %v2216 = vadd.f32 %v1910, %v2150
      %v2217 = vadd.f32 %v1911, %v2155
      %v2218 = vadd.f32 %v1912, %v2160
      %v2219 = vadd.f32 %v1913, %v2165
      %v2220 = vadd.f32 %v1914, %v2170
      %v2221 = vadd.f32 %v1915, %v2175
      %v2222 = vadd.f32 %v1916, %v2180
      %v2223 = vadd.f32 %v1917, %v2185
      %v2224 = vadd.f32 %v1918, %v2190
      %s2225 = scalar_lea.vmem [#allocation2], 48
      %v2226 = vld [vmem:[%s2225] sm:$0xff]
      %v2227 = vld [vmem:[%s2225 + $0x8] sm:$0xff]
      %v2228 = vld [vmem:[%s2225 + $0x18] sm:$0xff]
      %v2229 = vld [vmem:[%s2225 + $0x20] sm:$0xff]
      %v2230 = vld [vmem:[%s2225 + $0x30] sm:$0xff]
      %v2231 = vld [vmem:[%s2225 + $0x38] sm:$0xff]
      %v2232 = vld [vmem:[%s2225 + $0x48] sm:$0xff]
      %v2233 = vld [vmem:[%s2225 + $0x50] sm:$0xff]
      %v2234 = vld [vmem:[%s2225 + $0x60] sm:$0xff]
      %v2235 = vld [vmem:[%s2225 + $0x68] sm:$0xff]
      %v2236 = vld [vmem:[%s2225 + $0x78] sm:$0xff]
      %v2237 = vld [vmem:[%s2225 + $0x80] sm:$0xff]
      %v2238 = vld [vmem:[%s2225 + $0x90] sm:$0xff]
      %v2239 = vld [vmem:[%s2225 + $0x98] sm:$0xff]
      %v2240 = vld [vmem:[%s2225 + $0xa8] sm:$0xff]
      %v2241 = vld [vmem:[%s2225 + $0xb0] sm:$0xff]
      %v2242 = vld [vmem:[%s2225 + $0xc0] sm:$0xff]
      %v2243 = vld [vmem:[%s2225 + $0xc8] sm:$0xff]
      %v2244 = vld [vmem:[%s2225 + $0xd8] sm:$0xff]
      %v2245 = vld [vmem:[%s2225 + $0xe0] sm:$0xff]
      %v2246 = vld [vmem:[%s2225 + $0xf0] sm:$0xff]
      %v2247 = vld [vmem:[%s2225 + $0xf8] sm:$0xff]
      %v2248 = vld [vmem:[%s2225 + $0x108] sm:$0xff]
      %v2249 = vld [vmem:[%s2225 + $0x110] sm:$0xff]
      %v2250 = vld [vmem:[%s2225 + $0x120] sm:$0xff]
      %v2251 = vld [vmem:[%s2225 + $0x128] sm:$0xff]
      %v2252 = vld [vmem:[%s2225 + $0x138] sm:$0xff]
      %v2253 = vld [vmem:[%s2225 + $0x140] sm:$0xff]
      %v2254 = vld [vmem:[%s2225 + $0x150] sm:$0xff]
      %v2255 = vld [vmem:[%s2225 + $0x158] sm:$0xff]
      %v2256 = vld [vmem:[%s2225 + $0x168] sm:$0xff]
      %v2257 = vld [vmem:[%s2225 + $0x170] sm:$0xff]
      %s2258 = scalar_lea.vmem %s3, 768
      %v2259 = vld [vmem:[%s2258] sm:$0xff]
      %v2260 = vld [vmem:[%s2258 + $0x8] sm:$0xff]
      %v2261 = vld [vmem:[%s2258 + $0x10] sm:$0xff]
      %v2262 = vld [vmem:[%s2258 + $0x18] sm:$0xff]
      %v2263 = vld [vmem:[%s2258 + $0x20] sm:$0xff]
      %v2264 = vld [vmem:[%s2258 + $0x28] sm:$0xff]
      %v2265 = vld [vmem:[%s2258 + $0x30] sm:$0xff]
      %v2266 = vld [vmem:[%s2258 + $0x38] sm:$0xff]
      %v2267 = vld [vmem:[%s2258 + $0x40] sm:$0xff]
      %v2268 = vld [vmem:[%s2258 + $0x48] sm:$0xff]
      %v2269 = vld [vmem:[%s2258 + $0x50] sm:$0xff]
      %v2270 = vld [vmem:[%s2258 + $0x58] sm:$0xff]
      %v2271 = vld [vmem:[%s2258 + $0x60] sm:$0xff]
      %v2272 = vld [vmem:[%s2258 + $0x68] sm:$0xff]
      %v2273 = vld [vmem:[%s2258 + $0x70] sm:$0xff]
      %v2274 = vld [vmem:[%s2258 + $0x78] sm:$0xff]
      %2275 = vmatprep.subr.mxu0 0.0
      %2276 = vmatpush1.msra.mxu0 %v2259
      %2277 = vmatprep.subr.mxu0 0.0
      %2278 = vmatpush1.msra.mxu0 %v2260
      %2279 = vmatprep.subr.mxu0 0.0
      %2280 = vmatpush1.msra.mxu0 %v2261
      %2281 = vmatprep.subr.mxu0 0.0
      %2282 = vmatpush1.msra.mxu0 %v2262
      %2283 = vmatprep.subr.mxu0 0.0
      %2284 = vmatpush1.msra.mxu0 %v2263
      %2285 = vmatprep.subr.mxu0 0.0
      %2286 = vmatpush1.msra.mxu0 %v2264
      %2287 = vmatprep.subr.mxu0 0.0
      %2288 = vmatpush1.msra.mxu0 %v2265
      %2289 = vmatprep.subr.mxu0 0.0
      %2290 = vmatpush1.msra.mxu0 %v2266
      %2291 = vmatprep.subr.mxu0 0.0
      %2292 = vmatpush1.msra.mxu0 %v2267
      %2293 = vmatprep.subr.mxu0 0.0
      %2294 = vmatpush1.msra.mxu0 %v2268
      %2295 = vmatprep.subr.mxu0 0.0
      %2296 = vmatpush1.msra.mxu0 %v2269
      %2297 = vmatprep.subr.mxu0 0.0
      %2298 = vmatpush1.msra.mxu0 %v2270
      %2299 = vmatprep.subr.mxu0 0.0
      %2300 = vmatpush1.msra.mxu0 %v2271
      %2301 = vmatprep.subr.mxu0 0.0
      %2302 = vmatpush1.msra.mxu0 %v2272
      %2303 = vmatprep.subr.mxu0 0.0
      %2304 = vmatpush1.msra.mxu0 %v2273
      %2305 = vmatprep.subr.mxu0 0.0
      %2306 = vmatpush1.msra.mxu0 %v2274
      %2307 = vmatprep.subr.mxu0 0.0
      %2308 = vmatpush1.msra.mxu0 0.0
      %2309 = vmatprep.subr.mxu0 0.0
      %2310 = vmatpush1.msra.mxu0 0.0
      %2311 = vmatprep.subr.mxu0 0.0
      %2312 = vmatpush1.msra.mxu0 0.0
      %2313 = vmatprep.subr.mxu0 0.0
      %2314 = vmatpush1.msra.mxu0 0.0
      %2315 = vmatprep.subr.mxu0 0.0
      %2316 = vmatpush1.msra.mxu0 0.0
      %2317 = vmatprep.subr.mxu0 0.0
      %2318 = vmatpush1.msra.mxu0 0.0
      %2319 = vmatprep.subr.mxu0 0.0
      %2320 = vmatpush1.msra.mxu0 0.0
      %2321 = vmatprep.subr.mxu0 0.0
      %2322 = vmatpush1.msra.mxu0 0.0
      %2323 = vmatprep.subr.mxu0 0.0
      %2324 = vmatpush1.msra.mxu0 0.0
      %2325 = vmatprep.subr.mxu0 0.0
      %2326 = vmatpush1.msra.mxu0 0.0
      %2327 = vmatprep.subr.mxu0 0.0
      %2328 = vmatpush1.msra.mxu0 0.0
      %2329 = vmatprep.subr.mxu0 0.0
      %2330 = vmatpush1.msra.mxu0 0.0
      %2331 = vmatprep.subr.mxu0 0.0
      %2332 = vmatpush1.msra.mxu0 0.0
      %2333 = vmatprep.subr.mxu0 0.0
      %2334 = vmatpush1.msra.mxu0 0.0
      %2335 = vmatprep.subr.mxu0 0.0
      %2336 = vmatpush1.msra.mxu0 0.0
      %2337 = vmatprep.subr.mxu0 0.0
      %2338 = vmatpush1.msra.mxu0 0.0
      %2339 = vmatprep.mubr.f32.mxu0 0.0
      %2340 = vmatmul.mubr.f32.gmra.mrb[0].mxu0 %v2226
      %v2341 = vpop.f32.mrb[0].mxu0
      %v2342 = vadd.f32 0.0, %v2341
      %v2343 = vpop.f32.mrb[0].mxu0
      %2344 = vmatprep.mubr.f32.mxu0 0.0
      %2345 = vmatmul.mubr.f32.gmra.mrb[0].mxu0 %v2227
      %v2346 = vpop.f32.mrb[0].mxu0
      %v2347 = vadd.f32 0.0, %v2346
      %v2348 = vpop.f32.mrb[0].mxu0
      %2349 = vmatprep.mubr.f32.mxu0 0.0
      %2350 = vmatmul.mubr.f32.gmra.mrb[0].mxu0 %v2228
      %v2351 = vpop.f32.mrb[0].mxu0
      %v2352 = vadd.f32 0.0, %v2351
      %v2353 = vpop.f32.mrb[0].mxu0
      %2354 = vmatprep.mubr.f32.mxu0 0.0
      %2355 = vmatmul.mubr.f32.gmra.mrb[0].mxu0 %v2229
      %v2356 = vpop.f32.mrb[0].mxu0
      %v2357 = vadd.f32 0.0, %v2356
      %v2358 = vpop.f32.mrb[0].mxu0
      %2359 = vmatprep.mubr.f32.mxu0 0.0
      %2360 = vmatmul.mubr.f32.gmra.mrb[0].mxu0 %v2230
      %v2361 = vpop.f32.mrb[0].mxu0
      %v2362 = vadd.f32 0.0, %v2361
      %v2363 = vpop.f32.mrb[0].mxu0
      %2364 = vmatprep.mubr.f32.mxu0 0.0
      %2365 = vmatmul.mubr.f32.gmra.mrb[0].mxu0 %v2231
      %v2366 = vpop.f32.mrb[0].mxu0
      %v2367 = vadd.f32 0.0, %v2366
      %v2368 = vpop.f32.mrb[0].mxu0
      %2369 = vmatprep.mubr.f32.mxu0 0.0
      %2370 = vmatmul.mubr.f32.gmra.mrb[0].mxu0 %v2232
      %v2371 = vpop.f32.mrb[0].mxu0
      %v2372 = vadd.f32 0.0, %v2371
      %v2373 = vpop.f32.mrb[0].mxu0
      %2374 = vmatprep.mubr.f32.mxu0 0.0
      %2375 = vmatmul.mubr.f32.gmra.mrb[0].mxu0 %v2233
      %v2376 = vpop.f32.mrb[0].mxu0
      %v2377 = vadd.f32 0.0, %v2376
      %v2378 = vpop.f32.mrb[0].mxu0
      %2379 = vmatprep.mubr.f32.mxu0 0.0
      %2380 = vmatmul.mubr.f32.gmra.mrb[0].mxu0 %v2234
      %v2381 = vpop.f32.mrb[0].mxu0
      %v2382 = vadd.f32 0.0, %v2381
      %v2383 = vpop.f32.mrb[0].mxu0
      %2384 = vmatprep.mubr.f32.mxu0 0.0
      %2385 = vmatmul.mubr.f32.gmra.mrb[0].mxu0 %v2235
      %v2386 = vpop.f32.mrb[0].mxu0
      %v2387 = vadd.f32 0.0, %v2386
      %v2388 = vpop.f32.mrb[0].mxu0
      %2389 = vmatprep.mubr.f32.mxu0 0.0
      %2390 = vmatmul.mubr.f32.gmra.mrb[0].mxu0 %v2236
      %v2391 = vpop.f32.mrb[0].mxu0
      %v2392 = vadd.f32 0.0, %v2391
      %v2393 = vpop.f32.mrb[0].mxu0
      %2394 = vmatprep.mubr.f32.mxu0 0.0
      %2395 = vmatmul.mubr.f32.gmra.mrb[0].mxu0 %v2237
      %v2396 = vpop.f32.mrb[0].mxu0
      %v2397 = vadd.f32 0.0, %v2396
      %v2398 = vpop.f32.mrb[0].mxu0
      %2399 = vmatprep.mubr.f32.mxu0 0.0
      %2400 = vmatmul.mubr.f32.gmra.mrb[0].mxu0 %v2238
      %v2401 = vpop.f32.mrb[0].mxu0
      %v2402 = vadd.f32 0.0, %v2401
      %v2403 = vpop.f32.mrb[0].mxu0
      %2404 = vmatprep.mubr.f32.mxu0 0.0
      %2405 = vmatmul.mubr.f32.gmra.mrb[0].mxu0 %v2239
      %v2406 = vpop.f32.mrb[0].mxu0
      %v2407 = vadd.f32 0.0, %v2406
      %v2408 = vpop.f32.mrb[0].mxu0
      %2409 = vmatprep.mubr.f32.mxu0 0.0
      %2410 = vmatmul.mubr.f32.gmra.mrb[0].mxu0 %v2240
      %v2411 = vpop.f32.mrb[0].mxu0
      %v2412 = vadd.f32 0.0, %v2411
      %v2413 = vpop.f32.mrb[0].mxu0
      %2414 = vmatprep.mubr.f32.mxu0 0.0
      %2415 = vmatmul.mubr.f32.gmra.mrb[0].mxu0 %v2241
      %v2416 = vpop.f32.mrb[0].mxu0
      %v2417 = vadd.f32 0.0, %v2416
      %v2418 = vpop.f32.mrb[0].mxu0
      %2419 = vmatprep.mubr.f32.mxu0 0.0
      %2420 = vmatmul.mubr.f32.gmra.mrb[0].mxu0 %v2242
      %v2421 = vpop.f32.mrb[0].mxu0
      %v2422 = vadd.f32 0.0, %v2421
      %v2423 = vpop.f32.mrb[0].mxu0
      %2424 = vmatprep.mubr.f32.mxu0 0.0
      %2425 = vmatmul.mubr.f32.gmra.mrb[0].mxu0 %v2243
      %v2426 = vpop.f32.mrb[0].mxu0
      %v2427 = vadd.f32 0.0, %v2426
      %v2428 = vpop.f32.mrb[0].mxu0
      %2429 = vmatprep.mubr.f32.mxu0 0.0
      %2430 = vmatmul.mubr.f32.gmra.mrb[0].mxu0 %v2244
      %v2431 = vpop.f32.mrb[0].mxu0
      %v2432 = vadd.f32 0.0, %v2431
      %v2433 = vpop.f32.mrb[0].mxu0
      %2434 = vmatprep.mubr.f32.mxu0 0.0
      %2435 = vmatmul.mubr.f32.gmra.mrb[0].mxu0 %v2245
      %v2436 = vpop.f32.mrb[0].mxu0
      %v2437 = vadd.f32 0.0, %v2436
      %v2438 = vpop.f32.mrb[0].mxu0
      %2439 = vmatprep.mubr.f32.mxu0 0.0
      %2440 = vmatmul.mubr.f32.gmra.mrb[0].mxu0 %v2246
      %v2441 = vpop.f32.mrb[0].mxu0
      %v2442 = vadd.f32 0.0, %v2441
      %v2443 = vpop.f32.mrb[0].mxu0
      %2444 = vmatprep.mubr.f32.mxu0 0.0
      %2445 = vmatmul.mubr.f32.gmra.mrb[0].mxu0 %v2247
      %v2446 = vpop.f32.mrb[0].mxu0
      %v2447 = vadd.f32 0.0, %v2446
      %v2448 = vpop.f32.mrb[0].mxu0
      %2449 = vmatprep.mubr.f32.mxu0 0.0
      %2450 = vmatmul.mubr.f32.gmra.mrb[0].mxu0 %v2248
      %v2451 = vpop.f32.mrb[0].mxu0
      %v2452 = vadd.f32 0.0, %v2451
      %v2453 = vpop.f32.mrb[0].mxu0
      %2454 = vmatprep.mubr.f32.mxu0 0.0
      %2455 = vmatmul.mubr.f32.gmra.mrb[0].mxu0 %v2249
      %v2456 = vpop.f32.mrb[0].mxu0
      %v2457 = vadd.f32 0.0, %v2456
      %v2458 = vpop.f32.mrb[0].mxu0
      %2459 = vmatprep.mubr.f32.mxu0 0.0
      %2460 = vmatmul.mubr.f32.gmra.mrb[0].mxu0 %v2250
      %v2461 = vpop.f32.mrb[0].mxu0
      %v2462 = vadd.f32 0.0, %v2461
      %v2463 = vpop.f32.mrb[0].mxu0
      %2464 = vmatprep.mubr.f32.mxu0 0.0
      %2465 = vmatmul.mubr.f32.gmra.mrb[0].mxu0 %v2251
      %v2466 = vpop.f32.mrb[0].mxu0
      %v2467 = vadd.f32 0.0, %v2466
      %v2468 = vpop.f32.mrb[0].mxu0
      %2469 = vmatprep.mubr.f32.mxu0 0.0
      %2470 = vmatmul.mubr.f32.gmra.mrb[0].mxu0 %v2252
      %v2471 = vpop.f32.mrb[0].mxu0
      %v2472 = vadd.f32 0.0, %v2471
      %v2473 = vpop.f32.mrb[0].mxu0
      %2474 = vmatprep.mubr.f32.mxu0 0.0
      %2475 = vmatmul.mubr.f32.gmra.mrb[0].mxu0 %v2253
      %v2476 = vpop.f32.mrb[0].mxu0
      %v2477 = vadd.f32 0.0, %v2476
      %v2478 = vpop.f32.mrb[0].mxu0
      %2479 = vmatprep.mubr.f32.mxu0 0.0
      %2480 = vmatmul.mubr.f32.gmra.mrb[0].mxu0 %v2254
      %v2481 = vpop.f32.mrb[0].mxu0
      %v2482 = vadd.f32 0.0, %v2481
      %v2483 = vpop.f32.mrb[0].mxu0
      %2484 = vmatprep.mubr.f32.mxu0 0.0
      %2485 = vmatmul.mubr.f32.gmra.mrb[0].mxu0 %v2255
      %v2486 = vpop.f32.mrb[0].mxu0
      %v2487 = vadd.f32 0.0, %v2486
      %v2488 = vpop.f32.mrb[0].mxu0
      %2489 = vmatprep.mubr.f32.mxu0 0.0
      %2490 = vmatmul.mubr.f32.gmra.mrb[0].mxu0 %v2256
      %v2491 = vpop.f32.mrb[0].mxu0
      %v2492 = vadd.f32 0.0, %v2491
      %v2493 = vpop.f32.mrb[0].mxu0
      %2494 = vmatprep.mubr.f32.mxu0 0.0
      %2495 = vmatmul.mubr.f32.gmra.mrb[0].mxu0 %v2257
      %v2496 = vpop.f32.mrb[0].mxu0
      %v2497 = vadd.f32 0.0, %v2496
      %v2498 = vpop.f32.mrb[0].mxu0
      %2499 = vdwg.mxu0
      %v2500 = vadd.f32 %v2193, %v2342
      %v2501 = vadd.f32 %v2194, %v2347
      %v2502 = vadd.f32 %v2195, %v2352
      %v2503 = vadd.f32 %v2196, %v2357
      %v2504 = vadd.f32 %v2197, %v2362
      %v2505 = vadd.f32 %v2198, %v2367
      %v2506 = vadd.f32 %v2199, %v2372
      %v2507 = vadd.f32 %v2200, %v2377
      %v2508 = vadd.f32 %v2201, %v2382
      %v2509 = vadd.f32 %v2202, %v2387
      %v2510 = vadd.f32 %v2203, %v2392
      %v2511 = vadd.f32 %v2204, %v2397
      %v2512 = vadd.f32 %v2205, %v2402
      %v2513 = vadd.f32 %v2206, %v2407
      %v2514 = vadd.f32 %v2207, %v2412
      %v2515 = vadd.f32 %v2208, %v2417
      %v2516 = vadd.f32 %v2209, %v2422
      %v2517 = vadd.f32 %v2210, %v2427
      %v2518 = vadd.f32 %v2211, %v2432
      %v2519 = vadd.f32 %v2212, %v2437
      %v2520 = vadd.f32 %v2213, %v2442
      %v2521 = vadd.f32 %v2214, %v2447
      %v2522 = vadd.f32 %v2215, %v2452
      %v2523 = vadd.f32 %v2216, %v2457
      %v2524 = vadd.f32 %v2217, %v2462
      %v2525 = vadd.f32 %v2218, %v2467
      %v2526 = vadd.f32 %v2219, %v2472
      %v2527 = vadd.f32 %v2220, %v2477
      %v2528 = vadd.f32 %v2221, %v2482
      %v2529 = vadd.f32 %v2222, %v2487
      %v2530 = vadd.f32 %v2223, %v2492
      %v2531 = vadd.f32 %v2224, %v2497
      %v2532 = vld [vmem:[%s2225 + $0x1] sm:$0xff]
      %v2533 = vld [vmem:[%s2225 + $0x9] sm:$0xff]
      %v2534 = vld [vmem:[%s2225 + $0x19] sm:$0xff]
      %v2535 = vld [vmem:[%s2225 + $0x21] sm:$0xff]
      %v2536 = vld [vmem:[%s2225 + $0x31] sm:$0xff]
      %v2537 = vld [vmem:[%s2225 + $0x39] sm:$0xff]
      %v2538 = vld [vmem:[%s2225 + $0x49] sm:$0xff]
      %v2539 = vld [vmem:[%s2225 + $0x51] sm:$0xff]
      %v2540 = vld [vmem:[%s2225 + $0x61] sm:$0xff]
      %v2541 = vld [vmem:[%s2225 + $0x69] sm:$0xff]
      %v2542 = vld [vmem:[%s2225 + $0x79] sm:$0xff]
      %v2543 = vld [vmem:[%s2225 + $0x81] sm:$0xff]
      %v2544 = vld [vmem:[%s2225 + $0x91] sm:$0xff]
      %v2545 = vld [vmem:[%s2225 + $0x99] sm:$0xff]
      %v2546 = vld [vmem:[%s2225 + $0xa9] sm:$0xff]
      %v2547 = vld [vmem:[%s2225 + $0xb1] sm:$0xff]
      %v2548 = vld [vmem:[%s2225 + $0xc1] sm:$0xff]
      %v2549 = vld [vmem:[%s2225 + $0xc9] sm:$0xff]
      %v2550 = vld [vmem:[%s2225 + $0xd9] sm:$0xff]
      %v2551 = vld [vmem:[%s2225 + $0xe1] sm:$0xff]
      %v2552 = vld [vmem:[%s2225 + $0xf1] sm:$0xff]
      %v2553 = vld [vmem:[%s2225 + $0xf9] sm:$0xff]
      %v2554 = vld [vmem:[%s2225 + $0x109] sm:$0xff]
      %v2555 = vld [vmem:[%s2225 + $0x111] sm:$0xff]
      %v2556 = vld [vmem:[%s2225 + $0x121] sm:$0xff]
      %v2557 = vld [vmem:[%s2225 + $0x129] sm:$0xff]
      %v2558 = vld [vmem:[%s2225 + $0x139] sm:$0xff]
      %v2559 = vld [vmem:[%s2225 + $0x141] sm:$0xff]
      %v2560 = vld [vmem:[%s2225 + $0x151] sm:$0xff]
      %v2561 = vld [vmem:[%s2225 + $0x159] sm:$0xff]
      %v2562 = vld [vmem:[%s2225 + $0x169] sm:$0xff]
      %v2563 = vld [vmem:[%s2225 + $0x171] sm:$0xff]
      %s2564 = scalar_lea.vmem %s3, 896
      %v2565 = vld [vmem:[%s2564] sm:$0xff]
      %v2566 = vld [vmem:[%s2564 + $0x8] sm:$0xff]
      %v2567 = vld [vmem:[%s2564 + $0x10] sm:$0xff]
      %v2568 = vld [vmem:[%s2564 + $0x18] sm:$0xff]
      %v2569 = vld [vmem:[%s2564 + $0x20] sm:$0xff]
      %v2570 = vld [vmem:[%s2564 + $0x28] sm:$0xff]
      %v2571 = vld [vmem:[%s2564 + $0x30] sm:$0xff]
      %v2572 = vld [vmem:[%s2564 + $0x38] sm:$0xff]
      %v2573 = vld [vmem:[%s2564 + $0x40] sm:$0xff]
      %v2574 = vld [vmem:[%s2564 + $0x48] sm:$0xff]
      %v2575 = vld [vmem:[%s2564 + $0x50] sm:$0xff]
      %v2576 = vld [vmem:[%s2564 + $0x58] sm:$0xff]
      %v2577 = vld [vmem:[%s2564 + $0x60] sm:$0xff]
      %v2578 = vld [vmem:[%s2564 + $0x68] sm:$0xff]
      %v2579 = vld [vmem:[%s2564 + $0x70] sm:$0xff]
      %v2580 = vld [vmem:[%s2564 + $0x78] sm:$0xff]
      %2581 = vmatprep.subr.mxu0 0.0
      %2582 = vmatpush1.msra.mxu0 %v2565
      %2583 = vmatprep.subr.mxu0 0.0
      %2584 = vmatpush1.msra.mxu0 %v2566
      %2585 = vmatprep.subr.mxu0 0.0
      %2586 = vmatpush1.msra.mxu0 %v2567
      %2587 = vmatprep.subr.mxu0 0.0
      %2588 = vmatpush1.msra.mxu0 %v2568
      %2589 = vmatprep.subr.mxu0 0.0
      %2590 = vmatpush1.msra.mxu0 %v2569
      %2591 = vmatprep.subr.mxu0 0.0
      %2592 = vmatpush1.msra.mxu0 %v2570
      %2593 = vmatprep.subr.mxu0 0.0
      %2594 = vmatpush1.msra.mxu0 %v2571
      %2595 = vmatprep.subr.mxu0 0.0
      %2596 = vmatpush1.msra.mxu0 %v2572
      %2597 = vmatprep.subr.mxu0 0.0
      %2598 = vmatpush1.msra.mxu0 %v2573
      %2599 = vmatprep.subr.mxu0 0.0
      %2600 = vmatpush1.msra.mxu0 %v2574
      %2601 = vmatprep.subr.mxu0 0.0
      %2602 = vmatpush1.msra.mxu0 %v2575
      %2603 = vmatprep.subr.mxu0 0.0
      %2604 = vmatpush1.msra.mxu0 %v2576
      %2605 = vmatprep.subr.mxu0 0.0
      %2606 = vmatpush1.msra.mxu0 %v2577
      %2607 = vmatprep.subr.mxu0 0.0
      %2608 = vmatpush1.msra.mxu0 %v2578
      %2609 = vmatprep.subr.mxu0 0.0
      %2610 = vmatpush1.msra.mxu0 %v2579
      %2611 = vmatprep.subr.mxu0 0.0
      %2612 = vmatpush1.msra.mxu0 %v2580
      %2613 = vmatprep.subr.mxu0 0.0
      %2614 = vmatpush1.msra.mxu0 0.0
      %2615 = vmatprep.subr.mxu0 0.0
      %2616 = vmatpush1.msra.mxu0 0.0
      %2617 = vmatprep.subr.mxu0 0.0
      %2618 = vmatpush1.msra.mxu0 0.0
      %2619 = vmatprep.subr.mxu0 0.0
      %2620 = vmatpush1.msra.mxu0 0.0
      %2621 = vmatprep.subr.mxu0 0.0
      %2622 = vmatpush1.msra.mxu0 0.0
      %2623 = vmatprep.subr.mxu0 0.0
      %2624 = vmatpush1.msra.mxu0 0.0
      %2625 = vmatprep.subr.mxu0 0.0
      %2626 = vmatpush1.msra.mxu0 0.0
      %2627 = vmatprep.subr.mxu0 0.0
      %2628 = vmatpush1.msra.mxu0 0.0
      %2629 = vmatprep.subr.mxu0 0.0
      %2630 = vmatpush1.msra.mxu0 0.0
      %2631 = vmatprep.subr.mxu0 0.0
      %2632 = vmatpush1.msra.mxu0 0.0
      %2633 = vmatprep.subr.mxu0 0.0
      %2634 = vmatpush1.msra.mxu0 0.0
      %2635 = vmatprep.subr.mxu0 0.0
      %2636 = vmatpush1.msra.mxu0 0.0
      %2637 = vmatprep.subr.mxu0 0.0
      %2638 = vmatpush1.msra.mxu0 0.0
      %2639 = vmatprep.subr.mxu0 0.0
      %2640 = vmatpush1.msra.mxu0 0.0
      %2641 = vmatprep.subr.mxu0 0.0
      %2642 = vmatpush1.msra.mxu0 0.0
      %2643 = vmatprep.subr.mxu0 0.0
      %2644 = vmatpush1.msra.mxu0 0.0
      %2645 = vmatprep.mubr.f32.mxu0 0.0
      %2646 = vmatmul.mubr.f32.gmra.mrb[0].mxu0 %v2532
      %v2647 = vpop.f32.mrb[0].mxu0
      %v2648 = vadd.f32 0.0, %v2647
      %v2649 = vpop.f32.mrb[0].mxu0
      %2650 = vmatprep.mubr.f32.mxu0 0.0
      %2651 = vmatmul.mubr.f32.gmra.mrb[0].mxu0 %v2533
      %v2652 = vpop.f32.mrb[0].mxu0
      %v2653 = vadd.f32 0.0, %v2652
      %v2654 = vpop.f32.mrb[0].mxu0
      %2655 = vmatprep.mubr.f32.mxu0 0.0
      %2656 = vmatmul.mubr.f32.gmra.mrb[0].mxu0 %v2534
      %v2657 = vpop.f32.mrb[0].mxu0
      %v2658 = vadd.f32 0.0, %v2657
      %v2659 = vpop.f32.mrb[0].mxu0
      %2660 = vmatprep.mubr.f32.mxu0 0.0
      %2661 = vmatmul.mubr.f32.gmra.mrb[0].mxu0 %v2535
      %v2662 = vpop.f32.mrb[0].mxu0
      %v2663 = vadd.f32 0.0, %v2662
      %v2664 = vpop.f32.mrb[0].mxu0
      %2665 = vmatprep.mubr.f32.mxu0 0.0
      %2666 = vmatmul.mubr.f32.gmra.mrb[0].mxu0 %v2536
      %v2667 = vpop.f32.mrb[0].mxu0
      %v2668 = vadd.f32 0.0, %v2667
      %v2669 = vpop.f32.mrb[0].mxu0
      %2670 = vmatprep.mubr.f32.mxu0 0.0
      %2671 = vmatmul.mubr.f32.gmra.mrb[0].mxu0 %v2537
      %v2672 = vpop.f32.mrb[0].mxu0
      %v2673 = vadd.f32 0.0, %v2672
      %v2674 = vpop.f32.mrb[0].mxu0
      %2675 = vmatprep.mubr.f32.mxu0 0.0
      %2676 = vmatmul.mubr.f32.gmra.mrb[0].mxu0 %v2538
      %v2677 = vpop.f32.mrb[0].mxu0
      %v2678 = vadd.f32 0.0, %v2677
      %v2679 = vpop.f32.mrb[0].mxu0
      %2680 = vmatprep.mubr.f32.mxu0 0.0
      %2681 = vmatmul.mubr.f32.gmra.mrb[0].mxu0 %v2539
      %v2682 = vpop.f32.mrb[0].mxu0
      %v2683 = vadd.f32 0.0, %v2682
      %v2684 = vpop.f32.mrb[0].mxu0
      %2685 = vmatprep.mubr.f32.mxu0 0.0
      %2686 = vmatmul.mubr.f32.gmra.mrb[0].mxu0 %v2540
      %v2687 = vpop.f32.mrb[0].mxu0
      %v2688 = vadd.f32 0.0, %v2687
      %v2689 = vpop.f32.mrb[0].mxu0
      %2690 = vmatprep.mubr.f32.mxu0 0.0
      %2691 = vmatmul.mubr.f32.gmra.mrb[0].mxu0 %v2541
      %v2692 = vpop.f32.mrb[0].mxu0
      %v2693 = vadd.f32 0.0, %v2692
      %v2694 = vpop.f32.mrb[0].mxu0
      %2695 = vmatprep.mubr.f32.mxu0 0.0
      %2696 = vmatmul.mubr.f32.gmra.mrb[0].mxu0 %v2542
      %v2697 = vpop.f32.mrb[0].mxu0
      %v2698 = vadd.f32 0.0, %v2697
      %v2699 = vpop.f32.mrb[0].mxu0
      %2700 = vmatprep.mubr.f32.mxu0 0.0
      %2701 = vmatmul.mubr.f32.gmra.mrb[0].mxu0 %v2543
      %v2702 = vpop.f32.mrb[0].mxu0
      %v2703 = vadd.f32 0.0, %v2702
      %v2704 = vpop.f32.mrb[0].mxu0
      %2705 = vmatprep.mubr.f32.mxu0 0.0
      %2706 = vmatmul.mubr.f32.gmra.mrb[0].mxu0 %v2544
      %v2707 = vpop.f32.mrb[0].mxu0
      %v2708 = vadd.f32 0.0, %v2707
      %v2709 = vpop.f32.mrb[0].mxu0
      %2710 = vmatprep.mubr.f32.mxu0 0.0
      %2711 = vmatmul.mubr.f32.gmra.mrb[0].mxu0 %v2545
      %v2712 = vpop.f32.mrb[0].mxu0
      %v2713 = vadd.f32 0.0, %v2712
      %v2714 = vpop.f32.mrb[0].mxu0
      %2715 = vmatprep.mubr.f32.mxu0 0.0
      %2716 = vmatmul.mubr.f32.gmra.mrb[0].mxu0 %v2546
      %v2717 = vpop.f32.mrb[0].mxu0
      %v2718 = vadd.f32 0.0, %v2717
      %v2719 = vpop.f32.mrb[0].mxu0
      %2720 = vmatprep.mubr.f32.mxu0 0.0
      %2721 = vmatmul.mubr.f32.gmra.mrb[0].mxu0 %v2547
      %v2722 = vpop.f32.mrb[0].mxu0
      %v2723 = vadd.f32 0.0, %v2722
      %v2724 = vpop.f32.mrb[0].mxu0
      %2725 = vmatprep.mubr.f32.mxu0 0.0
      %2726 = vmatmul.mubr.f32.gmra.mrb[0].mxu0 %v2548
      %v2727 = vpop.f32.mrb[0].mxu0
      %v2728 = vadd.f32 0.0, %v2727
      %v2729 = vpop.f32.mrb[0].mxu0
      %2730 = vmatprep.mubr.f32.mxu0 0.0
      %2731 = vmatmul.mubr.f32.gmra.mrb[0].mxu0 %v2549
      %v2732 = vpop.f32.mrb[0].mxu0
      %v2733 = vadd.f32 0.0, %v2732
      %v2734 = vpop.f32.mrb[0].mxu0
      %2735 = vmatprep.mubr.f32.mxu0 0.0
      %2736 = vmatmul.mubr.f32.gmra.mrb[0].mxu0 %v2550
      %v2737 = vpop.f32.mrb[0].mxu0
      %v2738 = vadd.f32 0.0, %v2737
      %v2739 = vpop.f32.mrb[0].mxu0
      %2740 = vmatprep.mubr.f32.mxu0 0.0
      %2741 = vmatmul.mubr.f32.gmra.mrb[0].mxu0 %v2551
      %v2742 = vpop.f32.mrb[0].mxu0
      %v2743 = vadd.f32 0.0, %v2742
      %v2744 = vpop.f32.mrb[0].mxu0
      %2745 = vmatprep.mubr.f32.mxu0 0.0
      %2746 = vmatmul.mubr.f32.gmra.mrb[0].mxu0 %v2552
      %v2747 = vpop.f32.mrb[0].mxu0
      %v2748 = vadd.f32 0.0, %v2747
      %v2749 = vpop.f32.mrb[0].mxu0
      %2750 = vmatprep.mubr.f32.mxu0 0.0
      %2751 = vmatmul.mubr.f32.gmra.mrb[0].mxu0 %v2553
      %v2752 = vpop.f32.mrb[0].mxu0
      %v2753 = vadd.f32 0.0, %v2752
      %v2754 = vpop.f32.mrb[0].mxu0
      %2755 = vmatprep.mubr.f32.mxu0 0.0
      %2756 = vmatmul.mubr.f32.gmra.mrb[0].mxu0 %v2554
      %v2757 = vpop.f32.mrb[0].mxu0
      %v2758 = vadd.f32 0.0, %v2757
      %v2759 = vpop.f32.mrb[0].mxu0
      %2760 = vmatprep.mubr.f32.mxu0 0.0
      %2761 = vmatmul.mubr.f32.gmra.mrb[0].mxu0 %v2555
      %v2762 = vpop.f32.mrb[0].mxu0
      %v2763 = vadd.f32 0.0, %v2762
      %v2764 = vpop.f32.mrb[0].mxu0
      %2765 = vmatprep.mubr.f32.mxu0 0.0
      %2766 = vmatmul.mubr.f32.gmra.mrb[0].mxu0 %v2556
      %v2767 = vpop.f32.mrb[0].mxu0
      %v2768 = vadd.f32 0.0, %v2767
      %v2769 = vpop.f32.mrb[0].mxu0
      %2770 = vmatprep.mubr.f32.mxu0 0.0
      %2771 = vmatmul.mubr.f32.gmra.mrb[0].mxu0 %v2557
      %v2772 = vpop.f32.mrb[0].mxu0
      %v2773 = vadd.f32 0.0, %v2772
      %v2774 = vpop.f32.mrb[0].mxu0
      %2775 = vmatprep.mubr.f32.mxu0 0.0
      %2776 = vmatmul.mubr.f32.gmra.mrb[0].mxu0 %v2558
      %v2777 = vpop.f32.mrb[0].mxu0
      %v2778 = vadd.f32 0.0, %v2777
      %v2779 = vpop.f32.mrb[0].mxu0
      %2780 = vmatprep.mubr.f32.mxu0 0.0
      %2781 = vmatmul.mubr.f32.gmra.mrb[0].mxu0 %v2559
      %v2782 = vpop.f32.mrb[0].mxu0
      %v2783 = vadd.f32 0.0, %v2782
      %v2784 = vpop.f32.mrb[0].mxu0
      %2785 = vmatprep.mubr.f32.mxu0 0.0
      %2786 = vmatmul.mubr.f32.gmra.mrb[0].mxu0 %v2560
      %v2787 = vpop.f32.mrb[0].mxu0
      %v2788 = vadd.f32 0.0, %v2787
      %v2789 = vpop.f32.mrb[0].mxu0
      %2790 = vmatprep.mubr.f32.mxu0 0.0
      %2791 = vmatmul.mubr.f32.gmra.mrb[0].mxu0 %v2561
      %v2792 = vpop.f32.mrb[0].mxu0
      %v2793 = vadd.f32 0.0, %v2792
      %v2794 = vpop.f32.mrb[0].mxu0
      %2795 = vmatprep.mubr.f32.mxu0 0.0
      %2796 = vmatmul.mubr.f32.gmra.mrb[0].mxu0 %v2562
      %v2797 = vpop.f32.mrb[0].mxu0
      %v2798 = vadd.f32 0.0, %v2797
      %v2799 = vpop.f32.mrb[0].mxu0
      %2800 = vmatprep.mubr.f32.mxu0 0.0
      %2801 = vmatmul.mubr.f32.gmra.mrb[0].mxu0 %v2563
      %v2802 = vpop.f32.mrb[0].mxu0
      %v2803 = vadd.f32 0.0, %v2802
      %v2804 = vpop.f32.mrb[0].mxu0
      %2805 = vdwg.mxu0
      %v2806 = vadd.f32 %v2500, %v2648
      %v2807 = vadd.f32 %v2501, %v2653
      %v2808 = vadd.f32 %v2502, %v2658
      %v2809 = vadd.f32 %v2503, %v2663
      %v2810 = vadd.f32 %v2504, %v2668
      %v2811 = vadd.f32 %v2505, %v2673
      %v2812 = vadd.f32 %v2506, %v2678
      %v2813 = vadd.f32 %v2507, %v2683
      %v2814 = vadd.f32 %v2508, %v2688
      %v2815 = vadd.f32 %v2509, %v2693
      %v2816 = vadd.f32 %v2510, %v2698
      %v2817 = vadd.f32 %v2511, %v2703
      %v2818 = vadd.f32 %v2512, %v2708
      %v2819 = vadd.f32 %v2513, %v2713
      %v2820 = vadd.f32 %v2514, %v2718
      %v2821 = vadd.f32 %v2515, %v2723
      %v2822 = vadd.f32 %v2516, %v2728
      %v2823 = vadd.f32 %v2517, %v2733
      %v2824 = vadd.f32 %v2518, %v2738
      %v2825 = vadd.f32 %v2519, %v2743
      %v2826 = vadd.f32 %v2520, %v2748
      %v2827 = vadd.f32 %v2521, %v2753
      %v2828 = vadd.f32 %v2522, %v2758
      %v2829 = vadd.f32 %v2523, %v2763
      %v2830 = vadd.f32 %v2524, %v2768
      %v2831 = vadd.f32 %v2525, %v2773
      %v2832 = vadd.f32 %v2526, %v2778
      %v2833 = vadd.f32 %v2527, %v2783
      %v2834 = vadd.f32 %v2528, %v2788
      %v2835 = vadd.f32 %v2529, %v2793
      %v2836 = vadd.f32 %v2530, %v2798
      %v2837 = vadd.f32 %v2531, %v2803
      %v2838 = vld [vmem:[%s2225 + $0x2] sm:$0xff]
      %v2839 = vld [vmem:[%s2225 + $0xa] sm:$0xff]
      %v2840 = vld [vmem:[%s2225 + $0x1a] sm:$0xff]
      %v2841 = vld [vmem:[%s2225 + $0x22] sm:$0xff]
      %v2842 = vld [vmem:[%s2225 + $0x32] sm:$0xff]
      %v2843 = vld [vmem:[%s2225 + $0x3a] sm:$0xff]
      %v2844 = vld [vmem:[%s2225 + $0x4a] sm:$0xff]
      %v2845 = vld [vmem:[%s2225 + $0x52] sm:$0xff]
      %v2846 = vld [vmem:[%s2225 + $0x62] sm:$0xff]
      %v2847 = vld [vmem:[%s2225 + $0x6a] sm:$0xff]
      %v2848 = vld [vmem:[%s2225 + $0x7a] sm:$0xff]
      %v2849 = vld [vmem:[%s2225 + $0x82] sm:$0xff]
      %v2850 = vld [vmem:[%s2225 + $0x92] sm:$0xff]
      %v2851 = vld [vmem:[%s2225 + $0x9a] sm:$0xff]
      %v2852 = vld [vmem:[%s2225 + $0xaa] sm:$0xff]
      %v2853 = vld [vmem:[%s2225 + $0xb2] sm:$0xff]
      %v2854 = vld [vmem:[%s2225 + $0xc2] sm:$0xff]
      %v2855 = vld [vmem:[%s2225 + $0xca] sm:$0xff]
      %v2856 = vld [vmem:[%s2225 + $0xda] sm:$0xff]
      %v2857 = vld [vmem:[%s2225 + $0xe2] sm:$0xff]
      %v2858 = vld [vmem:[%s2225 + $0xf2] sm:$0xff]
      %v2859 = vld [vmem:[%s2225 + $0xfa] sm:$0xff]
      %v2860 = vld [vmem:[%s2225 + $0x10a] sm:$0xff]
      %v2861 = vld [vmem:[%s2225 + $0x112] sm:$0xff]
      %v2862 = vld [vmem:[%s2225 + $0x122] sm:$0xff]
      %v2863 = vld [vmem:[%s2225 + $0x12a] sm:$0xff]
      %v2864 = vld [vmem:[%s2225 + $0x13a] sm:$0xff]
      %v2865 = vld [vmem:[%s2225 + $0x142] sm:$0xff]
      %v2866 = vld [vmem:[%s2225 + $0x152] sm:$0xff]
      %v2867 = vld [vmem:[%s2225 + $0x15a] sm:$0xff]
      %v2868 = vld [vmem:[%s2225 + $0x16a] sm:$0xff]
      %v2869 = vld [vmem:[%s2225 + $0x172] sm:$0xff]
      %s2870 = scalar_lea.vmem %s3, 1024
      %v2871 = vld [vmem:[%s2870] sm:$0xff]
      %v2872 = vld [vmem:[%s2870 + $0x8] sm:$0xff]
      %v2873 = vld [vmem:[%s2870 + $0x10] sm:$0xff]
      %v2874 = vld [vmem:[%s2870 + $0x18] sm:$0xff]
      %v2875 = vld [vmem:[%s2870 + $0x20] sm:$0xff]
      %v2876 = vld [vmem:[%s2870 + $0x28] sm:$0xff]
      %v2877 = vld [vmem:[%s2870 + $0x30] sm:$0xff]
      %v2878 = vld [vmem:[%s2870 + $0x38] sm:$0xff]
      %v2879 = vld [vmem:[%s2870 + $0x40] sm:$0xff]
      %v2880 = vld [vmem:[%s2870 + $0x48] sm:$0xff]
      %v2881 = vld [vmem:[%s2870 + $0x50] sm:$0xff]
      %v2882 = vld [vmem:[%s2870 + $0x58] sm:$0xff]
      %v2883 = vld [vmem:[%s2870 + $0x60] sm:$0xff]
      %v2884 = vld [vmem:[%s2870 + $0x68] sm:$0xff]
      %v2885 = vld [vmem:[%s2870 + $0x70] sm:$0xff]
      %v2886 = vld [vmem:[%s2870 + $0x78] sm:$0xff]
      %2887 = vmatprep.subr.mxu0 0.0
      %2888 = vmatpush1.msra.mxu0 %v2871
      %2889 = vmatprep.subr.mxu0 0.0
      %2890 = vmatpush1.msra.mxu0 %v2872
      %2891 = vmatprep.subr.mxu0 0.0
      %2892 = vmatpush1.msra.mxu0 %v2873
      %2893 = vmatprep.subr.mxu0 0.0
      %2894 = vmatpush1.msra.mxu0 %v2874
      %2895 = vmatprep.subr.mxu0 0.0
      %2896 = vmatpush1.msra.mxu0 %v2875
      %2897 = vmatprep.subr.mxu0 0.0
      %2898 = vmatpush1.msra.mxu0 %v2876
      %2899 = vmatprep.subr.mxu0 0.0
      %2900 = vmatpush1.msra.mxu0 %v2877
      %2901 = vmatprep.subr.mxu0 0.0
      %2902 = vmatpush1.msra.mxu0 %v2878
      %2903 = vmatprep.subr.mxu0 0.0
      %2904 = vmatpush1.msra.mxu0 %v2879
      %2905 = vmatprep.subr.mxu0 0.0
      %2906 = vmatpush1.msra.mxu0 %v2880
      %2907 = vmatprep.subr.mxu0 0.0
      %2908 = vmatpush1.msra.mxu0 %v2881
      %2909 = vmatprep.subr.mxu0 0.0
      %2910 = vmatpush1.msra.mxu0 %v2882
      %2911 = vmatprep.subr.mxu0 0.0
      %2912 = vmatpush1.msra.mxu0 %v2883
      %2913 = vmatprep.subr.mxu0 0.0
      %2914 = vmatpush1.msra.mxu0 %v2884
      %2915 = vmatprep.subr.mxu0 0.0
      %2916 = vmatpush1.msra.mxu0 %v2885
      %2917 = vmatprep.subr.mxu0 0.0
      %2918 = vmatpush1.msra.mxu0 %v2886
      %2919 = vmatprep.subr.mxu0 0.0
      %2920 = vmatpush1.msra.mxu0 0.0
      %2921 = vmatprep.subr.mxu0 0.0
      %2922 = vmatpush1.msra.mxu0 0.0
      %2923 = vmatprep.subr.mxu0 0.0
      %2924 = vmatpush1.msra.mxu0 0.0
      %2925 = vmatprep.subr.mxu0 0.0
      %2926 = vmatpush1.msra.mxu0 0.0
      %2927 = vmatprep.subr.mxu0 0.0
      %2928 = vmatpush1.msra.mxu0 0.0
      %2929 = vmatprep.subr.mxu0 0.0
      %2930 = vmatpush1.msra.mxu0 0.0
      %2931 = vmatprep.subr.mxu0 0.0
      %2932 = vmatpush1.msra.mxu0 0.0
      %2933 = vmatprep.subr.mxu0 0.0
      %2934 = vmatpush1.msra.mxu0 0.0
      %2935 = vmatprep.subr.mxu0 0.0
      %2936 = vmatpush1.msra.mxu0 0.0
      %2937 = vmatprep.subr.mxu0 0.0
      %2938 = vmatpush1.msra.mxu0 0.0
      %2939 = vmatprep.subr.mxu0 0.0
      %2940 = vmatpush1.msra.mxu0 0.0
      %2941 = vmatprep.subr.mxu0 0.0
      %2942 = vmatpush1.msra.mxu0 0.0
      %2943 = vmatprep.subr.mxu0 0.0
      %2944 = vmatpush1.msra.mxu0 0.0
      %2945 = vmatprep.subr.mxu0 0.0
      %2946 = vmatpush1.msra.mxu0 0.0
      %2947 = vmatprep.subr.mxu0 0.0
      %2948 = vmatpush1.msra.mxu0 0.0
      %2949 = vmatprep.subr.mxu0 0.0
      %2950 = vmatpush1.msra.mxu0 0.0
      %2951 = vmatprep.mubr.f32.mxu0 0.0
      %2952 = vmatmul.mubr.f32.gmra.mrb[0].mxu0 %v2838
      %v2953 = vpop.f32.mrb[0].mxu0
      %v2954 = vadd.f32 0.0, %v2953
      %v2955 = vpop.f32.mrb[0].mxu0
      %2956 = vmatprep.mubr.f32.mxu0 0.0
      %2957 = vmatmul.mubr.f32.gmra.mrb[0].mxu0 %v2839
      %v2958 = vpop.f32.mrb[0].mxu0
      %v2959 = vadd.f32 0.0, %v2958
      %v2960 = vpop.f32.mrb[0].mxu0
      %2961 = vmatprep.mubr.f32.mxu0 0.0
      %2962 = vmatmul.mubr.f32.gmra.mrb[0].mxu0 %v2840
      %v2963 = vpop.f32.mrb[0].mxu0
      %v2964 = vadd.f32 0.0, %v2963
      %v2965 = vpop.f32.mrb[0].mxu0
      %2966 = vmatprep.mubr.f32.mxu0 0.0
      %2967 = vmatmul.mubr.f32.gmra.mrb[0].mxu0 %v2841
      %v2968 = vpop.f32.mrb[0].mxu0
      %v2969 = vadd.f32 0.0, %v2968
      %v2970 = vpop.f32.mrb[0].mxu0
      %2971 = vmatprep.mubr.f32.mxu0 0.0
      %2972 = vmatmul.mubr.f32.gmra.mrb[0].mxu0 %v2842
      %v2973 = vpop.f32.mrb[0].mxu0
      %v2974 = vadd.f32 0.0, %v2973
      %v2975 = vpop.f32.mrb[0].mxu0
      %2976 = vmatprep.mubr.f32.mxu0 0.0
      %2977 = vmatmul.mubr.f32.gmra.mrb[0].mxu0 %v2843
      %v2978 = vpop.f32.mrb[0].mxu0
      %v2979 = vadd.f32 0.0, %v2978
      %v2980 = vpop.f32.mrb[0].mxu0
      %2981 = vmatprep.mubr.f32.mxu0 0.0
      %2982 = vmatmul.mubr.f32.gmra.mrb[0].mxu0 %v2844
      %v2983 = vpop.f32.mrb[0].mxu0
      %v2984 = vadd.f32 0.0, %v2983
      %v2985 = vpop.f32.mrb[0].mxu0
      %2986 = vmatprep.mubr.f32.mxu0 0.0
      %2987 = vmatmul.mubr.f32.gmra.mrb[0].mxu0 %v2845
      %v2988 = vpop.f32.mrb[0].mxu0
      %v2989 = vadd.f32 0.0, %v2988
      %v2990 = vpop.f32.mrb[0].mxu0
      %2991 = vmatprep.mubr.f32.mxu0 0.0
      %2992 = vmatmul.mubr.f32.gmra.mrb[0].mxu0 %v2846
      %v2993 = vpop.f32.mrb[0].mxu0
      %v2994 = vadd.f32 0.0, %v2993
      %v2995 = vpop.f32.mrb[0].mxu0
      %2996 = vmatprep.mubr.f32.mxu0 0.0
      %2997 = vmatmul.mubr.f32.gmra.mrb[0].mxu0 %v2847
      %v2998 = vpop.f32.mrb[0].mxu0
      %v2999 = vadd.f32 0.0, %v2998
      %v3000 = vpop.f32.mrb[0].mxu0
      %3001 = vmatprep.mubr.f32.mxu0 0.0
      %3002 = vmatmul.mubr.f32.gmra.mrb[0].mxu0 %v2848
      %v3003 = vpop.f32.mrb[0].mxu0
      %v3004 = vadd.f32 0.0, %v3003
      %v3005 = vpop.f32.mrb[0].mxu0
      %3006 = vmatprep.mubr.f32.mxu0 0.0
      %3007 = vmatmul.mubr.f32.gmra.mrb[0].mxu0 %v2849
      %v3008 = vpop.f32.mrb[0].mxu0
      %v3009 = vadd.f32 0.0, %v3008
      %v3010 = vpop.f32.mrb[0].mxu0
      %3011 = vmatprep.mubr.f32.mxu0 0.0
      %3012 = vmatmul.mubr.f32.gmra.mrb[0].mxu0 %v2850
      %v3013 = vpop.f32.mrb[0].mxu0
      %v3014 = vadd.f32 0.0, %v3013
      %v3015 = vpop.f32.mrb[0].mxu0
      %3016 = vmatprep.mubr.f32.mxu0 0.0
      %3017 = vmatmul.mubr.f32.gmra.mrb[0].mxu0 %v2851
      %v3018 = vpop.f32.mrb[0].mxu0
      %v3019 = vadd.f32 0.0, %v3018
      %v3020 = vpop.f32.mrb[0].mxu0
      %3021 = vmatprep.mubr.f32.mxu0 0.0
      %3022 = vmatmul.mubr.f32.gmra.mrb[0].mxu0 %v2852
      %v3023 = vpop.f32.mrb[0].mxu0
      %v3024 = vadd.f32 0.0, %v3023
      %v3025 = vpop.f32.mrb[0].mxu0
      %3026 = vmatprep.mubr.f32.mxu0 0.0
      %3027 = vmatmul.mubr.f32.gmra.mrb[0].mxu0 %v2853
      %v3028 = vpop.f32.mrb[0].mxu0
      %v3029 = vadd.f32 0.0, %v3028
      %v3030 = vpop.f32.mrb[0].mxu0
      %3031 = vmatprep.mubr.f32.mxu0 0.0
      %3032 = vmatmul.mubr.f32.gmra.mrb[0].mxu0 %v2854
      %v3033 = vpop.f32.mrb[0].mxu0
      %v3034 = vadd.f32 0.0, %v3033
      %v3035 = vpop.f32.mrb[0].mxu0
      %3036 = vmatprep.mubr.f32.mxu0 0.0
      %3037 = vmatmul.mubr.f32.gmra.mrb[0].mxu0 %v2855
      %v3038 = vpop.f32.mrb[0].mxu0
      %v3039 = vadd.f32 0.0, %v3038
      %v3040 = vpop.f32.mrb[0].mxu0
      %3041 = vmatprep.mubr.f32.mxu0 0.0
      %3042 = vmatmul.mubr.f32.gmra.mrb[0].mxu0 %v2856
      %v3043 = vpop.f32.mrb[0].mxu0
      %v3044 = vadd.f32 0.0, %v3043
      %v3045 = vpop.f32.mrb[0].mxu0
      %3046 = vmatprep.mubr.f32.mxu0 0.0
      %3047 = vmatmul.mubr.f32.gmra.mrb[0].mxu0 %v2857
      %v3048 = vpop.f32.mrb[0].mxu0
      %v3049 = vadd.f32 0.0, %v3048
      %v3050 = vpop.f32.mrb[0].mxu0
      %3051 = vmatprep.mubr.f32.mxu0 0.0
      %3052 = vmatmul.mubr.f32.gmra.mrb[0].mxu0 %v2858
      %v3053 = vpop.f32.mrb[0].mxu0
      %v3054 = vadd.f32 0.0, %v3053
      %v3055 = vpop.f32.mrb[0].mxu0
      %3056 = vmatprep.mubr.f32.mxu0 0.0
      %3057 = vmatmul.mubr.f32.gmra.mrb[0].mxu0 %v2859
      %v3058 = vpop.f32.mrb[0].mxu0
      %v3059 = vadd.f32 0.0, %v3058
      %v3060 = vpop.f32.mrb[0].mxu0
      %3061 = vmatprep.mubr.f32.mxu0 0.0
      %3062 = vmatmul.mubr.f32.gmra.mrb[0].mxu0 %v2860
      %v3063 = vpop.f32.mrb[0].mxu0
      %v3064 = vadd.f32 0.0, %v3063
      %v3065 = vpop.f32.mrb[0].mxu0
      %3066 = vmatprep.mubr.f32.mxu0 0.0
      %3067 = vmatmul.mubr.f32.gmra.mrb[0].mxu0 %v2861
      %v3068 = vpop.f32.mrb[0].mxu0
      %v3069 = vadd.f32 0.0, %v3068
      %v3070 = vpop.f32.mrb[0].mxu0
      %3071 = vmatprep.mubr.f32.mxu0 0.0
      %3072 = vmatmul.mubr.f32.gmra.mrb[0].mxu0 %v2862
      %v3073 = vpop.f32.mrb[0].mxu0
      %v3074 = vadd.f32 0.0, %v3073
      %v3075 = vpop.f32.mrb[0].mxu0
      %3076 = vmatprep.mubr.f32.mxu0 0.0
      %3077 = vmatmul.mubr.f32.gmra.mrb[0].mxu0 %v2863
      %v3078 = vpop.f32.mrb[0].mxu0
      %v3079 = vadd.f32 0.0, %v3078
      %v3080 = vpop.f32.mrb[0].mxu0
      %3081 = vmatprep.mubr.f32.mxu0 0.0
      %3082 = vmatmul.mubr.f32.gmra.mrb[0].mxu0 %v2864
      %v3083 = vpop.f32.mrb[0].mxu0
      %v3084 = vadd.f32 0.0, %v3083
      %v3085 = vpop.f32.mrb[0].mxu0
      %3086 = vmatprep.mubr.f32.mxu0 0.0
      %3087 = vmatmul.mubr.f32.gmra.mrb[0].mxu0 %v2865
      %v3088 = vpop.f32.mrb[0].mxu0
      %v3089 = vadd.f32 0.0, %v3088
      %v3090 = vpop.f32.mrb[0].mxu0
      %3091 = vmatprep.mubr.f32.mxu0 0.0
      %3092 = vmatmul.mubr.f32.gmra.mrb[0].mxu0 %v2866
      %v3093 = vpop.f32.mrb[0].mxu0
      %v3094 = vadd.f32 0.0, %v3093
      %v3095 = vpop.f32.mrb[0].mxu0
      %3096 = vmatprep.mubr.f32.mxu0 0.0
      %3097 = vmatmul.mubr.f32.gmra.mrb[0].mxu0 %v2867
      %v3098 = vpop.f32.mrb[0].mxu0
      %v3099 = vadd.f32 0.0, %v3098
      %v3100 = vpop.f32.mrb[0].mxu0
      %3101 = vmatprep.mubr.f32.mxu0 0.0
      %3102 = vmatmul.mubr.f32.gmra.mrb[0].mxu0 %v2868
      %v3103 = vpop.f32.mrb[0].mxu0
      %v3104 = vadd.f32 0.0, %v3103
      %v3105 = vpop.f32.mrb[0].mxu0
      %3106 = vmatprep.mubr.f32.mxu0 0.0
      %3107 = vmatmul.mubr.f32.gmra.mrb[0].mxu0 %v2869
      %v3108 = vpop.f32.mrb[0].mxu0
      %v3109 = vadd.f32 0.0, %v3108
      %v3110 = vpop.f32.mrb[0].mxu0
      %3111 = vdwg.mxu0
      %v3112 = vadd.f32 %v2806, %v2954
      %v3113 = vadd.f32 %v2807, %v2959
      %v3114 = vadd.f32 %v2808, %v2964
      %v3115 = vadd.f32 %v2809, %v2969
      %v3116 = vadd.f32 %v2810, %v2974
      %v3117 = vadd.f32 %v2811, %v2979
      %v3118 = vadd.f32 %v2812, %v2984
      %v3119 = vadd.f32 %v2813, %v2989
      %v3120 = vadd.f32 %v2814, %v2994
      %v3121 = vadd.f32 %v2815, %v2999
      %v3122 = vadd.f32 %v2816, %v3004
      %v3123 = vadd.f32 %v2817, %v3009
      %v3124 = vadd.f32 %v2818, %v3014
      %v3125 = vadd.f32 %v2819, %v3019
      %v3126 = vadd.f32 %v2820, %v3024
      %v3127 = vadd.f32 %v2821, %v3029
      %v3128 = vadd.f32 %v2822, %v3034
      %v3129 = vadd.f32 %v2823, %v3039
      %v3130 = vadd.f32 %v2824, %v3044
      %v3131 = vadd.f32 %v2825, %v3049
      %v3132 = vadd.f32 %v2826, %v3054
      %v3133 = vadd.f32 %v2827, %v3059
      %v3134 = vadd.f32 %v2828, %v3064
      %v3135 = vadd.f32 %v2829, %v3069
      %v3136 = vadd.f32 %v2830, %v3074
      %v3137 = vadd.f32 %v2831, %v3079
      %v3138 = vadd.f32 %v2832, %v3084
      %v3139 = vadd.f32 %v2833, %v3089
      %v3140 = vadd.f32 %v2834, %v3094
      %v3141 = vadd.f32 %v2835, %v3099
      %v3142 = vadd.f32 %v2836, %v3104
      %v3143 = vadd.f32 %v2837, %v3109
      %v3144 = vld [vmem:[%s4] sm:$0x1]
      %v3146 = vlaneseq
      %v3147 = vshrl.u32 %v3146, 7
      %v3148 = vsub.s32 0, %v3147
      %v3149 = vrot.slane %v3144, %v3148
      %v3151 = vadd.f32 %v3112, %v3149
      %v3152 = vadd.f32 %v3113, %v3149
      %v3153 = vadd.f32 %v3114, %v3149
      %v3154 = vadd.f32 %v3115, %v3149
      %v3155 = vadd.f32 %v3116, %v3149
      %v3156 = vadd.f32 %v3117, %v3149
      %v3157 = vadd.f32 %v3118, %v3149
      %v3158 = vadd.f32 %v3119, %v3149
      %v3159 = vadd.f32 %v3120, %v3149
      %v3160 = vadd.f32 %v3121, %v3149
      %v3161 = vadd.f32 %v3122, %v3149
      %v3162 = vadd.f32 %v3123, %v3149
      %v3163 = vadd.f32 %v3124, %v3149
      %v3164 = vadd.f32 %v3125, %v3149
      %v3165 = vadd.f32 %v3126, %v3149
      %v3166 = vadd.f32 %v3127, %v3149
      %v3167 = vadd.f32 %v3128, %v3149
      %v3168 = vadd.f32 %v3129, %v3149
      %v3169 = vadd.f32 %v3130, %v3149
      %v3170 = vadd.f32 %v3131, %v3149
      %v3171 = vadd.f32 %v3132, %v3149
      %v3172 = vadd.f32 %v3133, %v3149
      %v3173 = vadd.f32 %v3134, %v3149
      %v3174 = vadd.f32 %v3135, %v3149
      %v3175 = vadd.f32 %v3136, %v3149
      %v3176 = vadd.f32 %v3137, %v3149
      %v3177 = vadd.f32 %v3138, %v3149
      %v3178 = vadd.f32 %v3139, %v3149
      %v3179 = vadd.f32 %v3140, %v3149
      %v3180 = vadd.f32 %v3141, %v3149
      %v3181 = vadd.f32 %v3142, %v3149
      %v3182 = vadd.f32 %v3143, %v3149
      %3183 = vst [vmem:[%s224] sm:$0xff] %v3151
      %3184 = vst [vmem:[%s224 + $0x8] sm:$0xff] %v3152
      %3185 = vst [vmem:[%s224 + $0x10] sm:$0xff] %v3153
      %3186 = vst [vmem:[%s224 + $0x18] sm:$0xff] %v3154
      %3187 = vst [vmem:[%s224 + $0x20] sm:$0xff] %v3155
      %3188 = vst [vmem:[%s224 + $0x28] sm:$0xff] %v3156
      %3189 = vst [vmem:[%s224 + $0x30] sm:$0xff] %v3157
      %3190 = vst [vmem:[%s224 + $0x38] sm:$0xff] %v3158
      %3191 = vst [vmem:[%s224 + $0x40] sm:$0xff] %v3159
      %3192 = vst [vmem:[%s224 + $0x48] sm:$0xff] %v3160
      %3193 = vst [vmem:[%s224 + $0x50] sm:$0xff] %v3161
      %3194 = vst [vmem:[%s224 + $0x58] sm:$0xff] %v3162
      %3195 = vst [vmem:[%s224 + $0x60] sm:$0xff] %v3163
      %3196 = vst [vmem:[%s224 + $0x68] sm:$0xff] %v3164
      %3197 = vst [vmem:[%s224 + $0x70] sm:$0xff] %v3165
      %3198 = vst [vmem:[%s224 + $0x78] sm:$0xff] %v3166
      %3199 = vst [vmem:[%s224 + $0x80] sm:$0xff] %v3167
      %3200 = vst [vmem:[%s224 + $0x88] sm:$0xff] %v3168
      %3201 = vst [vmem:[%s224 + $0x90] sm:$0xff] %v3169
      %3202 = vst [vmem:[%s224 + $0x98] sm:$0xff] %v3170
      %3203 = vst [vmem:[%s224 + $0xa0] sm:$0xff] %v3171
      %3204 = vst [vmem:[%s224 + $0xa8] sm:$0xff] %v3172
      %3205 = vst [vmem:[%s224 + $0xb0] sm:$0xff] %v3173
      %3206 = vst [vmem:[%s224 + $0xb8] sm:$0xff] %v3174
      %3207 = vst [vmem:[%s224 + $0xc0] sm:$0xff] %v3175
      %3208 = vst [vmem:[%s224 + $0xc8] sm:$0xff] %v3176
      %3209 = vst [vmem:[%s224 + $0xd0] sm:$0xff] %v3177
      %3210 = vst [vmem:[%s224 + $0xd8] sm:$0xff] %v3178
      %3211 = vst [vmem:[%s224 + $0xe0] sm:$0xff] %v3179
      %3212 = vst [vmem:[%s224 + $0xe8] sm:$0xff] %v3180
      %3213 = vst [vmem:[%s224 + $0xf0] sm:$0xff] %v3181
      %3214 = vst [vmem:[%s224 + $0xf8] sm:$0xff] %v3182
      %p3215 = scmp.lt.s32.totalorder %s16, 1
      %s3216 = scalar_select %p3215, %s16, 1
      %s3217 = smul.addr %s3216, 32
      %s3218 = smul.addr %s3217, 8
      %s3219 = scalar_lea.vmem %s5, %s3218
      // Predicated region
      $region41: #{wide_basic_forward.2} parent=39 // pred_check
        %p3220 = pneg %p144
      $region42: #{wide_basic_forward.2} parent=39 // pred_check_branch
        %3222 = sbr.rel (%p3220) target = $region44
      $region43: #{wide_basic_forward.2} parent=39 // pred_region
        _
      $region44: #{wide_basic_forward.2} parent=39 // pred_fallthru
        _
    $region40: #{wide_basic_forward.2} parent=5 // pred_fallthru
      _
    %p3223 = scmp.le.s32.totalorder 2, %s11
    // Predicated region
    $region45: #{wide_basic_forward.2} parent=5 // pred_check
      %p3224 = pneg %p3223
    $region46: #{wide_basic_forward.2} parent=5 // pred_check_branch
      %3226 = sbr.rel (%p3224) target = $region48
    $region47: #{wide_basic_forward.2} parent=5 // pred_region
      %s3227 = ssub.s32 %s11, 2
      // Predicated region
      $region49: #{wide_basic_forward.2} parent=47 // pred_check
        %p3228 = pneg %p150
      $region50: #{wide_basic_forward.2} parent=47 // pred_check_branch
        %3230 = sbr.rel (%p3228) target = $region52
      $region51: #{wide_basic_forward.2} parent=47 // pred_region
        %p3231 = scmp.lt.s32.totalorder %s17, 1
        %s3232 = scalar_select %p3231, %s17, 1
        %s3233 = smul.addr %s3232, 32
        %s3234 = smul.addr %s3233, 8
        %s3235 = scalar_lea.vmem %s5, %s3234
      $region52: #{wide_basic_forward.2} parent=47 // pred_fallthru
        _
    $region48: #{wide_basic_forward.2} parent=5 // pred_fallthru
      _
  $region6: #{wide_basic_forward.2} parent=0 // loop_footer
    %s15 = sadd.s32 1, %s11
  $region7: #{wide_basic_forward.2} parent=0 // loop_footer_branch
    %10 = sbr.rel target = $region3
  $region8: #{wide_basic_forward.2} parent=0 // loop_exit
    _

</llo_original>
